<compile_context>
chip_gen: v7x
topology: tpu7x:2x2x1
jax: 0.10.0
libtpu: 0.0.40
codegen_flags: <defaults>
</compile_context>

<pallas_src>
import functools

import jax
import jax.numpy as jnp
from jax.experimental import pallas as pl
from jax.experimental.pallas import tpu as pltpu


# ----------------------------------------------------------------------------
# Fused kernel
# ----------------------------------------------------------------------------
def _small_k_matmul(x, w):
    """(B,K) @ (K,N) on the VPU via K broadcast mul-adds; K is tiny and static."""
    K = w.shape[0]
    acc = x[:, 0:1] * w[0:1, :]
    for k in range(1, K):
        acc = acc + x[:, k:k + 1] * w[k:k + 1, :]
    return acc


def _foar_fused_kernel(
    # data
    cloud_ref, ft_ref, ff_ref, color_ref,
    # sparse / force readout stand-ins
    ws_ref, bs_ref, es_ref,
    wf_ref, bf_ref, ef_ref,
    eflat_ref,
    # classifier
    wr_ref, br_ref,
    w1_ref, b1_ref, w2_ref, b2_ref,
    wct_ref, wcb_ref, bc_ref,
    # action head (split + lane-padded)
    was_ref, waf_ref, ba_ref,
    # outputs
    prop_ref, act_ref,
):
    f32 = jnp.float32
    bf16 = jnp.bfloat16

    # ---- folded glue: lane reductions (inputs pre-transposed so the reduced
    #      axis is the lane axis) ---------------------------------------------
    cloud_feat = jnp.mean(cloud_ref[...], axis=-1)        # (B, 6)
    force_mean = jnp.mean(ft_ref[...], axis=-1)           # (B, 6)
    pooled = jnp.mean(color_ref[...], axis=-1)            # (B, 3)  global avg pool

    # ---- sparse branch stand-in (TODO(synk): Sparse3DEncoder + Transformer) --
    sparse_readout = (_small_k_matmul(cloud_feat, ws_ref[...])
                      + bs_ref[...] + es_ref[...])         # (B, H)

    # ---- force branch stand-in (TODO(synk): ForceEncoder + Transformer) ------
    force_readout = (_small_k_matmul(force_mean, wf_ref[...])
                     + bf_ref[...] + ef_ref[...])          # (B, H)

    # ---- classifier (exact force_fc / cls_fc semantics) ----------------------
    # TODO(synk): resnet18 pretrained backbone; GAP + K=3 VPU projection stand-in.
    resnet_feat = _small_k_matmul(pooled, wr_ref[...]) + br_ref[...]      # (B, 512)

    # force_fc: Linear(6T,128) -> ReLU -> Linear(128,256)  (bf16 MXU, f32 acc)
    h1 = jnp.dot(ff_ref[...].astype(bf16), w1_ref[...],
                 preferred_element_type=f32) + b1_ref[...]
    h1 = jnp.maximum(h1, 0.0)                                             # (B, 128)
    cls_force = jnp.dot(h1.astype(bf16), w2_ref[...],
                        preferred_element_type=f32) + b2_ref[...]         # (B, 256)

    # cls_fc on cat(resnet_feat, cls_force) — split weight, two lane reductions
    logit = (jnp.sum(resnet_feat * wct_ref[...], axis=-1, keepdims=True)
             + jnp.sum(cls_force * wcb_ref[...], axis=-1, keepdims=True)
             + bc_ref[...])                                               # (B, 1)

    # numerically stable sigmoid using only exp / where / div (f32, VPU/EUP)
    z = jnp.exp(-jnp.abs(logit))
    prop = jnp.where(logit >= 0.0, 1.0 / (1.0 + z), z / (1.0 + z))        # (B, 1)

    # ---- FoAR fusion: w*force_readout + (1-w)*flat_embed ---------------------
    fused = prop * force_readout + (1.0 - prop) * eflat_ref[...]          # (B, H)

    # ---- action head on implicit cat([sparse, fused]) (split weights) --------
    # TODO(synk): DiffusionUNetPolicy.predict_action; linear head stand-in.
    action = (jnp.dot(sparse_readout.astype(bf16), was_ref[...],
                      preferred_element_type=f32)
              + jnp.dot(fused.astype(bf16), waf_ref[...],
                        preferred_element_type=f32)
              + ba_ref[...])                                              # (B, A_pad)

    # lane-dense outputs (prop broadcast across 128 lanes, sliced outside)
    prop_ref[...] = jnp.broadcast_to(prop, prop_ref.shape).astype(prop_ref.dtype)
    act_ref[...] = action.astype(act_ref.dtype)


def _full_spec(shape):
    nd = len(shape)
    return pl.BlockSpec(shape, lambda *_: (0,) * nd)


# ----------------------------------------------------------------------------
# Parameter construction (deterministic, seeded)
# ----------------------------------------------------------------------------
def _dense(key, fan_in, fan_out, scale=0.02, dtype=jnp.float32):
    w = (jax.random.normal(key, (fan_in, fan_out), jnp.float32) * scale).astype(dtype)
    b = jnp.zeros((1, fan_out), jnp.float32)
    return w, b


def init_foar_params(key, *, num_action, input_dim, obs_feature_dim, action_dim,
                     hidden_dim, num_obs_force, resnet_feat_dim=512):
    del obs_feature_dim  # equal to hidden_dim in this toy configuration
    ks = jax.random.split(key, 12)
    A = num_action * action_dim
    A_pad = ((A + 127) // 128) * 128
    p = {}

    # classifier.force_fc : Linear(6*T,128) -> ReLU -> Linear(128,256)  (exact shapes)
    p["fc1_w"], p["fc1_b"] = _dense(ks[0], 6 * num_obs_force, 128, dtype=jnp.bfloat16)
    p["fc2_w"], p["fc2_b"] = _dense(ks[1], 128, 256, dtype=jnp.bfloat16)

    # classifier.fc : Linear(512+256, 1) split into row blocks kept as (1,K) rows
    cls_w = jax.random.normal(ks[2], (resnet_feat_dim + 256,), jnp.float32) * 0.02
    p["cls_w_img"] = cls_w[:resnet_feat_dim].reshape(1, resnet_feat_dim)
    p["cls_w_force"] = cls_w[resnet_feat_dim:].reshape(1, 256)
    p["cls_b"] = jnp.zeros((1, 1), jnp.float32)

    # TODO(synk): resnet18 pretrained backbone not reproducible; GAP + projection stand-in.
    p["resnet_w"], p["resnet_b"] = _dense(ks[3], 3, resnet_feat_dim)

    # FoAR nn.Embedding(1, hidden_dim).weight
    p["sparse_readout_embed"] = jax.random.normal(ks[4], (1, hidden_dim), jnp.float32) * 0.02
    p["force_readout_embed"] = jax.random.normal(ks[5], (1, hidden_dim), jnp.float32) * 0.02
    p["flat_embed"] = jax.random.normal(ks[6], (1, hidden_dim), jnp.float32) * 0.02

    # TODO(synk): Sparse3DEncoder + sparse Transformer not provided; stand-in projection.
    p["sparse_w"], p["sparse_b"] = _dense(ks[7], input_dim, hidden_dim)
    # TODO(synk): ForceEncoder + force Transformer not provided; stand-in projection.
    p["force_w"], p["force_b"] = _dense(ks[8], input_dim, hidden_dim)

    # TODO(synk): DiffusionUNetPolicy not provided; linear action-head stand-in.
    # (2H -> A) split into two (H -> A) blocks; columns zero-padded to a lane-dense A_pad.
    w_as = jax.random.normal(ks[9], (hidden_dim, A), jnp.float32) * 0.02
    w_af = jax.random.normal(ks[10], (hidden_dim, A), jnp.float32) * 0.02
    pad = A_pad - A
    p["act_w_sparse"] = jnp.pad(w_as, ((0, 0), (0, pad))).astype(jnp.bfloat16)
    p["act_w_fused"] = jnp.pad(w_af, ((0, 0), (0, pad))).astype(jnp.bfloat16)
    p["act_b"] = jnp.zeros((1, A_pad), jnp.float32)
    return p


# ----------------------------------------------------------------------------
# Forward pass (actions=None branch of FoAR.forward) — one fused pallas_call
# ----------------------------------------------------------------------------
def foar_forward(params, force_torque, color, cloud, *, num_action, action_dim,
                 batch_size):
    B = batch_size
    A = num_action * action_dim
    A_pad = params["act_b"].shape[1]

    # zero-cost host-side layout plumbing only (reshape / transpose)
    cloud_t = jnp.transpose(cloud, (0, 2, 1))          # (B, 6, P)   reduce over lanes
    ft_t = jnp.transpose(force_torque, (0, 2, 1))      # (B, 6, T)   reduce over lanes
    force_flat = force_torque.reshape(B, -1)           # (B, 6*T)    classifier input
    color_r = color.reshape(B, color.shape[1], -1)     # (B, 3, H*W) global-avg-pool input

    inputs = (
        cloud_t, ft_t, force_flat, color_r,
        params["sparse_w"], params["sparse_b"], params["sparse_readout_embed"],
        params["force_w"], params["force_b"], params["force_readout_embed"],
        params["flat_embed"],
        params["resnet_w"], params["resnet_b"],
        params["fc1_w"], params["fc1_b"], params["fc2_w"], params["fc2_b"],
        params["cls_w_img"], params["cls_w_force"], params["cls_b"],
        params["act_w_sparse"], params["act_w_fused"], params["act_b"],
    )

    prop_pad, action_pad = pl.pallas_call(
        _foar_fused_kernel,
        grid=(1,),
        in_specs=[_full_spec(x.shape) for x in inputs],
        out_specs=(_full_spec((B, 128)), _full_spec((B, A_pad))),
        out_shape=(jax.ShapeDtypeStruct((B, 128), jnp.float32),
                   jax.ShapeDtypeStruct((B, A_pad), jnp.float32)),
        compiler_params=pltpu.CompilerParams(
            dimension_semantics=("arbitrary",),
            vmem_limit_bytes=32 * 1024 * 1024,
        ),
    )(*inputs)

    prop = prop_pad[:, 0]                          # (B,)  (avoids rank-0 squeeze at B==1)
    action_pred = action_pad[:, :A].reshape(B, num_action, action_dim)
    return prop, action_pred


# ----------------------------------------------------------------------------
if __name__ == "__main__":
    B = 4
    num_obs_force = 8
    num_points = 32
    input_dim = 6
    hidden_dim = obs_feature_dim = 128
    num_action, action_dim = 20, 10

    root = jax.random.PRNGKey(0)
    k_param, k_ft, k_img, k_cloud = jax.random.split(root, 4)

    params = init_foar_params(
        k_param, num_action=num_action, input_dim=input_dim,
        obs_feature_dim=obs_feature_dim, action_dim=action_dim,
        hidden_dim=hidden_dim, num_obs_force=num_obs_force)

    force_torque = jax.random.normal(k_ft, (B, num_obs_force, 6), jnp.float32)
    color = jax.random.normal(k_img, (B, 3, 16, 16), jnp.float32)   # NCHW like PyTorch
    cloud = jax.random.normal(k_cloud, (B, num_points, input_dim), jnp.float32)

    fwd = jax.jit(functools.partial(
        foar_forward, num_action=num_action, action_dim=action_dim, batch_size=B))
    prop, action_pred = fwd(params, force_torque, color, cloud)
    jax.block_until_ready((prop, action_pred))

    assert prop.shape == (B,)
    assert action_pred.shape == (B, num_action, action_dim)
    assert bool(jnp.all((prop >= 0.0) & (prop <= 1.0)))
    assert bool(jnp.all(jnp.isfinite(action_pred)))
    print("KERNEL_OK")
</pallas_src>

<mosaic_0001>
module attributes {stable_mosaic.version = 11 : i64} {
  func.func @_foar_fused_kernel(%arg0: i32, %arg1: memref<4x6x32xf32, #tpu.memory_space<vmem>>, %arg2: memref<4x6x8xf32, #tpu.memory_space<vmem>>, %arg3: memref<4x48xf32, #tpu.memory_space<vmem>>, %arg4: memref<4x3x256xf32, #tpu.memory_space<vmem>>, %arg5: memref<6x128xf32, #tpu.memory_space<vmem>>, %arg6: memref<1x128xf32, #tpu.memory_space<vmem>>, %arg7: memref<1x128xf32, #tpu.memory_space<vmem>>, %arg8: memref<6x128xf32, #tpu.memory_space<vmem>>, %arg9: memref<1x128xf32, #tpu.memory_space<vmem>>, %arg10: memref<1x128xf32, #tpu.memory_space<vmem>>, %arg11: memref<1x128xf32, #tpu.memory_space<vmem>>, %arg12: memref<3x512xf32, #tpu.memory_space<vmem>>, %arg13: memref<1x512xf32, #tpu.memory_space<vmem>>, %arg14: memref<48x128xbf16, #tpu.memory_space<vmem>>, %arg15: memref<1x128xf32, #tpu.memory_space<vmem>>, %arg16: memref<128x256xbf16, #tpu.memory_space<vmem>>, %arg17: memref<1x256xf32, #tpu.memory_space<vmem>>, %arg18: memref<1x512xf32, #tpu.memory_space<vmem>>, %arg19: memref<1x256xf32, #tpu.memory_space<vmem>>, %arg20: memref<1x1xf32, #tpu.memory_space<vmem>>, %arg21: memref<128x256xbf16, #tpu.memory_space<vmem>>, %arg22: memref<128x256xbf16, #tpu.memory_space<vmem>>, %arg23: memref<1x256xf32, #tpu.memory_space<vmem>>, %arg24: memref<4x128xf32, #tpu.memory_space<vmem>>, %arg25: memref<4x256xf32, #tpu.memory_space<vmem>>) attributes {dimension_semantics = [#tpu.dimension_semantics<arbitrary>], iteration_bounds = array<i64: 1>, scalar_prefetch = 0 : i64, scratch_operands = 0 : i64, tpu.core_type = #tpu.core_type<tc>, window_params = [{pipeline_mode = #tpu.pipeline_mode<synchronous>, transform_indices = @transform_0, window_bounds = array<i64: 4, 6, 32>}, {pipeline_mode = #tpu.pipeline_mode<synchronous>, transform_indices = @transform_1, window_bounds = array<i64: 4, 6, 8>}, {pipeline_mode = #tpu.pipeline_mode<synchronous>, transform_indices = @transform_2, window_bounds = array<i64: 4, 48>}, {pipeline_mode = #tpu.pipeline_mode<synchronous>, transform_indices = @transform_3, window_bounds = array<i64: 4, 3, 256>}, {pipeline_mode = #tpu.pipeline_mode<synchronous>, transform_indices = @transform_4, window_bounds = array<i64: 6, 128>}, {pipeline_mode = #tpu.pipeline_mode<synchronous>, transform_indices = @transform_5, window_bounds = array<i64: 1, 128>}, {pipeline_mode = #tpu.pipeline_mode<synchronous>, transform_indices = @transform_6, window_bounds = array<i64: 1, 128>}, {pipeline_mode = #tpu.pipeline_mode<synchronous>, transform_indices = @transform_7, window_bounds = array<i64: 6, 128>}, {pipeline_mode = #tpu.pipeline_mode<synchronous>, transform_indices = @transform_8, window_bounds = array<i64: 1, 128>}, {pipeline_mode = #tpu.pipeline_mode<synchronous>, transform_indices = @transform_9, window_bounds = array<i64: 1, 128>}, {pipeline_mode = #tpu.pipeline_mode<synchronous>, transform_indices = @transform_10, window_bounds = array<i64: 1, 128>}, {pipeline_mode = #tpu.pipeline_mode<synchronous>, transform_indices = @transform_11, window_bounds = array<i64: 3, 512>}, {pipeline_mode = #tpu.pipeline_mode<synchronous>, transform_indices = @transform_12, window_bounds = array<i64: 1, 512>}, {pipeline_mode = #tpu.pipeline_mode<synchronous>, transform_indices = @transform_13, window_bounds = array<i64: 48, 128>}, {pipeline_mode = #tpu.pipeline_mode<synchronous>, transform_indices = @transform_14, window_bounds = array<i64: 1, 128>}, {pipeline_mode = #tpu.pipeline_mode<synchronous>, transform_indices = @transform_15, window_bounds = array<i64: 128, 256>}, {pipeline_mode = #tpu.pipeline_mode<synchronous>, transform_indices = @transform_16, window_bounds = array<i64: 1, 256>}, {pipeline_mode = #tpu.pipeline_mode<synchronous>, transform_indices = @transform_17, window_bounds = array<i64: 1, 512>}, {pipeline_mode = #tpu.pipeline_mode<synchronous>, transform_indices = @transform_18, window_bounds = array<i64: 1, 256>}, {pipeline_mode = #tpu.pipeline_mode<synchronous>, transform_indices = @transform_19, window_bounds = array<i64: 1, 1>}, {pipeline_mode = #tpu.pipeline_mode<synchronous>, transform_indices = @transform_20, window_bounds = array<i64: 128, 256>}, {pipeline_mode = #tpu.pipeline_mode<synchronous>, transform_indices = @transform_21, window_bounds = array<i64: 128, 256>}, {pipeline_mode = #tpu.pipeline_mode<synchronous>, transform_indices = @transform_22, window_bounds = array<i64: 1, 256>}, {pipeline_mode = #tpu.pipeline_mode<synchronous>, transform_indices = @transform_23, window_bounds = array<i64: 4, 128>}, {pipeline_mode = #tpu.pipeline_mode<synchronous>, transform_indices = @transform_24, window_bounds = array<i64: 4, 256>}]} {
    %c0 = arith.constant 0 : index
    %c0_0 = arith.constant 0 : index
    %c0_1 = arith.constant 0 : index
    %0 = vector.load %arg1[%c0, %c0_0, %c0_1] : memref<4x6x32xf32, #tpu.memory_space<vmem>>, vector<4x6x32xf32>
    %cst = arith.constant dense<0.000000e+00> : vector<4x6xf32>
    %1 = vector.multi_reduction <add>, %0, %cst [2] : vector<4x6x32xf32> to vector<4x6xf32>
    %cst_2 = arith.constant 3.200000e+01 : f32
    %2 = vector.broadcast %cst_2 : f32 to vector<4x6xf32>
    %3 = arith.divf %1, %2 : vector<4x6xf32>
    %c0_3 = arith.constant 0 : index
    %c0_4 = arith.constant 0 : index
    %c0_5 = arith.constant 0 : index
    %4 = vector.load %arg2[%c0_3, %c0_4, %c0_5] : memref<4x6x8xf32, #tpu.memory_space<vmem>>, vector<4x6x8xf32>
    %cst_6 = arith.constant dense<0.000000e+00> : vector<4x6xf32>
    %5 = vector.multi_reduction <add>, %4, %cst_6 [2] : vector<4x6x8xf32> to vector<4x6xf32>
    %cst_7 = arith.constant 8.000000e+00 : f32
    %6 = vector.broadcast %cst_7 : f32 to vector<4x6xf32>
    %7 = arith.divf %5, %6 : vector<4x6xf32>
    %c0_8 = arith.constant 0 : index
    %c0_9 = arith.constant 0 : index
    %c0_10 = arith.constant 0 : index
    %8 = vector.load %arg4[%c0_8, %c0_9, %c0_10] : memref<4x3x256xf32, #tpu.memory_space<vmem>>, vector<4x3x256xf32>
    %cst_11 = arith.constant dense<0.000000e+00> : vector<4x3xf32>
    %9 = vector.multi_reduction <add>, %8, %cst_11 [2] : vector<4x3x256xf32> to vector<4x3xf32>
    %cst_12 = arith.constant 2.560000e+02 : f32
    %10 = vector.broadcast %cst_12 : f32 to vector<4x3xf32>
    %11 = arith.divf %9, %10 : vector<4x3xf32>
    %c0_13 = arith.constant 0 : index
    %c0_14 = arith.constant 0 : index
    %12 = vector.load %arg5[%c0_13, %c0_14] : memref<6x128xf32, #tpu.memory_space<vmem>>, vector<6x128xf32>
    %13 = vector.extract_strided_slice %3 {offsets = [0, 0], sizes = [4, 1], strides = [1, 1]} : vector<4x6xf32> to vector<4x1xf32>
    %14 = vector.extract_strided_slice %12 {offsets = [0, 0], sizes = [1, 128], strides = [1, 1]} : vector<6x128xf32> to vector<1x128xf32>
    %15 = vector.broadcast %13 : vector<4x1xf32> to vector<4x128xf32>
    %16 = vector.broadcast %14 : vector<1x128xf32> to vector<4x128xf32>
    %17 = arith.mulf %15, %16 : vector<4x128xf32>
    %18 = vector.extract_strided_slice %3 {offsets = [0, 1], sizes = [4, 1], strides = [1, 1]} : vector<4x6xf32> to vector<4x1xf32>
    %19 = vector.extract_strided_slice %12 {offsets = [1, 0], sizes = [1, 128], strides = [1, 1]} : vector<6x128xf32> to vector<1x128xf32>
    %20 = vector.broadcast %18 : vector<4x1xf32> to vector<4x128xf32>
    %21 = vector.broadcast %19 : vector<1x128xf32> to vector<4x128xf32>
    %22 = arith.mulf %20, %21 : vector<4x128xf32>
    %23 = arith.addf %17, %22 : vector<4x128xf32>
    %24 = vector.extract_strided_slice %3 {offsets = [0, 2], sizes = [4, 1], strides = [1, 1]} : vector<4x6xf32> to vector<4x1xf32>
    %25 = vector.extract_strided_slice %12 {offsets = [2, 0], sizes = [1, 128], strides = [1, 1]} : vector<6x128xf32> to vector<1x128xf32>
    %26 = vector.broadcast %24 : vector<4x1xf32> to vector<4x128xf32>
    %27 = vector.broadcast %25 : vector<1x128xf32> to vector<4x128xf32>
    %28 = arith.mulf %26, %27 : vector<4x128xf32>
    %29 = arith.addf %23, %28 : vector<4x128xf32>
    %30 = vector.extract_strided_slice %3 {offsets = [0, 3], sizes = [4, 1], strides = [1, 1]} : vector<4x6xf32> to vector<4x1xf32>
    %31 = vector.extract_strided_slice %12 {offsets = [3, 0], sizes = [1, 128], strides = [1, 1]} : vector<6x128xf32> to vector<1x128xf32>
    %32 = vector.broadcast %30 : vector<4x1xf32> to vector<4x128xf32>
    %33 = vector.broadcast %31 : vector<1x128xf32> to vector<4x128xf32>
    %34 = arith.mulf %32, %33 : vector<4x128xf32>
    %35 = arith.addf %29, %34 : vector<4x128xf32>
    %36 = vector.extract_strided_slice %3 {offsets = [0, 4], sizes = [4, 1], strides = [1, 1]} : vector<4x6xf32> to vector<4x1xf32>
    %37 = vector.extract_strided_slice %12 {offsets = [4, 0], sizes = [1, 128], strides = [1, 1]} : vector<6x128xf32> to vector<1x128xf32>
    %38 = vector.broadcast %36 : vector<4x1xf32> to vector<4x128xf32>
    %39 = vector.broadcast %37 : vector<1x128xf32> to vector<4x128xf32>
    %40 = arith.mulf %38, %39 : vector<4x128xf32>
    %41 = arith.addf %35, %40 : vector<4x128xf32>
    %42 = vector.extract_strided_slice %3 {offsets = [0, 5], sizes = [4, 1], strides = [1, 1]} : vector<4x6xf32> to vector<4x1xf32>
    %43 = vector.extract_strided_slice %12 {offsets = [5, 0], sizes = [1, 128], strides = [1, 1]} : vector<6x128xf32> to vector<1x128xf32>
    %44 = vector.broadcast %42 : vector<4x1xf32> to vector<4x128xf32>
    %45 = vector.broadcast %43 : vector<1x128xf32> to vector<4x128xf32>
    %46 = arith.mulf %44, %45 : vector<4x128xf32>
    %47 = arith.addf %41, %46 : vector<4x128xf32>
    %c0_15 = arith.constant 0 : index
    %c0_16 = arith.constant 0 : index
    %48 = vector.load %arg6[%c0_15, %c0_16] : memref<1x128xf32, #tpu.memory_space<vmem>>, vector<1x128xf32>
    %49 = vector.broadcast %48 : vector<1x128xf32> to vector<4x128xf32>
    %50 = arith.addf %47, %49 : vector<4x128xf32>
    %c0_17 = arith.constant 0 : index
    %c0_18 = arith.constant 0 : index
    %51 = vector.load %arg7[%c0_17, %c0_18] : memref<1x128xf32, #tpu.memory_space<vmem>>, vector<1x128xf32>
    %52 = vector.broadcast %51 : vector<1x128xf32> to vector<4x128xf32>
    %53 = arith.addf %50, %52 : vector<4x128xf32>
    %c0_19 = arith.constant 0 : index
    %c0_20 = arith.constant 0 : index
    %54 = vector.load %arg8[%c0_19, %c0_20] : memref<6x128xf32, #tpu.memory_space<vmem>>, vector<6x128xf32>
    %55 = vector.extract_strided_slice %7 {offsets = [0, 0], sizes = [4, 1], strides = [1, 1]} : vector<4x6xf32> to vector<4x1xf32>
    %56 = vector.extract_strided_slice %54 {offsets = [0, 0], sizes = [1, 128], strides = [1, 1]} : vector<6x128xf32> to vector<1x128xf32>
    %57 = vector.broadcast %55 : vector<4x1xf32> to vector<4x128xf32>
    %58 = vector.broadcast %56 : vector<1x128xf32> to vector<4x128xf32>
    %59 = arith.mulf %57, %58 : vector<4x128xf32>
    %60 = vector.extract_strided_slice %7 {offsets = [0, 1], sizes = [4, 1], strides = [1, 1]} : vector<4x6xf32> to vector<4x1xf32>
    %61 = vector.extract_strided_slice %54 {offsets = [1, 0], sizes = [1, 128], strides = [1, 1]} : vector<6x128xf32> to vector<1x128xf32>
    %62 = vector.broadcast %60 : vector<4x1xf32> to vector<4x128xf32>
    %63 = vector.broadcast %61 : vector<1x128xf32> to vector<4x128xf32>
    %64 = arith.mulf %62, %63 : vector<4x128xf32>
    %65 = arith.addf %59, %64 : vector<4x128xf32>
    %66 = vector.extract_strided_slice %7 {offsets = [0, 2], sizes = [4, 1], strides = [1, 1]} : vector<4x6xf32> to vector<4x1xf32>
    %67 = vector.extract_strided_slice %54 {offsets = [2, 0], sizes = [1, 128], strides = [1, 1]} : vector<6x128xf32> to vector<1x128xf32>
    %68 = vector.broadcast %66 : vector<4x1xf32> to vector<4x128xf32>
    %69 = vector.broadcast %67 : vector<1x128xf32> to vector<4x128xf32>
    %70 = arith.mulf %68, %69 : vector<4x128xf32>
    %71 = arith.addf %65, %70 : vector<4x128xf32>
    %72 = vector.extract_strided_slice %7 {offsets = [0, 3], sizes = [4, 1], strides = [1, 1]} : vector<4x6xf32> to vector<4x1xf32>
    %73 = vector.extract_strided_slice %54 {offsets = [3, 0], sizes = [1, 128], strides = [1, 1]} : vector<6x128xf32> to vector<1x128xf32>
    %74 = vector.broadcast %72 : vector<4x1xf32> to vector<4x128xf32>
    %75 = vector.broadcast %73 : vector<1x128xf32> to vector<4x128xf32>
    %76 = arith.mulf %74, %75 : vector<4x128xf32>
    %77 = arith.addf %71, %76 : vector<4x128xf32>
    %78 = vector.extract_strided_slice %7 {offsets = [0, 4], sizes = [4, 1], strides = [1, 1]} : vector<4x6xf32> to vector<4x1xf32>
    %79 = vector.extract_strided_slice %54 {offsets = [4, 0], sizes = [1, 128], strides = [1, 1]} : vector<6x128xf32> to vector<1x128xf32>
    %80 = vector.broadcast %78 : vector<4x1xf32> to vector<4x128xf32>
    %81 = vector.broadcast %79 : vector<1x128xf32> to vector<4x128xf32>
    %82 = arith.mulf %80, %81 : vector<4x128xf32>
    %83 = arith.addf %77, %82 : vector<4x128xf32>
    %84 = vector.extract_strided_slice %7 {offsets = [0, 5], sizes = [4, 1], strides = [1, 1]} : vector<4x6xf32> to vector<4x1xf32>
    %85 = vector.extract_strided_slice %54 {offsets = [5, 0], sizes = [1, 128], strides = [1, 1]} : vector<6x128xf32> to vector<1x128xf32>
    %86 = vector.broadcast %84 : vector<4x1xf32> to vector<4x128xf32>
    %87 = vector.broadcast %85 : vector<1x128xf32> to vector<4x128xf32>
    %88 = arith.mulf %86, %87 : vector<4x128xf32>
    %89 = arith.addf %83, %88 : vector<4x128xf32>
    %c0_21 = arith.constant 0 : index
    %c0_22 = arith.constant 0 : index
    %90 = vector.load %arg9[%c0_21, %c0_22] : memref<1x128xf32, #tpu.memory_space<vmem>>, vector<1x128xf32>
    %91 = vector.broadcast %90 : vector<1x128xf32> to vector<4x128xf32>
    %92 = arith.addf %89, %91 : vector<4x128xf32>
    %c0_23 = arith.constant 0 : index
    %c0_24 = arith.constant 0 : index
    %93 = vector.load %arg10[%c0_23, %c0_24] : memref<1x128xf32, #tpu.memory_space<vmem>>, vector<1x128xf32>
    %94 = vector.broadcast %93 : vector<1x128xf32> to vector<4x128xf32>
    %95 = arith.addf %92, %94 : vector<4x128xf32>
    %c0_25 = arith.constant 0 : index
    %c0_26 = arith.constant 0 : index
    %96 = vector.load %arg12[%c0_25, %c0_26] : memref<3x512xf32, #tpu.memory_space<vmem>>, vector<3x512xf32>
    %97 = vector.extract_strided_slice %11 {offsets = [0, 0], sizes = [4, 1], strides = [1, 1]} : vector<4x3xf32> to vector<4x1xf32>
    %98 = vector.extract_strided_slice %96 {offsets = [0, 0], sizes = [1, 512], strides = [1, 1]} : vector<3x512xf32> to vector<1x512xf32>
    %99 = vector.broadcast %97 : vector<4x1xf32> to vector<4x512xf32>
    %100 = vector.broadcast %98 : vector<1x512xf32> to vector<4x512xf32>
    %101 = arith.mulf %99, %100 : vector<4x512xf32>
    %102 = vector.extract_strided_slice %11 {offsets = [0, 1], sizes = [4, 1], strides = [1, 1]} : vector<4x3xf32> to vector<4x1xf32>
    %103 = vector.extract_strided_slice %96 {offsets = [1, 0], sizes = [1, 512], strides = [1, 1]} : vector<3x512xf32> to vector<1x512xf32>
    %104 = vector.broadcast %102 : vector<4x1xf32> to vector<4x512xf32>
    %105 = vector.broadcast %103 : vector<1x512xf32> to vector<4x512xf32>
    %106 = arith.mulf %104, %105 : vector<4x512xf32>
    %107 = arith.addf %101, %106 : vector<4x512xf32>
    %108 = vector.extract_strided_slice %11 {offsets = [0, 2], sizes = [4, 1], strides = [1, 1]} : vector<4x3xf32> to vector<4x1xf32>
    %109 = vector.extract_strided_slice %96 {offsets = [2, 0], sizes = [1, 512], strides = [1, 1]} : vector<3x512xf32> to vector<1x512xf32>
    %110 = vector.broadcast %108 : vector<4x1xf32> to vector<4x512xf32>
    %111 = vector.broadcast %109 : vector<1x512xf32> to vector<4x512xf32>
    %112 = arith.mulf %110, %111 : vector<4x512xf32>
    %113 = arith.addf %107, %112 : vector<4x512xf32>
    %c0_27 = arith.constant 0 : index
    %c0_28 = arith.constant 0 : index
    %114 = vector.load %arg13[%c0_27, %c0_28] : memref<1x512xf32, #tpu.memory_space<vmem>>, vector<1x512xf32>
    %115 = vector.broadcast %114 : vector<1x512xf32> to vector<4x512xf32>
    %116 = arith.addf %113, %115 : vector<4x512xf32>
    %c0_29 = arith.constant 0 : index
    %c0_30 = arith.constant 0 : index
    %117 = vector.load %arg3[%c0_29, %c0_30] : memref<4x48xf32, #tpu.memory_space<vmem>>, vector<4x48xf32>
    %118 = arith.truncf %117 : vector<4x48xf32> to vector<4x48xbf16>
    %c0_31 = arith.constant 0 : index
    %c0_32 = arith.constant 0 : index
    %119 = vector.load %arg14[%c0_31, %c0_32] : memref<48x128xbf16, #tpu.memory_space<vmem>>, vector<48x128xbf16>
    %cst_33 = arith.constant dense<0.000000e+00> : vector<4x128xf32>
    %120 = tpu.matmul %118, %119, %cst_33 {dimension_numbers = #tpu.dot_dimension_numbers<[1], [0], [0], [1], [0, 0, 1, 1], [], []>} : vector<4x48xbf16>, vector<48x128xbf16>, vector<4x128xf32> -> vector<4x128xf32>
    %c0_34 = arith.constant 0 : index
    %c0_35 = arith.constant 0 : index
    %121 = vector.load %arg15[%c0_34, %c0_35] : memref<1x128xf32, #tpu.memory_space<vmem>>, vector<1x128xf32>
    %122 = vector.broadcast %121 : vector<1x128xf32> to vector<4x128xf32>
    %123 = arith.addf %120, %122 : vector<4x128xf32>
    %cst_36 = arith.constant 0.000000e+00 : f32
    %124 = vector.broadcast %cst_36 : f32 to vector<4x128xf32>
    %125 = arith.maximumf %123, %124 : vector<4x128xf32>
    %126 = arith.truncf %125 : vector<4x128xf32> to vector<4x128xbf16>
    %c0_37 = arith.constant 0 : index
    %c0_38 = arith.constant 0 : index
    %127 = vector.load %arg16[%c0_37, %c0_38] : memref<128x256xbf16, #tpu.memory_space<vmem>>, vector<128x256xbf16>
    %cst_39 = arith.constant dense<0.000000e+00> : vector<4x256xf32>
    %128 = tpu.matmul %126, %127, %cst_39 {dimension_numbers = #tpu.dot_dimension_numbers<[1], [0], [0], [1], [0, 0, 1, 1], [], []>} : vector<4x128xbf16>, vector<128x256xbf16>, vector<4x256xf32> -> vector<4x256xf32>
    %c0_40 = arith.constant 0 : index
    %c0_41 = arith.constant 0 : index
    %129 = vector.load %arg17[%c0_40, %c0_41] : memref<1x256xf32, #tpu.memory_space<vmem>>, vector<1x256xf32>
    %130 = vector.broadcast %129 : vector<1x256xf32> to vector<4x256xf32>
    %131 = arith.addf %128, %130 : vector<4x256xf32>
    %c0_42 = arith.constant 0 : index
    %c0_43 = arith.constant 0 : index
    %132 = vector.load %arg18[%c0_42, %c0_43] : memref<1x512xf32, #tpu.memory_space<vmem>>, vector<1x512xf32>
    %133 = vector.broadcast %132 : vector<1x512xf32> to vector<4x512xf32>
    %134 = arith.mulf %116, %133 : vector<4x512xf32>
    %cst_44 = arith.constant dense<0.000000e+00> : vector<4xf32>
    %135 = vector.multi_reduction <add>, %134, %cst_44 [1] : vector<4x512xf32> to vector<4xf32>
    %136 = vector.shape_cast %135 : vector<4xf32> to vector<4x1xf32>
    %c0_45 = arith.constant 0 : index
    %c0_46 = arith.constant 0 : index
    %137 = vector.load %arg19[%c0_45, %c0_46] : memref<1x256xf32, #tpu.memory_space<vmem>>, vector<1x256xf32>
    %138 = vector.broadcast %137 : vector<1x256xf32> to vector<4x256xf32>
    %139 = arith.mulf %131, %138 : vector<4x256xf32>
    %cst_47 = arith.constant dense<0.000000e+00> : vector<4xf32>
    %140 = vector.multi_reduction <add>, %139, %cst_47 [1] : vector<4x256xf32> to vector<4xf32>
    %141 = vector.shape_cast %140 : vector<4xf32> to vector<4x1xf32>
    %142 = arith.addf %136, %141 : vector<4x1xf32>
    %c0_48 = arith.constant 0 : index
    %c0_49 = arith.constant 0 : index
    %143 = vector.load %arg20[%c0_48, %c0_49] : memref<1x1xf32, #tpu.memory_space<vmem>>, vector<1x1xf32>
    %144 = vector.broadcast %143 : vector<1x1xf32> to vector<4x1xf32>
    %145 = arith.addf %142, %144 : vector<4x1xf32>
    %146 = math.absf %145 : vector<4x1xf32>
    %cst_50 = arith.constant 0.000000e+00 : f32
    %147 = vector.broadcast %cst_50 : f32 to vector<4x1xf32>
    %148 = arith.subf %147, %146 : vector<4x1xf32>
    %149 = math.exp %148 : vector<4x1xf32>
    %cst_51 = arith.constant 0.000000e+00 : f32
    %150 = vector.broadcast %cst_51 : f32 to vector<4x1xf32>
    %151 = arith.cmpf oge, %145, %150 : vector<4x1xf32>
    %cst_52 = arith.constant 1.000000e+00 : f32
    %152 = vector.broadcast %cst_52 : f32 to vector<4x1xf32>
    %153 = arith.addf %152, %149 : vector<4x1xf32>
    %cst_53 = arith.constant 1.000000e+00 : f32
    %154 = vector.broadcast %cst_53 : f32 to vector<4x1xf32>
    %155 = arith.divf %154, %153 : vector<4x1xf32>
    %cst_54 = arith.constant 1.000000e+00 : f32
    %156 = vector.broadcast %cst_54 : f32 to vector<4x1xf32>
    %157 = arith.addf %156, %149 : vector<4x1xf32>
    %158 = arith.divf %149, %157 : vector<4x1xf32>
    %159 = arith.select %151, %155, %158 : vector<4x1xi1>, vector<4x1xf32>
    %160 = vector.broadcast %159 : vector<4x1xf32> to vector<4x128xf32>
    %161 = arith.mulf %160, %95 : vector<4x128xf32>
    %cst_55 = arith.constant 1.000000e+00 : f32
    %162 = vector.broadcast %cst_55 : f32 to vector<4x1xf32>
    %163 = arith.subf %162, %159 : vector<4x1xf32>
    %c0_56 = arith.constant 0 : index
    %c0_57 = arith.constant 0 : index
    %164 = vector.load %arg11[%c0_56, %c0_57] : memref<1x128xf32, #tpu.memory_space<vmem>>, vector<1x128xf32>
    %165 = vector.broadcast %163 : vector<4x1xf32> to vector<4x128xf32>
    %166 = vector.broadcast %164 : vector<1x128xf32> to vector<4x128xf32>
    %167 = arith.mulf %165, %166 : vector<4x128xf32>
    %168 = arith.addf %161, %167 : vector<4x128xf32>
    %169 = arith.truncf %53 : vector<4x128xf32> to vector<4x128xbf16>
    %c0_58 = arith.constant 0 : index
    %c0_59 = arith.constant 0 : index
    %170 = vector.load %arg21[%c0_58, %c0_59] : memref<128x256xbf16, #tpu.memory_space<vmem>>, vector<128x256xbf16>
    %cst_60 = arith.constant dense<0.000000e+00> : vector<4x256xf32>
    %171 = tpu.matmul %169, %170, %cst_60 {dimension_numbers = #tpu.dot_dimension_numbers<[1], [0], [0], [1], [0, 0, 1, 1], [], []>} : vector<4x128xbf16>, vector<128x256xbf16>, vector<4x256xf32> -> vector<4x256xf32>
    %172 = arith.truncf %168 : vector<4x128xf32> to vector<4x128xbf16>
    %c0_61 = arith.constant 0 : index
    %c0_62 = arith.constant 0 : index
    %173 = vector.load %arg22[%c0_61, %c0_62] : memref<128x256xbf16, #tpu.memory_space<vmem>>, vector<128x256xbf16>
    %cst_63 = arith.constant dense<0.000000e+00> : vector<4x256xf32>
    %174 = tpu.matmul %172, %173, %cst_63 {dimension_numbers = #tpu.dot_dimension_numbers<[1], [0], [0], [1], [0, 0, 1, 1], [], []>} : vector<4x128xbf16>, vector<128x256xbf16>, vector<4x256xf32> -> vector<4x256xf32>
    %175 = arith.addf %171, %174 : vector<4x256xf32>
    %c0_64 = arith.constant 0 : index
    %c0_65 = arith.constant 0 : index
    %176 = vector.load %arg23[%c0_64, %c0_65] : memref<1x256xf32, #tpu.memory_space<vmem>>, vector<1x256xf32>
    %177 = vector.broadcast %176 : vector<1x256xf32> to vector<4x256xf32>
    %178 = arith.addf %175, %177 : vector<4x256xf32>
    %179 = vector.shape_cast %159 : vector<4x1xf32> to vector<4x1xf32>
    %180 = vector.broadcast %179 : vector<4x1xf32> to vector<4x128xf32>
    %c0_66 = arith.constant 0 : index
    %c0_67 = arith.constant 0 : index
    %181 = vector.load %arg24[%c0_66, %c0_67] : memref<4x128xf32, #tpu.memory_space<vmem>>, vector<4x128xf32>
    tpu.vector_store %arg24[%c0_66, %c0_67], %180 {strides = array<i32>} : memref<4x128xf32, #tpu.memory_space<vmem>>, vector<4x128xf32>,
    %c0_68 = arith.constant 0 : index
    %c0_69 = arith.constant 0 : index
    %182 = vector.load %arg25[%c0_68, %c0_69] : memref<4x256xf32, #tpu.memory_space<vmem>>, vector<4x256xf32>
    tpu.vector_store %arg25[%c0_68, %c0_69], %178 {strides = array<i32>} : memref<4x256xf32, #tpu.memory_space<vmem>>, vector<4x256xf32>,
    return
  }
  func.func @transform_0(%arg0: i32) -> (i32, i32, i32) {
    %c0_i32 = arith.constant 0 : i32
    %c0_i32_0 = arith.constant 0 : i32
    %c0_i32_1 = arith.constant 0 : i32
    %c0_i32_2 = arith.constant 0 : i32
    return %c0_i32, %c0_i32_0, %c0_i32_1 : i32, i32, i32
  }
  func.func @transform_1(%arg0: i32) -> (i32, i32, i32) {
    %c0_i32 = arith.constant 0 : i32
    %c0_i32_0 = arith.constant 0 : i32
    %c0_i32_1 = arith.constant 0 : i32
    %c0_i32_2 = arith.constant 0 : i32
    return %c0_i32, %c0_i32_0, %c0_i32_1 : i32, i32, i32
  }
  func.func @transform_2(%arg0: i32) -> (i32, i32) {
    %c0_i32 = arith.constant 0 : i32
    %c0_i32_0 = arith.constant 0 : i32
    %c0_i32_1 = arith.constant 0 : i32
    return %c0_i32, %c0_i32_0 : i32, i32
  }
  func.func @transform_3(%arg0: i32) -> (i32, i32, i32) {
    %c0_i32 = arith.constant 0 : i32
    %c0_i32_0 = arith.constant 0 : i32
    %c0_i32_1 = arith.constant 0 : i32
    %c0_i32_2 = arith.constant 0 : i32
    return %c0_i32, %c0_i32_0, %c0_i32_1 : i32, i32, i32
  }
  func.func @transform_4(%arg0: i32) -> (i32, i32) {
    %c0_i32 = arith.constant 0 : i32
    %c0_i32_0 = arith.constant 0 : i32
    %c0_i32_1 = arith.constant 0 : i32
    return %c0_i32, %c0_i32_0 : i32, i32
  }
  func.func @transform_5(%arg0: i32) -> (i32, i32) {
    %c0_i32 = arith.constant 0 : i32
    %c0_i32_0 = arith.constant 0 : i32
    %c0_i32_1 = arith.constant 0 : i32
    return %c0_i32, %c0_i32_0 : i32, i32
  }
  func.func @transform_6(%arg0: i32) -> (i32, i32) {
    %c0_i32 = arith.constant 0 : i32
    %c0_i32_0 = arith.constant 0 : i32
    %c0_i32_1 = arith.constant 0 : i32
    return %c0_i32, %c0_i32_0 : i32, i32
  }
  func.func @transform_7(%arg0: i32) -> (i32, i32) {
    %c0_i32 = arith.constant 0 : i32
    %c0_i32_0 = arith.constant 0 : i32
    %c0_i32_1 = arith.constant 0 : i32
    return %c0_i32, %c0_i32_0 : i32, i32
  }
  func.func @transform_8(%arg0: i32) -> (i32, i32) {
    %c0_i32 = arith.constant 0 : i32
    %c0_i32_0 = arith.constant 0 : i32
    %c0_i32_1 = arith.constant 0 : i32
    return %c0_i32, %c0_i32_0 : i32, i32
  }
  func.func @transform_9(%arg0: i32) -> (i32, i32) {
    %c0_i32 = arith.constant 0 : i32
    %c0_i32_0 = arith.constant 0 : i32
    %c0_i32_1 = arith.constant 0 : i32
    return %c0_i32, %c0_i32_0 : i32, i32
  }
  func.func @transform_10(%arg0: i32) -> (i32, i32) {
    %c0_i32 = arith.constant 0 : i32
    %c0_i32_0 = arith.constant 0 : i32
    %c0_i32_1 = arith.constant 0 : i32
    return %c0_i32, %c0_i32_0 : i32, i32
  }
  func.func @transform_11(%arg0: i32) -> (i32, i32) {
    %c0_i32 = arith.constant 0 : i32
    %c0_i32_0 = arith.constant 0 : i32
    %c0_i32_1 = arith.constant 0 : i32
    return %c0_i32, %c0_i32_0 : i32, i32
  }
  func.func @transform_12(%arg0: i32) -> (i32, i32) {
    %c0_i32 = arith.constant 0 : i32
    %c0_i32_0 = arith.constant 0 : i32
    %c0_i32_1 = arith.constant 0 : i32
    return %c0_i32, %c0_i32_0 : i32, i32
  }
  func.func @transform_13(%arg0: i32) -> (i32, i32) {
    %c0_i32 = arith.constant 0 : i32
    %c0_i32_0 = arith.constant 0 : i32
    %c0_i32_1 = arith.constant 0 : i32
    return %c0_i32, %c0_i32_0 : i32, i32
  }
  func.func @transform_14(%arg0: i32) -> (i32, i32) {
    %c0_i32 = arith.constant 0 : i32
    %c0_i32_0 = arith.constant 0 : i32
    %c0_i32_1 = arith.constant 0 : i32
    return %c0_i32, %c0_i32_0 : i32, i32
  }
  func.func @transform_15(%arg0: i32) -> (i32, i32) {
    %c0_i32 = arith.constant 0 : i32
    %c0_i32_0 = arith.constant 0 : i32
    %c0_i32_1 = arith.constant 0 : i32
    return %c0_i32, %c0_i32_0 : i32, i32
  }
  func.func @transform_16(%arg0: i32) -> (i32, i32) {
    %c0_i32 = arith.constant 0 : i32
    %c0_i32_0 = arith.constant 0 : i32
    %c0_i32_1 = arith.constant 0 : i32
    return %c0_i32, %c0_i32_0 : i32, i32
  }
  func.func @transform_17(%arg0: i32) -> (i32, i32) {
    %c0_i32 = arith.constant 0 : i32
    %c0_i32_0 = arith.constant 0 : i32
    %c0_i32_1 = arith.constant 0 : i32
    return %c0_i32, %c0_i32_0 : i32, i32
  }
  func.func @transform_18(%arg0: i32) -> (i32, i32) {
    %c0_i32 = arith.constant 0 : i32
    %c0_i32_0 = arith.constant 0 : i32
    %c0_i32_1 = arith.constant 0 : i32
    return %c0_i32, %c0_i32_0 : i32, i32
  }
  func.func @transform_19(%arg0: i32) -> (i32, i32) {
    %c0_i32 = arith.constant 0 : i32
    %c0_i32_0 = arith.constant 0 : i32
    %c0_i32_1 = arith.constant 0 : i32
    return %c0_i32, %c0_i32_0 : i32, i32
  }
  func.func @transform_20(%arg0: i32) -> (i32, i32) {
    %c0_i32 = arith.constant 0 : i32
    %c0_i32_0 = arith.constant 0 : i32
    %c0_i32_1 = arith.constant 0 : i32
    return %c0_i32, %c0_i32_0 : i32, i32
  }
  func.func @transform_21(%arg0: i32) -> (i32, i32) {
    %c0_i32 = arith.constant 0 : i32
    %c0_i32_0 = arith.constant 0 : i32
    %c0_i32_1 = arith.constant 0 : i32
    return %c0_i32, %c0_i32_0 : i32, i32
  }
  func.func @transform_22(%arg0: i32) -> (i32, i32) {
    %c0_i32 = arith.constant 0 : i32
    %c0_i32_0 = arith.constant 0 : i32
    %c0_i32_1 = arith.constant 0 : i32
    return %c0_i32, %c0_i32_0 : i32, i32
  }
  func.func @transform_23(%arg0: i32) -> (i32, i32) {
    %c0_i32 = arith.constant 0 : i32
    %c0_i32_0 = arith.constant 0 : i32
    %c0_i32_1 = arith.constant 0 : i32
    return %c0_i32, %c0_i32_0 : i32, i32
  }
  func.func @transform_24(%arg0: i32) -> (i32, i32) {
    %c0_i32 = arith.constant 0 : i32
    %c0_i32_0 = arith.constant 0 : i32
    %c0_i32_1 = arith.constant 0 : i32
    return %c0_i32, %c0_i32_0 : i32, i32
  }
}

</mosaic_0001>

<llo_original>
// kernel: foar_forward.1
$region0: #{foar_forward.1}
  #allocation0 [shape = 'u32[]', space=smem, size = 0x4, offset = 0x4, fixed_abs, tag = 'smem constant byte address 0x4 - core index']
  #allocation1 [shape = 'u32[144,128]{1,0:T(1,128)}', space=vmem, size = 0x12000, scoped, tag = 'internal scratch']
  #allocation2 [shape = 'f32[1,1]{1,0:T(1,128)S(1)}', space=vmem, size = 0x200, scoped, tag = 'scoped memory for foar_forward.1']
  %s0 = inlined_call_operand.vmem [shape: f32[4,6,32], index: 0, kind: input, shape index: {}]
  %s1 = inlined_call_operand.vmem [shape: f32[4,6,8], index: 1, kind: input, shape index: {}]
  %s2 = inlined_call_operand.vmem [shape: f32[4,48], index: 2, kind: input, shape index: {}]
  %s3 = inlined_call_operand.vmem [shape: f32[4,3,256], index: 3, kind: input, shape index: {}]
  %s4 = inlined_call_operand.vmem [shape: f32[6,128], index: 4, kind: input, shape index: {}]
  %s5 = inlined_call_operand.vmem [shape: f32[1,128], index: 5, kind: input, shape index: {}]
  %s6 = inlined_call_operand.vmem [shape: f32[1,128], index: 6, kind: input, shape index: {}]
  %s7 = inlined_call_operand.vmem [shape: f32[6,128], index: 7, kind: input, shape index: {}]
  %s8 = inlined_call_operand.vmem [shape: f32[1,128], index: 8, kind: input, shape index: {}]
  %s9 = inlined_call_operand.hbm [shape: f32[1,128], index: 9, kind: input, shape index: {}]
  %s10 = inlined_call_operand.hbm [shape: f32[1,128], index: 10, kind: input, shape index: {}]
  %s11 = inlined_call_operand.vmem [shape: f32[3,512], index: 11, kind: input, shape index: {}]
  %s12 = inlined_call_operand.vmem [shape: f32[1,512], index: 12, kind: input, shape index: {}]
  %s13 = inlined_call_operand.hbm [shape: bf16[48,128], index: 13, kind: input, shape index: {}]
  %s14 = inlined_call_operand.hbm [shape: f32[1,128], index: 14, kind: input, shape index: {}]
  %s15 = inlined_call_operand.vmem [shape: bf16[128,256], index: 15, kind: input, shape index: {}]
  %s16 = inlined_call_operand.vmem [shape: f32[1,256], index: 16, kind: input, shape index: {}]
  %s17 = inlined_call_operand.hbm [shape: f32[1,512], index: 17, kind: input, shape index: {}]
  %s18 = inlined_call_operand.hbm [shape: f32[1,256], index: 18, kind: input, shape index: {}]
  %s19 = inlined_call_operand.<no memory space> [shape: f32[1,1], index: 19, kind: input, shape index: {}]
  %s20 = inlined_call_operand.vmem [shape: bf16[128,256], index: 20, kind: input, shape index: {}]
  %s21 = inlined_call_operand.vmem [shape: bf16[128,256], index: 21, kind: input, shape index: {}]
  %s22 = inlined_call_operand.hbm [shape: f32[1,256], index: 22, kind: input, shape index: {}]
  %s23 = inlined_call_operand.vmem [shape: f32[4,128], index: 23, kind: output, shape index: {0}]
  %s24 = inlined_call_operand.vmem [shape: f32[4,256], index: 24, kind: output, shape index: {1}]
  %25 = xla_tuple %s23, %s24
  %s26 = sld [smem:[#allocation0]]
  $region138: #{foar_forward.1} parent=0
    _
  %s28 = ssub.s32 1, %s26
  %s29 = scalar_select 0, %s28, %s26
  %v30 = vstv %s19
  %31 = vst [vmem:[#allocation2] sm:$0x1] %v30
  $region1: #{foar_forward.1} parent=0
    #allocation3 [shape = 'u8[512]{0}', space=vmem, size = 0x400, scoped, tag = 'input window, operand 9, single buffered']
    #allocation4 [shape = 's32[1]{0}', space=sflag, size = 0x4, scoped, tag = 'scoped memory for foar_forward.1']
    #allocation5 [shape = 'u8[512]{0}', space=vmem, size = 0x400, scoped, tag = 'input window, operand 10, single buffered']
    #allocation6 [shape = 's32[1]{0}', space=sflag, size = 0x4, scoped, tag = 'scoped memory for foar_forward.1']
    #allocation7 [shape = 'u8[12288]{0}', space=vmem, size = 0x3000, scoped, tag = 'input window, operand 13, single buffered']
    #allocation8 [shape = 'u8[512]{0}', space=vmem, size = 0x400, scoped, tag = 'input window, operand 14, single buffered']
    #allocation9 [shape = 's32[1]{0}', space=sflag, size = 0x4, scoped, tag = 'scoped memory for foar_forward.1']
    #allocation10 [shape = 'u8[2048]{0}', space=vmem, size = 0x800, scoped, tag = 'input window, operand 17, single buffered']
    #allocation11 [shape = 'u8[1024]{0}', space=vmem, size = 0x400, scoped, tag = 'input window, operand 18, single buffered']
    #allocation12 [shape = 's32[1]{0}', space=sflag, size = 0x4, scoped, tag = 'scoped memory for foar_forward.1']
    #allocation13 [shape = 'u8[1024]{0}', space=vmem, size = 0x400, scoped, tag = 'input window, operand 22, single buffered']
    %32 = vsyncpa [#allocation4], 0
    %33 = vsyncpa [#allocation6], 0
    %34 = vsyncpa [#allocation9], 0
    %35 = vsyncpa [#allocation12], 0
    // Predicated region
    $region2: #{foar_forward.1} parent=1 // pred_check
      _
    $region3: #{foar_forward.1} parent=1 // pred_check_branch
      %37 = sbr.rel (0) target = $region5
    $region4: #{foar_forward.1} parent=1 // pred_region
      _
    $region5: #{foar_forward.1} parent=1 // pred_fallthru
      _
    // Predicated region
    $region6: #{foar_forward.1} parent=1 // pred_check
      _
    $region7: #{foar_forward.1} parent=1 // pred_check_branch
      %39 = sbr.rel (0) target = $region9
    $region8: #{foar_forward.1} parent=1 // pred_region
      _
    $region9: #{foar_forward.1} parent=1 // pred_fallthru
      _
    // Predicated region
    $region10: #{foar_forward.1} parent=1 // pred_check
      _
    $region11: #{foar_forward.1} parent=1 // pred_check_branch
      %41 = sbr.rel (0) target = $region13
    $region12: #{foar_forward.1} parent=1 // pred_region
      _
    $region13: #{foar_forward.1} parent=1 // pred_fallthru
      _
    // Predicated region
    $region14: #{foar_forward.1} parent=1 // pred_check
      _
    $region15: #{foar_forward.1} parent=1 // pred_check_branch
      %43 = sbr.rel (0) target = $region17
    $region16: #{foar_forward.1} parent=1 // pred_region
      _
    $region17: #{foar_forward.1} parent=1 // pred_fallthru
      _
    // Predicated region
    $region18: #{foar_forward.1} parent=1 // pred_check
      _
    $region19: #{foar_forward.1} parent=1 // pred_check_branch
      %45 = sbr.rel (0) target = $region21
    $region20: #{foar_forward.1} parent=1 // pred_region
      _
    $region21: #{foar_forward.1} parent=1 // pred_fallthru
      _
    // Predicated region
    $region22: #{foar_forward.1} parent=1 // pred_check
      _
    $region23: #{foar_forward.1} parent=1 // pred_check_branch
      %47 = sbr.rel (0) target = $region25
    $region24: #{foar_forward.1} parent=1 // pred_region
      _
    $region25: #{foar_forward.1} parent=1 // pred_fallthru
      _
    // Predicated region
    $region26: #{foar_forward.1} parent=1 // pred_check
      _
    $region27: #{foar_forward.1} parent=1 // pred_check_branch
      %49 = sbr.rel (0) target = $region29
    $region28: #{foar_forward.1} parent=1 // pred_region
      _
    $region29: #{foar_forward.1} parent=1 // pred_fallthru
      _
    // Predicated region
    $region30: #{foar_forward.1} parent=1 // pred_check
      _
    $region31: #{foar_forward.1} parent=1 // pred_check_branch
      %51 = sbr.rel (0) target = $region33
    $region32: #{foar_forward.1} parent=1 // pred_region
      _
    $region33: #{foar_forward.1} parent=1 // pred_fallthru
      _
    // Predicated region
    $region34: #{foar_forward.1} parent=1 // pred_check
      _
    $region35: #{foar_forward.1} parent=1 // pred_check_branch
      %53 = sbr.rel (0) target = $region37
    $region36: #{foar_forward.1} parent=1 // pred_region
      _
    $region37: #{foar_forward.1} parent=1 // pred_fallthru
      _
    // Predicated region
    $region38: #{foar_forward.1} parent=1 // pred_check
      _
    $region39: #{foar_forward.1} parent=1 // pred_check_branch
      %55 = sbr.rel (0) target = $region41
    $region40: #{foar_forward.1} parent=1 // pred_region
      %s57 = ssub.s32 16, 16
      %58 = vsyncadd [#allocation4], %s57
      %s60 = sshll.u32 [#allocation3], 4
      %s61 = int_to_ptr.vmem [resolvable:$true] %s60
      %63 = dma.hbm_to_vmem [thread:$0]  %s9, 16, %s61, [#allocation4]
    $region41: #{foar_forward.1} parent=1 // pred_fallthru
      _
    // Predicated region
    $region42: #{foar_forward.1} parent=1 // pred_check
      _
    $region43: #{foar_forward.1} parent=1 // pred_check_branch
      %65 = sbr.rel (0) target = $region45
    $region44: #{foar_forward.1} parent=1 // pred_region
      %s67 = ssub.s32 16, 16
      %68 = vsyncadd [#allocation6], %s67
      %s70 = sshll.u32 [#allocation5], 4
      %s71 = int_to_ptr.vmem [resolvable:$true] %s70
      %73 = dma.hbm_to_vmem [thread:$0]  %s10, 16, %s71, [#allocation6]
    $region45: #{foar_forward.1} parent=1 // pred_fallthru
      _
    // Predicated region
    $region46: #{foar_forward.1} parent=1 // pred_check
      _
    $region47: #{foar_forward.1} parent=1 // pred_check_branch
      %75 = sbr.rel (0) target = $region49
    $region48: #{foar_forward.1} parent=1 // pred_region
      _
    $region49: #{foar_forward.1} parent=1 // pred_fallthru
      _
    // Predicated region
    $region50: #{foar_forward.1} parent=1 // pred_check
      _
    $region51: #{foar_forward.1} parent=1 // pred_check_branch
      %77 = sbr.rel (0) target = $region53
    $region52: #{foar_forward.1} parent=1 // pred_region
      _
    $region53: #{foar_forward.1} parent=1 // pred_fallthru
      _
    // Predicated region
    $region54: #{foar_forward.1} parent=1 // pred_check
      _
    $region55: #{foar_forward.1} parent=1 // pred_check_branch
      %79 = sbr.rel (0) target = $region57
    $region56: #{foar_forward.1} parent=1 // pred_region
      %s81 = ssub.s32 384, 384
      %82 = vsyncadd [#allocation6], %s81
      %s83 = sshll.u32 [#allocation7], 4
      %s84 = int_to_ptr.vmem [resolvable:$true] %s83
      %89 = dma.hbm_to_vmem [thread:$0]  %s13, 384, %s84, [#allocation6], 64, 64, 4
    $region57: #{foar_forward.1} parent=1 // pred_fallthru
      _
    // Predicated region
    $region58: #{foar_forward.1} parent=1 // pred_check
      _
    $region59: #{foar_forward.1} parent=1 // pred_check_branch
      %91 = sbr.rel (0) target = $region61
    $region60: #{foar_forward.1} parent=1 // pred_region
      %s93 = ssub.s32 16, 16
      %94 = vsyncadd [#allocation9], %s93
      %s96 = sshll.u32 [#allocation8], 4
      %s97 = int_to_ptr.vmem [resolvable:$true] %s96
      %99 = dma.hbm_to_vmem [thread:$0]  %s14, 16, %s97, [#allocation9]
    $region61: #{foar_forward.1} parent=1 // pred_fallthru
      _
    // Predicated region
    $region62: #{foar_forward.1} parent=1 // pred_check
      _
    $region63: #{foar_forward.1} parent=1 // pred_check_branch
      %101 = sbr.rel (0) target = $region65
    $region64: #{foar_forward.1} parent=1 // pred_region
      _
    $region65: #{foar_forward.1} parent=1 // pred_fallthru
      _
    // Predicated region
    $region66: #{foar_forward.1} parent=1 // pred_check
      _
    $region67: #{foar_forward.1} parent=1 // pred_check_branch
      %103 = sbr.rel (0) target = $region69
    $region68: #{foar_forward.1} parent=1 // pred_region
      _
    $region69: #{foar_forward.1} parent=1 // pred_fallthru
      _
    // Predicated region
    $region70: #{foar_forward.1} parent=1 // pred_check
      _
    $region71: #{foar_forward.1} parent=1 // pred_check_branch
      %105 = sbr.rel (0) target = $region73
    $region72: #{foar_forward.1} parent=1 // pred_region
      %s107 = ssub.s32 64, 64
      %108 = vsyncadd [#allocation9], %s107
      %s110 = sshll.u32 [#allocation10], 4
      %s111 = int_to_ptr.vmem [resolvable:$true] %s110
      %113 = dma.hbm_to_vmem [thread:$0]  %s17, 64, %s111, [#allocation9]
    $region73: #{foar_forward.1} parent=1 // pred_fallthru
      _
    // Predicated region
    $region74: #{foar_forward.1} parent=1 // pred_check
      _
    $region75: #{foar_forward.1} parent=1 // pred_check_branch
      %115 = sbr.rel (0) target = $region77
    $region76: #{foar_forward.1} parent=1 // pred_region
      %s117 = ssub.s32 32, 32
      %118 = vsyncadd [#allocation12], %s117
      %s120 = sshll.u32 [#allocation11], 4
      %s121 = int_to_ptr.vmem [resolvable:$true] %s120
      %123 = dma.hbm_to_vmem [thread:$0]  %s18, 32, %s121, [#allocation12]
    $region77: #{foar_forward.1} parent=1 // pred_fallthru
      _
    // Predicated region
    $region78: #{foar_forward.1} parent=1 // pred_check
      _
    $region79: #{foar_forward.1} parent=1 // pred_check_branch
      %125 = sbr.rel (0) target = $region81
    $region80: #{foar_forward.1} parent=1 // pred_region
      _
    $region81: #{foar_forward.1} parent=1 // pred_fallthru
      _
    // Predicated region
    $region82: #{foar_forward.1} parent=1 // pred_check
      _
    $region83: #{foar_forward.1} parent=1 // pred_check_branch
      %127 = sbr.rel (0) target = $region85
    $region84: #{foar_forward.1} parent=1 // pred_region
      _
    $region85: #{foar_forward.1} parent=1 // pred_fallthru
      _
    // Predicated region
    $region86: #{foar_forward.1} parent=1 // pred_check
      _
    $region87: #{foar_forward.1} parent=1 // pred_check_branch
      %129 = sbr.rel (0) target = $region89
    $region88: #{foar_forward.1} parent=1 // pred_region
      _
    $region89: #{foar_forward.1} parent=1 // pred_fallthru
      _
    // Predicated region
    $region90: #{foar_forward.1} parent=1 // pred_check
      _
    $region91: #{foar_forward.1} parent=1 // pred_check_branch
      %131 = sbr.rel (0) target = $region93
    $region92: #{foar_forward.1} parent=1 // pred_region
      %s133 = ssub.s32 32, 32
      %134 = vsyncadd [#allocation12], %s133
      %s136 = sshll.u32 [#allocation13], 4
      %s137 = int_to_ptr.vmem [resolvable:$true] %s136
      %139 = dma.hbm_to_vmem [thread:$0]  %s22, 32, %s137, [#allocation12]
    $region93: #{foar_forward.1} parent=1 // pred_fallthru
      _
    // Predicated region
    $region94: #{foar_forward.1} parent=1 // pred_check
      _
    $region95: #{foar_forward.1} parent=1 // pred_check_branch
      %141 = sbr.rel (0) target = $region97
    $region96: #{foar_forward.1} parent=1 // pred_region
      %142 = dma.done [#allocation4], 16
    $region97: #{foar_forward.1} parent=1 // pred_fallthru
      _
    // Predicated region
    $region98: #{foar_forward.1} parent=1 // pred_check
      _
    $region99: #{foar_forward.1} parent=1 // pred_check_branch
      %144 = sbr.rel (0) target = $region101
    $region100: #{foar_forward.1} parent=1 // pred_region
      %145 = dma.done [#allocation6], 16
    $region101: #{foar_forward.1} parent=1 // pred_fallthru
      _
    // Predicated region
    $region102: #{foar_forward.1} parent=1 // pred_check
      _
    $region103: #{foar_forward.1} parent=1 // pred_check_branch
      %147 = sbr.rel (0) target = $region105
    $region104: #{foar_forward.1} parent=1 // pred_region
      %148 = dma.done [#allocation6], 384
    $region105: #{foar_forward.1} parent=1 // pred_fallthru
      _
    // Predicated region
    $region106: #{foar_forward.1} parent=1 // pred_check
      _
    $region107: #{foar_forward.1} parent=1 // pred_check_branch
      %150 = sbr.rel (0) target = $region109
    $region108: #{foar_forward.1} parent=1 // pred_region
      %151 = dma.done [#allocation9], 16
    $region109: #{foar_forward.1} parent=1 // pred_fallthru
      _
    // Predicated region
    $region110: #{foar_forward.1} parent=1 // pred_check
      _
    $region111: #{foar_forward.1} parent=1 // pred_check_branch
      %153 = sbr.rel (0) target = $region113
    $region112: #{foar_forward.1} parent=1 // pred_region
      %154 = dma.done [#allocation9], 64
    $region113: #{foar_forward.1} parent=1 // pred_fallthru
      _
    // Predicated region
    $region114: #{foar_forward.1} parent=1 // pred_check
      _
    $region115: #{foar_forward.1} parent=1 // pred_check_branch
      %156 = sbr.rel (0) target = $region117
    $region116: #{foar_forward.1} parent=1 // pred_region
      %157 = dma.done [#allocation12], 32
    $region117: #{foar_forward.1} parent=1 // pred_fallthru
      _
    // Predicated region
    $region118: #{foar_forward.1} parent=1 // pred_check
      _
    $region119: #{foar_forward.1} parent=1 // pred_check_branch
      %159 = sbr.rel (0) target = $region121
    $region120: #{foar_forward.1} parent=1 // pred_region
      %160 = dma.done [#allocation12], 32
    $region121: #{foar_forward.1} parent=1 // pred_fallthru
      _
    %v162 = vld [vmem:[%s0] sm:$0x3f]
    %v163 = vld [vmem:[%s0 + $0x8] sm:$0x3f]
    %v164 = vld [vmem:[%s0 + $0x10] sm:$0x3f]
    %v165 = vld [vmem:[%s0 + $0x18] sm:$0x3f]
    %vm166 = vcmask 259072
    %v167 = vsel %vm166, %v162, 0.0
    %168 = vadd.xlane.f32.xlu0 %v167
    %v169 = vpop.xlane.xlu0 %168
    %v170 = vsel %vm166, %v163, 0.0
    %171 = vadd.xlane.f32.xlu0 %v170
    %v172 = vpop.xlane.xlu0 %171
    %v173 = vsel %vm166, %v164, 0.0
    %174 = vadd.xlane.f32.xlu0 %v173
    %v175 = vpop.xlane.xlu0 %174
    %v176 = vsel %vm166, %v165, 0.0
    %177 = vadd.xlane.f32.xlu0 %v176
    %v178 = vpop.xlane.xlu0 %177
    %v179 = vrcp.pop 32.0
    %v180 = vmul.f32 %v169, %v179
    %v181 = vmul.f32 %v172, %v179
    %v182 = vmul.f32 %v175, %v179
    %v183 = vmul.f32 %v178, %v179
    %v184 = vld [vmem:[%s1] sm:$0x3f]
    %v185 = vld [vmem:[%s1 + $0x8] sm:$0x3f]
    %v186 = vld [vmem:[%s1 + $0x10] sm:$0x3f]
    %v187 = vld [vmem:[%s1 + $0x18] sm:$0x3f]
    %vm188 = vcmask 62464
    %v189 = vsel %vm188, %v184, 0.0
    %190 = vadd.xlane.f32.xlu0 %v189
    %v191 = vpop.xlane.xlu0 %190
    %v192 = vsel %vm188, %v185, 0.0
    %193 = vadd.xlane.f32.xlu0 %v192
    %v194 = vpop.xlane.xlu0 %193
    %v195 = vsel %vm188, %v186, 0.0
    %196 = vadd.xlane.f32.xlu0 %v195
    %v197 = vpop.xlane.xlu0 %196
    %v198 = vsel %vm188, %v187, 0.0
    %199 = vadd.xlane.f32.xlu0 %v198
    %v200 = vpop.xlane.xlu0 %199
    %v201 = vrcp.pop 8.0
    %v202 = vmul.f32 %v191, %v201
    %v203 = vmul.f32 %v194, %v201
    %v204 = vmul.f32 %v197, %v201
    %v205 = vmul.f32 %v200, %v201
    %v206 = vld [vmem:[%s3] sm:$0x77]
    %v207 = vld [vmem:[%s3 + $0x8] sm:$0x77]
    %v208 = vld [vmem:[%s3 + $0x10] sm:$0x77]
    %v209 = vld [vmem:[%s3 + $0x18] sm:$0x77]
    %v214 = vcombine.high %v206, %v206
    %v215 = vcombine.high %v207, %v207
    %v216 = vcombine.high %v208, %v208
    %v217 = vcombine.high %v209, %v209
    %vm222 = vcmask 1042432
    %v223 = vsel %vm222, %v206, 0.0
    %v224 = vsel %vm222, %v214, 0.0
    %v225 = vadd.f32 %v223, %v224
    %226 = vadd.xlane.f32.xlu0 %v225
    %v227 = vpop.xlane.xlu0 %226
    %v228 = vsel %vm222, %v207, 0.0
    %v229 = vsel %vm222, %v215, 0.0
    %v230 = vadd.f32 %v228, %v229
    %231 = vadd.xlane.f32.xlu0 %v230
    %v232 = vpop.xlane.xlu0 %231
    %v233 = vsel %vm222, %v208, 0.0
    %v234 = vsel %vm222, %v216, 0.0
    %v235 = vadd.f32 %v233, %v234
    %236 = vadd.xlane.f32.xlu0 %v235
    %v237 = vpop.xlane.xlu0 %236
    %v238 = vsel %vm222, %v209, 0.0
    %v239 = vsel %vm222, %v217, 0.0
    %v240 = vadd.f32 %v238, %v239
    %241 = vadd.xlane.f32.xlu0 %v240
    %v242 = vpop.xlane.xlu0 %241
    %v243 = vrcp.pop 256.0
    %v244 = vmul.f32 %v227, %v243
    %v245 = vmul.f32 %v232, %v243
    %v246 = vmul.f32 %v237, %v243
    %v247 = vmul.f32 %v242, %v243
    %v248 = vld [vmem:[%s4] sm:$0x3f]
    %v249 = vlaneseq
    %v250 = vshrl.u32 %v249, 7
    %v251 = vsub.s32 0, %v250
    %v252 = vrot.slane %v180, %v251
    %v253 = vlaneseq
    %v254 = vshrl.u32 %v253, 7
    %v255 = vsub.s32 0, %v254
    %v256 = vrot.slane %v181, %v255
    %v257 = vlaneseq
    %v258 = vshrl.u32 %v257, 7
    %v259 = vsub.s32 0, %v258
    %v260 = vrot.slane %v182, %v259
    %v261 = vlaneseq
    %v262 = vshrl.u32 %v261, 7
    %v263 = vsub.s32 0, %v262
    %v264 = vrot.slane %v183, %v263
    %v265 = vlaneseq
    %v266 = vshrl.u32 %v265, 7
    %v267 = vsub.s32 0, %v266
    %v268 = vrot.slane %v248, %v267
    %271 = vbcast.lane.b32.xlu0 %v268, 256
    %v272 = vpop.permute.xlu0 %271
    %s274 = sor.u32 256, 8
    %275 = vbcast.lane.b32.xlu0 %v268, %s274
    %v276 = vpop.permute.xlu0 %275
    %s278 = sor.u32 256, 16
    %279 = vbcast.lane.b32.xlu0 %v268, %s278
    %v280 = vpop.permute.xlu0 %279
    %s282 = sor.u32 256, 24
    %283 = vbcast.lane.b32.xlu0 %v268, %s282
    %v284 = vpop.permute.xlu0 %283
    %s286 = sor.u32 256, 32
    %287 = vbcast.lane.b32.xlu0 %v268, %s286
    %v288 = vpop.permute.xlu0 %287
    %s290 = sor.u32 256, 40
    %291 = vbcast.lane.b32.xlu0 %v268, %s290
    %v292 = vpop.permute.xlu0 %291
    %s294 = sor.u32 256, 48
    %295 = vbcast.lane.b32.xlu0 %v268, %s294
    %v296 = vpop.permute.xlu0 %295
    %s298 = sor.u32 256, 56
    %299 = vbcast.lane.b32.xlu0 %v268, %s298
    %v300 = vpop.permute.xlu0 %299
    %s302 = sor.u32 256, 64
    %303 = vbcast.lane.b32.xlu0 %v268, %s302
    %v304 = vpop.permute.xlu0 %303
    %s306 = sor.u32 256, 72
    %307 = vbcast.lane.b32.xlu0 %v268, %s306
    %v308 = vpop.permute.xlu0 %307
    %s310 = sor.u32 256, 80
    %311 = vbcast.lane.b32.xlu0 %v268, %s310
    %v312 = vpop.permute.xlu0 %311
    %s314 = sor.u32 256, 88
    %315 = vbcast.lane.b32.xlu0 %v268, %s314
    %v316 = vpop.permute.xlu0 %315
    %s318 = sor.u32 256, 96
    %319 = vbcast.lane.b32.xlu0 %v268, %s318
    %v320 = vpop.permute.xlu0 %319
    %s322 = sor.u32 256, 104
    %323 = vbcast.lane.b32.xlu0 %v268, %s322
    %v324 = vpop.permute.xlu0 %323
    %s326 = sor.u32 256, 112
    %327 = vbcast.lane.b32.xlu0 %v268, %s326
    %v328 = vpop.permute.xlu0 %327
    %s330 = sor.u32 256, 120
    %331 = vbcast.lane.b32.xlu0 %v268, %s330
    %v332 = vpop.permute.xlu0 %331
    %v349 = vmul.f32 %v252, %v272
    %v350 = vmul.f32 %v252, %v276
    %v351 = vmul.f32 %v252, %v280
    %v352 = vmul.f32 %v252, %v284
    %v353 = vmul.f32 %v252, %v288
    %v354 = vmul.f32 %v252, %v292
    %v355 = vmul.f32 %v252, %v296
    %v356 = vmul.f32 %v252, %v300
    %v357 = vmul.f32 %v252, %v304
    %v358 = vmul.f32 %v252, %v308
    %v359 = vmul.f32 %v252, %v312
    %v360 = vmul.f32 %v252, %v316
    %v361 = vmul.f32 %v252, %v320
    %v362 = vmul.f32 %v252, %v324
    %v363 = vmul.f32 %v252, %v328
    %v364 = vmul.f32 %v252, %v332
    %v365 = vmul.f32 %v256, %v272
    %v366 = vmul.f32 %v256, %v276
    %v367 = vmul.f32 %v256, %v280
    %v368 = vmul.f32 %v256, %v284
    %v369 = vmul.f32 %v256, %v288
    %v370 = vmul.f32 %v256, %v292
    %v371 = vmul.f32 %v256, %v296
    %v372 = vmul.f32 %v256, %v300
    %v373 = vmul.f32 %v256, %v304
    %v374 = vmul.f32 %v256, %v308
    %v375 = vmul.f32 %v256, %v312
    %v376 = vmul.f32 %v256, %v316
    %v377 = vmul.f32 %v256, %v320
    %v378 = vmul.f32 %v256, %v324
    %v379 = vmul.f32 %v256, %v328
    %v380 = vmul.f32 %v256, %v332
    %v381 = vmul.f32 %v260, %v272
    %v382 = vmul.f32 %v260, %v276
    %v383 = vmul.f32 %v260, %v280
    %v384 = vmul.f32 %v260, %v284
    %v385 = vmul.f32 %v260, %v288
    %v386 = vmul.f32 %v260, %v292
    %v387 = vmul.f32 %v260, %v296
    %v388 = vmul.f32 %v260, %v300
    %v389 = vmul.f32 %v260, %v304
    %v390 = vmul.f32 %v260, %v308
    %v391 = vmul.f32 %v260, %v312
    %v392 = vmul.f32 %v260, %v316
    %v393 = vmul.f32 %v260, %v320
    %v394 = vmul.f32 %v260, %v324
    %v395 = vmul.f32 %v260, %v328
    %v396 = vmul.f32 %v260, %v332
    %v397 = vmul.f32 %v264, %v272
    %v398 = vmul.f32 %v264, %v276
    %v399 = vmul.f32 %v264, %v280
    %v400 = vmul.f32 %v264, %v284
    %v401 = vmul.f32 %v264, %v288
    %v402 = vmul.f32 %v264, %v292
    %v403 = vmul.f32 %v264, %v296
    %v404 = vmul.f32 %v264, %v300
    %v405 = vmul.f32 %v264, %v304
    %v406 = vmul.f32 %v264, %v308
    %v407 = vmul.f32 %v264, %v312
    %v408 = vmul.f32 %v264, %v316
    %v409 = vmul.f32 %v264, %v320
    %v410 = vmul.f32 %v264, %v324
    %v411 = vmul.f32 %v264, %v328
    %v412 = vmul.f32 %v264, %v332
    %v413 = vlaneseq
    %v414 = vshrl.u32 %v413, 7
    %v415 = vsub.s32 1, %v414
    %v416 = vrot.slane %v180, %v415
    %v417 = vlaneseq
    %v418 = vshrl.u32 %v417, 7
    %v419 = vsub.s32 1, %v418
    %v420 = vrot.slane %v181, %v419
    %v421 = vlaneseq
    %v422 = vshrl.u32 %v421, 7
    %v423 = vsub.s32 1, %v422
    %v424 = vrot.slane %v182, %v423
    %v425 = vlaneseq
    %v426 = vshrl.u32 %v425, 7
    %v427 = vsub.s32 1, %v426
    %v428 = vrot.slane %v183, %v427
    %v429 = vlaneseq
    %v430 = vshrl.u32 %v429, 7
    %v431 = vsub.s32 1, %v430
    %v432 = vrot.slane %v248, %v431
    %435 = vbcast.lane.b32.xlu0 %v432, 256
    %v436 = vpop.permute.xlu0 %435
    %s438 = sor.u32 256, 8
    %439 = vbcast.lane.b32.xlu0 %v432, %s438
    %v440 = vpop.permute.xlu0 %439
    %s442 = sor.u32 256, 16
    %443 = vbcast.lane.b32.xlu0 %v432, %s442
    %v444 = vpop.permute.xlu0 %443
    %s446 = sor.u32 256, 24
    %447 = vbcast.lane.b32.xlu0 %v432, %s446
    %v448 = vpop.permute.xlu0 %447
    %s450 = sor.u32 256, 32
    %451 = vbcast.lane.b32.xlu0 %v432, %s450
    %v452 = vpop.permute.xlu0 %451
    %s454 = sor.u32 256, 40
    %455 = vbcast.lane.b32.xlu0 %v432, %s454
    %v456 = vpop.permute.xlu0 %455
    %s458 = sor.u32 256, 48
    %459 = vbcast.lane.b32.xlu0 %v432, %s458
    %v460 = vpop.permute.xlu0 %459
    %s462 = sor.u32 256, 56
    %463 = vbcast.lane.b32.xlu0 %v432, %s462
    %v464 = vpop.permute.xlu0 %463
    %s466 = sor.u32 256, 64
    %467 = vbcast.lane.b32.xlu0 %v432, %s466
    %v468 = vpop.permute.xlu0 %467
    %s470 = sor.u32 256, 72
    %471 = vbcast.lane.b32.xlu0 %v432, %s470
    %v472 = vpop.permute.xlu0 %471
    %s474 = sor.u32 256, 80
    %475 = vbcast.lane.b32.xlu0 %v432, %s474
    %v476 = vpop.permute.xlu0 %475
    %s478 = sor.u32 256, 88
    %479 = vbcast.lane.b32.xlu0 %v432, %s478
    %v480 = vpop.permute.xlu0 %479
    %s482 = sor.u32 256, 96
    %483 = vbcast.lane.b32.xlu0 %v432, %s482
    %v484 = vpop.permute.xlu0 %483
    %s486 = sor.u32 256, 104
    %487 = vbcast.lane.b32.xlu0 %v432, %s486
    %v488 = vpop.permute.xlu0 %487
    %s490 = sor.u32 256, 112
    %491 = vbcast.lane.b32.xlu0 %v432, %s490
    %v492 = vpop.permute.xlu0 %491
    %s494 = sor.u32 256, 120
    %495 = vbcast.lane.b32.xlu0 %v432, %s494
    %v496 = vpop.permute.xlu0 %495
    %v513 = vmul.f32 %v416, %v436
    %v514 = vmul.f32 %v416, %v440
    %v515 = vmul.f32 %v416, %v444
    %v516 = vmul.f32 %v416, %v448
    %v517 = vmul.f32 %v416, %v452
    %v518 = vmul.f32 %v416, %v456
    %v519 = vmul.f32 %v416, %v460
    %v520 = vmul.f32 %v416, %v464
    %v521 = vmul.f32 %v416, %v468
    %v522 = vmul.f32 %v416, %v472
    %v523 = vmul.f32 %v416, %v476
    %v524 = vmul.f32 %v416, %v480
    %v525 = vmul.f32 %v416, %v484
    %v526 = vmul.f32 %v416, %v488
    %v527 = vmul.f32 %v416, %v492
    %v528 = vmul.f32 %v416, %v496
    %v529 = vmul.f32 %v420, %v436
    %v530 = vmul.f32 %v420, %v440
    %v531 = vmul.f32 %v420, %v444
    %v532 = vmul.f32 %v420, %v448
    %v533 = vmul.f32 %v420, %v452
    %v534 = vmul.f32 %v420, %v456
    %v535 = vmul.f32 %v420, %v460
    %v536 = vmul.f32 %v420, %v464
    %v537 = vmul.f32 %v420, %v468
    %v538 = vmul.f32 %v420, %v472
    %v539 = vmul.f32 %v420, %v476
    %v540 = vmul.f32 %v420, %v480
    %v541 = vmul.f32 %v420, %v484
    %v542 = vmul.f32 %v420, %v488
    %v543 = vmul.f32 %v420, %v492
    %v544 = vmul.f32 %v420, %v496
    %v545 = vmul.f32 %v424, %v436
    %v546 = vmul.f32 %v424, %v440
    %v547 = vmul.f32 %v424, %v444
    %v548 = vmul.f32 %v424, %v448
    %v549 = vmul.f32 %v424, %v452
    %v550 = vmul.f32 %v424, %v456
    %v551 = vmul.f32 %v424, %v460
    %v552 = vmul.f32 %v424, %v464
    %v553 = vmul.f32 %v424, %v468
    %v554 = vmul.f32 %v424, %v472
    %v555 = vmul.f32 %v424, %v476
    %v556 = vmul.f32 %v424, %v480
    %v557 = vmul.f32 %v424, %v484
    %v558 = vmul.f32 %v424, %v488
    %v559 = vmul.f32 %v424, %v492
    %v560 = vmul.f32 %v424, %v496
    %v561 = vmul.f32 %v428, %v436
    %v562 = vmul.f32 %v428, %v440
    %v563 = vmul.f32 %v428, %v444
    %v564 = vmul.f32 %v428, %v448
    %v565 = vmul.f32 %v428, %v452
    %v566 = vmul.f32 %v428, %v456
    %v567 = vmul.f32 %v428, %v460
    %v568 = vmul.f32 %v428, %v464
    %v569 = vmul.f32 %v428, %v468
    %v570 = vmul.f32 %v428, %v472
    %v571 = vmul.f32 %v428, %v476
    %v572 = vmul.f32 %v428, %v480
    %v573 = vmul.f32 %v428, %v484
    %v574 = vmul.f32 %v428, %v488
    %v575 = vmul.f32 %v428, %v492
    %v576 = vmul.f32 %v428, %v496
    %v577 = vadd.f32 %v349, %v513
    %v578 = vadd.f32 %v350, %v514
    %v579 = vadd.f32 %v351, %v515
    %v580 = vadd.f32 %v352, %v516
    %v581 = vadd.f32 %v353, %v517
    %v582 = vadd.f32 %v354, %v518
    %v583 = vadd.f32 %v355, %v519
    %v584 = vadd.f32 %v356, %v520
    %v585 = vadd.f32 %v357, %v521
    %v586 = vadd.f32 %v358, %v522
    %v587 = vadd.f32 %v359, %v523
    %v588 = vadd.f32 %v360, %v524
    %v589 = vadd.f32 %v361, %v525
    %v590 = vadd.f32 %v362, %v526
    %v591 = vadd.f32 %v363, %v527
    %v592 = vadd.f32 %v364, %v528
    %v593 = vadd.f32 %v365, %v529
    %v594 = vadd.f32 %v366, %v530
    %v595 = vadd.f32 %v367, %v531
    %v596 = vadd.f32 %v368, %v532
    %v597 = vadd.f32 %v369, %v533
    %v598 = vadd.f32 %v370, %v534
    %v599 = vadd.f32 %v371, %v535
    %v600 = vadd.f32 %v372, %v536
    %v601 = vadd.f32 %v373, %v537
    %v602 = vadd.f32 %v374, %v538
    %v603 = vadd.f32 %v375, %v539
    %v604 = vadd.f32 %v376, %v540
    %v605 = vadd.f32 %v377, %v541
    %v606 = vadd.f32 %v378, %v542
    %v607 = vadd.f32 %v379, %v543
    %v608 = vadd.f32 %v380, %v544
    %v609 = vadd.f32 %v381, %v545
    %v610 = vadd.f32 %v382, %v546
    %v611 = vadd.f32 %v383, %v547
    %v612 = vadd.f32 %v384, %v548
    %v613 = vadd.f32 %v385, %v549
    %v614 = vadd.f32 %v386, %v550
    %v615 = vadd.f32 %v387, %v551
    %v616 = vadd.f32 %v388, %v552
    %v617 = vadd.f32 %v389, %v553
    %v618 = vadd.f32 %v390, %v554
    %v619 = vadd.f32 %v391, %v555
    %v620 = vadd.f32 %v392, %v556
    %v621 = vadd.f32 %v393, %v557
    %v622 = vadd.f32 %v394, %v558
    %v623 = vadd.f32 %v395, %v559
    %v624 = vadd.f32 %v396, %v560
    %v625 = vadd.f32 %v397, %v561
    %v626 = vadd.f32 %v398, %v562
    %v627 = vadd.f32 %v399, %v563
    %v628 = vadd.f32 %v400, %v564
    %v629 = vadd.f32 %v401, %v565
    %v630 = vadd.f32 %v402, %v566
    %v631 = vadd.f32 %v403, %v567
    %v632 = vadd.f32 %v404, %v568
    %v633 = vadd.f32 %v405, %v569
    %v634 = vadd.f32 %v406, %v570
    %v635 = vadd.f32 %v407, %v571
    %v636 = vadd.f32 %v408, %v572
    %v637 = vadd.f32 %v409, %v573
    %v638 = vadd.f32 %v410, %v574
    %v639 = vadd.f32 %v411, %v575
    %v640 = vadd.f32 %v412, %v576
    %v641 = vlaneseq
    %v642 = vshrl.u32 %v641, 7
    %v643 = vsub.s32 2, %v642
    %v644 = vrot.slane %v180, %v643
    %v645 = vlaneseq
    %v646 = vshrl.u32 %v645, 7
    %v647 = vsub.s32 2, %v646
    %v648 = vrot.slane %v181, %v647
    %v649 = vlaneseq
    %v650 = vshrl.u32 %v649, 7
    %v651 = vsub.s32 2, %v650
    %v652 = vrot.slane %v182, %v651
    %v653 = vlaneseq
    %v654 = vshrl.u32 %v653, 7
    %v655 = vsub.s32 2, %v654
    %v656 = vrot.slane %v183, %v655
    %v657 = vlaneseq
    %v658 = vshrl.u32 %v657, 7
    %v659 = vsub.s32 2, %v658
    %v660 = vrot.slane %v248, %v659
    %663 = vbcast.lane.b32.xlu0 %v660, 256
    %v664 = vpop.permute.xlu0 %663
    %s666 = sor.u32 256, 8
    %667 = vbcast.lane.b32.xlu0 %v660, %s666
    %v668 = vpop.permute.xlu0 %667
    %s670 = sor.u32 256, 16
    %671 = vbcast.lane.b32.xlu0 %v660, %s670
    %v672 = vpop.permute.xlu0 %671
    %s674 = sor.u32 256, 24
    %675 = vbcast.lane.b32.xlu0 %v660, %s674
    %v676 = vpop.permute.xlu0 %675
    %s678 = sor.u32 256, 32
    %679 = vbcast.lane.b32.xlu0 %v660, %s678
    %v680 = vpop.permute.xlu0 %679
    %s682 = sor.u32 256, 40
    %683 = vbcast.lane.b32.xlu0 %v660, %s682
    %v684 = vpop.permute.xlu0 %683
    %s686 = sor.u32 256, 48
    %687 = vbcast.lane.b32.xlu0 %v660, %s686
    %v688 = vpop.permute.xlu0 %687
    %s690 = sor.u32 256, 56
    %691 = vbcast.lane.b32.xlu0 %v660, %s690
    %v692 = vpop.permute.xlu0 %691
    %s694 = sor.u32 256, 64
    %695 = vbcast.lane.b32.xlu0 %v660, %s694
    %v696 = vpop.permute.xlu0 %695
    %s698 = sor.u32 256, 72
    %699 = vbcast.lane.b32.xlu0 %v660, %s698
    %v700 = vpop.permute.xlu0 %699
    %s702 = sor.u32 256, 80
    %703 = vbcast.lane.b32.xlu0 %v660, %s702
    %v704 = vpop.permute.xlu0 %703
    %s706 = sor.u32 256, 88
    %707 = vbcast.lane.b32.xlu0 %v660, %s706
    %v708 = vpop.permute.xlu0 %707
    %s710 = sor.u32 256, 96
    %711 = vbcast.lane.b32.xlu0 %v660, %s710
    %v712 = vpop.permute.xlu0 %711
    %s714 = sor.u32 256, 104
    %715 = vbcast.lane.b32.xlu0 %v660, %s714
    %v716 = vpop.permute.xlu0 %715
    %s718 = sor.u32 256, 112
    %719 = vbcast.lane.b32.xlu0 %v660, %s718
    %v720 = vpop.permute.xlu0 %719
    %s722 = sor.u32 256, 120
    %723 = vbcast.lane.b32.xlu0 %v660, %s722
    %v724 = vpop.permute.xlu0 %723
    %v741 = vmul.f32 %v644, %v664
    %v742 = vmul.f32 %v644, %v668
    %v743 = vmul.f32 %v644, %v672
    %v744 = vmul.f32 %v644, %v676
    %v745 = vmul.f32 %v644, %v680
    %v746 = vmul.f32 %v644, %v684
    %v747 = vmul.f32 %v644, %v688
    %v748 = vmul.f32 %v644, %v692
    %v749 = vmul.f32 %v644, %v696
    %v750 = vmul.f32 %v644, %v700
    %v751 = vmul.f32 %v644, %v704
    %v752 = vmul.f32 %v644, %v708
    %v753 = vmul.f32 %v644, %v712
    %v754 = vmul.f32 %v644, %v716
    %v755 = vmul.f32 %v644, %v720
    %v756 = vmul.f32 %v644, %v724
    %v757 = vmul.f32 %v648, %v664
    %v758 = vmul.f32 %v648, %v668
    %v759 = vmul.f32 %v648, %v672
    %v760 = vmul.f32 %v648, %v676
    %v761 = vmul.f32 %v648, %v680
    %v762 = vmul.f32 %v648, %v684
    %v763 = vmul.f32 %v648, %v688
    %v764 = vmul.f32 %v648, %v692
    %v765 = vmul.f32 %v648, %v696
    %v766 = vmul.f32 %v648, %v700
    %v767 = vmul.f32 %v648, %v704
    %v768 = vmul.f32 %v648, %v708
    %v769 = vmul.f32 %v648, %v712
    %v770 = vmul.f32 %v648, %v716
    %v771 = vmul.f32 %v648, %v720
    %v772 = vmul.f32 %v648, %v724
    %v773 = vmul.f32 %v652, %v664
    %v774 = vmul.f32 %v652, %v668
    %v775 = vmul.f32 %v652, %v672
    %v776 = vmul.f32 %v652, %v676
    %v777 = vmul.f32 %v652, %v680
    %v778 = vmul.f32 %v652, %v684
    %v779 = vmul.f32 %v652, %v688
    %v780 = vmul.f32 %v652, %v692
    %v781 = vmul.f32 %v652, %v696
    %v782 = vmul.f32 %v652, %v700
    %v783 = vmul.f32 %v652, %v704
    %v784 = vmul.f32 %v652, %v708
    %v785 = vmul.f32 %v652, %v712
    %v786 = vmul.f32 %v652, %v716
    %v787 = vmul.f32 %v652, %v720
    %v788 = vmul.f32 %v652, %v724
    %v789 = vmul.f32 %v656, %v664
    %v790 = vmul.f32 %v656, %v668
    %v791 = vmul.f32 %v656, %v672
    %v792 = vmul.f32 %v656, %v676
    %v793 = vmul.f32 %v656, %v680
    %v794 = vmul.f32 %v656, %v684
    %v795 = vmul.f32 %v656, %v688
    %v796 = vmul.f32 %v656, %v692
    %v797 = vmul.f32 %v656, %v696
    %v798 = vmul.f32 %v656, %v700
    %v799 = vmul.f32 %v656, %v704
    %v800 = vmul.f32 %v656, %v708
    %v801 = vmul.f32 %v656, %v712
    %v802 = vmul.f32 %v656, %v716
    %v803 = vmul.f32 %v656, %v720
    %v804 = vmul.f32 %v656, %v724
    %v805 = vadd.f32 %v577, %v741
    %v806 = vadd.f32 %v578, %v742
    %v807 = vadd.f32 %v579, %v743
    %v808 = vadd.f32 %v580, %v744
    %v809 = vadd.f32 %v581, %v745
    %v810 = vadd.f32 %v582, %v746
    %v811 = vadd.f32 %v583, %v747
    %v812 = vadd.f32 %v584, %v748
    %v813 = vadd.f32 %v585, %v749
    %v814 = vadd.f32 %v586, %v750
    %v815 = vadd.f32 %v587, %v751
    %v816 = vadd.f32 %v588, %v752
    %v817 = vadd.f32 %v589, %v753
    %v818 = vadd.f32 %v590, %v754
    %v819 = vadd.f32 %v591, %v755
    %v820 = vadd.f32 %v592, %v756
    %v821 = vadd.f32 %v593, %v757
    %v822 = vadd.f32 %v594, %v758
    %v823 = vadd.f32 %v595, %v759
    %v824 = vadd.f32 %v596, %v760
    %v825 = vadd.f32 %v597, %v761
    %v826 = vadd.f32 %v598, %v762
    %v827 = vadd.f32 %v599, %v763
    %v828 = vadd.f32 %v600, %v764
    %v829 = vadd.f32 %v601, %v765
    %v830 = vadd.f32 %v602, %v766
    %v831 = vadd.f32 %v603, %v767
    %v832 = vadd.f32 %v604, %v768
    %v833 = vadd.f32 %v605, %v769
    %v834 = vadd.f32 %v606, %v770
    %v835 = vadd.f32 %v607, %v771
    %v836 = vadd.f32 %v608, %v772
    %v837 = vadd.f32 %v609, %v773
    %v838 = vadd.f32 %v610, %v774
    %v839 = vadd.f32 %v611, %v775
    %v840 = vadd.f32 %v612, %v776
    %v841 = vadd.f32 %v613, %v777
    %v842 = vadd.f32 %v614, %v778
    %v843 = vadd.f32 %v615, %v779
    %v844 = vadd.f32 %v616, %v780
    %v845 = vadd.f32 %v617, %v781
    %v846 = vadd.f32 %v618, %v782
    %v847 = vadd.f32 %v619, %v783
    %v848 = vadd.f32 %v620, %v784
    %v849 = vadd.f32 %v621, %v785
    %v850 = vadd.f32 %v622, %v786
    %v851 = vadd.f32 %v623, %v787
    %v852 = vadd.f32 %v624, %v788
    %v853 = vadd.f32 %v625, %v789
    %v854 = vadd.f32 %v626, %v790
    %v855 = vadd.f32 %v627, %v791
    %v856 = vadd.f32 %v628, %v792
    %v857 = vadd.f32 %v629, %v793
    %v858 = vadd.f32 %v630, %v794
    %v859 = vadd.f32 %v631, %v795
    %v860 = vadd.f32 %v632, %v796
    %v861 = vadd.f32 %v633, %v797
    %v862 = vadd.f32 %v634, %v798
    %v863 = vadd.f32 %v635, %v799
    %v864 = vadd.f32 %v636, %v800
    %v865 = vadd.f32 %v637, %v801
    %v866 = vadd.f32 %v638, %v802
    %v867 = vadd.f32 %v639, %v803
    %v868 = vadd.f32 %v640, %v804
    %v869 = vlaneseq
    %v870 = vshrl.u32 %v869, 7
    %v871 = vsub.s32 3, %v870
    %v872 = vrot.slane %v180, %v871
    %v873 = vlaneseq
    %v874 = vshrl.u32 %v873, 7
    %v875 = vsub.s32 3, %v874
    %v876 = vrot.slane %v181, %v875
    %v877 = vlaneseq
    %v878 = vshrl.u32 %v877, 7
    %v879 = vsub.s32 3, %v878
    %v880 = vrot.slane %v182, %v879
    %v881 = vlaneseq
    %v882 = vshrl.u32 %v881, 7
    %v883 = vsub.s32 3, %v882
    %v884 = vrot.slane %v183, %v883
    %v885 = vlaneseq
    %v886 = vshrl.u32 %v885, 7
    %v887 = vsub.s32 3, %v886
    %v888 = vrot.slane %v248, %v887
    %891 = vbcast.lane.b32.xlu0 %v888, 256
    %v892 = vpop.permute.xlu0 %891
    %s894 = sor.u32 256, 8
    %895 = vbcast.lane.b32.xlu0 %v888, %s894
    %v896 = vpop.permute.xlu0 %895
    %s898 = sor.u32 256, 16
    %899 = vbcast.lane.b32.xlu0 %v888, %s898
    %v900 = vpop.permute.xlu0 %899
    %s902 = sor.u32 256, 24
    %903 = vbcast.lane.b32.xlu0 %v888, %s902
    %v904 = vpop.permute.xlu0 %903
    %s906 = sor.u32 256, 32
    %907 = vbcast.lane.b32.xlu0 %v888, %s906
    %v908 = vpop.permute.xlu0 %907
    %s910 = sor.u32 256, 40
    %911 = vbcast.lane.b32.xlu0 %v888, %s910
    %v912 = vpop.permute.xlu0 %911
    %s914 = sor.u32 256, 48
    %915 = vbcast.lane.b32.xlu0 %v888, %s914
    %v916 = vpop.permute.xlu0 %915
    %s918 = sor.u32 256, 56
    %919 = vbcast.lane.b32.xlu0 %v888, %s918
    %v920 = vpop.permute.xlu0 %919
    %s922 = sor.u32 256, 64
    %923 = vbcast.lane.b32.xlu0 %v888, %s922
    %v924 = vpop.permute.xlu0 %923
    %s926 = sor.u32 256, 72
    %927 = vbcast.lane.b32.xlu0 %v888, %s926
    %v928 = vpop.permute.xlu0 %927
    %s930 = sor.u32 256, 80
    %931 = vbcast.lane.b32.xlu0 %v888, %s930
    %v932 = vpop.permute.xlu0 %931
    %s934 = sor.u32 256, 88
    %935 = vbcast.lane.b32.xlu0 %v888, %s934
    %v936 = vpop.permute.xlu0 %935
    %s938 = sor.u32 256, 96
    %939 = vbcast.lane.b32.xlu0 %v888, %s938
    %v940 = vpop.permute.xlu0 %939
    %s942 = sor.u32 256, 104
    %943 = vbcast.lane.b32.xlu0 %v888, %s942
    %v944 = vpop.permute.xlu0 %943
    %s946 = sor.u32 256, 112
    %947 = vbcast.lane.b32.xlu0 %v888, %s946
    %v948 = vpop.permute.xlu0 %947
    %s950 = sor.u32 256, 120
    %951 = vbcast.lane.b32.xlu0 %v888, %s950
    %v952 = vpop.permute.xlu0 %951
    %v969 = vmul.f32 %v872, %v892
    %v970 = vmul.f32 %v872, %v896
    %v971 = vmul.f32 %v872, %v900
    %v972 = vmul.f32 %v872, %v904
    %v973 = vmul.f32 %v872, %v908
    %v974 = vmul.f32 %v872, %v912
    %v975 = vmul.f32 %v872, %v916
    %v976 = vmul.f32 %v872, %v920
    %v977 = vmul.f32 %v872, %v924
    %v978 = vmul.f32 %v872, %v928
    %v979 = vmul.f32 %v872, %v932
    %v980 = vmul.f32 %v872, %v936
    %v981 = vmul.f32 %v872, %v940
    %v982 = vmul.f32 %v872, %v944
    %v983 = vmul.f32 %v872, %v948
    %v984 = vmul.f32 %v872, %v952
    %v985 = vmul.f32 %v876, %v892
    %v986 = vmul.f32 %v876, %v896
    %v987 = vmul.f32 %v876, %v900
    %v988 = vmul.f32 %v876, %v904
    %v989 = vmul.f32 %v876, %v908
    %v990 = vmul.f32 %v876, %v912
    %v991 = vmul.f32 %v876, %v916
    %v992 = vmul.f32 %v876, %v920
    %v993 = vmul.f32 %v876, %v924
    %v994 = vmul.f32 %v876, %v928
    %v995 = vmul.f32 %v876, %v932
    %v996 = vmul.f32 %v876, %v936
    %v997 = vmul.f32 %v876, %v940
    %v998 = vmul.f32 %v876, %v944
    %v999 = vmul.f32 %v876, %v948
    %v1000 = vmul.f32 %v876, %v952
    %v1001 = vmul.f32 %v880, %v892
    %v1002 = vmul.f32 %v880, %v896
    %v1003 = vmul.f32 %v880, %v900
    %v1004 = vmul.f32 %v880, %v904
    %v1005 = vmul.f32 %v880, %v908
    %v1006 = vmul.f32 %v880, %v912
    %v1007 = vmul.f32 %v880, %v916
    %v1008 = vmul.f32 %v880, %v920
    %v1009 = vmul.f32 %v880, %v924
    %v1010 = vmul.f32 %v880, %v928
    %v1011 = vmul.f32 %v880, %v932
    %v1012 = vmul.f32 %v880, %v936
    %v1013 = vmul.f32 %v880, %v940
    %v1014 = vmul.f32 %v880, %v944
    %v1015 = vmul.f32 %v880, %v948
    %v1016 = vmul.f32 %v880, %v952
    %v1017 = vmul.f32 %v884, %v892
    %v1018 = vmul.f32 %v884, %v896
    %v1019 = vmul.f32 %v884, %v900
    %v1020 = vmul.f32 %v884, %v904
    %v1021 = vmul.f32 %v884, %v908
    %v1022 = vmul.f32 %v884, %v912
    %v1023 = vmul.f32 %v884, %v916
    %v1024 = vmul.f32 %v884, %v920
    %v1025 = vmul.f32 %v884, %v924
    %v1026 = vmul.f32 %v884, %v928
    %v1027 = vmul.f32 %v884, %v932
    %v1028 = vmul.f32 %v884, %v936
    %v1029 = vmul.f32 %v884, %v940
    %v1030 = vmul.f32 %v884, %v944
    %v1031 = vmul.f32 %v884, %v948
    %v1032 = vmul.f32 %v884, %v952
    %v1033 = vadd.f32 %v805, %v969
    %v1034 = vadd.f32 %v806, %v970
    %v1035 = vadd.f32 %v807, %v971
    %v1036 = vadd.f32 %v808, %v972
    %v1037 = vadd.f32 %v809, %v973
    %v1038 = vadd.f32 %v810, %v974
    %v1039 = vadd.f32 %v811, %v975
    %v1040 = vadd.f32 %v812, %v976
    %v1041 = vadd.f32 %v813, %v977
    %v1042 = vadd.f32 %v814, %v978
    %v1043 = vadd.f32 %v815, %v979
    %v1044 = vadd.f32 %v816, %v980
    %v1045 = vadd.f32 %v817, %v981
    %v1046 = vadd.f32 %v818, %v982
    %v1047 = vadd.f32 %v819, %v983
    %v1048 = vadd.f32 %v820, %v984
    %v1049 = vadd.f32 %v821, %v985
    %v1050 = vadd.f32 %v822, %v986
    %v1051 = vadd.f32 %v823, %v987
    %v1052 = vadd.f32 %v824, %v988
    %v1053 = vadd.f32 %v825, %v989
    %v1054 = vadd.f32 %v826, %v990
    %v1055 = vadd.f32 %v827, %v991
    %v1056 = vadd.f32 %v828, %v992
    %v1057 = vadd.f32 %v829, %v993
    %v1058 = vadd.f32 %v830, %v994
    %v1059 = vadd.f32 %v831, %v995
    %v1060 = vadd.f32 %v832, %v996
    %v1061 = vadd.f32 %v833, %v997
    %v1062 = vadd.f32 %v834, %v998
    %v1063 = vadd.f32 %v835, %v999
    %v1064 = vadd.f32 %v836, %v1000
    %v1065 = vadd.f32 %v837, %v1001
    %v1066 = vadd.f32 %v838, %v1002
    %v1067 = vadd.f32 %v839, %v1003
    %v1068 = vadd.f32 %v840, %v1004
    %v1069 = vadd.f32 %v841, %v1005
    %v1070 = vadd.f32 %v842, %v1006
    %v1071 = vadd.f32 %v843, %v1007
    %v1072 = vadd.f32 %v844, %v1008
    %v1073 = vadd.f32 %v845, %v1009
    %v1074 = vadd.f32 %v846, %v1010
    %v1075 = vadd.f32 %v847, %v1011
    %v1076 = vadd.f32 %v848, %v1012
    %v1077 = vadd.f32 %v849, %v1013
    %v1078 = vadd.f32 %v850, %v1014
    %v1079 = vadd.f32 %v851, %v1015
    %v1080 = vadd.f32 %v852, %v1016
    %v1081 = vadd.f32 %v853, %v1017
    %v1082 = vadd.f32 %v854, %v1018
    %v1083 = vadd.f32 %v855, %v1019
    %v1084 = vadd.f32 %v856, %v1020
    %v1085 = vadd.f32 %v857, %v1021
    %v1086 = vadd.f32 %v858, %v1022
    %v1087 = vadd.f32 %v859, %v1023
    %v1088 = vadd.f32 %v860, %v1024
    %v1089 = vadd.f32 %v861, %v1025
    %v1090 = vadd.f32 %v862, %v1026
    %v1091 = vadd.f32 %v863, %v1027
    %v1092 = vadd.f32 %v864, %v1028
    %v1093 = vadd.f32 %v865, %v1029
    %v1094 = vadd.f32 %v866, %v1030
    %v1095 = vadd.f32 %v867, %v1031
    %v1096 = vadd.f32 %v868, %v1032
    %v1097 = vlaneseq
    %v1098 = vshrl.u32 %v1097, 7
    %v1099 = vsub.s32 4, %v1098
    %v1100 = vrot.slane %v180, %v1099
    %v1101 = vlaneseq
    %v1102 = vshrl.u32 %v1101, 7
    %v1103 = vsub.s32 4, %v1102
    %v1104 = vrot.slane %v181, %v1103
    %v1105 = vlaneseq
    %v1106 = vshrl.u32 %v1105, 7
    %v1107 = vsub.s32 4, %v1106
    %v1108 = vrot.slane %v182, %v1107
    %v1109 = vlaneseq
    %v1110 = vshrl.u32 %v1109, 7
    %v1111 = vsub.s32 4, %v1110
    %v1112 = vrot.slane %v183, %v1111
    %v1113 = vlaneseq
    %v1114 = vshrl.u32 %v1113, 7
    %v1115 = vsub.s32 4, %v1114
    %v1116 = vrot.slane %v248, %v1115
    %1119 = vbcast.lane.b32.xlu0 %v1116, 256
    %v1120 = vpop.permute.xlu0 %1119
    %s1122 = sor.u32 256, 8
    %1123 = vbcast.lane.b32.xlu0 %v1116, %s1122
    %v1124 = vpop.permute.xlu0 %1123
    %s1126 = sor.u32 256, 16
    %1127 = vbcast.lane.b32.xlu0 %v1116, %s1126
    %v1128 = vpop.permute.xlu0 %1127
    %s1130 = sor.u32 256, 24
    %1131 = vbcast.lane.b32.xlu0 %v1116, %s1130
    %v1132 = vpop.permute.xlu0 %1131
    %s1134 = sor.u32 256, 32
    %1135 = vbcast.lane.b32.xlu0 %v1116, %s1134
    %v1136 = vpop.permute.xlu0 %1135
    %s1138 = sor.u32 256, 40
    %1139 = vbcast.lane.b32.xlu0 %v1116, %s1138
    %v1140 = vpop.permute.xlu0 %1139
    %s1142 = sor.u32 256, 48
    %1143 = vbcast.lane.b32.xlu0 %v1116, %s1142
    %v1144 = vpop.permute.xlu0 %1143
    %s1146 = sor.u32 256, 56
    %1147 = vbcast.lane.b32.xlu0 %v1116, %s1146
    %v1148 = vpop.permute.xlu0 %1147
    %s1150 = sor.u32 256, 64
    %1151 = vbcast.lane.b32.xlu0 %v1116, %s1150
    %v1152 = vpop.permute.xlu0 %1151
    %s1154 = sor.u32 256, 72
    %1155 = vbcast.lane.b32.xlu0 %v1116, %s1154
    %v1156 = vpop.permute.xlu0 %1155
    %s1158 = sor.u32 256, 80
    %1159 = vbcast.lane.b32.xlu0 %v1116, %s1158
    %v1160 = vpop.permute.xlu0 %1159
    %s1162 = sor.u32 256, 88
    %1163 = vbcast.lane.b32.xlu0 %v1116, %s1162
    %v1164 = vpop.permute.xlu0 %1163
    %s1166 = sor.u32 256, 96
    %1167 = vbcast.lane.b32.xlu0 %v1116, %s1166
    %v1168 = vpop.permute.xlu0 %1167
    %s1170 = sor.u32 256, 104
    %1171 = vbcast.lane.b32.xlu0 %v1116, %s1170
    %v1172 = vpop.permute.xlu0 %1171
    %s1174 = sor.u32 256, 112
    %1175 = vbcast.lane.b32.xlu0 %v1116, %s1174
    %v1176 = vpop.permute.xlu0 %1175
    %s1178 = sor.u32 256, 120
    %1179 = vbcast.lane.b32.xlu0 %v1116, %s1178
    %v1180 = vpop.permute.xlu0 %1179
    %v1197 = vmul.f32 %v1100, %v1120
    %v1198 = vmul.f32 %v1100, %v1124
    %v1199 = vmul.f32 %v1100, %v1128
    %v1200 = vmul.f32 %v1100, %v1132
    %v1201 = vmul.f32 %v1100, %v1136
    %v1202 = vmul.f32 %v1100, %v1140
    %v1203 = vmul.f32 %v1100, %v1144
    %v1204 = vmul.f32 %v1100, %v1148
    %v1205 = vmul.f32 %v1100, %v1152
    %v1206 = vmul.f32 %v1100, %v1156
    %v1207 = vmul.f32 %v1100, %v1160
    %v1208 = vmul.f32 %v1100, %v1164
    %v1209 = vmul.f32 %v1100, %v1168
    %v1210 = vmul.f32 %v1100, %v1172
    %v1211 = vmul.f32 %v1100, %v1176
    %v1212 = vmul.f32 %v1100, %v1180
    %v1213 = vmul.f32 %v1104, %v1120
    %v1214 = vmul.f32 %v1104, %v1124
    %v1215 = vmul.f32 %v1104, %v1128
    %v1216 = vmul.f32 %v1104, %v1132
    %v1217 = vmul.f32 %v1104, %v1136
    %v1218 = vmul.f32 %v1104, %v1140
    %v1219 = vmul.f32 %v1104, %v1144
    %v1220 = vmul.f32 %v1104, %v1148
    %v1221 = vmul.f32 %v1104, %v1152
    %v1222 = vmul.f32 %v1104, %v1156
    %v1223 = vmul.f32 %v1104, %v1160
    %v1224 = vmul.f32 %v1104, %v1164
    %v1225 = vmul.f32 %v1104, %v1168
    %v1226 = vmul.f32 %v1104, %v1172
    %v1227 = vmul.f32 %v1104, %v1176
    %v1228 = vmul.f32 %v1104, %v1180
    %v1229 = vmul.f32 %v1108, %v1120
    %v1230 = vmul.f32 %v1108, %v1124
    %v1231 = vmul.f32 %v1108, %v1128
    %v1232 = vmul.f32 %v1108, %v1132
    %v1233 = vmul.f32 %v1108, %v1136
    %v1234 = vmul.f32 %v1108, %v1140
    %v1235 = vmul.f32 %v1108, %v1144
    %v1236 = vmul.f32 %v1108, %v1148
    %v1237 = vmul.f32 %v1108, %v1152
    %v1238 = vmul.f32 %v1108, %v1156
    %v1239 = vmul.f32 %v1108, %v1160
    %v1240 = vmul.f32 %v1108, %v1164
    %v1241 = vmul.f32 %v1108, %v1168
    %v1242 = vmul.f32 %v1108, %v1172
    %v1243 = vmul.f32 %v1108, %v1176
    %v1244 = vmul.f32 %v1108, %v1180
    %v1245 = vmul.f32 %v1112, %v1120
    %v1246 = vmul.f32 %v1112, %v1124
    %v1247 = vmul.f32 %v1112, %v1128
    %v1248 = vmul.f32 %v1112, %v1132
    %v1249 = vmul.f32 %v1112, %v1136
    %v1250 = vmul.f32 %v1112, %v1140
    %v1251 = vmul.f32 %v1112, %v1144
    %v1252 = vmul.f32 %v1112, %v1148
    %v1253 = vmul.f32 %v1112, %v1152
    %v1254 = vmul.f32 %v1112, %v1156
    %v1255 = vmul.f32 %v1112, %v1160
    %v1256 = vmul.f32 %v1112, %v1164
    %v1257 = vmul.f32 %v1112, %v1168
    %v1258 = vmul.f32 %v1112, %v1172
    %v1259 = vmul.f32 %v1112, %v1176
    %v1260 = vmul.f32 %v1112, %v1180
    %v1261 = vadd.f32 %v1033, %v1197
    %v1262 = vadd.f32 %v1034, %v1198
    %v1263 = vadd.f32 %v1035, %v1199
    %v1264 = vadd.f32 %v1036, %v1200
    %v1265 = vadd.f32 %v1037, %v1201
    %v1266 = vadd.f32 %v1038, %v1202
    %v1267 = vadd.f32 %v1039, %v1203
    %v1268 = vadd.f32 %v1040, %v1204
    %v1269 = vadd.f32 %v1041, %v1205
    %v1270 = vadd.f32 %v1042, %v1206
    %v1271 = vadd.f32 %v1043, %v1207
    %v1272 = vadd.f32 %v1044, %v1208
    %v1273 = vadd.f32 %v1045, %v1209
    %v1274 = vadd.f32 %v1046, %v1210
    %v1275 = vadd.f32 %v1047, %v1211
    %v1276 = vadd.f32 %v1048, %v1212
    %v1277 = vadd.f32 %v1049, %v1213
    %v1278 = vadd.f32 %v1050, %v1214
    %v1279 = vadd.f32 %v1051, %v1215
    %v1280 = vadd.f32 %v1052, %v1216
    %v1281 = vadd.f32 %v1053, %v1217
    %v1282 = vadd.f32 %v1054, %v1218
    %v1283 = vadd.f32 %v1055, %v1219
    %v1284 = vadd.f32 %v1056, %v1220
    %v1285 = vadd.f32 %v1057, %v1221
    %v1286 = vadd.f32 %v1058, %v1222
    %v1287 = vadd.f32 %v1059, %v1223
    %v1288 = vadd.f32 %v1060, %v1224
    %v1289 = vadd.f32 %v1061, %v1225
    %v1290 = vadd.f32 %v1062, %v1226
    %v1291 = vadd.f32 %v1063, %v1227
    %v1292 = vadd.f32 %v1064, %v1228
    %v1293 = vadd.f32 %v1065, %v1229
    %v1294 = vadd.f32 %v1066, %v1230
    %v1295 = vadd.f32 %v1067, %v1231
    %v1296 = vadd.f32 %v1068, %v1232
    %v1297 = vadd.f32 %v1069, %v1233
    %v1298 = vadd.f32 %v1070, %v1234
    %v1299 = vadd.f32 %v1071, %v1235
    %v1300 = vadd.f32 %v1072, %v1236
    %v1301 = vadd.f32 %v1073, %v1237
    %v1302 = vadd.f32 %v1074, %v1238
    %v1303 = vadd.f32 %v1075, %v1239
    %v1304 = vadd.f32 %v1076, %v1240
    %v1305 = vadd.f32 %v1077, %v1241
    %v1306 = vadd.f32 %v1078, %v1242
    %v1307 = vadd.f32 %v1079, %v1243
    %v1308 = vadd.f32 %v1080, %v1244
    %v1309 = vadd.f32 %v1081, %v1245
    %v1310 = vadd.f32 %v1082, %v1246
    %v1311 = vadd.f32 %v1083, %v1247
    %v1312 = vadd.f32 %v1084, %v1248
    %v1313 = vadd.f32 %v1085, %v1249
    %v1314 = vadd.f32 %v1086, %v1250
    %v1315 = vadd.f32 %v1087, %v1251
    %v1316 = vadd.f32 %v1088, %v1252
    %v1317 = vadd.f32 %v1089, %v1253
    %v1318 = vadd.f32 %v1090, %v1254
    %v1319 = vadd.f32 %v1091, %v1255
    %v1320 = vadd.f32 %v1092, %v1256
    %v1321 = vadd.f32 %v1093, %v1257
    %v1322 = vadd.f32 %v1094, %v1258
    %v1323 = vadd.f32 %v1095, %v1259
    %v1324 = vadd.f32 %v1096, %v1260
    %v1325 = vlaneseq
    %v1326 = vshrl.u32 %v1325, 7
    %v1327 = vsub.s32 5, %v1326
    %v1328 = vrot.slane %v180, %v1327
    %v1329 = vlaneseq
    %v1330 = vshrl.u32 %v1329, 7
    %v1331 = vsub.s32 5, %v1330
    %v1332 = vrot.slane %v181, %v1331
    %v1333 = vlaneseq
    %v1334 = vshrl.u32 %v1333, 7
    %v1335 = vsub.s32 5, %v1334
    %v1336 = vrot.slane %v182, %v1335
    %v1337 = vlaneseq
    %v1338 = vshrl.u32 %v1337, 7
    %v1339 = vsub.s32 5, %v1338
    %v1340 = vrot.slane %v183, %v1339
    %v1341 = vlaneseq
    %v1342 = vshrl.u32 %v1341, 7
    %v1343 = vsub.s32 5, %v1342
    %v1344 = vrot.slane %v248, %v1343
    %1347 = vbcast.lane.b32.xlu0 %v1344, 256
    %v1348 = vpop.permute.xlu0 %1347
    %s1350 = sor.u32 256, 8
    %1351 = vbcast.lane.b32.xlu0 %v1344, %s1350
    %v1352 = vpop.permute.xlu0 %1351
    %s1354 = sor.u32 256, 16
    %1355 = vbcast.lane.b32.xlu0 %v1344, %s1354
    %v1356 = vpop.permute.xlu0 %1355
    %s1358 = sor.u32 256, 24
    %1359 = vbcast.lane.b32.xlu0 %v1344, %s1358
    %v1360 = vpop.permute.xlu0 %1359
    %s1362 = sor.u32 256, 32
    %1363 = vbcast.lane.b32.xlu0 %v1344, %s1362
    %v1364 = vpop.permute.xlu0 %1363
    %s1366 = sor.u32 256, 40
    %1367 = vbcast.lane.b32.xlu0 %v1344, %s1366
    %v1368 = vpop.permute.xlu0 %1367
    %s1370 = sor.u32 256, 48
    %1371 = vbcast.lane.b32.xlu0 %v1344, %s1370
    %v1372 = vpop.permute.xlu0 %1371
    %s1374 = sor.u32 256, 56
    %1375 = vbcast.lane.b32.xlu0 %v1344, %s1374
    %v1376 = vpop.permute.xlu0 %1375
    %s1378 = sor.u32 256, 64
    %1379 = vbcast.lane.b32.xlu0 %v1344, %s1378
    %v1380 = vpop.permute.xlu0 %1379
    %s1382 = sor.u32 256, 72
    %1383 = vbcast.lane.b32.xlu0 %v1344, %s1382
    %v1384 = vpop.permute.xlu0 %1383
    %s1386 = sor.u32 256, 80
    %1387 = vbcast.lane.b32.xlu0 %v1344, %s1386
    %v1388 = vpop.permute.xlu0 %1387
    %s1390 = sor.u32 256, 88
    %1391 = vbcast.lane.b32.xlu0 %v1344, %s1390
    %v1392 = vpop.permute.xlu0 %1391
    %s1394 = sor.u32 256, 96
    %1395 = vbcast.lane.b32.xlu0 %v1344, %s1394
    %v1396 = vpop.permute.xlu0 %1395
    %s1398 = sor.u32 256, 104
    %1399 = vbcast.lane.b32.xlu0 %v1344, %s1398
    %v1400 = vpop.permute.xlu0 %1399
    %s1402 = sor.u32 256, 112
    %1403 = vbcast.lane.b32.xlu0 %v1344, %s1402
    %v1404 = vpop.permute.xlu0 %1403
    %s1406 = sor.u32 256, 120
    %1407 = vbcast.lane.b32.xlu0 %v1344, %s1406
    %v1408 = vpop.permute.xlu0 %1407
    %v1425 = vmul.f32 %v1328, %v1348
    %v1426 = vmul.f32 %v1328, %v1352
    %v1427 = vmul.f32 %v1328, %v1356
    %v1428 = vmul.f32 %v1328, %v1360
    %v1429 = vmul.f32 %v1328, %v1364
    %v1430 = vmul.f32 %v1328, %v1368
    %v1431 = vmul.f32 %v1328, %v1372
    %v1432 = vmul.f32 %v1328, %v1376
    %v1433 = vmul.f32 %v1328, %v1380
    %v1434 = vmul.f32 %v1328, %v1384
    %v1435 = vmul.f32 %v1328, %v1388
    %v1436 = vmul.f32 %v1328, %v1392
    %v1437 = vmul.f32 %v1328, %v1396
    %v1438 = vmul.f32 %v1328, %v1400
    %v1439 = vmul.f32 %v1328, %v1404
    %v1440 = vmul.f32 %v1328, %v1408
    %v1441 = vmul.f32 %v1332, %v1348
    %v1442 = vmul.f32 %v1332, %v1352
    %v1443 = vmul.f32 %v1332, %v1356
    %v1444 = vmul.f32 %v1332, %v1360
    %v1445 = vmul.f32 %v1332, %v1364
    %v1446 = vmul.f32 %v1332, %v1368
    %v1447 = vmul.f32 %v1332, %v1372
    %v1448 = vmul.f32 %v1332, %v1376
    %v1449 = vmul.f32 %v1332, %v1380
    %v1450 = vmul.f32 %v1332, %v1384
    %v1451 = vmul.f32 %v1332, %v1388
    %v1452 = vmul.f32 %v1332, %v1392
    %v1453 = vmul.f32 %v1332, %v1396
    %v1454 = vmul.f32 %v1332, %v1400
    %v1455 = vmul.f32 %v1332, %v1404
    %v1456 = vmul.f32 %v1332, %v1408
    %v1457 = vmul.f32 %v1336, %v1348
    %v1458 = vmul.f32 %v1336, %v1352
    %v1459 = vmul.f32 %v1336, %v1356
    %v1460 = vmul.f32 %v1336, %v1360
    %v1461 = vmul.f32 %v1336, %v1364
    %v1462 = vmul.f32 %v1336, %v1368
    %v1463 = vmul.f32 %v1336, %v1372
    %v1464 = vmul.f32 %v1336, %v1376
    %v1465 = vmul.f32 %v1336, %v1380
    %v1466 = vmul.f32 %v1336, %v1384
    %v1467 = vmul.f32 %v1336, %v1388
    %v1468 = vmul.f32 %v1336, %v1392
    %v1469 = vmul.f32 %v1336, %v1396
    %v1470 = vmul.f32 %v1336, %v1400
    %v1471 = vmul.f32 %v1336, %v1404
    %v1472 = vmul.f32 %v1336, %v1408
    %v1473 = vmul.f32 %v1340, %v1348
    %v1474 = vmul.f32 %v1340, %v1352
    %v1475 = vmul.f32 %v1340, %v1356
    %v1476 = vmul.f32 %v1340, %v1360
    %v1477 = vmul.f32 %v1340, %v1364
    %v1478 = vmul.f32 %v1340, %v1368
    %v1479 = vmul.f32 %v1340, %v1372
    %v1480 = vmul.f32 %v1340, %v1376
    %v1481 = vmul.f32 %v1340, %v1380
    %v1482 = vmul.f32 %v1340, %v1384
    %v1483 = vmul.f32 %v1340, %v1388
    %v1484 = vmul.f32 %v1340, %v1392
    %v1485 = vmul.f32 %v1340, %v1396
    %v1486 = vmul.f32 %v1340, %v1400
    %v1487 = vmul.f32 %v1340, %v1404
    %v1488 = vmul.f32 %v1340, %v1408
    %v1489 = vadd.f32 %v1261, %v1425
    %v1490 = vadd.f32 %v1262, %v1426
    %v1491 = vadd.f32 %v1263, %v1427
    %v1492 = vadd.f32 %v1264, %v1428
    %v1493 = vadd.f32 %v1265, %v1429
    %v1494 = vadd.f32 %v1266, %v1430
    %v1495 = vadd.f32 %v1267, %v1431
    %v1496 = vadd.f32 %v1268, %v1432
    %v1497 = vadd.f32 %v1269, %v1433
    %v1498 = vadd.f32 %v1270, %v1434
    %v1499 = vadd.f32 %v1271, %v1435
    %v1500 = vadd.f32 %v1272, %v1436
    %v1501 = vadd.f32 %v1273, %v1437
    %v1502 = vadd.f32 %v1274, %v1438
    %v1503 = vadd.f32 %v1275, %v1439
    %v1504 = vadd.f32 %v1276, %v1440
    %v1505 = vadd.f32 %v1277, %v1441
    %v1506 = vadd.f32 %v1278, %v1442
    %v1507 = vadd.f32 %v1279, %v1443
    %v1508 = vadd.f32 %v1280, %v1444
    %v1509 = vadd.f32 %v1281, %v1445
    %v1510 = vadd.f32 %v1282, %v1446
    %v1511 = vadd.f32 %v1283, %v1447
    %v1512 = vadd.f32 %v1284, %v1448
    %v1513 = vadd.f32 %v1285, %v1449
    %v1514 = vadd.f32 %v1286, %v1450
    %v1515 = vadd.f32 %v1287, %v1451
    %v1516 = vadd.f32 %v1288, %v1452
    %v1517 = vadd.f32 %v1289, %v1453
    %v1518 = vadd.f32 %v1290, %v1454
    %v1519 = vadd.f32 %v1291, %v1455
    %v1520 = vadd.f32 %v1292, %v1456
    %v1521 = vadd.f32 %v1293, %v1457
    %v1522 = vadd.f32 %v1294, %v1458
    %v1523 = vadd.f32 %v1295, %v1459
    %v1524 = vadd.f32 %v1296, %v1460
    %v1525 = vadd.f32 %v1297, %v1461
    %v1526 = vadd.f32 %v1298, %v1462
    %v1527 = vadd.f32 %v1299, %v1463
    %v1528 = vadd.f32 %v1300, %v1464
    %v1529 = vadd.f32 %v1301, %v1465
    %v1530 = vadd.f32 %v1302, %v1466
    %v1531 = vadd.f32 %v1303, %v1467
    %v1532 = vadd.f32 %v1304, %v1468
    %v1533 = vadd.f32 %v1305, %v1469
    %v1534 = vadd.f32 %v1306, %v1470
    %v1535 = vadd.f32 %v1307, %v1471
    %v1536 = vadd.f32 %v1308, %v1472
    %v1537 = vadd.f32 %v1309, %v1473
    %v1538 = vadd.f32 %v1310, %v1474
    %v1539 = vadd.f32 %v1311, %v1475
    %v1540 = vadd.f32 %v1312, %v1476
    %v1541 = vadd.f32 %v1313, %v1477
    %v1542 = vadd.f32 %v1314, %v1478
    %v1543 = vadd.f32 %v1315, %v1479
    %v1544 = vadd.f32 %v1316, %v1480
    %v1545 = vadd.f32 %v1317, %v1481
    %v1546 = vadd.f32 %v1318, %v1482
    %v1547 = vadd.f32 %v1319, %v1483
    %v1548 = vadd.f32 %v1320, %v1484
    %v1549 = vadd.f32 %v1321, %v1485
    %v1550 = vadd.f32 %v1322, %v1486
    %v1551 = vadd.f32 %v1323, %v1487
    %v1552 = vadd.f32 %v1324, %v1488
    %v1553 = vld [vmem:[%s5] sm:$0x1]
    %v1555 = vlaneseq
    %v1556 = vshrl.u32 %v1555, 7
    %v1557 = vsub.s32 0, %v1556
    %v1558 = vrot.slane %v1553, %v1557
    %1560 = vbcast.lane.b32.xlu0 %v1558, 256
    %v1561 = vpop.permute.xlu0 %1560
    %s1563 = sor.u32 256, 8
    %1564 = vbcast.lane.b32.xlu0 %v1558, %s1563
    %v1565 = vpop.permute.xlu0 %1564
    %s1567 = sor.u32 256, 16
    %1568 = vbcast.lane.b32.xlu0 %v1558, %s1567
    %v1569 = vpop.permute.xlu0 %1568
    %s1571 = sor.u32 256, 24
    %1572 = vbcast.lane.b32.xlu0 %v1558, %s1571
    %v1573 = vpop.permute.xlu0 %1572
    %s1575 = sor.u32 256, 32
    %1576 = vbcast.lane.b32.xlu0 %v1558, %s1575
    %v1577 = vpop.permute.xlu0 %1576
    %s1579 = sor.u32 256, 40
    %1580 = vbcast.lane.b32.xlu0 %v1558, %s1579
    %v1581 = vpop.permute.xlu0 %1580
    %s1583 = sor.u32 256, 48
    %1584 = vbcast.lane.b32.xlu0 %v1558, %s1583
    %v1585 = vpop.permute.xlu0 %1584
    %s1587 = sor.u32 256, 56
    %1588 = vbcast.lane.b32.xlu0 %v1558, %s1587
    %v1589 = vpop.permute.xlu0 %1588
    %s1591 = sor.u32 256, 64
    %1592 = vbcast.lane.b32.xlu0 %v1558, %s1591
    %v1593 = vpop.permute.xlu0 %1592
    %s1595 = sor.u32 256, 72
    %1596 = vbcast.lane.b32.xlu0 %v1558, %s1595
    %v1597 = vpop.permute.xlu0 %1596
    %s1599 = sor.u32 256, 80
    %1600 = vbcast.lane.b32.xlu0 %v1558, %s1599
    %v1601 = vpop.permute.xlu0 %1600
    %s1603 = sor.u32 256, 88
    %1604 = vbcast.lane.b32.xlu0 %v1558, %s1603
    %v1605 = vpop.permute.xlu0 %1604
    %s1607 = sor.u32 256, 96
    %1608 = vbcast.lane.b32.xlu0 %v1558, %s1607
    %v1609 = vpop.permute.xlu0 %1608
    %s1611 = sor.u32 256, 104
    %1612 = vbcast.lane.b32.xlu0 %v1558, %s1611
    %v1613 = vpop.permute.xlu0 %1612
    %s1615 = sor.u32 256, 112
    %1616 = vbcast.lane.b32.xlu0 %v1558, %s1615
    %v1617 = vpop.permute.xlu0 %1616
    %s1619 = sor.u32 256, 120
    %1620 = vbcast.lane.b32.xlu0 %v1558, %s1619
    %v1621 = vpop.permute.xlu0 %1620
    %v1638 = vadd.f32 %v1489, %v1561
    %v1639 = vadd.f32 %v1490, %v1565
    %v1640 = vadd.f32 %v1491, %v1569
    %v1641 = vadd.f32 %v1492, %v1573
    %v1642 = vadd.f32 %v1493, %v1577
    %v1643 = vadd.f32 %v1494, %v1581
    %v1644 = vadd.f32 %v1495, %v1585
    %v1645 = vadd.f32 %v1496, %v1589
    %v1646 = vadd.f32 %v1497, %v1593
    %v1647 = vadd.f32 %v1498, %v1597
    %v1648 = vadd.f32 %v1499, %v1601
    %v1649 = vadd.f32 %v1500, %v1605
    %v1650 = vadd.f32 %v1501, %v1609
    %v1651 = vadd.f32 %v1502, %v1613
    %v1652 = vadd.f32 %v1503, %v1617
    %v1653 = vadd.f32 %v1504, %v1621
    %v1654 = vadd.f32 %v1505, %v1561
    %v1655 = vadd.f32 %v1506, %v1565
    %v1656 = vadd.f32 %v1507, %v1569
    %v1657 = vadd.f32 %v1508, %v1573
    %v1658 = vadd.f32 %v1509, %v1577
    %v1659 = vadd.f32 %v1510, %v1581
    %v1660 = vadd.f32 %v1511, %v1585
    %v1661 = vadd.f32 %v1512, %v1589
    %v1662 = vadd.f32 %v1513, %v1593
    %v1663 = vadd.f32 %v1514, %v1597
    %v1664 = vadd.f32 %v1515, %v1601
    %v1665 = vadd.f32 %v1516, %v1605
    %v1666 = vadd.f32 %v1517, %v1609
    %v1667 = vadd.f32 %v1518, %v1613
    %v1668 = vadd.f32 %v1519, %v1617
    %v1669 = vadd.f32 %v1520, %v1621
    %v1670 = vadd.f32 %v1521, %v1561
    %v1671 = vadd.f32 %v1522, %v1565
    %v1672 = vadd.f32 %v1523, %v1569
    %v1673 = vadd.f32 %v1524, %v1573
    %v1674 = vadd.f32 %v1525, %v1577
    %v1675 = vadd.f32 %v1526, %v1581
    %v1676 = vadd.f32 %v1527, %v1585
    %v1677 = vadd.f32 %v1528, %v1589
    %v1678 = vadd.f32 %v1529, %v1593
    %v1679 = vadd.f32 %v1530, %v1597
    %v1680 = vadd.f32 %v1531, %v1601
    %v1681 = vadd.f32 %v1532, %v1605
    %v1682 = vadd.f32 %v1533, %v1609
    %v1683 = vadd.f32 %v1534, %v1613
    %v1684 = vadd.f32 %v1535, %v1617
    %v1685 = vadd.f32 %v1536, %v1621
    %v1686 = vadd.f32 %v1537, %v1561
    %v1687 = vadd.f32 %v1538, %v1565
    %v1688 = vadd.f32 %v1539, %v1569
    %v1689 = vadd.f32 %v1540, %v1573
    %v1690 = vadd.f32 %v1541, %v1577
    %v1691 = vadd.f32 %v1542, %v1581
    %v1692 = vadd.f32 %v1543, %v1585
    %v1693 = vadd.f32 %v1544, %v1589
    %v1694 = vadd.f32 %v1545, %v1593
    %v1695 = vadd.f32 %v1546, %v1597
    %v1696 = vadd.f32 %v1547, %v1601
    %v1697 = vadd.f32 %v1548, %v1605
    %v1698 = vadd.f32 %v1549, %v1609
    %v1699 = vadd.f32 %v1550, %v1613
    %v1700 = vadd.f32 %v1551, %v1617
    %v1701 = vadd.f32 %v1552, %v1621
    %v1702 = vld [vmem:[%s6] sm:$0x1]
    %v1704 = vlaneseq
    %v1705 = vshrl.u32 %v1704, 7
    %v1706 = vsub.s32 0, %v1705
    %v1707 = vrot.slane %v1702, %v1706
    %1709 = vbcast.lane.b32.xlu0 %v1707, 256
    %v1710 = vpop.permute.xlu0 %1709
    %s1712 = sor.u32 256, 8
    %1713 = vbcast.lane.b32.xlu0 %v1707, %s1712
    %v1714 = vpop.permute.xlu0 %1713
    %s1716 = sor.u32 256, 16
    %1717 = vbcast.lane.b32.xlu0 %v1707, %s1716
    %v1718 = vpop.permute.xlu0 %1717
    %s1720 = sor.u32 256, 24
    %1721 = vbcast.lane.b32.xlu0 %v1707, %s1720
    %v1722 = vpop.permute.xlu0 %1721
    %s1724 = sor.u32 256, 32
    %1725 = vbcast.lane.b32.xlu0 %v1707, %s1724
    %v1726 = vpop.permute.xlu0 %1725
    %s1728 = sor.u32 256, 40
    %1729 = vbcast.lane.b32.xlu0 %v1707, %s1728
    %v1730 = vpop.permute.xlu0 %1729
    %s1732 = sor.u32 256, 48
    %1733 = vbcast.lane.b32.xlu0 %v1707, %s1732
    %v1734 = vpop.permute.xlu0 %1733
    %s1736 = sor.u32 256, 56
    %1737 = vbcast.lane.b32.xlu0 %v1707, %s1736
    %v1738 = vpop.permute.xlu0 %1737
    %s1740 = sor.u32 256, 64
    %1741 = vbcast.lane.b32.xlu0 %v1707, %s1740
    %v1742 = vpop.permute.xlu0 %1741
    %s1744 = sor.u32 256, 72
    %1745 = vbcast.lane.b32.xlu0 %v1707, %s1744
    %v1746 = vpop.permute.xlu0 %1745
    %s1748 = sor.u32 256, 80
    %1749 = vbcast.lane.b32.xlu0 %v1707, %s1748
    %v1750 = vpop.permute.xlu0 %1749
    %s1752 = sor.u32 256, 88
    %1753 = vbcast.lane.b32.xlu0 %v1707, %s1752
    %v1754 = vpop.permute.xlu0 %1753
    %s1756 = sor.u32 256, 96
    %1757 = vbcast.lane.b32.xlu0 %v1707, %s1756
    %v1758 = vpop.permute.xlu0 %1757
    %s1760 = sor.u32 256, 104
    %1761 = vbcast.lane.b32.xlu0 %v1707, %s1760
    %v1762 = vpop.permute.xlu0 %1761
    %s1764 = sor.u32 256, 112
    %1765 = vbcast.lane.b32.xlu0 %v1707, %s1764
    %v1766 = vpop.permute.xlu0 %1765
    %s1768 = sor.u32 256, 120
    %1769 = vbcast.lane.b32.xlu0 %v1707, %s1768
    %v1770 = vpop.permute.xlu0 %1769
    %v1787 = vadd.f32 %v1638, %v1710
    %v1788 = vadd.f32 %v1639, %v1714
    %v1789 = vadd.f32 %v1640, %v1718
    %v1790 = vadd.f32 %v1641, %v1722
    %v1791 = vadd.f32 %v1642, %v1726
    %v1792 = vadd.f32 %v1643, %v1730
    %v1793 = vadd.f32 %v1644, %v1734
    %v1794 = vadd.f32 %v1645, %v1738
    %v1795 = vadd.f32 %v1646, %v1742
    %v1796 = vadd.f32 %v1647, %v1746
    %v1797 = vadd.f32 %v1648, %v1750
    %v1798 = vadd.f32 %v1649, %v1754
    %v1799 = vadd.f32 %v1650, %v1758
    %v1800 = vadd.f32 %v1651, %v1762
    %v1801 = vadd.f32 %v1652, %v1766
    %v1802 = vadd.f32 %v1653, %v1770
    %v1803 = vadd.f32 %v1654, %v1710
    %v1804 = vadd.f32 %v1655, %v1714
    %v1805 = vadd.f32 %v1656, %v1718
    %v1806 = vadd.f32 %v1657, %v1722
    %v1807 = vadd.f32 %v1658, %v1726
    %v1808 = vadd.f32 %v1659, %v1730
    %v1809 = vadd.f32 %v1660, %v1734
    %v1810 = vadd.f32 %v1661, %v1738
    %v1811 = vadd.f32 %v1662, %v1742
    %v1812 = vadd.f32 %v1663, %v1746
    %v1813 = vadd.f32 %v1664, %v1750
    %v1814 = vadd.f32 %v1665, %v1754
    %v1815 = vadd.f32 %v1666, %v1758
    %v1816 = vadd.f32 %v1667, %v1762
    %v1817 = vadd.f32 %v1668, %v1766
    %v1818 = vadd.f32 %v1669, %v1770
    %v1819 = vadd.f32 %v1670, %v1710
    %v1820 = vadd.f32 %v1671, %v1714
    %v1821 = vadd.f32 %v1672, %v1718
    %v1822 = vadd.f32 %v1673, %v1722
    %v1823 = vadd.f32 %v1674, %v1726
    %v1824 = vadd.f32 %v1675, %v1730
    %v1825 = vadd.f32 %v1676, %v1734
    %v1826 = vadd.f32 %v1677, %v1738
    %v1827 = vadd.f32 %v1678, %v1742
    %v1828 = vadd.f32 %v1679, %v1746
    %v1829 = vadd.f32 %v1680, %v1750
    %v1830 = vadd.f32 %v1681, %v1754
    %v1831 = vadd.f32 %v1682, %v1758
    %v1832 = vadd.f32 %v1683, %v1762
    %v1833 = vadd.f32 %v1684, %v1766
    %v1834 = vadd.f32 %v1685, %v1770
    %v1835 = vadd.f32 %v1686, %v1710
    %v1836 = vadd.f32 %v1687, %v1714
    %v1837 = vadd.f32 %v1688, %v1718
    %v1838 = vadd.f32 %v1689, %v1722
    %v1839 = vadd.f32 %v1690, %v1726
    %v1840 = vadd.f32 %v1691, %v1730
    %v1841 = vadd.f32 %v1692, %v1734
    %v1842 = vadd.f32 %v1693, %v1738
    %v1843 = vadd.f32 %v1694, %v1742
    %v1844 = vadd.f32 %v1695, %v1746
    %v1845 = vadd.f32 %v1696, %v1750
    %v1846 = vadd.f32 %v1697, %v1754
    %v1847 = vadd.f32 %v1698, %v1758
    %v1848 = vadd.f32 %v1699, %v1762
    %v1849 = vadd.f32 %v1700, %v1766
    %v1850 = vadd.f32 %v1701, %v1770
    %v1851 = vld [vmem:[%s7] sm:$0x3f]
    %v1852 = vlaneseq
    %v1853 = vshrl.u32 %v1852, 7
    %v1854 = vsub.s32 0, %v1853
    %v1855 = vrot.slane %v202, %v1854
    %v1856 = vlaneseq
    %v1857 = vshrl.u32 %v1856, 7
    %v1858 = vsub.s32 0, %v1857
    %v1859 = vrot.slane %v203, %v1858
    %v1860 = vlaneseq
    %v1861 = vshrl.u32 %v1860, 7
    %v1862 = vsub.s32 0, %v1861
    %v1863 = vrot.slane %v204, %v1862
    %v1864 = vlaneseq
    %v1865 = vshrl.u32 %v1864, 7
    %v1866 = vsub.s32 0, %v1865
    %v1867 = vrot.slane %v205, %v1866
    %v1868 = vlaneseq
    %v1869 = vshrl.u32 %v1868, 7
    %v1870 = vsub.s32 0, %v1869
    %v1871 = vrot.slane %v1851, %v1870
    %1874 = vbcast.lane.b32.xlu0 %v1871, 256
    %v1875 = vpop.permute.xlu0 %1874
    %s1877 = sor.u32 256, 8
    %1878 = vbcast.lane.b32.xlu0 %v1871, %s1877
    %v1879 = vpop.permute.xlu0 %1878
    %s1881 = sor.u32 256, 16
    %1882 = vbcast.lane.b32.xlu0 %v1871, %s1881
    %v1883 = vpop.permute.xlu0 %1882
    %s1885 = sor.u32 256, 24
    %1886 = vbcast.lane.b32.xlu0 %v1871, %s1885
    %v1887 = vpop.permute.xlu0 %1886
    %s1889 = sor.u32 256, 32
    %1890 = vbcast.lane.b32.xlu0 %v1871, %s1889
    %v1891 = vpop.permute.xlu0 %1890
    %s1893 = sor.u32 256, 40
    %1894 = vbcast.lane.b32.xlu0 %v1871, %s1893
    %v1895 = vpop.permute.xlu0 %1894
    %s1897 = sor.u32 256, 48
    %1898 = vbcast.lane.b32.xlu0 %v1871, %s1897
    %v1899 = vpop.permute.xlu0 %1898
    %s1901 = sor.u32 256, 56
    %1902 = vbcast.lane.b32.xlu0 %v1871, %s1901
    %v1903 = vpop.permute.xlu0 %1902
    %s1905 = sor.u32 256, 64
    %1906 = vbcast.lane.b32.xlu0 %v1871, %s1905
    %v1907 = vpop.permute.xlu0 %1906
    %s1909 = sor.u32 256, 72
    %1910 = vbcast.lane.b32.xlu0 %v1871, %s1909
    %v1911 = vpop.permute.xlu0 %1910
    %s1913 = sor.u32 256, 80
    %1914 = vbcast.lane.b32.xlu0 %v1871, %s1913
    %v1915 = vpop.permute.xlu0 %1914
    %s1917 = sor.u32 256, 88
    %1918 = vbcast.lane.b32.xlu0 %v1871, %s1917
    %v1919 = vpop.permute.xlu0 %1918
    %s1921 = sor.u32 256, 96
    %1922 = vbcast.lane.b32.xlu0 %v1871, %s1921
    %v1923 = vpop.permute.xlu0 %1922
    %s1925 = sor.u32 256, 104
    %1926 = vbcast.lane.b32.xlu0 %v1871, %s1925
    %v1927 = vpop.permute.xlu0 %1926
    %s1929 = sor.u32 256, 112
    %1930 = vbcast.lane.b32.xlu0 %v1871, %s1929
    %v1931 = vpop.permute.xlu0 %1930
    %s1933 = sor.u32 256, 120
    %1934 = vbcast.lane.b32.xlu0 %v1871, %s1933
    %v1935 = vpop.permute.xlu0 %1934
    %v1952 = vmul.f32 %v1855, %v1875
    %v1953 = vmul.f32 %v1855, %v1879
    %v1954 = vmul.f32 %v1855, %v1883
    %v1955 = vmul.f32 %v1855, %v1887
    %v1956 = vmul.f32 %v1855, %v1891
    %v1957 = vmul.f32 %v1855, %v1895
    %v1958 = vmul.f32 %v1855, %v1899
    %v1959 = vmul.f32 %v1855, %v1903
    %v1960 = vmul.f32 %v1855, %v1907
    %v1961 = vmul.f32 %v1855, %v1911
    %v1962 = vmul.f32 %v1855, %v1915
    %v1963 = vmul.f32 %v1855, %v1919
    %v1964 = vmul.f32 %v1855, %v1923
    %v1965 = vmul.f32 %v1855, %v1927
    %v1966 = vmul.f32 %v1855, %v1931
    %v1967 = vmul.f32 %v1855, %v1935
    %v1968 = vmul.f32 %v1859, %v1875
    %v1969 = vmul.f32 %v1859, %v1879
    %v1970 = vmul.f32 %v1859, %v1883
    %v1971 = vmul.f32 %v1859, %v1887
    %v1972 = vmul.f32 %v1859, %v1891
    %v1973 = vmul.f32 %v1859, %v1895
    %v1974 = vmul.f32 %v1859, %v1899
    %v1975 = vmul.f32 %v1859, %v1903
    %v1976 = vmul.f32 %v1859, %v1907
    %v1977 = vmul.f32 %v1859, %v1911
    %v1978 = vmul.f32 %v1859, %v1915
    %v1979 = vmul.f32 %v1859, %v1919
    %v1980 = vmul.f32 %v1859, %v1923
    %v1981 = vmul.f32 %v1859, %v1927
    %v1982 = vmul.f32 %v1859, %v1931
    %v1983 = vmul.f32 %v1859, %v1935
    %v1984 = vmul.f32 %v1863, %v1875
    %v1985 = vmul.f32 %v1863, %v1879
    %v1986 = vmul.f32 %v1863, %v1883
    %v1987 = vmul.f32 %v1863, %v1887
    %v1988 = vmul.f32 %v1863, %v1891
    %v1989 = vmul.f32 %v1863, %v1895
    %v1990 = vmul.f32 %v1863, %v1899
    %v1991 = vmul.f32 %v1863, %v1903
    %v1992 = vmul.f32 %v1863, %v1907
    %v1993 = vmul.f32 %v1863, %v1911
    %v1994 = vmul.f32 %v1863, %v1915
    %v1995 = vmul.f32 %v1863, %v1919
    %v1996 = vmul.f32 %v1863, %v1923
    %v1997 = vmul.f32 %v1863, %v1927
    %v1998 = vmul.f32 %v1863, %v1931
    %v1999 = vmul.f32 %v1863, %v1935
    %v2000 = vmul.f32 %v1867, %v1875
    %v2001 = vmul.f32 %v1867, %v1879
    %v2002 = vmul.f32 %v1867, %v1883
    %v2003 = vmul.f32 %v1867, %v1887
    %v2004 = vmul.f32 %v1867, %v1891
    %v2005 = vmul.f32 %v1867, %v1895
    %v2006 = vmul.f32 %v1867, %v1899
    %v2007 = vmul.f32 %v1867, %v1903
    %v2008 = vmul.f32 %v1867, %v1907
    %v2009 = vmul.f32 %v1867, %v1911
    %v2010 = vmul.f32 %v1867, %v1915
    %v2011 = vmul.f32 %v1867, %v1919
    %v2012 = vmul.f32 %v1867, %v1923
    %v2013 = vmul.f32 %v1867, %v1927
    %v2014 = vmul.f32 %v1867, %v1931
    %v2015 = vmul.f32 %v1867, %v1935
    %v2016 = vlaneseq
    %v2017 = vshrl.u32 %v2016, 7
    %v2018 = vsub.s32 1, %v2017
    %v2019 = vrot.slane %v202, %v2018
    %v2020 = vlaneseq
    %v2021 = vshrl.u32 %v2020, 7
    %v2022 = vsub.s32 1, %v2021
    %v2023 = vrot.slane %v203, %v2022
    %v2024 = vlaneseq
    %v2025 = vshrl.u32 %v2024, 7
    %v2026 = vsub.s32 1, %v2025
    %v2027 = vrot.slane %v204, %v2026
    %v2028 = vlaneseq
    %v2029 = vshrl.u32 %v2028, 7
    %v2030 = vsub.s32 1, %v2029
    %v2031 = vrot.slane %v205, %v2030
    %v2032 = vlaneseq
    %v2033 = vshrl.u32 %v2032, 7
    %v2034 = vsub.s32 1, %v2033
    %v2035 = vrot.slane %v1851, %v2034
    %2038 = vbcast.lane.b32.xlu0 %v2035, 256
    %v2039 = vpop.permute.xlu0 %2038
    %s2041 = sor.u32 256, 8
    %2042 = vbcast.lane.b32.xlu0 %v2035, %s2041
    %v2043 = vpop.permute.xlu0 %2042
    %s2045 = sor.u32 256, 16
    %2046 = vbcast.lane.b32.xlu0 %v2035, %s2045
    %v2047 = vpop.permute.xlu0 %2046
    %s2049 = sor.u32 256, 24
    %2050 = vbcast.lane.b32.xlu0 %v2035, %s2049
    %v2051 = vpop.permute.xlu0 %2050
    %s2053 = sor.u32 256, 32
    %2054 = vbcast.lane.b32.xlu0 %v2035, %s2053
    %v2055 = vpop.permute.xlu0 %2054
    %s2057 = sor.u32 256, 40
    %2058 = vbcast.lane.b32.xlu0 %v2035, %s2057
    %v2059 = vpop.permute.xlu0 %2058
    %s2061 = sor.u32 256, 48
    %2062 = vbcast.lane.b32.xlu0 %v2035, %s2061
    %v2063 = vpop.permute.xlu0 %2062
    %s2065 = sor.u32 256, 56
    %2066 = vbcast.lane.b32.xlu0 %v2035, %s2065
    %v2067 = vpop.permute.xlu0 %2066
    %s2069 = sor.u32 256, 64
    %2070 = vbcast.lane.b32.xlu0 %v2035, %s2069
    %v2071 = vpop.permute.xlu0 %2070
    %s2073 = sor.u32 256, 72
    %2074 = vbcast.lane.b32.xlu0 %v2035, %s2073
    %v2075 = vpop.permute.xlu0 %2074
    %s2077 = sor.u32 256, 80
    %2078 = vbcast.lane.b32.xlu0 %v2035, %s2077
    %v2079 = vpop.permute.xlu0 %2078
    %s2081 = sor.u32 256, 88
    %2082 = vbcast.lane.b32.xlu0 %v2035, %s2081
    %v2083 = vpop.permute.xlu0 %2082
    %s2085 = sor.u32 256, 96
    %2086 = vbcast.lane.b32.xlu0 %v2035, %s2085
    %v2087 = vpop.permute.xlu0 %2086
    %s2089 = sor.u32 256, 104
    %2090 = vbcast.lane.b32.xlu0 %v2035, %s2089
    %v2091 = vpop.permute.xlu0 %2090
    %s2093 = sor.u32 256, 112
    %2094 = vbcast.lane.b32.xlu0 %v2035, %s2093
    %v2095 = vpop.permute.xlu0 %2094
    %s2097 = sor.u32 256, 120
    %2098 = vbcast.lane.b32.xlu0 %v2035, %s2097
    %v2099 = vpop.permute.xlu0 %2098
    %v2116 = vmul.f32 %v2019, %v2039
    %v2117 = vmul.f32 %v2019, %v2043
    %v2118 = vmul.f32 %v2019, %v2047
    %v2119 = vmul.f32 %v2019, %v2051
    %v2120 = vmul.f32 %v2019, %v2055
    %v2121 = vmul.f32 %v2019, %v2059
    %v2122 = vmul.f32 %v2019, %v2063
    %v2123 = vmul.f32 %v2019, %v2067
    %v2124 = vmul.f32 %v2019, %v2071
    %v2125 = vmul.f32 %v2019, %v2075
    %v2126 = vmul.f32 %v2019, %v2079
    %v2127 = vmul.f32 %v2019, %v2083
    %v2128 = vmul.f32 %v2019, %v2087
    %v2129 = vmul.f32 %v2019, %v2091
    %v2130 = vmul.f32 %v2019, %v2095
    %v2131 = vmul.f32 %v2019, %v2099
    %v2132 = vmul.f32 %v2023, %v2039
    %v2133 = vmul.f32 %v2023, %v2043
    %v2134 = vmul.f32 %v2023, %v2047
    %v2135 = vmul.f32 %v2023, %v2051
    %v2136 = vmul.f32 %v2023, %v2055
    %v2137 = vmul.f32 %v2023, %v2059
    %v2138 = vmul.f32 %v2023, %v2063
    %v2139 = vmul.f32 %v2023, %v2067
    %v2140 = vmul.f32 %v2023, %v2071
    %v2141 = vmul.f32 %v2023, %v2075
    %v2142 = vmul.f32 %v2023, %v2079
    %v2143 = vmul.f32 %v2023, %v2083
    %v2144 = vmul.f32 %v2023, %v2087
    %v2145 = vmul.f32 %v2023, %v2091
    %v2146 = vmul.f32 %v2023, %v2095
    %v2147 = vmul.f32 %v2023, %v2099
    %v2148 = vmul.f32 %v2027, %v2039
    %v2149 = vmul.f32 %v2027, %v2043
    %v2150 = vmul.f32 %v2027, %v2047
    %v2151 = vmul.f32 %v2027, %v2051
    %v2152 = vmul.f32 %v2027, %v2055
    %v2153 = vmul.f32 %v2027, %v2059
    %v2154 = vmul.f32 %v2027, %v2063
    %v2155 = vmul.f32 %v2027, %v2067
    %v2156 = vmul.f32 %v2027, %v2071
    %v2157 = vmul.f32 %v2027, %v2075
    %v2158 = vmul.f32 %v2027, %v2079
    %v2159 = vmul.f32 %v2027, %v2083
    %v2160 = vmul.f32 %v2027, %v2087
    %v2161 = vmul.f32 %v2027, %v2091
    %v2162 = vmul.f32 %v2027, %v2095
    %v2163 = vmul.f32 %v2027, %v2099
    %v2164 = vmul.f32 %v2031, %v2039
    %v2165 = vmul.f32 %v2031, %v2043
    %v2166 = vmul.f32 %v2031, %v2047
    %v2167 = vmul.f32 %v2031, %v2051
    %v2168 = vmul.f32 %v2031, %v2055
    %v2169 = vmul.f32 %v2031, %v2059
    %v2170 = vmul.f32 %v2031, %v2063
    %v2171 = vmul.f32 %v2031, %v2067
    %v2172 = vmul.f32 %v2031, %v2071
    %v2173 = vmul.f32 %v2031, %v2075
    %v2174 = vmul.f32 %v2031, %v2079
    %v2175 = vmul.f32 %v2031, %v2083
    %v2176 = vmul.f32 %v2031, %v2087
    %v2177 = vmul.f32 %v2031, %v2091
    %v2178 = vmul.f32 %v2031, %v2095
    %v2179 = vmul.f32 %v2031, %v2099
    %v2180 = vadd.f32 %v1952, %v2116
    %v2181 = vadd.f32 %v1953, %v2117
    %v2182 = vadd.f32 %v1954, %v2118
    %v2183 = vadd.f32 %v1955, %v2119
    %v2184 = vadd.f32 %v1956, %v2120
    %v2185 = vadd.f32 %v1957, %v2121
    %v2186 = vadd.f32 %v1958, %v2122
    %v2187 = vadd.f32 %v1959, %v2123
    %v2188 = vadd.f32 %v1960, %v2124
    %v2189 = vadd.f32 %v1961, %v2125
    %v2190 = vadd.f32 %v1962, %v2126
    %v2191 = vadd.f32 %v1963, %v2127
    %v2192 = vadd.f32 %v1964, %v2128
    %v2193 = vadd.f32 %v1965, %v2129
    %v2194 = vadd.f32 %v1966, %v2130
    %v2195 = vadd.f32 %v1967, %v2131
    %v2196 = vadd.f32 %v1968, %v2132
    %v2197 = vadd.f32 %v1969, %v2133
    %v2198 = vadd.f32 %v1970, %v2134
    %v2199 = vadd.f32 %v1971, %v2135
    %v2200 = vadd.f32 %v1972, %v2136
    %v2201 = vadd.f32 %v1973, %v2137
    %v2202 = vadd.f32 %v1974, %v2138
    %v2203 = vadd.f32 %v1975, %v2139
    %v2204 = vadd.f32 %v1976, %v2140
    %v2205 = vadd.f32 %v1977, %v2141
    %v2206 = vadd.f32 %v1978, %v2142
    %v2207 = vadd.f32 %v1979, %v2143
    %v2208 = vadd.f32 %v1980, %v2144
    %v2209 = vadd.f32 %v1981, %v2145
    %v2210 = vadd.f32 %v1982, %v2146
    %v2211 = vadd.f32 %v1983, %v2147
    %v2212 = vadd.f32 %v1984, %v2148
    %v2213 = vadd.f32 %v1985, %v2149
    %v2214 = vadd.f32 %v1986, %v2150
    %v2215 = vadd.f32 %v1987, %v2151
    %v2216 = vadd.f32 %v1988, %v2152
    %v2217 = vadd.f32 %v1989, %v2153
    %v2218 = vadd.f32 %v1990, %v2154
    %v2219 = vadd.f32 %v1991, %v2155
    %v2220 = vadd.f32 %v1992, %v2156
    %v2221 = vadd.f32 %v1993, %v2157
    %v2222 = vadd.f32 %v1994, %v2158
    %v2223 = vadd.f32 %v1995, %v2159
    %v2224 = vadd.f32 %v1996, %v2160
    %v2225 = vadd.f32 %v1997, %v2161
    %v2226 = vadd.f32 %v1998, %v2162
    %v2227 = vadd.f32 %v1999, %v2163
    %v2228 = vadd.f32 %v2000, %v2164
    %v2229 = vadd.f32 %v2001, %v2165
    %v2230 = vadd.f32 %v2002, %v2166
    %v2231 = vadd.f32 %v2003, %v2167
    %v2232 = vadd.f32 %v2004, %v2168
    %v2233 = vadd.f32 %v2005, %v2169
    %v2234 = vadd.f32 %v2006, %v2170
    %v2235 = vadd.f32 %v2007, %v2171
    %v2236 = vadd.f32 %v2008, %v2172
    %v2237 = vadd.f32 %v2009, %v2173
    %v2238 = vadd.f32 %v2010, %v2174
    %v2239 = vadd.f32 %v2011, %v2175
    %v2240 = vadd.f32 %v2012, %v2176
    %v2241 = vadd.f32 %v2013, %v2177
    %v2242 = vadd.f32 %v2014, %v2178
    %v2243 = vadd.f32 %v2015, %v2179
    %v2244 = vlaneseq
    %v2245 = vshrl.u32 %v2244, 7
    %v2246 = vsub.s32 2, %v2245
    %v2247 = vrot.slane %v202, %v2246
    %v2248 = vlaneseq
    %v2249 = vshrl.u32 %v2248, 7
    %v2250 = vsub.s32 2, %v2249
    %v2251 = vrot.slane %v203, %v2250
    %v2252 = vlaneseq
    %v2253 = vshrl.u32 %v2252, 7
    %v2254 = vsub.s32 2, %v2253
    %v2255 = vrot.slane %v204, %v2254
    %v2256 = vlaneseq
    %v2257 = vshrl.u32 %v2256, 7
    %v2258 = vsub.s32 2, %v2257
    %v2259 = vrot.slane %v205, %v2258
    %v2260 = vlaneseq
    %v2261 = vshrl.u32 %v2260, 7
    %v2262 = vsub.s32 2, %v2261
    %v2263 = vrot.slane %v1851, %v2262
    %2266 = vbcast.lane.b32.xlu0 %v2263, 256
    %v2267 = vpop.permute.xlu0 %2266
    %s2269 = sor.u32 256, 8
    %2270 = vbcast.lane.b32.xlu0 %v2263, %s2269
    %v2271 = vpop.permute.xlu0 %2270
    %s2273 = sor.u32 256, 16
    %2274 = vbcast.lane.b32.xlu0 %v2263, %s2273
    %v2275 = vpop.permute.xlu0 %2274
    %s2277 = sor.u32 256, 24
    %2278 = vbcast.lane.b32.xlu0 %v2263, %s2277
    %v2279 = vpop.permute.xlu0 %2278
    %s2281 = sor.u32 256, 32
    %2282 = vbcast.lane.b32.xlu0 %v2263, %s2281
    %v2283 = vpop.permute.xlu0 %2282
    %s2285 = sor.u32 256, 40
    %2286 = vbcast.lane.b32.xlu0 %v2263, %s2285
    %v2287 = vpop.permute.xlu0 %2286
    %s2289 = sor.u32 256, 48
    %2290 = vbcast.lane.b32.xlu0 %v2263, %s2289
    %v2291 = vpop.permute.xlu0 %2290
    %s2293 = sor.u32 256, 56
    %2294 = vbcast.lane.b32.xlu0 %v2263, %s2293
    %v2295 = vpop.permute.xlu0 %2294
    %s2297 = sor.u32 256, 64
    %2298 = vbcast.lane.b32.xlu0 %v2263, %s2297
    %v2299 = vpop.permute.xlu0 %2298
    %s2301 = sor.u32 256, 72
    %2302 = vbcast.lane.b32.xlu0 %v2263, %s2301
    %v2303 = vpop.permute.xlu0 %2302
    %s2305 = sor.u32 256, 80
    %2306 = vbcast.lane.b32.xlu0 %v2263, %s2305
    %v2307 = vpop.permute.xlu0 %2306
    %s2309 = sor.u32 256, 88
    %2310 = vbcast.lane.b32.xlu0 %v2263, %s2309
    %v2311 = vpop.permute.xlu0 %2310
    %s2313 = sor.u32 256, 96
    %2314 = vbcast.lane.b32.xlu0 %v2263, %s2313
    %v2315 = vpop.permute.xlu0 %2314
    %s2317 = sor.u32 256, 104
    %2318 = vbcast.lane.b32.xlu0 %v2263, %s2317
    %v2319 = vpop.permute.xlu0 %2318
    %s2321 = sor.u32 256, 112
    %2322 = vbcast.lane.b32.xlu0 %v2263, %s2321
    %v2323 = vpop.permute.xlu0 %2322
    %s2325 = sor.u32 256, 120
    %2326 = vbcast.lane.b32.xlu0 %v2263, %s2325
    %v2327 = vpop.permute.xlu0 %2326
    %v2344 = vmul.f32 %v2247, %v2267
    %v2345 = vmul.f32 %v2247, %v2271
    %v2346 = vmul.f32 %v2247, %v2275
    %v2347 = vmul.f32 %v2247, %v2279
    %v2348 = vmul.f32 %v2247, %v2283
    %v2349 = vmul.f32 %v2247, %v2287
    %v2350 = vmul.f32 %v2247, %v2291
    %v2351 = vmul.f32 %v2247, %v2295
    %v2352 = vmul.f32 %v2247, %v2299
    %v2353 = vmul.f32 %v2247, %v2303
    %v2354 = vmul.f32 %v2247, %v2307
    %v2355 = vmul.f32 %v2247, %v2311
    %v2356 = vmul.f32 %v2247, %v2315
    %v2357 = vmul.f32 %v2247, %v2319
    %v2358 = vmul.f32 %v2247, %v2323
    %v2359 = vmul.f32 %v2247, %v2327
    %v2360 = vmul.f32 %v2251, %v2267
    %v2361 = vmul.f32 %v2251, %v2271
    %v2362 = vmul.f32 %v2251, %v2275
    %v2363 = vmul.f32 %v2251, %v2279
    %v2364 = vmul.f32 %v2251, %v2283
    %v2365 = vmul.f32 %v2251, %v2287
    %v2366 = vmul.f32 %v2251, %v2291
    %v2367 = vmul.f32 %v2251, %v2295
    %v2368 = vmul.f32 %v2251, %v2299
    %v2369 = vmul.f32 %v2251, %v2303
    %v2370 = vmul.f32 %v2251, %v2307
    %v2371 = vmul.f32 %v2251, %v2311
    %v2372 = vmul.f32 %v2251, %v2315
    %v2373 = vmul.f32 %v2251, %v2319
    %v2374 = vmul.f32 %v2251, %v2323
    %v2375 = vmul.f32 %v2251, %v2327
    %v2376 = vmul.f32 %v2255, %v2267
    %v2377 = vmul.f32 %v2255, %v2271
    %v2378 = vmul.f32 %v2255, %v2275
    %v2379 = vmul.f32 %v2255, %v2279
    %v2380 = vmul.f32 %v2255, %v2283
    %v2381 = vmul.f32 %v2255, %v2287
    %v2382 = vmul.f32 %v2255, %v2291
    %v2383 = vmul.f32 %v2255, %v2295
    %v2384 = vmul.f32 %v2255, %v2299
    %v2385 = vmul.f32 %v2255, %v2303
    %v2386 = vmul.f32 %v2255, %v2307
    %v2387 = vmul.f32 %v2255, %v2311
    %v2388 = vmul.f32 %v2255, %v2315
    %v2389 = vmul.f32 %v2255, %v2319
    %v2390 = vmul.f32 %v2255, %v2323
    %v2391 = vmul.f32 %v2255, %v2327
    %v2392 = vmul.f32 %v2259, %v2267
    %v2393 = vmul.f32 %v2259, %v2271
    %v2394 = vmul.f32 %v2259, %v2275
    %v2395 = vmul.f32 %v2259, %v2279
    %v2396 = vmul.f32 %v2259, %v2283
    %v2397 = vmul.f32 %v2259, %v2287
    %v2398 = vmul.f32 %v2259, %v2291
    %v2399 = vmul.f32 %v2259, %v2295
    %v2400 = vmul.f32 %v2259, %v2299
    %v2401 = vmul.f32 %v2259, %v2303
    %v2402 = vmul.f32 %v2259, %v2307
    %v2403 = vmul.f32 %v2259, %v2311
    %v2404 = vmul.f32 %v2259, %v2315
    %v2405 = vmul.f32 %v2259, %v2319
    %v2406 = vmul.f32 %v2259, %v2323
    %v2407 = vmul.f32 %v2259, %v2327
    %v2408 = vadd.f32 %v2180, %v2344
    %v2409 = vadd.f32 %v2181, %v2345
    %v2410 = vadd.f32 %v2182, %v2346
    %v2411 = vadd.f32 %v2183, %v2347
    %v2412 = vadd.f32 %v2184, %v2348
    %v2413 = vadd.f32 %v2185, %v2349
    %v2414 = vadd.f32 %v2186, %v2350
    %v2415 = vadd.f32 %v2187, %v2351
    %v2416 = vadd.f32 %v2188, %v2352
    %v2417 = vadd.f32 %v2189, %v2353
    %v2418 = vadd.f32 %v2190, %v2354
    %v2419 = vadd.f32 %v2191, %v2355
    %v2420 = vadd.f32 %v2192, %v2356
    %v2421 = vadd.f32 %v2193, %v2357
    %v2422 = vadd.f32 %v2194, %v2358
    %v2423 = vadd.f32 %v2195, %v2359
    %v2424 = vadd.f32 %v2196, %v2360
    %v2425 = vadd.f32 %v2197, %v2361
    %v2426 = vadd.f32 %v2198, %v2362
    %v2427 = vadd.f32 %v2199, %v2363
    %v2428 = vadd.f32 %v2200, %v2364
    %v2429 = vadd.f32 %v2201, %v2365
    %v2430 = vadd.f32 %v2202, %v2366
    %v2431 = vadd.f32 %v2203, %v2367
    %v2432 = vadd.f32 %v2204, %v2368
    %v2433 = vadd.f32 %v2205, %v2369
    %v2434 = vadd.f32 %v2206, %v2370
    %v2435 = vadd.f32 %v2207, %v2371
    %v2436 = vadd.f32 %v2208, %v2372
    %v2437 = vadd.f32 %v2209, %v2373
    %v2438 = vadd.f32 %v2210, %v2374
    %v2439 = vadd.f32 %v2211, %v2375
    %v2440 = vadd.f32 %v2212, %v2376
    %v2441 = vadd.f32 %v2213, %v2377
    %v2442 = vadd.f32 %v2214, %v2378
    %v2443 = vadd.f32 %v2215, %v2379
    %v2444 = vadd.f32 %v2216, %v2380
    %v2445 = vadd.f32 %v2217, %v2381
    %v2446 = vadd.f32 %v2218, %v2382
    %v2447 = vadd.f32 %v2219, %v2383
    %v2448 = vadd.f32 %v2220, %v2384
    %v2449 = vadd.f32 %v2221, %v2385
    %v2450 = vadd.f32 %v2222, %v2386
    %v2451 = vadd.f32 %v2223, %v2387
    %v2452 = vadd.f32 %v2224, %v2388
    %v2453 = vadd.f32 %v2225, %v2389
    %v2454 = vadd.f32 %v2226, %v2390
    %v2455 = vadd.f32 %v2227, %v2391
    %v2456 = vadd.f32 %v2228, %v2392
    %v2457 = vadd.f32 %v2229, %v2393
    %v2458 = vadd.f32 %v2230, %v2394
    %v2459 = vadd.f32 %v2231, %v2395
    %v2460 = vadd.f32 %v2232, %v2396
    %v2461 = vadd.f32 %v2233, %v2397
    %v2462 = vadd.f32 %v2234, %v2398
    %v2463 = vadd.f32 %v2235, %v2399
    %v2464 = vadd.f32 %v2236, %v2400
    %v2465 = vadd.f32 %v2237, %v2401
    %v2466 = vadd.f32 %v2238, %v2402
    %v2467 = vadd.f32 %v2239, %v2403
    %v2468 = vadd.f32 %v2240, %v2404
    %v2469 = vadd.f32 %v2241, %v2405
    %v2470 = vadd.f32 %v2242, %v2406
    %v2471 = vadd.f32 %v2243, %v2407
    %v2472 = vlaneseq
    %v2473 = vshrl.u32 %v2472, 7
    %v2474 = vsub.s32 3, %v2473
    %v2475 = vrot.slane %v202, %v2474
    %v2476 = vlaneseq
    %v2477 = vshrl.u32 %v2476, 7
    %v2478 = vsub.s32 3, %v2477
    %v2479 = vrot.slane %v203, %v2478
    %v2480 = vlaneseq
    %v2481 = vshrl.u32 %v2480, 7
    %v2482 = vsub.s32 3, %v2481
    %v2483 = vrot.slane %v204, %v2482
    %v2484 = vlaneseq
    %v2485 = vshrl.u32 %v2484, 7
    %v2486 = vsub.s32 3, %v2485
    %v2487 = vrot.slane %v205, %v2486
    %v2488 = vlaneseq
    %v2489 = vshrl.u32 %v2488, 7
    %v2490 = vsub.s32 3, %v2489
    %v2491 = vrot.slane %v1851, %v2490
    %2494 = vbcast.lane.b32.xlu0 %v2491, 256
    %v2495 = vpop.permute.xlu0 %2494
    %s2497 = sor.u32 256, 8
    %2498 = vbcast.lane.b32.xlu0 %v2491, %s2497
    %v2499 = vpop.permute.xlu0 %2498
    %s2501 = sor.u32 256, 16
    %2502 = vbcast.lane.b32.xlu0 %v2491, %s2501
    %v2503 = vpop.permute.xlu0 %2502
    %s2505 = sor.u32 256, 24
    %2506 = vbcast.lane.b32.xlu0 %v2491, %s2505
    %v2507 = vpop.permute.xlu0 %2506
    %s2509 = sor.u32 256, 32
    %2510 = vbcast.lane.b32.xlu0 %v2491, %s2509
    %v2511 = vpop.permute.xlu0 %2510
    %s2513 = sor.u32 256, 40
    %2514 = vbcast.lane.b32.xlu0 %v2491, %s2513
    %v2515 = vpop.permute.xlu0 %2514
    %s2517 = sor.u32 256, 48
    %2518 = vbcast.lane.b32.xlu0 %v2491, %s2517
    %v2519 = vpop.permute.xlu0 %2518
    %s2521 = sor.u32 256, 56
    %2522 = vbcast.lane.b32.xlu0 %v2491, %s2521
    %v2523 = vpop.permute.xlu0 %2522
    %s2525 = sor.u32 256, 64
    %2526 = vbcast.lane.b32.xlu0 %v2491, %s2525
    %v2527 = vpop.permute.xlu0 %2526
    %s2529 = sor.u32 256, 72
    %2530 = vbcast.lane.b32.xlu0 %v2491, %s2529
    %v2531 = vpop.permute.xlu0 %2530
    %s2533 = sor.u32 256, 80
    %2534 = vbcast.lane.b32.xlu0 %v2491, %s2533
    %v2535 = vpop.permute.xlu0 %2534
    %s2537 = sor.u32 256, 88
    %2538 = vbcast.lane.b32.xlu0 %v2491, %s2537
    %v2539 = vpop.permute.xlu0 %2538
    %s2541 = sor.u32 256, 96
    %2542 = vbcast.lane.b32.xlu0 %v2491, %s2541
    %v2543 = vpop.permute.xlu0 %2542
    %s2545 = sor.u32 256, 104
    %2546 = vbcast.lane.b32.xlu0 %v2491, %s2545
    %v2547 = vpop.permute.xlu0 %2546
    %s2549 = sor.u32 256, 112
    %2550 = vbcast.lane.b32.xlu0 %v2491, %s2549
    %v2551 = vpop.permute.xlu0 %2550
    %s2553 = sor.u32 256, 120
    %2554 = vbcast.lane.b32.xlu0 %v2491, %s2553
    %v2555 = vpop.permute.xlu0 %2554
    %v2572 = vmul.f32 %v2475, %v2495
    %v2573 = vmul.f32 %v2475, %v2499
    %v2574 = vmul.f32 %v2475, %v2503
    %v2575 = vmul.f32 %v2475, %v2507
    %v2576 = vmul.f32 %v2475, %v2511
    %v2577 = vmul.f32 %v2475, %v2515
    %v2578 = vmul.f32 %v2475, %v2519
    %v2579 = vmul.f32 %v2475, %v2523
    %v2580 = vmul.f32 %v2475, %v2527
    %v2581 = vmul.f32 %v2475, %v2531
    %v2582 = vmul.f32 %v2475, %v2535
    %v2583 = vmul.f32 %v2475, %v2539
    %v2584 = vmul.f32 %v2475, %v2543
    %v2585 = vmul.f32 %v2475, %v2547
    %v2586 = vmul.f32 %v2475, %v2551
    %v2587 = vmul.f32 %v2475, %v2555
    %v2588 = vmul.f32 %v2479, %v2495
    %v2589 = vmul.f32 %v2479, %v2499
    %v2590 = vmul.f32 %v2479, %v2503
    %v2591 = vmul.f32 %v2479, %v2507
    %v2592 = vmul.f32 %v2479, %v2511
    %v2593 = vmul.f32 %v2479, %v2515
    %v2594 = vmul.f32 %v2479, %v2519
    %v2595 = vmul.f32 %v2479, %v2523
    %v2596 = vmul.f32 %v2479, %v2527
    %v2597 = vmul.f32 %v2479, %v2531
    %v2598 = vmul.f32 %v2479, %v2535
    %v2599 = vmul.f32 %v2479, %v2539
    %v2600 = vmul.f32 %v2479, %v2543
    %v2601 = vmul.f32 %v2479, %v2547
    %v2602 = vmul.f32 %v2479, %v2551
    %v2603 = vmul.f32 %v2479, %v2555
    %v2604 = vmul.f32 %v2483, %v2495
    %v2605 = vmul.f32 %v2483, %v2499
    %v2606 = vmul.f32 %v2483, %v2503
    %v2607 = vmul.f32 %v2483, %v2507
    %v2608 = vmul.f32 %v2483, %v2511
    %v2609 = vmul.f32 %v2483, %v2515
    %v2610 = vmul.f32 %v2483, %v2519
    %v2611 = vmul.f32 %v2483, %v2523
    %v2612 = vmul.f32 %v2483, %v2527
    %v2613 = vmul.f32 %v2483, %v2531
    %v2614 = vmul.f32 %v2483, %v2535
    %v2615 = vmul.f32 %v2483, %v2539
    %v2616 = vmul.f32 %v2483, %v2543
    %v2617 = vmul.f32 %v2483, %v2547
    %v2618 = vmul.f32 %v2483, %v2551
    %v2619 = vmul.f32 %v2483, %v2555
    %v2620 = vmul.f32 %v2487, %v2495
    %v2621 = vmul.f32 %v2487, %v2499
    %v2622 = vmul.f32 %v2487, %v2503
    %v2623 = vmul.f32 %v2487, %v2507
    %v2624 = vmul.f32 %v2487, %v2511
    %v2625 = vmul.f32 %v2487, %v2515
    %v2626 = vmul.f32 %v2487, %v2519
    %v2627 = vmul.f32 %v2487, %v2523
    %v2628 = vmul.f32 %v2487, %v2527
    %v2629 = vmul.f32 %v2487, %v2531
    %v2630 = vmul.f32 %v2487, %v2535
    %v2631 = vmul.f32 %v2487, %v2539
    %v2632 = vmul.f32 %v2487, %v2543
    %v2633 = vmul.f32 %v2487, %v2547
    %v2634 = vmul.f32 %v2487, %v2551
    %v2635 = vmul.f32 %v2487, %v2555
    %v2636 = vadd.f32 %v2408, %v2572
    %v2637 = vadd.f32 %v2409, %v2573
    %v2638 = vadd.f32 %v2410, %v2574
    %v2639 = vadd.f32 %v2411, %v2575
    %v2640 = vadd.f32 %v2412, %v2576
    %v2641 = vadd.f32 %v2413, %v2577
    %v2642 = vadd.f32 %v2414, %v2578
    %v2643 = vadd.f32 %v2415, %v2579
    %v2644 = vadd.f32 %v2416, %v2580
    %v2645 = vadd.f32 %v2417, %v2581
    %v2646 = vadd.f32 %v2418, %v2582
    %v2647 = vadd.f32 %v2419, %v2583
    %v2648 = vadd.f32 %v2420, %v2584
    %v2649 = vadd.f32 %v2421, %v2585
    %v2650 = vadd.f32 %v2422, %v2586
    %v2651 = vadd.f32 %v2423, %v2587
    %v2652 = vadd.f32 %v2424, %v2588
    %v2653 = vadd.f32 %v2425, %v2589
    %v2654 = vadd.f32 %v2426, %v2590
    %v2655 = vadd.f32 %v2427, %v2591
    %v2656 = vadd.f32 %v2428, %v2592
    %v2657 = vadd.f32 %v2429, %v2593
    %v2658 = vadd.f32 %v2430, %v2594
    %v2659 = vadd.f32 %v2431, %v2595
    %v2660 = vadd.f32 %v2432, %v2596
    %v2661 = vadd.f32 %v2433, %v2597
    %v2662 = vadd.f32 %v2434, %v2598
    %v2663 = vadd.f32 %v2435, %v2599
    %v2664 = vadd.f32 %v2436, %v2600
    %v2665 = vadd.f32 %v2437, %v2601
    %v2666 = vadd.f32 %v2438, %v2602
    %v2667 = vadd.f32 %v2439, %v2603
    %v2668 = vadd.f32 %v2440, %v2604
    %v2669 = vadd.f32 %v2441, %v2605
    %v2670 = vadd.f32 %v2442, %v2606
    %v2671 = vadd.f32 %v2443, %v2607
    %v2672 = vadd.f32 %v2444, %v2608
    %v2673 = vadd.f32 %v2445, %v2609
    %v2674 = vadd.f32 %v2446, %v2610
    %v2675 = vadd.f32 %v2447, %v2611
    %v2676 = vadd.f32 %v2448, %v2612
    %v2677 = vadd.f32 %v2449, %v2613
    %v2678 = vadd.f32 %v2450, %v2614
    %v2679 = vadd.f32 %v2451, %v2615
    %v2680 = vadd.f32 %v2452, %v2616
    %v2681 = vadd.f32 %v2453, %v2617
    %v2682 = vadd.f32 %v2454, %v2618
    %v2683 = vadd.f32 %v2455, %v2619
    %v2684 = vadd.f32 %v2456, %v2620
    %v2685 = vadd.f32 %v2457, %v2621
    %v2686 = vadd.f32 %v2458, %v2622
    %v2687 = vadd.f32 %v2459, %v2623
    %v2688 = vadd.f32 %v2460, %v2624
    %v2689 = vadd.f32 %v2461, %v2625
    %v2690 = vadd.f32 %v2462, %v2626
    %v2691 = vadd.f32 %v2463, %v2627
    %v2692 = vadd.f32 %v2464, %v2628
    %v2693 = vadd.f32 %v2465, %v2629
    %v2694 = vadd.f32 %v2466, %v2630
    %v2695 = vadd.f32 %v2467, %v2631
    %v2696 = vadd.f32 %v2468, %v2632
    %v2697 = vadd.f32 %v2469, %v2633
    %v2698 = vadd.f32 %v2470, %v2634
    %v2699 = vadd.f32 %v2471, %v2635
    %v2700 = vlaneseq
    %v2701 = vshrl.u32 %v2700, 7
    %v2702 = vsub.s32 4, %v2701
    %v2703 = vrot.slane %v202, %v2702
    %v2704 = vlaneseq
    %v2705 = vshrl.u32 %v2704, 7
    %v2706 = vsub.s32 4, %v2705
    %v2707 = vrot.slane %v203, %v2706
    %v2708 = vlaneseq
    %v2709 = vshrl.u32 %v2708, 7
    %v2710 = vsub.s32 4, %v2709
    %v2711 = vrot.slane %v204, %v2710
    %v2712 = vlaneseq
    %v2713 = vshrl.u32 %v2712, 7
    %v2714 = vsub.s32 4, %v2713
    %v2715 = vrot.slane %v205, %v2714
    %v2716 = vlaneseq
    %v2717 = vshrl.u32 %v2716, 7
    %v2718 = vsub.s32 4, %v2717
    %v2719 = vrot.slane %v1851, %v2718
    %2722 = vbcast.lane.b32.xlu0 %v2719, 256
    %v2723 = vpop.permute.xlu0 %2722
    %s2725 = sor.u32 256, 8
    %2726 = vbcast.lane.b32.xlu0 %v2719, %s2725
    %v2727 = vpop.permute.xlu0 %2726
    %s2729 = sor.u32 256, 16
    %2730 = vbcast.lane.b32.xlu0 %v2719, %s2729
    %v2731 = vpop.permute.xlu0 %2730
    %s2733 = sor.u32 256, 24
    %2734 = vbcast.lane.b32.xlu0 %v2719, %s2733
    %v2735 = vpop.permute.xlu0 %2734
    %s2737 = sor.u32 256, 32
    %2738 = vbcast.lane.b32.xlu0 %v2719, %s2737
    %v2739 = vpop.permute.xlu0 %2738
    %s2741 = sor.u32 256, 40
    %2742 = vbcast.lane.b32.xlu0 %v2719, %s2741
    %v2743 = vpop.permute.xlu0 %2742
    %s2745 = sor.u32 256, 48
    %2746 = vbcast.lane.b32.xlu0 %v2719, %s2745
    %v2747 = vpop.permute.xlu0 %2746
    %s2749 = sor.u32 256, 56
    %2750 = vbcast.lane.b32.xlu0 %v2719, %s2749
    %v2751 = vpop.permute.xlu0 %2750
    %s2753 = sor.u32 256, 64
    %2754 = vbcast.lane.b32.xlu0 %v2719, %s2753
    %v2755 = vpop.permute.xlu0 %2754
    %s2757 = sor.u32 256, 72
    %2758 = vbcast.lane.b32.xlu0 %v2719, %s2757
    %v2759 = vpop.permute.xlu0 %2758
    %s2761 = sor.u32 256, 80
    %2762 = vbcast.lane.b32.xlu0 %v2719, %s2761
    %v2763 = vpop.permute.xlu0 %2762
    %s2765 = sor.u32 256, 88
    %2766 = vbcast.lane.b32.xlu0 %v2719, %s2765
    %v2767 = vpop.permute.xlu0 %2766
    %s2769 = sor.u32 256, 96
    %2770 = vbcast.lane.b32.xlu0 %v2719, %s2769
    %v2771 = vpop.permute.xlu0 %2770
    %s2773 = sor.u32 256, 104
    %2774 = vbcast.lane.b32.xlu0 %v2719, %s2773
    %v2775 = vpop.permute.xlu0 %2774
    %s2777 = sor.u32 256, 112
    %2778 = vbcast.lane.b32.xlu0 %v2719, %s2777
    %v2779 = vpop.permute.xlu0 %2778
    %s2781 = sor.u32 256, 120
    %2782 = vbcast.lane.b32.xlu0 %v2719, %s2781
    %v2783 = vpop.permute.xlu0 %2782
    %v2800 = vmul.f32 %v2703, %v2723
    %v2801 = vmul.f32 %v2703, %v2727
    %v2802 = vmul.f32 %v2703, %v2731
    %v2803 = vmul.f32 %v2703, %v2735
    %v2804 = vmul.f32 %v2703, %v2739
    %v2805 = vmul.f32 %v2703, %v2743
    %v2806 = vmul.f32 %v2703, %v2747
    %v2807 = vmul.f32 %v2703, %v2751
    %v2808 = vmul.f32 %v2703, %v2755
    %v2809 = vmul.f32 %v2703, %v2759
    %v2810 = vmul.f32 %v2703, %v2763
    %v2811 = vmul.f32 %v2703, %v2767
    %v2812 = vmul.f32 %v2703, %v2771
    %v2813 = vmul.f32 %v2703, %v2775
    %v2814 = vmul.f32 %v2703, %v2779
    %v2815 = vmul.f32 %v2703, %v2783
    %v2816 = vmul.f32 %v2707, %v2723
    %v2817 = vmul.f32 %v2707, %v2727
    %v2818 = vmul.f32 %v2707, %v2731
    %v2819 = vmul.f32 %v2707, %v2735
    %v2820 = vmul.f32 %v2707, %v2739
    %v2821 = vmul.f32 %v2707, %v2743
    %v2822 = vmul.f32 %v2707, %v2747
    %v2823 = vmul.f32 %v2707, %v2751
    %v2824 = vmul.f32 %v2707, %v2755
    %v2825 = vmul.f32 %v2707, %v2759
    %v2826 = vmul.f32 %v2707, %v2763
    %v2827 = vmul.f32 %v2707, %v2767
    %v2828 = vmul.f32 %v2707, %v2771
    %v2829 = vmul.f32 %v2707, %v2775
    %v2830 = vmul.f32 %v2707, %v2779
    %v2831 = vmul.f32 %v2707, %v2783
    %v2832 = vmul.f32 %v2711, %v2723
    %v2833 = vmul.f32 %v2711, %v2727
    %v2834 = vmul.f32 %v2711, %v2731
    %v2835 = vmul.f32 %v2711, %v2735
    %v2836 = vmul.f32 %v2711, %v2739
    %v2837 = vmul.f32 %v2711, %v2743
    %v2838 = vmul.f32 %v2711, %v2747
    %v2839 = vmul.f32 %v2711, %v2751
    %v2840 = vmul.f32 %v2711, %v2755
    %v2841 = vmul.f32 %v2711, %v2759
    %v2842 = vmul.f32 %v2711, %v2763
    %v2843 = vmul.f32 %v2711, %v2767
    %v2844 = vmul.f32 %v2711, %v2771
    %v2845 = vmul.f32 %v2711, %v2775
    %v2846 = vmul.f32 %v2711, %v2779
    %v2847 = vmul.f32 %v2711, %v2783
    %v2848 = vmul.f32 %v2715, %v2723
    %v2849 = vmul.f32 %v2715, %v2727
    %v2850 = vmul.f32 %v2715, %v2731
    %v2851 = vmul.f32 %v2715, %v2735
    %v2852 = vmul.f32 %v2715, %v2739
    %v2853 = vmul.f32 %v2715, %v2743
    %v2854 = vmul.f32 %v2715, %v2747
    %v2855 = vmul.f32 %v2715, %v2751
    %v2856 = vmul.f32 %v2715, %v2755
    %v2857 = vmul.f32 %v2715, %v2759
    %v2858 = vmul.f32 %v2715, %v2763
    %v2859 = vmul.f32 %v2715, %v2767
    %v2860 = vmul.f32 %v2715, %v2771
    %v2861 = vmul.f32 %v2715, %v2775
    %v2862 = vmul.f32 %v2715, %v2779
    %v2863 = vmul.f32 %v2715, %v2783
    %v2864 = vadd.f32 %v2636, %v2800
    %v2865 = vadd.f32 %v2637, %v2801
    %v2866 = vadd.f32 %v2638, %v2802
    %v2867 = vadd.f32 %v2639, %v2803
    %v2868 = vadd.f32 %v2640, %v2804
    %v2869 = vadd.f32 %v2641, %v2805
    %v2870 = vadd.f32 %v2642, %v2806
    %v2871 = vadd.f32 %v2643, %v2807
    %v2872 = vadd.f32 %v2644, %v2808
    %v2873 = vadd.f32 %v2645, %v2809
    %v2874 = vadd.f32 %v2646, %v2810
    %v2875 = vadd.f32 %v2647, %v2811
    %v2876 = vadd.f32 %v2648, %v2812
    %v2877 = vadd.f32 %v2649, %v2813
    %v2878 = vadd.f32 %v2650, %v2814
    %v2879 = vadd.f32 %v2651, %v2815
    %v2880 = vadd.f32 %v2652, %v2816
    %v2881 = vadd.f32 %v2653, %v2817
    %v2882 = vadd.f32 %v2654, %v2818
    %v2883 = vadd.f32 %v2655, %v2819
    %v2884 = vadd.f32 %v2656, %v2820
    %v2885 = vadd.f32 %v2657, %v2821
    %v2886 = vadd.f32 %v2658, %v2822
    %v2887 = vadd.f32 %v2659, %v2823
    %v2888 = vadd.f32 %v2660, %v2824
    %v2889 = vadd.f32 %v2661, %v2825
    %v2890 = vadd.f32 %v2662, %v2826
    %v2891 = vadd.f32 %v2663, %v2827
    %v2892 = vadd.f32 %v2664, %v2828
    %v2893 = vadd.f32 %v2665, %v2829
    %v2894 = vadd.f32 %v2666, %v2830
    %v2895 = vadd.f32 %v2667, %v2831
    %v2896 = vadd.f32 %v2668, %v2832
    %v2897 = vadd.f32 %v2669, %v2833
    %v2898 = vadd.f32 %v2670, %v2834
    %v2899 = vadd.f32 %v2671, %v2835
    %v2900 = vadd.f32 %v2672, %v2836
    %v2901 = vadd.f32 %v2673, %v2837
    %v2902 = vadd.f32 %v2674, %v2838
    %v2903 = vadd.f32 %v2675, %v2839
    %v2904 = vadd.f32 %v2676, %v2840
    %v2905 = vadd.f32 %v2677, %v2841
    %v2906 = vadd.f32 %v2678, %v2842
    %v2907 = vadd.f32 %v2679, %v2843
    %v2908 = vadd.f32 %v2680, %v2844
    %v2909 = vadd.f32 %v2681, %v2845
    %v2910 = vadd.f32 %v2682, %v2846
    %v2911 = vadd.f32 %v2683, %v2847
    %v2912 = vadd.f32 %v2684, %v2848
    %v2913 = vadd.f32 %v2685, %v2849
    %v2914 = vadd.f32 %v2686, %v2850
    %v2915 = vadd.f32 %v2687, %v2851
    %v2916 = vadd.f32 %v2688, %v2852
    %v2917 = vadd.f32 %v2689, %v2853
    %v2918 = vadd.f32 %v2690, %v2854
    %v2919 = vadd.f32 %v2691, %v2855
    %v2920 = vadd.f32 %v2692, %v2856
    %v2921 = vadd.f32 %v2693, %v2857
    %v2922 = vadd.f32 %v2694, %v2858
    %v2923 = vadd.f32 %v2695, %v2859
    %v2924 = vadd.f32 %v2696, %v2860
    %v2925 = vadd.f32 %v2697, %v2861
    %v2926 = vadd.f32 %v2698, %v2862
    %v2927 = vadd.f32 %v2699, %v2863
    %v2928 = vlaneseq
    %v2929 = vshrl.u32 %v2928, 7
    %v2930 = vsub.s32 5, %v2929
    %v2931 = vrot.slane %v202, %v2930
    %v2932 = vlaneseq
    %v2933 = vshrl.u32 %v2932, 7
    %v2934 = vsub.s32 5, %v2933
    %v2935 = vrot.slane %v203, %v2934
    %v2936 = vlaneseq
    %v2937 = vshrl.u32 %v2936, 7
    %v2938 = vsub.s32 5, %v2937
    %v2939 = vrot.slane %v204, %v2938
    %v2940 = vlaneseq
    %v2941 = vshrl.u32 %v2940, 7
    %v2942 = vsub.s32 5, %v2941
    %v2943 = vrot.slane %v205, %v2942
    %v2944 = vlaneseq
    %v2945 = vshrl.u32 %v2944, 7
    %v2946 = vsub.s32 5, %v2945
    %v2947 = vrot.slane %v1851, %v2946
    %2950 = vbcast.lane.b32.xlu0 %v2947, 256
    %v2951 = vpop.permute.xlu0 %2950
    %s2953 = sor.u32 256, 8
    %2954 = vbcast.lane.b32.xlu0 %v2947, %s2953
    %v2955 = vpop.permute.xlu0 %2954
    %s2957 = sor.u32 256, 16
    %2958 = vbcast.lane.b32.xlu0 %v2947, %s2957
    %v2959 = vpop.permute.xlu0 %2958
    %s2961 = sor.u32 256, 24
    %2962 = vbcast.lane.b32.xlu0 %v2947, %s2961
    %v2963 = vpop.permute.xlu0 %2962
    %s2965 = sor.u32 256, 32
    %2966 = vbcast.lane.b32.xlu0 %v2947, %s2965
    %v2967 = vpop.permute.xlu0 %2966
    %s2969 = sor.u32 256, 40
    %2970 = vbcast.lane.b32.xlu0 %v2947, %s2969
    %v2971 = vpop.permute.xlu0 %2970
    %s2973 = sor.u32 256, 48
    %2974 = vbcast.lane.b32.xlu0 %v2947, %s2973
    %v2975 = vpop.permute.xlu0 %2974
    %s2977 = sor.u32 256, 56
    %2978 = vbcast.lane.b32.xlu0 %v2947, %s2977
    %v2979 = vpop.permute.xlu0 %2978
    %s2981 = sor.u32 256, 64
    %2982 = vbcast.lane.b32.xlu0 %v2947, %s2981
    %v2983 = vpop.permute.xlu0 %2982
    %s2985 = sor.u32 256, 72
    %2986 = vbcast.lane.b32.xlu0 %v2947, %s2985
    %v2987 = vpop.permute.xlu0 %2986
    %s2989 = sor.u32 256, 80
    %2990 = vbcast.lane.b32.xlu0 %v2947, %s2989
    %v2991 = vpop.permute.xlu0 %2990
    %s2993 = sor.u32 256, 88
    %2994 = vbcast.lane.b32.xlu0 %v2947, %s2993
    %v2995 = vpop.permute.xlu0 %2994
    %s2997 = sor.u32 256, 96
    %2998 = vbcast.lane.b32.xlu0 %v2947, %s2997
    %v2999 = vpop.permute.xlu0 %2998
    %s3001 = sor.u32 256, 104
    %3002 = vbcast.lane.b32.xlu0 %v2947, %s3001
    %v3003 = vpop.permute.xlu0 %3002
    %s3005 = sor.u32 256, 112
    %3006 = vbcast.lane.b32.xlu0 %v2947, %s3005
    %v3007 = vpop.permute.xlu0 %3006
    %s3009 = sor.u32 256, 120
    %3010 = vbcast.lane.b32.xlu0 %v2947, %s3009
    %v3011 = vpop.permute.xlu0 %3010
    %v3028 = vmul.f32 %v2931, %v2951
    %v3029 = vmul.f32 %v2931, %v2955
    %v3030 = vmul.f32 %v2931, %v2959
    %v3031 = vmul.f32 %v2931, %v2963
    %v3032 = vmul.f32 %v2931, %v2967
    %v3033 = vmul.f32 %v2931, %v2971
    %v3034 = vmul.f32 %v2931, %v2975
    %v3035 = vmul.f32 %v2931, %v2979
    %v3036 = vmul.f32 %v2931, %v2983
    %v3037 = vmul.f32 %v2931, %v2987
    %v3038 = vmul.f32 %v2931, %v2991
    %v3039 = vmul.f32 %v2931, %v2995
    %v3040 = vmul.f32 %v2931, %v2999
    %v3041 = vmul.f32 %v2931, %v3003
    %v3042 = vmul.f32 %v2931, %v3007
    %v3043 = vmul.f32 %v2931, %v3011
    %v3044 = vmul.f32 %v2935, %v2951
    %v3045 = vmul.f32 %v2935, %v2955
    %v3046 = vmul.f32 %v2935, %v2959
    %v3047 = vmul.f32 %v2935, %v2963
    %v3048 = vmul.f32 %v2935, %v2967
    %v3049 = vmul.f32 %v2935, %v2971
    %v3050 = vmul.f32 %v2935, %v2975
    %v3051 = vmul.f32 %v2935, %v2979
    %v3052 = vmul.f32 %v2935, %v2983
    %v3053 = vmul.f32 %v2935, %v2987
    %v3054 = vmul.f32 %v2935, %v2991
    %v3055 = vmul.f32 %v2935, %v2995
    %v3056 = vmul.f32 %v2935, %v2999
    %v3057 = vmul.f32 %v2935, %v3003
    %v3058 = vmul.f32 %v2935, %v3007
    %v3059 = vmul.f32 %v2935, %v3011
    %v3060 = vmul.f32 %v2939, %v2951
    %v3061 = vmul.f32 %v2939, %v2955
    %v3062 = vmul.f32 %v2939, %v2959
    %v3063 = vmul.f32 %v2939, %v2963
    %v3064 = vmul.f32 %v2939, %v2967
    %v3065 = vmul.f32 %v2939, %v2971
    %v3066 = vmul.f32 %v2939, %v2975
    %v3067 = vmul.f32 %v2939, %v2979
    %v3068 = vmul.f32 %v2939, %v2983
    %v3069 = vmul.f32 %v2939, %v2987
    %v3070 = vmul.f32 %v2939, %v2991
    %v3071 = vmul.f32 %v2939, %v2995
    %v3072 = vmul.f32 %v2939, %v2999
    %v3073 = vmul.f32 %v2939, %v3003
    %v3074 = vmul.f32 %v2939, %v3007
    %v3075 = vmul.f32 %v2939, %v3011
    %v3076 = vmul.f32 %v2943, %v2951
    %v3077 = vmul.f32 %v2943, %v2955
    %v3078 = vmul.f32 %v2943, %v2959
    %v3079 = vmul.f32 %v2943, %v2963
    %v3080 = vmul.f32 %v2943, %v2967
    %v3081 = vmul.f32 %v2943, %v2971
    %v3082 = vmul.f32 %v2943, %v2975
    %v3083 = vmul.f32 %v2943, %v2979
    %v3084 = vmul.f32 %v2943, %v2983
    %v3085 = vmul.f32 %v2943, %v2987
    %v3086 = vmul.f32 %v2943, %v2991
    %v3087 = vmul.f32 %v2943, %v2995
    %v3088 = vmul.f32 %v2943, %v2999
    %v3089 = vmul.f32 %v2943, %v3003
    %v3090 = vmul.f32 %v2943, %v3007
    %v3091 = vmul.f32 %v2943, %v3011
    %v3092 = vadd.f32 %v2864, %v3028
    %v3093 = vadd.f32 %v2865, %v3029
    %v3094 = vadd.f32 %v2866, %v3030
    %v3095 = vadd.f32 %v2867, %v3031
    %v3096 = vadd.f32 %v2868, %v3032
    %v3097 = vadd.f32 %v2869, %v3033
    %v3098 = vadd.f32 %v2870, %v3034
    %v3099 = vadd.f32 %v2871, %v3035
    %v3100 = vadd.f32 %v2872, %v3036
    %v3101 = vadd.f32 %v2873, %v3037
    %v3102 = vadd.f32 %v2874, %v3038
    %v3103 = vadd.f32 %v2875, %v3039
    %v3104 = vadd.f32 %v2876, %v3040
    %v3105 = vadd.f32 %v2877, %v3041
    %v3106 = vadd.f32 %v2878, %v3042
    %v3107 = vadd.f32 %v2879, %v3043
    %v3108 = vadd.f32 %v2880, %v3044
    %v3109 = vadd.f32 %v2881, %v3045
    %v3110 = vadd.f32 %v2882, %v3046
    %v3111 = vadd.f32 %v2883, %v3047
    %v3112 = vadd.f32 %v2884, %v3048
    %v3113 = vadd.f32 %v2885, %v3049
    %v3114 = vadd.f32 %v2886, %v3050
    %v3115 = vadd.f32 %v2887, %v3051
    %v3116 = vadd.f32 %v2888, %v3052
    %v3117 = vadd.f32 %v2889, %v3053
    %v3118 = vadd.f32 %v2890, %v3054
    %v3119 = vadd.f32 %v2891, %v3055
    %v3120 = vadd.f32 %v2892, %v3056
    %v3121 = vadd.f32 %v2893, %v3057
    %v3122 = vadd.f32 %v2894, %v3058
    %v3123 = vadd.f32 %v2895, %v3059
    %v3124 = vadd.f32 %v2896, %v3060
    %v3125 = vadd.f32 %v2897, %v3061
    %v3126 = vadd.f32 %v2898, %v3062
    %v3127 = vadd.f32 %v2899, %v3063
    %v3128 = vadd.f32 %v2900, %v3064
    %v3129 = vadd.f32 %v2901, %v3065
    %v3130 = vadd.f32 %v2902, %v3066
    %v3131 = vadd.f32 %v2903, %v3067
    %v3132 = vadd.f32 %v2904, %v3068
    %v3133 = vadd.f32 %v2905, %v3069
    %v3134 = vadd.f32 %v2906, %v3070
    %v3135 = vadd.f32 %v2907, %v3071
    %v3136 = vadd.f32 %v2908, %v3072
    %v3137 = vadd.f32 %v2909, %v3073
    %v3138 = vadd.f32 %v2910, %v3074
    %v3139 = vadd.f32 %v2911, %v3075
    %v3140 = vadd.f32 %v2912, %v3076
    %v3141 = vadd.f32 %v2913, %v3077
    %v3142 = vadd.f32 %v2914, %v3078
    %v3143 = vadd.f32 %v2915, %v3079
    %v3144 = vadd.f32 %v2916, %v3080
    %v3145 = vadd.f32 %v2917, %v3081
    %v3146 = vadd.f32 %v2918, %v3082
    %v3147 = vadd.f32 %v2919, %v3083
    %v3148 = vadd.f32 %v2920, %v3084
    %v3149 = vadd.f32 %v2921, %v3085
    %v3150 = vadd.f32 %v2922, %v3086
    %v3151 = vadd.f32 %v2923, %v3087
    %v3152 = vadd.f32 %v2924, %v3088
    %v3153 = vadd.f32 %v2925, %v3089
    %v3154 = vadd.f32 %v2926, %v3090
    %v3155 = vadd.f32 %v2927, %v3091
    %v3156 = vld [vmem:[%s8] sm:$0x1]
    %v3158 = vlaneseq
    %v3159 = vshrl.u32 %v3158, 7
    %v3160 = vsub.s32 0, %v3159
    %v3161 = vrot.slane %v3156, %v3160
    %3163 = vbcast.lane.b32.xlu0 %v3161, 256
    %v3164 = vpop.permute.xlu0 %3163
    %s3166 = sor.u32 256, 8
    %3167 = vbcast.lane.b32.xlu0 %v3161, %s3166
    %v3168 = vpop.permute.xlu0 %3167
    %s3170 = sor.u32 256, 16
    %3171 = vbcast.lane.b32.xlu0 %v3161, %s3170
    %v3172 = vpop.permute.xlu0 %3171
    %s3174 = sor.u32 256, 24
    %3175 = vbcast.lane.b32.xlu0 %v3161, %s3174
    %v3176 = vpop.permute.xlu0 %3175
    %s3178 = sor.u32 256, 32
    %3179 = vbcast.lane.b32.xlu0 %v3161, %s3178
    %v3180 = vpop.permute.xlu0 %3179
    %s3182 = sor.u32 256, 40
    %3183 = vbcast.lane.b32.xlu0 %v3161, %s3182
    %v3184 = vpop.permute.xlu0 %3183
    %s3186 = sor.u32 256, 48
    %3187 = vbcast.lane.b32.xlu0 %v3161, %s3186
    %v3188 = vpop.permute.xlu0 %3187
    %s3190 = sor.u32 256, 56
    %3191 = vbcast.lane.b32.xlu0 %v3161, %s3190
    %v3192 = vpop.permute.xlu0 %3191
    %s3194 = sor.u32 256, 64
    %3195 = vbcast.lane.b32.xlu0 %v3161, %s3194
    %v3196 = vpop.permute.xlu0 %3195
    %s3198 = sor.u32 256, 72
    %3199 = vbcast.lane.b32.xlu0 %v3161, %s3198
    %v3200 = vpop.permute.xlu0 %3199
    %s3202 = sor.u32 256, 80
    %3203 = vbcast.lane.b32.xlu0 %v3161, %s3202
    %v3204 = vpop.permute.xlu0 %3203
    %s3206 = sor.u32 256, 88
    %3207 = vbcast.lane.b32.xlu0 %v3161, %s3206
    %v3208 = vpop.permute.xlu0 %3207
    %s3210 = sor.u32 256, 96
    %3211 = vbcast.lane.b32.xlu0 %v3161, %s3210
    %v3212 = vpop.permute.xlu0 %3211
    %s3214 = sor.u32 256, 104
    %3215 = vbcast.lane.b32.xlu0 %v3161, %s3214
    %v3216 = vpop.permute.xlu0 %3215
    %s3218 = sor.u32 256, 112
    %3219 = vbcast.lane.b32.xlu0 %v3161, %s3218
    %v3220 = vpop.permute.xlu0 %3219
    %s3222 = sor.u32 256, 120
    %3223 = vbcast.lane.b32.xlu0 %v3161, %s3222
    %v3224 = vpop.permute.xlu0 %3223
    %v3241 = vadd.f32 %v3092, %v3164
    %v3242 = vadd.f32 %v3093, %v3168
    %v3243 = vadd.f32 %v3094, %v3172
    %v3244 = vadd.f32 %v3095, %v3176
    %v3245 = vadd.f32 %v3096, %v3180
    %v3246 = vadd.f32 %v3097, %v3184
    %v3247 = vadd.f32 %v3098, %v3188
    %v3248 = vadd.f32 %v3099, %v3192
    %v3249 = vadd.f32 %v3100, %v3196
    %v3250 = vadd.f32 %v3101, %v3200
    %v3251 = vadd.f32 %v3102, %v3204
    %v3252 = vadd.f32 %v3103, %v3208
    %v3253 = vadd.f32 %v3104, %v3212
    %v3254 = vadd.f32 %v3105, %v3216
    %v3255 = vadd.f32 %v3106, %v3220
    %v3256 = vadd.f32 %v3107, %v3224
    %v3257 = vadd.f32 %v3108, %v3164
    %v3258 = vadd.f32 %v3109, %v3168
    %v3259 = vadd.f32 %v3110, %v3172
    %v3260 = vadd.f32 %v3111, %v3176
    %v3261 = vadd.f32 %v3112, %v3180
    %v3262 = vadd.f32 %v3113, %v3184
    %v3263 = vadd.f32 %v3114, %v3188
    %v3264 = vadd.f32 %v3115, %v3192
    %v3265 = vadd.f32 %v3116, %v3196
    %v3266 = vadd.f32 %v3117, %v3200
    %v3267 = vadd.f32 %v3118, %v3204
    %v3268 = vadd.f32 %v3119, %v3208
    %v3269 = vadd.f32 %v3120, %v3212
    %v3270 = vadd.f32 %v3121, %v3216
    %v3271 = vadd.f32 %v3122, %v3220
    %v3272 = vadd.f32 %v3123, %v3224
    %v3273 = vadd.f32 %v3124, %v3164
    %v3274 = vadd.f32 %v3125, %v3168
    %v3275 = vadd.f32 %v3126, %v3172
    %v3276 = vadd.f32 %v3127, %v3176
    %v3277 = vadd.f32 %v3128, %v3180
    %v3278 = vadd.f32 %v3129, %v3184
    %v3279 = vadd.f32 %v3130, %v3188
    %v3280 = vadd.f32 %v3131, %v3192
    %v3281 = vadd.f32 %v3132, %v3196
    %v3282 = vadd.f32 %v3133, %v3200
    %v3283 = vadd.f32 %v3134, %v3204
    %v3284 = vadd.f32 %v3135, %v3208
    %v3285 = vadd.f32 %v3136, %v3212
    %v3286 = vadd.f32 %v3137, %v3216
    %v3287 = vadd.f32 %v3138, %v3220
    %v3288 = vadd.f32 %v3139, %v3224
    %v3289 = vadd.f32 %v3140, %v3164
    %v3290 = vadd.f32 %v3141, %v3168
    %v3291 = vadd.f32 %v3142, %v3172
    %v3292 = vadd.f32 %v3143, %v3176
    %v3293 = vadd.f32 %v3144, %v3180
    %v3294 = vadd.f32 %v3145, %v3184
    %v3295 = vadd.f32 %v3146, %v3188
    %v3296 = vadd.f32 %v3147, %v3192
    %v3297 = vadd.f32 %v3148, %v3196
    %v3298 = vadd.f32 %v3149, %v3200
    %v3299 = vadd.f32 %v3150, %v3204
    %v3300 = vadd.f32 %v3151, %v3208
    %v3301 = vadd.f32 %v3152, %v3212
    %v3302 = vadd.f32 %v3153, %v3216
    %v3303 = vadd.f32 %v3154, %v3220
    %v3304 = vadd.f32 %v3155, %v3224
    %v3305 = vld [vmem:[#allocation3] sm:$0x1]
    %v3307 = vlaneseq
    %v3308 = vshrl.u32 %v3307, 7
    %v3309 = vsub.s32 0, %v3308
    %v3310 = vrot.slane %v3305, %v3309
    %3312 = vbcast.lane.b32.xlu0 %v3310, 256
    %v3313 = vpop.permute.xlu0 %3312
    %s3315 = sor.u32 256, 8
    %3316 = vbcast.lane.b32.xlu0 %v3310, %s3315
    %v3317 = vpop.permute.xlu0 %3316
    %s3319 = sor.u32 256, 16
    %3320 = vbcast.lane.b32.xlu0 %v3310, %s3319
    %v3321 = vpop.permute.xlu0 %3320
    %s3323 = sor.u32 256, 24
    %3324 = vbcast.lane.b32.xlu0 %v3310, %s3323
    %v3325 = vpop.permute.xlu0 %3324
    %s3327 = sor.u32 256, 32
    %3328 = vbcast.lane.b32.xlu0 %v3310, %s3327
    %v3329 = vpop.permute.xlu0 %3328
    %s3331 = sor.u32 256, 40
    %3332 = vbcast.lane.b32.xlu0 %v3310, %s3331
    %v3333 = vpop.permute.xlu0 %3332
    %s3335 = sor.u32 256, 48
    %3336 = vbcast.lane.b32.xlu0 %v3310, %s3335
    %v3337 = vpop.permute.xlu0 %3336
    %s3339 = sor.u32 256, 56
    %3340 = vbcast.lane.b32.xlu0 %v3310, %s3339
    %v3341 = vpop.permute.xlu0 %3340
    %s3343 = sor.u32 256, 64
    %3344 = vbcast.lane.b32.xlu0 %v3310, %s3343
    %v3345 = vpop.permute.xlu0 %3344
    %s3347 = sor.u32 256, 72
    %3348 = vbcast.lane.b32.xlu0 %v3310, %s3347
    %v3349 = vpop.permute.xlu0 %3348
    %s3351 = sor.u32 256, 80
    %3352 = vbcast.lane.b32.xlu0 %v3310, %s3351
    %v3353 = vpop.permute.xlu0 %3352
    %s3355 = sor.u32 256, 88
    %3356 = vbcast.lane.b32.xlu0 %v3310, %s3355
    %v3357 = vpop.permute.xlu0 %3356
    %s3359 = sor.u32 256, 96
    %3360 = vbcast.lane.b32.xlu0 %v3310, %s3359
    %v3361 = vpop.permute.xlu0 %3360
    %s3363 = sor.u32 256, 104
    %3364 = vbcast.lane.b32.xlu0 %v3310, %s3363
    %v3365 = vpop.permute.xlu0 %3364
    %s3367 = sor.u32 256, 112
    %3368 = vbcast.lane.b32.xlu0 %v3310, %s3367
    %v3369 = vpop.permute.xlu0 %3368
    %s3371 = sor.u32 256, 120
    %3372 = vbcast.lane.b32.xlu0 %v3310, %s3371
    %v3373 = vpop.permute.xlu0 %3372
    %v3390 = vadd.f32 %v3241, %v3313
    %v3391 = vadd.f32 %v3242, %v3317
    %v3392 = vadd.f32 %v3243, %v3321
    %v3393 = vadd.f32 %v3244, %v3325
    %v3394 = vadd.f32 %v3245, %v3329
    %v3395 = vadd.f32 %v3246, %v3333
    %v3396 = vadd.f32 %v3247, %v3337
    %v3397 = vadd.f32 %v3248, %v3341
    %v3398 = vadd.f32 %v3249, %v3345
    %v3399 = vadd.f32 %v3250, %v3349
    %v3400 = vadd.f32 %v3251, %v3353
    %v3401 = vadd.f32 %v3252, %v3357
    %v3402 = vadd.f32 %v3253, %v3361
    %v3403 = vadd.f32 %v3254, %v3365
    %v3404 = vadd.f32 %v3255, %v3369
    %v3405 = vadd.f32 %v3256, %v3373
    %v3406 = vadd.f32 %v3257, %v3313
    %v3407 = vadd.f32 %v3258, %v3317
    %v3408 = vadd.f32 %v3259, %v3321
    %v3409 = vadd.f32 %v3260, %v3325
    %v3410 = vadd.f32 %v3261, %v3329
    %v3411 = vadd.f32 %v3262, %v3333
    %v3412 = vadd.f32 %v3263, %v3337
    %v3413 = vadd.f32 %v3264, %v3341
    %v3414 = vadd.f32 %v3265, %v3345
    %v3415 = vadd.f32 %v3266, %v3349
    %v3416 = vadd.f32 %v3267, %v3353
    %v3417 = vadd.f32 %v3268, %v3357
    %v3418 = vadd.f32 %v3269, %v3361
    %v3419 = vadd.f32 %v3270, %v3365
    %v3420 = vadd.f32 %v3271, %v3369
    %v3421 = vadd.f32 %v3272, %v3373
    %v3422 = vadd.f32 %v3273, %v3313
    %v3423 = vadd.f32 %v3274, %v3317
    %v3424 = vadd.f32 %v3275, %v3321
    %v3425 = vadd.f32 %v3276, %v3325
    %v3426 = vadd.f32 %v3277, %v3329
    %v3427 = vadd.f32 %v3278, %v3333
    %v3428 = vadd.f32 %v3279, %v3337
    %v3429 = vadd.f32 %v3280, %v3341
    %v3430 = vadd.f32 %v3281, %v3345
    %v3431 = vadd.f32 %v3282, %v3349
    %v3432 = vadd.f32 %v3283, %v3353
    %v3433 = vadd.f32 %v3284, %v3357
    %v3434 = vadd.f32 %v3285, %v3361
    %v3435 = vadd.f32 %v3286, %v3365
    %v3436 = vadd.f32 %v3287, %v3369
    %v3437 = vadd.f32 %v3288, %v3373
    %v3438 = vadd.f32 %v3289, %v3313
    %v3439 = vadd.f32 %v3290, %v3317
    %v3440 = vadd.f32 %v3291, %v3321
    %v3441 = vadd.f32 %v3292, %v3325
    %v3442 = vadd.f32 %v3293, %v3329
    %v3443 = vadd.f32 %v3294, %v3333
    %v3444 = vadd.f32 %v3295, %v3337
    %v3445 = vadd.f32 %v3296, %v3341
    %v3446 = vadd.f32 %v3297, %v3345
    %v3447 = vadd.f32 %v3298, %v3349
    %v3448 = vadd.f32 %v3299, %v3353
    %v3449 = vadd.f32 %v3300, %v3357
    %v3450 = vadd.f32 %v3301, %v3361
    %v3451 = vadd.f32 %v3302, %v3365
    %v3452 = vadd.f32 %v3303, %v3369
    %v3453 = vadd.f32 %v3304, %v3373
    %v3454 = vld [vmem:[%s11] sm:$0x77]
    %v3455 = vld [vmem:[%s11 + $0x8] sm:$0x77]
    %v3456 = vlaneseq
    %v3457 = vshrl.u32 %v3456, 7
    %v3458 = vsub.s32 0, %v3457
    %v3459 = vrot.slane %v244, %v3458
    %v3460 = vlaneseq
    %v3461 = vshrl.u32 %v3460, 7
    %v3462 = vsub.s32 0, %v3461
    %v3463 = vrot.slane %v245, %v3462
    %v3464 = vlaneseq
    %v3465 = vshrl.u32 %v3464, 7
    %v3466 = vsub.s32 0, %v3465
    %v3467 = vrot.slane %v246, %v3466
    %v3468 = vlaneseq
    %v3469 = vshrl.u32 %v3468, 7
    %v3470 = vsub.s32 0, %v3469
    %v3471 = vrot.slane %v247, %v3470
    %v3474 = vlaneseq
    %v3475 = vshrl.u32 %v3474, 7
    %v3476 = vsub.s32 0, %v3475
    %v3477 = vrot.slane %v3454, %v3476
    %v3478 = vlaneseq
    %v3479 = vshrl.u32 %v3478, 7
    %v3480 = vsub.s32 4, %v3479
    %v3481 = vrot.slane %v3454, %v3480
    %v3482 = vlaneseq
    %v3483 = vshrl.u32 %v3482, 7
    %v3484 = vsub.s32 0, %v3483
    %v3485 = vrot.slane %v3455, %v3484
    %v3486 = vlaneseq
    %v3487 = vshrl.u32 %v3486, 7
    %v3488 = vsub.s32 4, %v3487
    %v3489 = vrot.slane %v3455, %v3488
    %v3494 = vlaneseq
    %v3495 = vshrl.u32 %v3494, 7
    %v3496 = vsub.s32 0, %v3495
    %v3497 = vrot.slane %v3477, %v3496
    %v3498 = vlaneseq
    %v3499 = vshrl.u32 %v3498, 7
    %v3500 = vsub.s32 0, %v3499
    %v3501 = vrot.slane %v3481, %v3500
    %v3502 = vlaneseq
    %v3503 = vshrl.u32 %v3502, 7
    %v3504 = vsub.s32 0, %v3503
    %v3505 = vrot.slane %v3485, %v3504
    %v3506 = vlaneseq
    %v3507 = vshrl.u32 %v3506, 7
    %v3508 = vsub.s32 0, %v3507
    %v3509 = vrot.slane %v3489, %v3508
    %3515 = vbcast.lane.b32.xlu0 %v3497, 256
    %v3516 = vpop.permute.xlu0 %3515
    %s3518 = sor.u32 256, 8
    %3519 = vbcast.lane.b32.xlu0 %v3497, %s3518
    %v3520 = vpop.permute.xlu0 %3519
    %s3522 = sor.u32 256, 16
    %3523 = vbcast.lane.b32.xlu0 %v3497, %s3522
    %v3524 = vpop.permute.xlu0 %3523
    %s3526 = sor.u32 256, 24
    %3527 = vbcast.lane.b32.xlu0 %v3497, %s3526
    %v3528 = vpop.permute.xlu0 %3527
    %s3530 = sor.u32 256, 32
    %3531 = vbcast.lane.b32.xlu0 %v3497, %s3530
    %v3532 = vpop.permute.xlu0 %3531
    %s3534 = sor.u32 256, 40
    %3535 = vbcast.lane.b32.xlu0 %v3497, %s3534
    %v3536 = vpop.permute.xlu0 %3535
    %s3538 = sor.u32 256, 48
    %3539 = vbcast.lane.b32.xlu0 %v3497, %s3538
    %v3540 = vpop.permute.xlu0 %3539
    %s3542 = sor.u32 256, 56
    %3543 = vbcast.lane.b32.xlu0 %v3497, %s3542
    %v3544 = vpop.permute.xlu0 %3543
    %s3546 = sor.u32 256, 64
    %3547 = vbcast.lane.b32.xlu0 %v3497, %s3546
    %v3548 = vpop.permute.xlu0 %3547
    %s3550 = sor.u32 256, 72
    %3551 = vbcast.lane.b32.xlu0 %v3497, %s3550
    %v3552 = vpop.permute.xlu0 %3551
    %s3554 = sor.u32 256, 80
    %3555 = vbcast.lane.b32.xlu0 %v3497, %s3554
    %v3556 = vpop.permute.xlu0 %3555
    %s3558 = sor.u32 256, 88
    %3559 = vbcast.lane.b32.xlu0 %v3497, %s3558
    %v3560 = vpop.permute.xlu0 %3559
    %s3562 = sor.u32 256, 96
    %3563 = vbcast.lane.b32.xlu0 %v3497, %s3562
    %v3564 = vpop.permute.xlu0 %3563
    %s3566 = sor.u32 256, 104
    %3567 = vbcast.lane.b32.xlu0 %v3497, %s3566
    %v3568 = vpop.permute.xlu0 %3567
    %s3570 = sor.u32 256, 112
    %3571 = vbcast.lane.b32.xlu0 %v3497, %s3570
    %v3572 = vpop.permute.xlu0 %3571
    %s3574 = sor.u32 256, 120
    %3575 = vbcast.lane.b32.xlu0 %v3497, %s3574
    %v3576 = vpop.permute.xlu0 %3575
    %3578 = vbcast.lane.b32.xlu0 %v3501, 256
    %v3579 = vpop.permute.xlu0 %3578
    %s3581 = sor.u32 256, 8
    %3582 = vbcast.lane.b32.xlu0 %v3501, %s3581
    %v3583 = vpop.permute.xlu0 %3582
    %s3585 = sor.u32 256, 16
    %3586 = vbcast.lane.b32.xlu0 %v3501, %s3585
    %v3587 = vpop.permute.xlu0 %3586
    %s3589 = sor.u32 256, 24
    %3590 = vbcast.lane.b32.xlu0 %v3501, %s3589
    %v3591 = vpop.permute.xlu0 %3590
    %s3593 = sor.u32 256, 32
    %3594 = vbcast.lane.b32.xlu0 %v3501, %s3593
    %v3595 = vpop.permute.xlu0 %3594
    %s3597 = sor.u32 256, 40
    %3598 = vbcast.lane.b32.xlu0 %v3501, %s3597
    %v3599 = vpop.permute.xlu0 %3598
    %s3601 = sor.u32 256, 48
    %3602 = vbcast.lane.b32.xlu0 %v3501, %s3601
    %v3603 = vpop.permute.xlu0 %3602
    %s3605 = sor.u32 256, 56
    %3606 = vbcast.lane.b32.xlu0 %v3501, %s3605
    %v3607 = vpop.permute.xlu0 %3606
    %s3609 = sor.u32 256, 64
    %3610 = vbcast.lane.b32.xlu0 %v3501, %s3609
    %v3611 = vpop.permute.xlu0 %3610
    %s3613 = sor.u32 256, 72
    %3614 = vbcast.lane.b32.xlu0 %v3501, %s3613
    %v3615 = vpop.permute.xlu0 %3614
    %s3617 = sor.u32 256, 80
    %3618 = vbcast.lane.b32.xlu0 %v3501, %s3617
    %v3619 = vpop.permute.xlu0 %3618
    %s3621 = sor.u32 256, 88
    %3622 = vbcast.lane.b32.xlu0 %v3501, %s3621
    %v3623 = vpop.permute.xlu0 %3622
    %s3625 = sor.u32 256, 96
    %3626 = vbcast.lane.b32.xlu0 %v3501, %s3625
    %v3627 = vpop.permute.xlu0 %3626
    %s3629 = sor.u32 256, 104
    %3630 = vbcast.lane.b32.xlu0 %v3501, %s3629
    %v3631 = vpop.permute.xlu0 %3630
    %s3633 = sor.u32 256, 112
    %3634 = vbcast.lane.b32.xlu0 %v3501, %s3633
    %v3635 = vpop.permute.xlu0 %3634
    %s3637 = sor.u32 256, 120
    %3638 = vbcast.lane.b32.xlu0 %v3501, %s3637
    %v3639 = vpop.permute.xlu0 %3638
    %3641 = vbcast.lane.b32.xlu0 %v3505, 256
    %v3642 = vpop.permute.xlu0 %3641
    %s3644 = sor.u32 256, 8
    %3645 = vbcast.lane.b32.xlu0 %v3505, %s3644
    %v3646 = vpop.permute.xlu0 %3645
    %s3648 = sor.u32 256, 16
    %3649 = vbcast.lane.b32.xlu0 %v3505, %s3648
    %v3650 = vpop.permute.xlu0 %3649
    %s3652 = sor.u32 256, 24
    %3653 = vbcast.lane.b32.xlu0 %v3505, %s3652
    %v3654 = vpop.permute.xlu0 %3653
    %s3656 = sor.u32 256, 32
    %3657 = vbcast.lane.b32.xlu0 %v3505, %s3656
    %v3658 = vpop.permute.xlu0 %3657
    %s3660 = sor.u32 256, 40
    %3661 = vbcast.lane.b32.xlu0 %v3505, %s3660
    %v3662 = vpop.permute.xlu0 %3661
    %s3664 = sor.u32 256, 48
    %3665 = vbcast.lane.b32.xlu0 %v3505, %s3664
    %v3666 = vpop.permute.xlu0 %3665
    %s3668 = sor.u32 256, 56
    %3669 = vbcast.lane.b32.xlu0 %v3505, %s3668
    %v3670 = vpop.permute.xlu0 %3669
    %s3672 = sor.u32 256, 64
    %3673 = vbcast.lane.b32.xlu0 %v3505, %s3672
    %v3674 = vpop.permute.xlu0 %3673
    %s3676 = sor.u32 256, 72
    %3677 = vbcast.lane.b32.xlu0 %v3505, %s3676
    %v3678 = vpop.permute.xlu0 %3677
    %s3680 = sor.u32 256, 80
    %3681 = vbcast.lane.b32.xlu0 %v3505, %s3680
    %v3682 = vpop.permute.xlu0 %3681
    %s3684 = sor.u32 256, 88
    %3685 = vbcast.lane.b32.xlu0 %v3505, %s3684
    %v3686 = vpop.permute.xlu0 %3685
    %s3688 = sor.u32 256, 96
    %3689 = vbcast.lane.b32.xlu0 %v3505, %s3688
    %v3690 = vpop.permute.xlu0 %3689
    %s3692 = sor.u32 256, 104
    %3693 = vbcast.lane.b32.xlu0 %v3505, %s3692
    %v3694 = vpop.permute.xlu0 %3693
    %s3696 = sor.u32 256, 112
    %3697 = vbcast.lane.b32.xlu0 %v3505, %s3696
    %v3698 = vpop.permute.xlu0 %3697
    %s3700 = sor.u32 256, 120
    %3701 = vbcast.lane.b32.xlu0 %v3505, %s3700
    %v3702 = vpop.permute.xlu0 %3701
    %3704 = vbcast.lane.b32.xlu0 %v3509, 256
    %v3705 = vpop.permute.xlu0 %3704
    %s3707 = sor.u32 256, 8
    %3708 = vbcast.lane.b32.xlu0 %v3509, %s3707
    %v3709 = vpop.permute.xlu0 %3708
    %s3711 = sor.u32 256, 16
    %3712 = vbcast.lane.b32.xlu0 %v3509, %s3711
    %v3713 = vpop.permute.xlu0 %3712
    %s3715 = sor.u32 256, 24
    %3716 = vbcast.lane.b32.xlu0 %v3509, %s3715
    %v3717 = vpop.permute.xlu0 %3716
    %s3719 = sor.u32 256, 32
    %3720 = vbcast.lane.b32.xlu0 %v3509, %s3719
    %v3721 = vpop.permute.xlu0 %3720
    %s3723 = sor.u32 256, 40
    %3724 = vbcast.lane.b32.xlu0 %v3509, %s3723
    %v3725 = vpop.permute.xlu0 %3724
    %s3727 = sor.u32 256, 48
    %3728 = vbcast.lane.b32.xlu0 %v3509, %s3727
    %v3729 = vpop.permute.xlu0 %3728
    %s3731 = sor.u32 256, 56
    %3732 = vbcast.lane.b32.xlu0 %v3509, %s3731
    %v3733 = vpop.permute.xlu0 %3732
    %s3735 = sor.u32 256, 64
    %3736 = vbcast.lane.b32.xlu0 %v3509, %s3735
    %v3737 = vpop.permute.xlu0 %3736
    %s3739 = sor.u32 256, 72
    %3740 = vbcast.lane.b32.xlu0 %v3509, %s3739
    %v3741 = vpop.permute.xlu0 %3740
    %s3743 = sor.u32 256, 80
    %3744 = vbcast.lane.b32.xlu0 %v3509, %s3743
    %v3745 = vpop.permute.xlu0 %3744
    %s3747 = sor.u32 256, 88
    %3748 = vbcast.lane.b32.xlu0 %v3509, %s3747
    %v3749 = vpop.permute.xlu0 %3748
    %s3751 = sor.u32 256, 96
    %3752 = vbcast.lane.b32.xlu0 %v3509, %s3751
    %v3753 = vpop.permute.xlu0 %3752
    %s3755 = sor.u32 256, 104
    %3756 = vbcast.lane.b32.xlu0 %v3509, %s3755
    %v3757 = vpop.permute.xlu0 %3756
    %s3759 = sor.u32 256, 112
    %3760 = vbcast.lane.b32.xlu0 %v3509, %s3759
    %v3761 = vpop.permute.xlu0 %3760
    %s3763 = sor.u32 256, 120
    %3764 = vbcast.lane.b32.xlu0 %v3509, %s3763
    %v3765 = vpop.permute.xlu0 %3764
    %v3830 = vmul.f32 %v3459, %v3516
    %v3831 = vmul.f32 %v3459, %v3520
    %v3832 = vmul.f32 %v3459, %v3524
    %v3833 = vmul.f32 %v3459, %v3528
    %v3834 = vmul.f32 %v3459, %v3532
    %v3835 = vmul.f32 %v3459, %v3536
    %v3836 = vmul.f32 %v3459, %v3540
    %v3837 = vmul.f32 %v3459, %v3544
    %v3838 = vmul.f32 %v3459, %v3548
    %v3839 = vmul.f32 %v3459, %v3552
    %v3840 = vmul.f32 %v3459, %v3556
    %v3841 = vmul.f32 %v3459, %v3560
    %v3842 = vmul.f32 %v3459, %v3564
    %v3843 = vmul.f32 %v3459, %v3568
    %v3844 = vmul.f32 %v3459, %v3572
    %v3845 = vmul.f32 %v3459, %v3576
    %v3846 = vmul.f32 %v3459, %v3579
    %v3847 = vmul.f32 %v3459, %v3583
    %v3848 = vmul.f32 %v3459, %v3587
    %v3849 = vmul.f32 %v3459, %v3591
    %v3850 = vmul.f32 %v3459, %v3595
    %v3851 = vmul.f32 %v3459, %v3599
    %v3852 = vmul.f32 %v3459, %v3603
    %v3853 = vmul.f32 %v3459, %v3607
    %v3854 = vmul.f32 %v3459, %v3611
    %v3855 = vmul.f32 %v3459, %v3615
    %v3856 = vmul.f32 %v3459, %v3619
    %v3857 = vmul.f32 %v3459, %v3623
    %v3858 = vmul.f32 %v3459, %v3627
    %v3859 = vmul.f32 %v3459, %v3631
    %v3860 = vmul.f32 %v3459, %v3635
    %v3861 = vmul.f32 %v3459, %v3639
    %v3862 = vmul.f32 %v3459, %v3642
    %v3863 = vmul.f32 %v3459, %v3646
    %v3864 = vmul.f32 %v3459, %v3650
    %v3865 = vmul.f32 %v3459, %v3654
    %v3866 = vmul.f32 %v3459, %v3658
    %v3867 = vmul.f32 %v3459, %v3662
    %v3868 = vmul.f32 %v3459, %v3666
    %v3869 = vmul.f32 %v3459, %v3670
    %v3870 = vmul.f32 %v3459, %v3674
    %v3871 = vmul.f32 %v3459, %v3678
    %v3872 = vmul.f32 %v3459, %v3682
    %v3873 = vmul.f32 %v3459, %v3686
    %v3874 = vmul.f32 %v3459, %v3690
    %v3875 = vmul.f32 %v3459, %v3694
    %v3876 = vmul.f32 %v3459, %v3698
    %v3877 = vmul.f32 %v3459, %v3702
    %v3878 = vmul.f32 %v3459, %v3705
    %v3879 = vmul.f32 %v3459, %v3709
    %v3880 = vmul.f32 %v3459, %v3713
    %v3881 = vmul.f32 %v3459, %v3717
    %v3882 = vmul.f32 %v3459, %v3721
    %v3883 = vmul.f32 %v3459, %v3725
    %v3884 = vmul.f32 %v3459, %v3729
    %v3885 = vmul.f32 %v3459, %v3733
    %v3886 = vmul.f32 %v3459, %v3737
    %v3887 = vmul.f32 %v3459, %v3741
    %v3888 = vmul.f32 %v3459, %v3745
    %v3889 = vmul.f32 %v3459, %v3749
    %v3890 = vmul.f32 %v3459, %v3753
    %v3891 = vmul.f32 %v3459, %v3757
    %v3892 = vmul.f32 %v3459, %v3761
    %v3893 = vmul.f32 %v3459, %v3765
    %v3894 = vmul.f32 %v3463, %v3516
    %v3895 = vmul.f32 %v3463, %v3520
    %v3896 = vmul.f32 %v3463, %v3524
    %v3897 = vmul.f32 %v3463, %v3528
    %v3898 = vmul.f32 %v3463, %v3532
    %v3899 = vmul.f32 %v3463, %v3536
    %v3900 = vmul.f32 %v3463, %v3540
    %v3901 = vmul.f32 %v3463, %v3544
    %v3902 = vmul.f32 %v3463, %v3548
    %v3903 = vmul.f32 %v3463, %v3552
    %v3904 = vmul.f32 %v3463, %v3556
    %v3905 = vmul.f32 %v3463, %v3560
    %v3906 = vmul.f32 %v3463, %v3564
    %v3907 = vmul.f32 %v3463, %v3568
    %v3908 = vmul.f32 %v3463, %v3572
    %v3909 = vmul.f32 %v3463, %v3576
    %v3910 = vmul.f32 %v3463, %v3579
    %v3911 = vmul.f32 %v3463, %v3583
    %v3912 = vmul.f32 %v3463, %v3587
    %v3913 = vmul.f32 %v3463, %v3591
    %v3914 = vmul.f32 %v3463, %v3595
    %v3915 = vmul.f32 %v3463, %v3599
    %v3916 = vmul.f32 %v3463, %v3603
    %v3917 = vmul.f32 %v3463, %v3607
    %v3918 = vmul.f32 %v3463, %v3611
    %v3919 = vmul.f32 %v3463, %v3615
    %v3920 = vmul.f32 %v3463, %v3619
    %v3921 = vmul.f32 %v3463, %v3623
    %v3922 = vmul.f32 %v3463, %v3627
    %v3923 = vmul.f32 %v3463, %v3631
    %v3924 = vmul.f32 %v3463, %v3635
    %v3925 = vmul.f32 %v3463, %v3639
    %v3926 = vmul.f32 %v3463, %v3642
    %v3927 = vmul.f32 %v3463, %v3646
    %v3928 = vmul.f32 %v3463, %v3650
    %v3929 = vmul.f32 %v3463, %v3654
    %v3930 = vmul.f32 %v3463, %v3658
    %v3931 = vmul.f32 %v3463, %v3662
    %v3932 = vmul.f32 %v3463, %v3666
    %v3933 = vmul.f32 %v3463, %v3670
    %v3934 = vmul.f32 %v3463, %v3674
    %v3935 = vmul.f32 %v3463, %v3678
    %v3936 = vmul.f32 %v3463, %v3682
    %v3937 = vmul.f32 %v3463, %v3686
    %v3938 = vmul.f32 %v3463, %v3690
    %v3939 = vmul.f32 %v3463, %v3694
    %v3940 = vmul.f32 %v3463, %v3698
    %v3941 = vmul.f32 %v3463, %v3702
    %v3942 = vmul.f32 %v3463, %v3705
    %v3943 = vmul.f32 %v3463, %v3709
    %v3944 = vmul.f32 %v3463, %v3713
    %v3945 = vmul.f32 %v3463, %v3717
    %v3946 = vmul.f32 %v3463, %v3721
    %v3947 = vmul.f32 %v3463, %v3725
    %v3948 = vmul.f32 %v3463, %v3729
    %v3949 = vmul.f32 %v3463, %v3733
    %v3950 = vmul.f32 %v3463, %v3737
    %v3951 = vmul.f32 %v3463, %v3741
    %v3952 = vmul.f32 %v3463, %v3745
    %v3953 = vmul.f32 %v3463, %v3749
    %v3954 = vmul.f32 %v3463, %v3753
    %v3955 = vmul.f32 %v3463, %v3757
    %v3956 = vmul.f32 %v3463, %v3761
    %v3957 = vmul.f32 %v3463, %v3765
    %v3958 = vmul.f32 %v3467, %v3516
    %v3959 = vmul.f32 %v3467, %v3520
    %v3960 = vmul.f32 %v3467, %v3524
    %v3961 = vmul.f32 %v3467, %v3528
    %v3962 = vmul.f32 %v3467, %v3532
    %v3963 = vmul.f32 %v3467, %v3536
    %v3964 = vmul.f32 %v3467, %v3540
    %v3965 = vmul.f32 %v3467, %v3544
    %v3966 = vmul.f32 %v3467, %v3548
    %v3967 = vmul.f32 %v3467, %v3552
    %v3968 = vmul.f32 %v3467, %v3556
    %v3969 = vmul.f32 %v3467, %v3560
    %v3970 = vmul.f32 %v3467, %v3564
    %v3971 = vmul.f32 %v3467, %v3568
    %v3972 = vmul.f32 %v3467, %v3572
    %v3973 = vmul.f32 %v3467, %v3576
    %v3974 = vmul.f32 %v3467, %v3579
    %v3975 = vmul.f32 %v3467, %v3583
    %v3976 = vmul.f32 %v3467, %v3587
    %v3977 = vmul.f32 %v3467, %v3591
    %v3978 = vmul.f32 %v3467, %v3595
    %v3979 = vmul.f32 %v3467, %v3599
    %v3980 = vmul.f32 %v3467, %v3603
    %v3981 = vmul.f32 %v3467, %v3607
    %v3982 = vmul.f32 %v3467, %v3611
    %v3983 = vmul.f32 %v3467, %v3615
    %v3984 = vmul.f32 %v3467, %v3619
    %v3985 = vmul.f32 %v3467, %v3623
    %v3986 = vmul.f32 %v3467, %v3627
    %v3987 = vmul.f32 %v3467, %v3631
    %v3988 = vmul.f32 %v3467, %v3635
    %v3989 = vmul.f32 %v3467, %v3639
    %v3990 = vmul.f32 %v3467, %v3642
    %v3991 = vmul.f32 %v3467, %v3646
    %v3992 = vmul.f32 %v3467, %v3650
    %v3993 = vmul.f32 %v3467, %v3654
    %v3994 = vmul.f32 %v3467, %v3658
    %v3995 = vmul.f32 %v3467, %v3662
    %v3996 = vmul.f32 %v3467, %v3666
    %v3997 = vmul.f32 %v3467, %v3670
    %v3998 = vmul.f32 %v3467, %v3674
    %v3999 = vmul.f32 %v3467, %v3678
    %v4000 = vmul.f32 %v3467, %v3682
    %v4001 = vmul.f32 %v3467, %v3686
    %v4002 = vmul.f32 %v3467, %v3690
    %v4003 = vmul.f32 %v3467, %v3694
    %v4004 = vmul.f32 %v3467, %v3698
    %v4005 = vmul.f32 %v3467, %v3702
    %v4006 = vmul.f32 %v3467, %v3705
    %v4007 = vmul.f32 %v3467, %v3709
    %v4008 = vmul.f32 %v3467, %v3713
    %v4009 = vmul.f32 %v3467, %v3717
    %v4010 = vmul.f32 %v3467, %v3721
    %v4011 = vmul.f32 %v3467, %v3725
    %v4012 = vmul.f32 %v3467, %v3729
    %v4013 = vmul.f32 %v3467, %v3733
    %v4014 = vmul.f32 %v3467, %v3737
    %v4015 = vmul.f32 %v3467, %v3741
    %v4016 = vmul.f32 %v3467, %v3745
    %v4017 = vmul.f32 %v3467, %v3749
    %v4018 = vmul.f32 %v3467, %v3753
    %v4019 = vmul.f32 %v3467, %v3757
    %v4020 = vmul.f32 %v3467, %v3761
    %v4021 = vmul.f32 %v3467, %v3765
    %v4022 = vmul.f32 %v3471, %v3516
    %v4023 = vmul.f32 %v3471, %v3520
    %v4024 = vmul.f32 %v3471, %v3524
    %v4025 = vmul.f32 %v3471, %v3528
    %v4026 = vmul.f32 %v3471, %v3532
    %v4027 = vmul.f32 %v3471, %v3536
    %v4028 = vmul.f32 %v3471, %v3540
    %v4029 = vmul.f32 %v3471, %v3544
    %v4030 = vmul.f32 %v3471, %v3548
    %v4031 = vmul.f32 %v3471, %v3552
    %v4032 = vmul.f32 %v3471, %v3556
    %v4033 = vmul.f32 %v3471, %v3560
    %v4034 = vmul.f32 %v3471, %v3564
    %v4035 = vmul.f32 %v3471, %v3568
    %v4036 = vmul.f32 %v3471, %v3572
    %v4037 = vmul.f32 %v3471, %v3576
    %v4038 = vmul.f32 %v3471, %v3579
    %v4039 = vmul.f32 %v3471, %v3583
    %v4040 = vmul.f32 %v3471, %v3587
    %v4041 = vmul.f32 %v3471, %v3591
    %v4042 = vmul.f32 %v3471, %v3595
    %v4043 = vmul.f32 %v3471, %v3599
    %v4044 = vmul.f32 %v3471, %v3603
    %v4045 = vmul.f32 %v3471, %v3607
    %v4046 = vmul.f32 %v3471, %v3611
    %v4047 = vmul.f32 %v3471, %v3615
    %v4048 = vmul.f32 %v3471, %v3619
    %v4049 = vmul.f32 %v3471, %v3623
    %v4050 = vmul.f32 %v3471, %v3627
    %v4051 = vmul.f32 %v3471, %v3631
    %v4052 = vmul.f32 %v3471, %v3635
    %v4053 = vmul.f32 %v3471, %v3639
    %v4054 = vmul.f32 %v3471, %v3642
    %v4055 = vmul.f32 %v3471, %v3646
    %v4056 = vmul.f32 %v3471, %v3650
    %v4057 = vmul.f32 %v3471, %v3654
    %v4058 = vmul.f32 %v3471, %v3658
    %v4059 = vmul.f32 %v3471, %v3662
    %v4060 = vmul.f32 %v3471, %v3666
    %v4061 = vmul.f32 %v3471, %v3670
    %v4062 = vmul.f32 %v3471, %v3674
    %v4063 = vmul.f32 %v3471, %v3678
    %v4064 = vmul.f32 %v3471, %v3682
    %v4065 = vmul.f32 %v3471, %v3686
    %v4066 = vmul.f32 %v3471, %v3690
    %v4067 = vmul.f32 %v3471, %v3694
    %v4068 = vmul.f32 %v3471, %v3698
    %v4069 = vmul.f32 %v3471, %v3702
    %v4070 = vmul.f32 %v3471, %v3705
    %v4071 = vmul.f32 %v3471, %v3709
    %v4072 = vmul.f32 %v3471, %v3713
    %v4073 = vmul.f32 %v3471, %v3717
    %v4074 = vmul.f32 %v3471, %v3721
    %v4075 = vmul.f32 %v3471, %v3725
    %v4076 = vmul.f32 %v3471, %v3729
    %v4077 = vmul.f32 %v3471, %v3733
    %v4078 = vmul.f32 %v3471, %v3737
    %v4079 = vmul.f32 %v3471, %v3741
    %v4080 = vmul.f32 %v3471, %v3745
    %v4081 = vmul.f32 %v3471, %v3749
    %v4082 = vmul.f32 %v3471, %v3753
    %v4083 = vmul.f32 %v3471, %v3757
    %v4084 = vmul.f32 %v3471, %v3761
    %v4085 = vmul.f32 %v3471, %v3765
    %v4086 = vlaneseq
    %v4087 = vshrl.u32 %v4086, 7
    %v4088 = vsub.s32 1, %v4087
    %v4089 = vrot.slane %v244, %v4088
    %v4090 = vlaneseq
    %v4091 = vshrl.u32 %v4090, 7
    %v4092 = vsub.s32 1, %v4091
    %v4093 = vrot.slane %v245, %v4092
    %v4094 = vlaneseq
    %v4095 = vshrl.u32 %v4094, 7
    %v4096 = vsub.s32 1, %v4095
    %v4097 = vrot.slane %v246, %v4096
    %v4098 = vlaneseq
    %v4099 = vshrl.u32 %v4098, 7
    %v4100 = vsub.s32 1, %v4099
    %v4101 = vrot.slane %v247, %v4100
    %v4102 = vlaneseq
    %v4103 = vshrl.u32 %v4102, 7
    %v4104 = vsub.s32 1, %v4103
    %v4105 = vrot.slane %v3454, %v4104
    %v4106 = vlaneseq
    %v4107 = vshrl.u32 %v4106, 7
    %v4108 = vsub.s32 5, %v4107
    %v4109 = vrot.slane %v3454, %v4108
    %v4110 = vlaneseq
    %v4111 = vshrl.u32 %v4110, 7
    %v4112 = vsub.s32 1, %v4111
    %v4113 = vrot.slane %v3455, %v4112
    %v4114 = vlaneseq
    %v4115 = vshrl.u32 %v4114, 7
    %v4116 = vsub.s32 5, %v4115
    %v4117 = vrot.slane %v3455, %v4116
    %v4122 = vlaneseq
    %v4123 = vshrl.u32 %v4122, 7
    %v4124 = vsub.s32 1, %v4123
    %v4125 = vrot.slane %v4105, %v4124
    %v4126 = vlaneseq
    %v4127 = vshrl.u32 %v4126, 7
    %v4128 = vsub.s32 1, %v4127
    %v4129 = vrot.slane %v4109, %v4128
    %v4130 = vlaneseq
    %v4131 = vshrl.u32 %v4130, 7
    %v4132 = vsub.s32 1, %v4131
    %v4133 = vrot.slane %v4113, %v4132
    %v4134 = vlaneseq
    %v4135 = vshrl.u32 %v4134, 7
    %v4136 = vsub.s32 1, %v4135
    %v4137 = vrot.slane %v4117, %v4136
    %4143 = vbcast.lane.b32.xlu0 %v4125, 256
    %v4144 = vpop.permute.xlu0 %4143
    %s4146 = sor.u32 256, 8
    %4147 = vbcast.lane.b32.xlu0 %v4125, %s4146
    %v4148 = vpop.permute.xlu0 %4147
    %s4150 = sor.u32 256, 16
    %4151 = vbcast.lane.b32.xlu0 %v4125, %s4150
    %v4152 = vpop.permute.xlu0 %4151
    %s4154 = sor.u32 256, 24
    %4155 = vbcast.lane.b32.xlu0 %v4125, %s4154
    %v4156 = vpop.permute.xlu0 %4155
    %s4158 = sor.u32 256, 32
    %4159 = vbcast.lane.b32.xlu0 %v4125, %s4158
    %v4160 = vpop.permute.xlu0 %4159
    %s4162 = sor.u32 256, 40
    %4163 = vbcast.lane.b32.xlu0 %v4125, %s4162
    %v4164 = vpop.permute.xlu0 %4163
    %s4166 = sor.u32 256, 48
    %4167 = vbcast.lane.b32.xlu0 %v4125, %s4166
    %v4168 = vpop.permute.xlu0 %4167
    %s4170 = sor.u32 256, 56
    %4171 = vbcast.lane.b32.xlu0 %v4125, %s4170
    %v4172 = vpop.permute.xlu0 %4171
    %s4174 = sor.u32 256, 64
    %4175 = vbcast.lane.b32.xlu0 %v4125, %s4174
    %v4176 = vpop.permute.xlu0 %4175
    %s4178 = sor.u32 256, 72
    %4179 = vbcast.lane.b32.xlu0 %v4125, %s4178
    %v4180 = vpop.permute.xlu0 %4179
    %s4182 = sor.u32 256, 80
    %4183 = vbcast.lane.b32.xlu0 %v4125, %s4182
    %v4184 = vpop.permute.xlu0 %4183
    %s4186 = sor.u32 256, 88
    %4187 = vbcast.lane.b32.xlu0 %v4125, %s4186
    %v4188 = vpop.permute.xlu0 %4187
    %s4190 = sor.u32 256, 96
    %4191 = vbcast.lane.b32.xlu0 %v4125, %s4190
    %v4192 = vpop.permute.xlu0 %4191
    %s4194 = sor.u32 256, 104
    %4195 = vbcast.lane.b32.xlu0 %v4125, %s4194
    %v4196 = vpop.permute.xlu0 %4195
    %s4198 = sor.u32 256, 112
    %4199 = vbcast.lane.b32.xlu0 %v4125, %s4198
    %v4200 = vpop.permute.xlu0 %4199
    %s4202 = sor.u32 256, 120
    %4203 = vbcast.lane.b32.xlu0 %v4125, %s4202
    %v4204 = vpop.permute.xlu0 %4203
    %4206 = vbcast.lane.b32.xlu0 %v4129, 256
    %v4207 = vpop.permute.xlu0 %4206
    %s4209 = sor.u32 256, 8
    %4210 = vbcast.lane.b32.xlu0 %v4129, %s4209
    %v4211 = vpop.permute.xlu0 %4210
    %s4213 = sor.u32 256, 16
    %4214 = vbcast.lane.b32.xlu0 %v4129, %s4213
    %v4215 = vpop.permute.xlu0 %4214
    %s4217 = sor.u32 256, 24
    %4218 = vbcast.lane.b32.xlu0 %v4129, %s4217
    %v4219 = vpop.permute.xlu0 %4218
    %s4221 = sor.u32 256, 32
    %4222 = vbcast.lane.b32.xlu0 %v4129, %s4221
    %v4223 = vpop.permute.xlu0 %4222
    %s4225 = sor.u32 256, 40
    %4226 = vbcast.lane.b32.xlu0 %v4129, %s4225
    %v4227 = vpop.permute.xlu0 %4226
    %s4229 = sor.u32 256, 48
    %4230 = vbcast.lane.b32.xlu0 %v4129, %s4229
    %v4231 = vpop.permute.xlu0 %4230
    %s4233 = sor.u32 256, 56
    %4234 = vbcast.lane.b32.xlu0 %v4129, %s4233
    %v4235 = vpop.permute.xlu0 %4234
    %s4237 = sor.u32 256, 64
    %4238 = vbcast.lane.b32.xlu0 %v4129, %s4237
    %v4239 = vpop.permute.xlu0 %4238
    %s4241 = sor.u32 256, 72
    %4242 = vbcast.lane.b32.xlu0 %v4129, %s4241
    %v4243 = vpop.permute.xlu0 %4242
    %s4245 = sor.u32 256, 80
    %4246 = vbcast.lane.b32.xlu0 %v4129, %s4245
    %v4247 = vpop.permute.xlu0 %4246
    %s4249 = sor.u32 256, 88
    %4250 = vbcast.lane.b32.xlu0 %v4129, %s4249
    %v4251 = vpop.permute.xlu0 %4250
    %s4253 = sor.u32 256, 96
    %4254 = vbcast.lane.b32.xlu0 %v4129, %s4253
    %v4255 = vpop.permute.xlu0 %4254
    %s4257 = sor.u32 256, 104
    %4258 = vbcast.lane.b32.xlu0 %v4129, %s4257
    %v4259 = vpop.permute.xlu0 %4258
    %s4261 = sor.u32 256, 112
    %4262 = vbcast.lane.b32.xlu0 %v4129, %s4261
    %v4263 = vpop.permute.xlu0 %4262
    %s4265 = sor.u32 256, 120
    %4266 = vbcast.lane.b32.xlu0 %v4129, %s4265
    %v4267 = vpop.permute.xlu0 %4266
    %4269 = vbcast.lane.b32.xlu0 %v4133, 256
    %v4270 = vpop.permute.xlu0 %4269
    %s4272 = sor.u32 256, 8
    %4273 = vbcast.lane.b32.xlu0 %v4133, %s4272
    %v4274 = vpop.permute.xlu0 %4273
    %s4276 = sor.u32 256, 16
    %4277 = vbcast.lane.b32.xlu0 %v4133, %s4276
    %v4278 = vpop.permute.xlu0 %4277
    %s4280 = sor.u32 256, 24
    %4281 = vbcast.lane.b32.xlu0 %v4133, %s4280
    %v4282 = vpop.permute.xlu0 %4281
    %s4284 = sor.u32 256, 32
    %4285 = vbcast.lane.b32.xlu0 %v4133, %s4284
    %v4286 = vpop.permute.xlu0 %4285
    %s4288 = sor.u32 256, 40
    %4289 = vbcast.lane.b32.xlu0 %v4133, %s4288
    %v4290 = vpop.permute.xlu0 %4289
    %s4292 = sor.u32 256, 48
    %4293 = vbcast.lane.b32.xlu0 %v4133, %s4292
    %v4294 = vpop.permute.xlu0 %4293
    %s4296 = sor.u32 256, 56
    %4297 = vbcast.lane.b32.xlu0 %v4133, %s4296
    %v4298 = vpop.permute.xlu0 %4297
    %s4300 = sor.u32 256, 64
    %4301 = vbcast.lane.b32.xlu0 %v4133, %s4300
    %v4302 = vpop.permute.xlu0 %4301
    %s4304 = sor.u32 256, 72
    %4305 = vbcast.lane.b32.xlu0 %v4133, %s4304
    %v4306 = vpop.permute.xlu0 %4305
    %s4308 = sor.u32 256, 80
    %4309 = vbcast.lane.b32.xlu0 %v4133, %s4308
    %v4310 = vpop.permute.xlu0 %4309
    %s4312 = sor.u32 256, 88
    %4313 = vbcast.lane.b32.xlu0 %v4133, %s4312
    %v4314 = vpop.permute.xlu0 %4313
    %s4316 = sor.u32 256, 96
    %4317 = vbcast.lane.b32.xlu0 %v4133, %s4316
    %v4318 = vpop.permute.xlu0 %4317
    %s4320 = sor.u32 256, 104
    %4321 = vbcast.lane.b32.xlu0 %v4133, %s4320
    %v4322 = vpop.permute.xlu0 %4321
    %s4324 = sor.u32 256, 112
    %4325 = vbcast.lane.b32.xlu0 %v4133, %s4324
    %v4326 = vpop.permute.xlu0 %4325
    %s4328 = sor.u32 256, 120
    %4329 = vbcast.lane.b32.xlu0 %v4133, %s4328
    %v4330 = vpop.permute.xlu0 %4329
    %4332 = vbcast.lane.b32.xlu0 %v4137, 256
    %v4333 = vpop.permute.xlu0 %4332
    %s4335 = sor.u32 256, 8
    %4336 = vbcast.lane.b32.xlu0 %v4137, %s4335
    %v4337 = vpop.permute.xlu0 %4336
    %s4339 = sor.u32 256, 16
    %4340 = vbcast.lane.b32.xlu0 %v4137, %s4339
    %v4341 = vpop.permute.xlu0 %4340
    %s4343 = sor.u32 256, 24
    %4344 = vbcast.lane.b32.xlu0 %v4137, %s4343
    %v4345 = vpop.permute.xlu0 %4344
    %s4347 = sor.u32 256, 32
    %4348 = vbcast.lane.b32.xlu0 %v4137, %s4347
    %v4349 = vpop.permute.xlu0 %4348
    %s4351 = sor.u32 256, 40
    %4352 = vbcast.lane.b32.xlu0 %v4137, %s4351
    %v4353 = vpop.permute.xlu0 %4352
    %s4355 = sor.u32 256, 48
    %4356 = vbcast.lane.b32.xlu0 %v4137, %s4355
    %v4357 = vpop.permute.xlu0 %4356
    %s4359 = sor.u32 256, 56
    %4360 = vbcast.lane.b32.xlu0 %v4137, %s4359
    %v4361 = vpop.permute.xlu0 %4360
    %s4363 = sor.u32 256, 64
    %4364 = vbcast.lane.b32.xlu0 %v4137, %s4363
    %v4365 = vpop.permute.xlu0 %4364
    %s4367 = sor.u32 256, 72
    %4368 = vbcast.lane.b32.xlu0 %v4137, %s4367
    %v4369 = vpop.permute.xlu0 %4368
    %s4371 = sor.u32 256, 80
    %4372 = vbcast.lane.b32.xlu0 %v4137, %s4371
    %v4373 = vpop.permute.xlu0 %4372
    %s4375 = sor.u32 256, 88
    %4376 = vbcast.lane.b32.xlu0 %v4137, %s4375
    %v4377 = vpop.permute.xlu0 %4376
    %s4379 = sor.u32 256, 96
    %4380 = vbcast.lane.b32.xlu0 %v4137, %s4379
    %v4381 = vpop.permute.xlu0 %4380
    %s4383 = sor.u32 256, 104
    %4384 = vbcast.lane.b32.xlu0 %v4137, %s4383
    %v4385 = vpop.permute.xlu0 %4384
    %s4387 = sor.u32 256, 112
    %4388 = vbcast.lane.b32.xlu0 %v4137, %s4387
    %v4389 = vpop.permute.xlu0 %4388
    %s4391 = sor.u32 256, 120
    %4392 = vbcast.lane.b32.xlu0 %v4137, %s4391
    %v4393 = vpop.permute.xlu0 %4392
    %v4458 = vmul.f32 %v4089, %v4144
    %v4459 = vmul.f32 %v4089, %v4148
    %v4460 = vmul.f32 %v4089, %v4152
    %v4461 = vmul.f32 %v4089, %v4156
    %v4462 = vmul.f32 %v4089, %v4160
    %v4463 = vmul.f32 %v4089, %v4164
    %v4464 = vmul.f32 %v4089, %v4168
    %v4465 = vmul.f32 %v4089, %v4172
    %v4466 = vmul.f32 %v4089, %v4176
    %v4467 = vmul.f32 %v4089, %v4180
    %v4468 = vmul.f32 %v4089, %v4184
    %v4469 = vmul.f32 %v4089, %v4188
    %v4470 = vmul.f32 %v4089, %v4192
    %v4471 = vmul.f32 %v4089, %v4196
    %v4472 = vmul.f32 %v4089, %v4200
    %v4473 = vmul.f32 %v4089, %v4204
    %v4474 = vmul.f32 %v4089, %v4207
    %v4475 = vmul.f32 %v4089, %v4211
    %v4476 = vmul.f32 %v4089, %v4215
    %v4477 = vmul.f32 %v4089, %v4219
    %v4478 = vmul.f32 %v4089, %v4223
    %v4479 = vmul.f32 %v4089, %v4227
    %v4480 = vmul.f32 %v4089, %v4231
    %v4481 = vmul.f32 %v4089, %v4235
    %v4482 = vmul.f32 %v4089, %v4239
    %v4483 = vmul.f32 %v4089, %v4243
    %v4484 = vmul.f32 %v4089, %v4247
    %v4485 = vmul.f32 %v4089, %v4251
    %v4486 = vmul.f32 %v4089, %v4255
    %v4487 = vmul.f32 %v4089, %v4259
    %v4488 = vmul.f32 %v4089, %v4263
    %v4489 = vmul.f32 %v4089, %v4267
    %v4490 = vmul.f32 %v4089, %v4270
    %v4491 = vmul.f32 %v4089, %v4274
    %v4492 = vmul.f32 %v4089, %v4278
    %v4493 = vmul.f32 %v4089, %v4282
    %v4494 = vmul.f32 %v4089, %v4286
    %v4495 = vmul.f32 %v4089, %v4290
    %v4496 = vmul.f32 %v4089, %v4294
    %v4497 = vmul.f32 %v4089, %v4298
    %v4498 = vmul.f32 %v4089, %v4302
    %v4499 = vmul.f32 %v4089, %v4306
    %v4500 = vmul.f32 %v4089, %v4310
    %v4501 = vmul.f32 %v4089, %v4314
    %v4502 = vmul.f32 %v4089, %v4318
    %v4503 = vmul.f32 %v4089, %v4322
    %v4504 = vmul.f32 %v4089, %v4326
    %v4505 = vmul.f32 %v4089, %v4330
    %v4506 = vmul.f32 %v4089, %v4333
    %v4507 = vmul.f32 %v4089, %v4337
    %v4508 = vmul.f32 %v4089, %v4341
    %v4509 = vmul.f32 %v4089, %v4345
    %v4510 = vmul.f32 %v4089, %v4349
    %v4511 = vmul.f32 %v4089, %v4353
    %v4512 = vmul.f32 %v4089, %v4357
    %v4513 = vmul.f32 %v4089, %v4361
    %v4514 = vmul.f32 %v4089, %v4365
    %v4515 = vmul.f32 %v4089, %v4369
    %v4516 = vmul.f32 %v4089, %v4373
    %v4517 = vmul.f32 %v4089, %v4377
    %v4518 = vmul.f32 %v4089, %v4381
    %v4519 = vmul.f32 %v4089, %v4385
    %v4520 = vmul.f32 %v4089, %v4389
    %v4521 = vmul.f32 %v4089, %v4393
    %v4522 = vmul.f32 %v4093, %v4144
    %v4523 = vmul.f32 %v4093, %v4148
    %v4524 = vmul.f32 %v4093, %v4152
    %v4525 = vmul.f32 %v4093, %v4156
    %v4526 = vmul.f32 %v4093, %v4160
    %v4527 = vmul.f32 %v4093, %v4164
    %v4528 = vmul.f32 %v4093, %v4168
    %v4529 = vmul.f32 %v4093, %v4172
    %v4530 = vmul.f32 %v4093, %v4176
    %v4531 = vmul.f32 %v4093, %v4180
    %v4532 = vmul.f32 %v4093, %v4184
    %v4533 = vmul.f32 %v4093, %v4188
    %v4534 = vmul.f32 %v4093, %v4192
    %v4535 = vmul.f32 %v4093, %v4196
    %v4536 = vmul.f32 %v4093, %v4200
    %v4537 = vmul.f32 %v4093, %v4204
    %v4538 = vmul.f32 %v4093, %v4207
    %v4539 = vmul.f32 %v4093, %v4211
    %v4540 = vmul.f32 %v4093, %v4215
    %v4541 = vmul.f32 %v4093, %v4219
    %v4542 = vmul.f32 %v4093, %v4223
    %v4543 = vmul.f32 %v4093, %v4227
    %v4544 = vmul.f32 %v4093, %v4231
    %v4545 = vmul.f32 %v4093, %v4235
    %v4546 = vmul.f32 %v4093, %v4239
    %v4547 = vmul.f32 %v4093, %v4243
    %v4548 = vmul.f32 %v4093, %v4247
    %v4549 = vmul.f32 %v4093, %v4251
    %v4550 = vmul.f32 %v4093, %v4255
    %v4551 = vmul.f32 %v4093, %v4259
    %v4552 = vmul.f32 %v4093, %v4263
    %v4553 = vmul.f32 %v4093, %v4267
    %v4554 = vmul.f32 %v4093, %v4270
    %v4555 = vmul.f32 %v4093, %v4274
    %v4556 = vmul.f32 %v4093, %v4278
    %v4557 = vmul.f32 %v4093, %v4282
    %v4558 = vmul.f32 %v4093, %v4286
    %v4559 = vmul.f32 %v4093, %v4290
    %v4560 = vmul.f32 %v4093, %v4294
    %v4561 = vmul.f32 %v4093, %v4298
    %v4562 = vmul.f32 %v4093, %v4302
    %v4563 = vmul.f32 %v4093, %v4306
    %v4564 = vmul.f32 %v4093, %v4310
    %v4565 = vmul.f32 %v4093, %v4314
    %v4566 = vmul.f32 %v4093, %v4318
    %v4567 = vmul.f32 %v4093, %v4322
    %v4568 = vmul.f32 %v4093, %v4326
    %v4569 = vmul.f32 %v4093, %v4330
    %v4570 = vmul.f32 %v4093, %v4333
    %v4571 = vmul.f32 %v4093, %v4337
    %v4572 = vmul.f32 %v4093, %v4341
    %v4573 = vmul.f32 %v4093, %v4345
    %v4574 = vmul.f32 %v4093, %v4349
    %v4575 = vmul.f32 %v4093, %v4353
    %v4576 = vmul.f32 %v4093, %v4357
    %v4577 = vmul.f32 %v4093, %v4361
    %v4578 = vmul.f32 %v4093, %v4365
    %v4579 = vmul.f32 %v4093, %v4369
    %v4580 = vmul.f32 %v4093, %v4373
    %v4581 = vmul.f32 %v4093, %v4377
    %v4582 = vmul.f32 %v4093, %v4381
    %v4583 = vmul.f32 %v4093, %v4385
    %v4584 = vmul.f32 %v4093, %v4389
    %v4585 = vmul.f32 %v4093, %v4393
    %v4586 = vmul.f32 %v4097, %v4144
    %v4587 = vmul.f32 %v4097, %v4148
    %v4588 = vmul.f32 %v4097, %v4152
    %v4589 = vmul.f32 %v4097, %v4156
    %v4590 = vmul.f32 %v4097, %v4160
    %v4591 = vmul.f32 %v4097, %v4164
    %v4592 = vmul.f32 %v4097, %v4168
    %v4593 = vmul.f32 %v4097, %v4172
    %v4594 = vmul.f32 %v4097, %v4176
    %v4595 = vmul.f32 %v4097, %v4180
    %v4596 = vmul.f32 %v4097, %v4184
    %v4597 = vmul.f32 %v4097, %v4188
    %v4598 = vmul.f32 %v4097, %v4192
    %v4599 = vmul.f32 %v4097, %v4196
    %v4600 = vmul.f32 %v4097, %v4200
    %v4601 = vmul.f32 %v4097, %v4204
    %v4602 = vmul.f32 %v4097, %v4207
    %v4603 = vmul.f32 %v4097, %v4211
    %v4604 = vmul.f32 %v4097, %v4215
    %v4605 = vmul.f32 %v4097, %v4219
    %v4606 = vmul.f32 %v4097, %v4223
    %v4607 = vmul.f32 %v4097, %v4227
    %v4608 = vmul.f32 %v4097, %v4231
    %v4609 = vmul.f32 %v4097, %v4235
    %v4610 = vmul.f32 %v4097, %v4239
    %v4611 = vmul.f32 %v4097, %v4243
    %v4612 = vmul.f32 %v4097, %v4247
    %v4613 = vmul.f32 %v4097, %v4251
    %v4614 = vmul.f32 %v4097, %v4255
    %v4615 = vmul.f32 %v4097, %v4259
    %v4616 = vmul.f32 %v4097, %v4263
    %v4617 = vmul.f32 %v4097, %v4267
    %v4618 = vmul.f32 %v4097, %v4270
    %v4619 = vmul.f32 %v4097, %v4274
    %v4620 = vmul.f32 %v4097, %v4278
    %v4621 = vmul.f32 %v4097, %v4282
    %v4622 = vmul.f32 %v4097, %v4286
    %v4623 = vmul.f32 %v4097, %v4290
    %v4624 = vmul.f32 %v4097, %v4294
    %v4625 = vmul.f32 %v4097, %v4298
    %v4626 = vmul.f32 %v4097, %v4302
    %v4627 = vmul.f32 %v4097, %v4306
    %v4628 = vmul.f32 %v4097, %v4310
    %v4629 = vmul.f32 %v4097, %v4314
    %v4630 = vmul.f32 %v4097, %v4318
    %v4631 = vmul.f32 %v4097, %v4322
    %v4632 = vmul.f32 %v4097, %v4326
    %v4633 = vmul.f32 %v4097, %v4330
    %v4634 = vmul.f32 %v4097, %v4333
    %v4635 = vmul.f32 %v4097, %v4337
    %v4636 = vmul.f32 %v4097, %v4341
    %v4637 = vmul.f32 %v4097, %v4345
    %v4638 = vmul.f32 %v4097, %v4349
    %v4639 = vmul.f32 %v4097, %v4353
    %v4640 = vmul.f32 %v4097, %v4357
    %v4641 = vmul.f32 %v4097, %v4361
    %v4642 = vmul.f32 %v4097, %v4365
    %v4643 = vmul.f32 %v4097, %v4369
    %v4644 = vmul.f32 %v4097, %v4373
    %v4645 = vmul.f32 %v4097, %v4377
    %v4646 = vmul.f32 %v4097, %v4381
    %v4647 = vmul.f32 %v4097, %v4385
    %v4648 = vmul.f32 %v4097, %v4389
    %v4649 = vmul.f32 %v4097, %v4393
    %v4650 = vmul.f32 %v4101, %v4144
    %v4651 = vmul.f32 %v4101, %v4148
    %v4652 = vmul.f32 %v4101, %v4152
    %v4653 = vmul.f32 %v4101, %v4156
    %v4654 = vmul.f32 %v4101, %v4160
    %v4655 = vmul.f32 %v4101, %v4164
    %v4656 = vmul.f32 %v4101, %v4168
    %v4657 = vmul.f32 %v4101, %v4172
    %v4658 = vmul.f32 %v4101, %v4176
    %v4659 = vmul.f32 %v4101, %v4180
    %v4660 = vmul.f32 %v4101, %v4184
    %v4661 = vmul.f32 %v4101, %v4188
    %v4662 = vmul.f32 %v4101, %v4192
    %v4663 = vmul.f32 %v4101, %v4196
    %v4664 = vmul.f32 %v4101, %v4200
    %v4665 = vmul.f32 %v4101, %v4204
    %v4666 = vmul.f32 %v4101, %v4207
    %v4667 = vmul.f32 %v4101, %v4211
    %v4668 = vmul.f32 %v4101, %v4215
    %v4669 = vmul.f32 %v4101, %v4219
    %v4670 = vmul.f32 %v4101, %v4223
    %v4671 = vmul.f32 %v4101, %v4227
    %v4672 = vmul.f32 %v4101, %v4231
    %v4673 = vmul.f32 %v4101, %v4235
    %v4674 = vmul.f32 %v4101, %v4239
    %v4675 = vmul.f32 %v4101, %v4243
    %v4676 = vmul.f32 %v4101, %v4247
    %v4677 = vmul.f32 %v4101, %v4251
    %v4678 = vmul.f32 %v4101, %v4255
    %v4679 = vmul.f32 %v4101, %v4259
    %v4680 = vmul.f32 %v4101, %v4263
    %v4681 = vmul.f32 %v4101, %v4267
    %v4682 = vmul.f32 %v4101, %v4270
    %v4683 = vmul.f32 %v4101, %v4274
    %v4684 = vmul.f32 %v4101, %v4278
    %v4685 = vmul.f32 %v4101, %v4282
    %v4686 = vmul.f32 %v4101, %v4286
    %v4687 = vmul.f32 %v4101, %v4290
    %v4688 = vmul.f32 %v4101, %v4294
    %v4689 = vmul.f32 %v4101, %v4298
    %v4690 = vmul.f32 %v4101, %v4302
    %v4691 = vmul.f32 %v4101, %v4306
    %v4692 = vmul.f32 %v4101, %v4310
    %v4693 = vmul.f32 %v4101, %v4314
    %v4694 = vmul.f32 %v4101, %v4318
    %v4695 = vmul.f32 %v4101, %v4322
    %v4696 = vmul.f32 %v4101, %v4326
    %v4697 = vmul.f32 %v4101, %v4330
    %v4698 = vmul.f32 %v4101, %v4333
    %v4699 = vmul.f32 %v4101, %v4337
    %v4700 = vmul.f32 %v4101, %v4341
    %v4701 = vmul.f32 %v4101, %v4345
    %v4702 = vmul.f32 %v4101, %v4349
    %v4703 = vmul.f32 %v4101, %v4353
    %v4704 = vmul.f32 %v4101, %v4357
    %v4705 = vmul.f32 %v4101, %v4361
    %v4706 = vmul.f32 %v4101, %v4365
    %v4707 = vmul.f32 %v4101, %v4369
    %v4708 = vmul.f32 %v4101, %v4373
    %v4709 = vmul.f32 %v4101, %v4377
    %v4710 = vmul.f32 %v4101, %v4381
    %v4711 = vmul.f32 %v4101, %v4385
    %v4712 = vmul.f32 %v4101, %v4389
    %v4713 = vmul.f32 %v4101, %v4393
    %v4714 = vadd.f32 %v3830, %v4458
    %v4715 = vadd.f32 %v3831, %v4459
    %v4716 = vadd.f32 %v3832, %v4460
    %v4717 = vadd.f32 %v3833, %v4461
    %v4718 = vadd.f32 %v3834, %v4462
    %v4719 = vadd.f32 %v3835, %v4463
    %v4720 = vadd.f32 %v3836, %v4464
    %v4721 = vadd.f32 %v3837, %v4465
    %v4722 = vadd.f32 %v3838, %v4466
    %v4723 = vadd.f32 %v3839, %v4467
    %v4724 = vadd.f32 %v3840, %v4468
    %v4725 = vadd.f32 %v3841, %v4469
    %v4726 = vadd.f32 %v3842, %v4470
    %v4727 = vadd.f32 %v3843, %v4471
    %v4728 = vadd.f32 %v3844, %v4472
    %v4729 = vadd.f32 %v3845, %v4473
    %v4730 = vadd.f32 %v3846, %v4474
    %v4731 = vadd.f32 %v3847, %v4475
    %v4732 = vadd.f32 %v3848, %v4476
    %v4733 = vadd.f32 %v3849, %v4477
    %v4734 = vadd.f32 %v3850, %v4478
    %v4735 = vadd.f32 %v3851, %v4479
    %v4736 = vadd.f32 %v3852, %v4480
    %v4737 = vadd.f32 %v3853, %v4481
    %v4738 = vadd.f32 %v3854, %v4482
    %v4739 = vadd.f32 %v3855, %v4483
    %v4740 = vadd.f32 %v3856, %v4484
    %v4741 = vadd.f32 %v3857, %v4485
    %v4742 = vadd.f32 %v3858, %v4486
    %v4743 = vadd.f32 %v3859, %v4487
    %v4744 = vadd.f32 %v3860, %v4488
    %v4745 = vadd.f32 %v3861, %v4489
    %v4746 = vadd.f32 %v3862, %v4490
    %v4747 = vadd.f32 %v3863, %v4491
    %v4748 = vadd.f32 %v3864, %v4492
    %v4749 = vadd.f32 %v3865, %v4493
    %v4750 = vadd.f32 %v3866, %v4494
    %v4751 = vadd.f32 %v3867, %v4495
    %v4752 = vadd.f32 %v3868, %v4496
    %v4753 = vadd.f32 %v3869, %v4497
    %v4754 = vadd.f32 %v3870, %v4498
    %v4755 = vadd.f32 %v3871, %v4499
    %v4756 = vadd.f32 %v3872, %v4500
    %v4757 = vadd.f32 %v3873, %v4501
    %v4758 = vadd.f32 %v3874, %v4502
    %v4759 = vadd.f32 %v3875, %v4503
    %v4760 = vadd.f32 %v3876, %v4504
    %v4761 = vadd.f32 %v3877, %v4505
    %v4762 = vadd.f32 %v3878, %v4506
    %v4763 = vadd.f32 %v3879, %v4507
    %v4764 = vadd.f32 %v3880, %v4508
    %v4765 = vadd.f32 %v3881, %v4509
    %v4766 = vadd.f32 %v3882, %v4510
    %v4767 = vadd.f32 %v3883, %v4511
    %v4768 = vadd.f32 %v3884, %v4512
    %v4769 = vadd.f32 %v3885, %v4513
    %v4770 = vadd.f32 %v3886, %v4514
    %v4771 = vadd.f32 %v3887, %v4515
    %v4772 = vadd.f32 %v3888, %v4516
    %v4773 = vadd.f32 %v3889, %v4517
    %v4774 = vadd.f32 %v3890, %v4518
    %v4775 = vadd.f32 %v3891, %v4519
    %v4776 = vadd.f32 %v3892, %v4520
    %v4777 = vadd.f32 %v3893, %v4521
    %v4778 = vadd.f32 %v3894, %v4522
    %v4779 = vadd.f32 %v3895, %v4523
    %v4780 = vadd.f32 %v3896, %v4524
    %v4781 = vadd.f32 %v3897, %v4525
    %v4782 = vadd.f32 %v3898, %v4526
    %v4783 = vadd.f32 %v3899, %v4527
    %v4784 = vadd.f32 %v3900, %v4528
    %v4785 = vadd.f32 %v3901, %v4529
    %v4786 = vadd.f32 %v3902, %v4530
    %v4787 = vadd.f32 %v3903, %v4531
    %v4788 = vadd.f32 %v3904, %v4532
    %v4789 = vadd.f32 %v3905, %v4533
    %v4790 = vadd.f32 %v3906, %v4534
    %v4791 = vadd.f32 %v3907, %v4535
    %v4792 = vadd.f32 %v3908, %v4536
    %v4793 = vadd.f32 %v3909, %v4537
    %v4794 = vadd.f32 %v3910, %v4538
    %v4795 = vadd.f32 %v3911, %v4539
    %v4796 = vadd.f32 %v3912, %v4540
    %v4797 = vadd.f32 %v3913, %v4541
    %v4798 = vadd.f32 %v3914, %v4542
    %v4799 = vadd.f32 %v3915, %v4543
    %v4800 = vadd.f32 %v3916, %v4544
    %v4801 = vadd.f32 %v3917, %v4545
    %v4802 = vadd.f32 %v3918, %v4546
    %v4803 = vadd.f32 %v3919, %v4547
    %v4804 = vadd.f32 %v3920, %v4548
    %v4805 = vadd.f32 %v3921, %v4549
    %v4806 = vadd.f32 %v3922, %v4550
    %v4807 = vadd.f32 %v3923, %v4551
    %v4808 = vadd.f32 %v3924, %v4552
    %v4809 = vadd.f32 %v3925, %v4553
    %v4810 = vadd.f32 %v3926, %v4554
    %v4811 = vadd.f32 %v3927, %v4555
    %v4812 = vadd.f32 %v3928, %v4556
    %v4813 = vadd.f32 %v3929, %v4557
    %v4814 = vadd.f32 %v3930, %v4558
    %v4815 = vadd.f32 %v3931, %v4559
    %v4816 = vadd.f32 %v3932, %v4560
    %v4817 = vadd.f32 %v3933, %v4561
    %v4818 = vadd.f32 %v3934, %v4562
    %v4819 = vadd.f32 %v3935, %v4563
    %v4820 = vadd.f32 %v3936, %v4564
    %v4821 = vadd.f32 %v3937, %v4565
    %v4822 = vadd.f32 %v3938, %v4566
    %v4823 = vadd.f32 %v3939, %v4567
    %v4824 = vadd.f32 %v3940, %v4568
    %v4825 = vadd.f32 %v3941, %v4569
    %v4826 = vadd.f32 %v3942, %v4570
    %v4827 = vadd.f32 %v3943, %v4571
    %v4828 = vadd.f32 %v3944, %v4572
    %v4829 = vadd.f32 %v3945, %v4573
    %v4830 = vadd.f32 %v3946, %v4574
    %v4831 = vadd.f32 %v3947, %v4575
    %v4832 = vadd.f32 %v3948, %v4576
    %v4833 = vadd.f32 %v3949, %v4577
    %v4834 = vadd.f32 %v3950, %v4578
    %v4835 = vadd.f32 %v3951, %v4579
    %v4836 = vadd.f32 %v3952, %v4580
    %v4837 = vadd.f32 %v3953, %v4581
    %v4838 = vadd.f32 %v3954, %v4582
    %v4839 = vadd.f32 %v3955, %v4583
    %v4840 = vadd.f32 %v3956, %v4584
    %v4841 = vadd.f32 %v3957, %v4585
    %v4842 = vadd.f32 %v3958, %v4586
    %v4843 = vadd.f32 %v3959, %v4587
    %v4844 = vadd.f32 %v3960, %v4588
    %v4845 = vadd.f32 %v3961, %v4589
    %v4846 = vadd.f32 %v3962, %v4590
    %v4847 = vadd.f32 %v3963, %v4591
    %v4848 = vadd.f32 %v3964, %v4592
    %v4849 = vadd.f32 %v3965, %v4593
    %v4850 = vadd.f32 %v3966, %v4594
    %v4851 = vadd.f32 %v3967, %v4595
    %v4852 = vadd.f32 %v3968, %v4596
    %v4853 = vadd.f32 %v3969, %v4597
    %v4854 = vadd.f32 %v3970, %v4598
    %v4855 = vadd.f32 %v3971, %v4599
    %v4856 = vadd.f32 %v3972, %v4600
    %v4857 = vadd.f32 %v3973, %v4601
    %v4858 = vadd.f32 %v3974, %v4602
    %v4859 = vadd.f32 %v3975, %v4603
    %v4860 = vadd.f32 %v3976, %v4604
    %v4861 = vadd.f32 %v3977, %v4605
    %v4862 = vadd.f32 %v3978, %v4606
    %v4863 = vadd.f32 %v3979, %v4607
    %v4864 = vadd.f32 %v3980, %v4608
    %v4865 = vadd.f32 %v3981, %v4609
    %v4866 = vadd.f32 %v3982, %v4610
    %v4867 = vadd.f32 %v3983, %v4611
    %v4868 = vadd.f32 %v3984, %v4612
    %v4869 = vadd.f32 %v3985, %v4613
    %v4870 = vadd.f32 %v3986, %v4614
    %v4871 = vadd.f32 %v3987, %v4615
    %v4872 = vadd.f32 %v3988, %v4616
    %v4873 = vadd.f32 %v3989, %v4617
    %v4874 = vadd.f32 %v3990, %v4618
    %v4875 = vadd.f32 %v3991, %v4619
    %v4876 = vadd.f32 %v3992, %v4620
    %v4877 = vadd.f32 %v3993, %v4621
    %v4878 = vadd.f32 %v3994, %v4622
    %v4879 = vadd.f32 %v3995, %v4623
    %v4880 = vadd.f32 %v3996, %v4624
    %v4881 = vadd.f32 %v3997, %v4625
    %v4882 = vadd.f32 %v3998, %v4626
    %v4883 = vadd.f32 %v3999, %v4627
    %v4884 = vadd.f32 %v4000, %v4628
    %v4885 = vadd.f32 %v4001, %v4629
    %v4886 = vadd.f32 %v4002, %v4630
    %v4887 = vadd.f32 %v4003, %v4631
    %v4888 = vadd.f32 %v4004, %v4632
    %v4889 = vadd.f32 %v4005, %v4633
    %v4890 = vadd.f32 %v4006, %v4634
    %v4891 = vadd.f32 %v4007, %v4635
    %v4892 = vadd.f32 %v4008, %v4636
    %v4893 = vadd.f32 %v4009, %v4637
    %v4894 = vadd.f32 %v4010, %v4638
    %v4895 = vadd.f32 %v4011, %v4639
    %v4896 = vadd.f32 %v4012, %v4640
    %v4897 = vadd.f32 %v4013, %v4641
    %v4898 = vadd.f32 %v4014, %v4642
    %v4899 = vadd.f32 %v4015, %v4643
    %v4900 = vadd.f32 %v4016, %v4644
    %v4901 = vadd.f32 %v4017, %v4645
    %v4902 = vadd.f32 %v4018, %v4646
    %v4903 = vadd.f32 %v4019, %v4647
    %v4904 = vadd.f32 %v4020, %v4648
    %v4905 = vadd.f32 %v4021, %v4649
    %v4906 = vadd.f32 %v4022, %v4650
    %v4907 = vadd.f32 %v4023, %v4651
    %v4908 = vadd.f32 %v4024, %v4652
    %v4909 = vadd.f32 %v4025, %v4653
    %v4910 = vadd.f32 %v4026, %v4654
    %v4911 = vadd.f32 %v4027, %v4655
    %v4912 = vadd.f32 %v4028, %v4656
    %v4913 = vadd.f32 %v4029, %v4657
    %v4914 = vadd.f32 %v4030, %v4658
    %v4915 = vadd.f32 %v4031, %v4659
    %v4916 = vadd.f32 %v4032, %v4660
    %v4917 = vadd.f32 %v4033, %v4661
    %v4918 = vadd.f32 %v4034, %v4662
    %v4919 = vadd.f32 %v4035, %v4663
    %v4920 = vadd.f32 %v4036, %v4664
    %v4921 = vadd.f32 %v4037, %v4665
    %v4922 = vadd.f32 %v4038, %v4666
    %v4923 = vadd.f32 %v4039, %v4667
    %v4924 = vadd.f32 %v4040, %v4668
    %v4925 = vadd.f32 %v4041, %v4669
    %v4926 = vadd.f32 %v4042, %v4670
    %v4927 = vadd.f32 %v4043, %v4671
    %v4928 = vadd.f32 %v4044, %v4672
    %v4929 = vadd.f32 %v4045, %v4673
    %v4930 = vadd.f32 %v4046, %v4674
    %v4931 = vadd.f32 %v4047, %v4675
    %v4932 = vadd.f32 %v4048, %v4676
    %v4933 = vadd.f32 %v4049, %v4677
    %v4934 = vadd.f32 %v4050, %v4678
    %v4935 = vadd.f32 %v4051, %v4679
    %v4936 = vadd.f32 %v4052, %v4680
    %v4937 = vadd.f32 %v4053, %v4681
    %v4938 = vadd.f32 %v4054, %v4682
    %v4939 = vadd.f32 %v4055, %v4683
    %v4940 = vadd.f32 %v4056, %v4684
    %v4941 = vadd.f32 %v4057, %v4685
    %v4942 = vadd.f32 %v4058, %v4686
    %v4943 = vadd.f32 %v4059, %v4687
    %v4944 = vadd.f32 %v4060, %v4688
    %v4945 = vadd.f32 %v4061, %v4689
    %v4946 = vadd.f32 %v4062, %v4690
    %v4947 = vadd.f32 %v4063, %v4691
    %v4948 = vadd.f32 %v4064, %v4692
    %v4949 = vadd.f32 %v4065, %v4693
    %v4950 = vadd.f32 %v4066, %v4694
    %v4951 = vadd.f32 %v4067, %v4695
    %v4952 = vadd.f32 %v4068, %v4696
    %v4953 = vadd.f32 %v4069, %v4697
    %v4954 = vadd.f32 %v4070, %v4698
    %v4955 = vadd.f32 %v4071, %v4699
    %v4956 = vadd.f32 %v4072, %v4700
    %v4957 = vadd.f32 %v4073, %v4701
    %v4958 = vadd.f32 %v4074, %v4702
    %v4959 = vadd.f32 %v4075, %v4703
    %v4960 = vadd.f32 %v4076, %v4704
    %v4961 = vadd.f32 %v4077, %v4705
    %v4962 = vadd.f32 %v4078, %v4706
    %v4963 = vadd.f32 %v4079, %v4707
    %v4964 = vadd.f32 %v4080, %v4708
    %v4965 = vadd.f32 %v4081, %v4709
    %v4966 = vadd.f32 %v4082, %v4710
    %v4967 = vadd.f32 %v4083, %v4711
    %v4968 = vadd.f32 %v4084, %v4712
    %v4969 = vadd.f32 %v4085, %v4713
    %v4970 = vlaneseq
    %v4971 = vshrl.u32 %v4970, 7
    %v4972 = vsub.s32 2, %v4971
    %v4973 = vrot.slane %v244, %v4972
    %v4974 = vlaneseq
    %v4975 = vshrl.u32 %v4974, 7
    %v4976 = vsub.s32 2, %v4975
    %v4977 = vrot.slane %v245, %v4976
    %v4978 = vlaneseq
    %v4979 = vshrl.u32 %v4978, 7
    %v4980 = vsub.s32 2, %v4979
    %v4981 = vrot.slane %v246, %v4980
    %v4982 = vlaneseq
    %v4983 = vshrl.u32 %v4982, 7
    %v4984 = vsub.s32 2, %v4983
    %v4985 = vrot.slane %v247, %v4984
    %v4986 = vlaneseq
    %v4987 = vshrl.u32 %v4986, 7
    %v4988 = vsub.s32 2, %v4987
    %v4989 = vrot.slane %v3454, %v4988
    %v4990 = vlaneseq
    %v4991 = vshrl.u32 %v4990, 7
    %v4992 = vsub.s32 6, %v4991
    %v4993 = vrot.slane %v3454, %v4992
    %v4994 = vlaneseq
    %v4995 = vshrl.u32 %v4994, 7
    %v4996 = vsub.s32 2, %v4995
    %v4997 = vrot.slane %v3455, %v4996
    %v4998 = vlaneseq
    %v4999 = vshrl.u32 %v4998, 7
    %v5000 = vsub.s32 6, %v4999
    %v5001 = vrot.slane %v3455, %v5000
    %v5006 = vlaneseq
    %v5007 = vshrl.u32 %v5006, 7
    %v5008 = vsub.s32 2, %v5007
    %v5009 = vrot.slane %v4989, %v5008
    %v5010 = vlaneseq
    %v5011 = vshrl.u32 %v5010, 7
    %v5012 = vsub.s32 2, %v5011
    %v5013 = vrot.slane %v4993, %v5012
    %v5014 = vlaneseq
    %v5015 = vshrl.u32 %v5014, 7
    %v5016 = vsub.s32 2, %v5015
    %v5017 = vrot.slane %v4997, %v5016
    %v5018 = vlaneseq
    %v5019 = vshrl.u32 %v5018, 7
    %v5020 = vsub.s32 2, %v5019
    %v5021 = vrot.slane %v5001, %v5020
    %5027 = vbcast.lane.b32.xlu0 %v5009, 256
    %v5028 = vpop.permute.xlu0 %5027
    %s5030 = sor.u32 256, 8
    %5031 = vbcast.lane.b32.xlu0 %v5009, %s5030
    %v5032 = vpop.permute.xlu0 %5031
    %s5034 = sor.u32 256, 16
    %5035 = vbcast.lane.b32.xlu0 %v5009, %s5034
    %v5036 = vpop.permute.xlu0 %5035
    %s5038 = sor.u32 256, 24
    %5039 = vbcast.lane.b32.xlu0 %v5009, %s5038
    %v5040 = vpop.permute.xlu0 %5039
    %s5042 = sor.u32 256, 32
    %5043 = vbcast.lane.b32.xlu0 %v5009, %s5042
    %v5044 = vpop.permute.xlu0 %5043
    %s5046 = sor.u32 256, 40
    %5047 = vbcast.lane.b32.xlu0 %v5009, %s5046
    %v5048 = vpop.permute.xlu0 %5047
    %s5050 = sor.u32 256, 48
    %5051 = vbcast.lane.b32.xlu0 %v5009, %s5050
    %v5052 = vpop.permute.xlu0 %5051
    %s5054 = sor.u32 256, 56
    %5055 = vbcast.lane.b32.xlu0 %v5009, %s5054
    %v5056 = vpop.permute.xlu0 %5055
    %s5058 = sor.u32 256, 64
    %5059 = vbcast.lane.b32.xlu0 %v5009, %s5058
    %v5060 = vpop.permute.xlu0 %5059
    %s5062 = sor.u32 256, 72
    %5063 = vbcast.lane.b32.xlu0 %v5009, %s5062
    %v5064 = vpop.permute.xlu0 %5063
    %s5066 = sor.u32 256, 80
    %5067 = vbcast.lane.b32.xlu0 %v5009, %s5066
    %v5068 = vpop.permute.xlu0 %5067
    %s5070 = sor.u32 256, 88
    %5071 = vbcast.lane.b32.xlu0 %v5009, %s5070
    %v5072 = vpop.permute.xlu0 %5071
    %s5074 = sor.u32 256, 96
    %5075 = vbcast.lane.b32.xlu0 %v5009, %s5074
    %v5076 = vpop.permute.xlu0 %5075
    %s5078 = sor.u32 256, 104
    %5079 = vbcast.lane.b32.xlu0 %v5009, %s5078
    %v5080 = vpop.permute.xlu0 %5079
    %s5082 = sor.u32 256, 112
    %5083 = vbcast.lane.b32.xlu0 %v5009, %s5082
    %v5084 = vpop.permute.xlu0 %5083
    %s5086 = sor.u32 256, 120
    %5087 = vbcast.lane.b32.xlu0 %v5009, %s5086
    %v5088 = vpop.permute.xlu0 %5087
    %5090 = vbcast.lane.b32.xlu0 %v5013, 256
    %v5091 = vpop.permute.xlu0 %5090
    %s5093 = sor.u32 256, 8
    %5094 = vbcast.lane.b32.xlu0 %v5013, %s5093
    %v5095 = vpop.permute.xlu0 %5094
    %s5097 = sor.u32 256, 16
    %5098 = vbcast.lane.b32.xlu0 %v5013, %s5097
    %v5099 = vpop.permute.xlu0 %5098
    %s5101 = sor.u32 256, 24
    %5102 = vbcast.lane.b32.xlu0 %v5013, %s5101
    %v5103 = vpop.permute.xlu0 %5102
    %s5105 = sor.u32 256, 32
    %5106 = vbcast.lane.b32.xlu0 %v5013, %s5105
    %v5107 = vpop.permute.xlu0 %5106
    %s5109 = sor.u32 256, 40
    %5110 = vbcast.lane.b32.xlu0 %v5013, %s5109
    %v5111 = vpop.permute.xlu0 %5110
    %s5113 = sor.u32 256, 48
    %5114 = vbcast.lane.b32.xlu0 %v5013, %s5113
    %v5115 = vpop.permute.xlu0 %5114
    %s5117 = sor.u32 256, 56
    %5118 = vbcast.lane.b32.xlu0 %v5013, %s5117
    %v5119 = vpop.permute.xlu0 %5118
    %s5121 = sor.u32 256, 64
    %5122 = vbcast.lane.b32.xlu0 %v5013, %s5121
    %v5123 = vpop.permute.xlu0 %5122
    %s5125 = sor.u32 256, 72
    %5126 = vbcast.lane.b32.xlu0 %v5013, %s5125
    %v5127 = vpop.permute.xlu0 %5126
    %s5129 = sor.u32 256, 80
    %5130 = vbcast.lane.b32.xlu0 %v5013, %s5129
    %v5131 = vpop.permute.xlu0 %5130
    %s5133 = sor.u32 256, 88
    %5134 = vbcast.lane.b32.xlu0 %v5013, %s5133
    %v5135 = vpop.permute.xlu0 %5134
    %s5137 = sor.u32 256, 96
    %5138 = vbcast.lane.b32.xlu0 %v5013, %s5137
    %v5139 = vpop.permute.xlu0 %5138
    %s5141 = sor.u32 256, 104
    %5142 = vbcast.lane.b32.xlu0 %v5013, %s5141
    %v5143 = vpop.permute.xlu0 %5142
    %s5145 = sor.u32 256, 112
    %5146 = vbcast.lane.b32.xlu0 %v5013, %s5145
    %v5147 = vpop.permute.xlu0 %5146
    %s5149 = sor.u32 256, 120
    %5150 = vbcast.lane.b32.xlu0 %v5013, %s5149
    %v5151 = vpop.permute.xlu0 %5150
    %5153 = vbcast.lane.b32.xlu0 %v5017, 256
    %v5154 = vpop.permute.xlu0 %5153
    %s5156 = sor.u32 256, 8
    %5157 = vbcast.lane.b32.xlu0 %v5017, %s5156
    %v5158 = vpop.permute.xlu0 %5157
    %s5160 = sor.u32 256, 16
    %5161 = vbcast.lane.b32.xlu0 %v5017, %s5160
    %v5162 = vpop.permute.xlu0 %5161
    %s5164 = sor.u32 256, 24
    %5165 = vbcast.lane.b32.xlu0 %v5017, %s5164
    %v5166 = vpop.permute.xlu0 %5165
    %s5168 = sor.u32 256, 32
    %5169 = vbcast.lane.b32.xlu0 %v5017, %s5168
    %v5170 = vpop.permute.xlu0 %5169
    %s5172 = sor.u32 256, 40
    %5173 = vbcast.lane.b32.xlu0 %v5017, %s5172
    %v5174 = vpop.permute.xlu0 %5173
    %s5176 = sor.u32 256, 48
    %5177 = vbcast.lane.b32.xlu0 %v5017, %s5176
    %v5178 = vpop.permute.xlu0 %5177
    %s5180 = sor.u32 256, 56
    %5181 = vbcast.lane.b32.xlu0 %v5017, %s5180
    %v5182 = vpop.permute.xlu0 %5181
    %s5184 = sor.u32 256, 64
    %5185 = vbcast.lane.b32.xlu0 %v5017, %s5184
    %v5186 = vpop.permute.xlu0 %5185
    %s5188 = sor.u32 256, 72
    %5189 = vbcast.lane.b32.xlu0 %v5017, %s5188
    %v5190 = vpop.permute.xlu0 %5189
    %s5192 = sor.u32 256, 80
    %5193 = vbcast.lane.b32.xlu0 %v5017, %s5192
    %v5194 = vpop.permute.xlu0 %5193
    %s5196 = sor.u32 256, 88
    %5197 = vbcast.lane.b32.xlu0 %v5017, %s5196
    %v5198 = vpop.permute.xlu0 %5197
    %s5200 = sor.u32 256, 96
    %5201 = vbcast.lane.b32.xlu0 %v5017, %s5200
    %v5202 = vpop.permute.xlu0 %5201
    %s5204 = sor.u32 256, 104
    %5205 = vbcast.lane.b32.xlu0 %v5017, %s5204
    %v5206 = vpop.permute.xlu0 %5205
    %s5208 = sor.u32 256, 112
    %5209 = vbcast.lane.b32.xlu0 %v5017, %s5208
    %v5210 = vpop.permute.xlu0 %5209
    %s5212 = sor.u32 256, 120
    %5213 = vbcast.lane.b32.xlu0 %v5017, %s5212
    %v5214 = vpop.permute.xlu0 %5213
    %5216 = vbcast.lane.b32.xlu0 %v5021, 256
    %v5217 = vpop.permute.xlu0 %5216
    %s5219 = sor.u32 256, 8
    %5220 = vbcast.lane.b32.xlu0 %v5021, %s5219
    %v5221 = vpop.permute.xlu0 %5220
    %s5223 = sor.u32 256, 16
    %5224 = vbcast.lane.b32.xlu0 %v5021, %s5223
    %v5225 = vpop.permute.xlu0 %5224
    %s5227 = sor.u32 256, 24
    %5228 = vbcast.lane.b32.xlu0 %v5021, %s5227
    %v5229 = vpop.permute.xlu0 %5228
    %s5231 = sor.u32 256, 32
    %5232 = vbcast.lane.b32.xlu0 %v5021, %s5231
    %v5233 = vpop.permute.xlu0 %5232
    %s5235 = sor.u32 256, 40
    %5236 = vbcast.lane.b32.xlu0 %v5021, %s5235
    %v5237 = vpop.permute.xlu0 %5236
    %s5239 = sor.u32 256, 48
    %5240 = vbcast.lane.b32.xlu0 %v5021, %s5239
    %v5241 = vpop.permute.xlu0 %5240
    %s5243 = sor.u32 256, 56
    %5244 = vbcast.lane.b32.xlu0 %v5021, %s5243
    %v5245 = vpop.permute.xlu0 %5244
    %s5247 = sor.u32 256, 64
    %5248 = vbcast.lane.b32.xlu0 %v5021, %s5247
    %v5249 = vpop.permute.xlu0 %5248
    %s5251 = sor.u32 256, 72
    %5252 = vbcast.lane.b32.xlu0 %v5021, %s5251
    %v5253 = vpop.permute.xlu0 %5252
    %s5255 = sor.u32 256, 80
    %5256 = vbcast.lane.b32.xlu0 %v5021, %s5255
    %v5257 = vpop.permute.xlu0 %5256
    %s5259 = sor.u32 256, 88
    %5260 = vbcast.lane.b32.xlu0 %v5021, %s5259
    %v5261 = vpop.permute.xlu0 %5260
    %s5263 = sor.u32 256, 96
    %5264 = vbcast.lane.b32.xlu0 %v5021, %s5263
    %v5265 = vpop.permute.xlu0 %5264
    %s5267 = sor.u32 256, 104
    %5268 = vbcast.lane.b32.xlu0 %v5021, %s5267
    %v5269 = vpop.permute.xlu0 %5268
    %s5271 = sor.u32 256, 112
    %5272 = vbcast.lane.b32.xlu0 %v5021, %s5271
    %v5273 = vpop.permute.xlu0 %5272
    %s5275 = sor.u32 256, 120
    %5276 = vbcast.lane.b32.xlu0 %v5021, %s5275
    %v5277 = vpop.permute.xlu0 %5276
    %v5342 = vmul.f32 %v4973, %v5028
    %v5343 = vmul.f32 %v4973, %v5032
    %v5344 = vmul.f32 %v4973, %v5036
    %v5345 = vmul.f32 %v4973, %v5040
    %v5346 = vmul.f32 %v4973, %v5044
    %v5347 = vmul.f32 %v4973, %v5048
    %v5348 = vmul.f32 %v4973, %v5052
    %v5349 = vmul.f32 %v4973, %v5056
    %v5350 = vmul.f32 %v4973, %v5060
    %v5351 = vmul.f32 %v4973, %v5064
    %v5352 = vmul.f32 %v4973, %v5068
    %v5353 = vmul.f32 %v4973, %v5072
    %v5354 = vmul.f32 %v4973, %v5076
    %v5355 = vmul.f32 %v4973, %v5080
    %v5356 = vmul.f32 %v4973, %v5084
    %v5357 = vmul.f32 %v4973, %v5088
    %v5358 = vmul.f32 %v4973, %v5091
    %v5359 = vmul.f32 %v4973, %v5095
    %v5360 = vmul.f32 %v4973, %v5099
    %v5361 = vmul.f32 %v4973, %v5103
    %v5362 = vmul.f32 %v4973, %v5107
    %v5363 = vmul.f32 %v4973, %v5111
    %v5364 = vmul.f32 %v4973, %v5115
    %v5365 = vmul.f32 %v4973, %v5119
    %v5366 = vmul.f32 %v4973, %v5123
    %v5367 = vmul.f32 %v4973, %v5127
    %v5368 = vmul.f32 %v4973, %v5131
    %v5369 = vmul.f32 %v4973, %v5135
    %v5370 = vmul.f32 %v4973, %v5139
    %v5371 = vmul.f32 %v4973, %v5143
    %v5372 = vmul.f32 %v4973, %v5147
    %v5373 = vmul.f32 %v4973, %v5151
    %v5374 = vmul.f32 %v4973, %v5154
    %v5375 = vmul.f32 %v4973, %v5158
    %v5376 = vmul.f32 %v4973, %v5162
    %v5377 = vmul.f32 %v4973, %v5166
    %v5378 = vmul.f32 %v4973, %v5170
    %v5379 = vmul.f32 %v4973, %v5174
    %v5380 = vmul.f32 %v4973, %v5178
    %v5381 = vmul.f32 %v4973, %v5182
    %v5382 = vmul.f32 %v4973, %v5186
    %v5383 = vmul.f32 %v4973, %v5190
    %v5384 = vmul.f32 %v4973, %v5194
    %v5385 = vmul.f32 %v4973, %v5198
    %v5386 = vmul.f32 %v4973, %v5202
    %v5387 = vmul.f32 %v4973, %v5206
    %v5388 = vmul.f32 %v4973, %v5210
    %v5389 = vmul.f32 %v4973, %v5214
    %v5390 = vmul.f32 %v4973, %v5217
    %v5391 = vmul.f32 %v4973, %v5221
    %v5392 = vmul.f32 %v4973, %v5225
    %v5393 = vmul.f32 %v4973, %v5229
    %v5394 = vmul.f32 %v4973, %v5233
    %v5395 = vmul.f32 %v4973, %v5237
    %v5396 = vmul.f32 %v4973, %v5241
    %v5397 = vmul.f32 %v4973, %v5245
    %v5398 = vmul.f32 %v4973, %v5249
    %v5399 = vmul.f32 %v4973, %v5253
    %v5400 = vmul.f32 %v4973, %v5257
    %v5401 = vmul.f32 %v4973, %v5261
    %v5402 = vmul.f32 %v4973, %v5265
    %v5403 = vmul.f32 %v4973, %v5269
    %v5404 = vmul.f32 %v4973, %v5273
    %v5405 = vmul.f32 %v4973, %v5277
    %v5406 = vmul.f32 %v4977, %v5028
    %v5407 = vmul.f32 %v4977, %v5032
    %v5408 = vmul.f32 %v4977, %v5036
    %v5409 = vmul.f32 %v4977, %v5040
    %v5410 = vmul.f32 %v4977, %v5044
    %v5411 = vmul.f32 %v4977, %v5048
    %v5412 = vmul.f32 %v4977, %v5052
    %v5413 = vmul.f32 %v4977, %v5056
    %v5414 = vmul.f32 %v4977, %v5060
    %v5415 = vmul.f32 %v4977, %v5064
    %v5416 = vmul.f32 %v4977, %v5068
    %v5417 = vmul.f32 %v4977, %v5072
    %v5418 = vmul.f32 %v4977, %v5076
    %v5419 = vmul.f32 %v4977, %v5080
    %v5420 = vmul.f32 %v4977, %v5084
    %v5421 = vmul.f32 %v4977, %v5088
    %v5422 = vmul.f32 %v4977, %v5091
    %v5423 = vmul.f32 %v4977, %v5095
    %v5424 = vmul.f32 %v4977, %v5099
    %v5425 = vmul.f32 %v4977, %v5103
    %v5426 = vmul.f32 %v4977, %v5107
    %v5427 = vmul.f32 %v4977, %v5111
    %v5428 = vmul.f32 %v4977, %v5115
    %v5429 = vmul.f32 %v4977, %v5119
    %v5430 = vmul.f32 %v4977, %v5123
    %v5431 = vmul.f32 %v4977, %v5127
    %v5432 = vmul.f32 %v4977, %v5131
    %v5433 = vmul.f32 %v4977, %v5135
    %v5434 = vmul.f32 %v4977, %v5139
    %v5435 = vmul.f32 %v4977, %v5143
    %v5436 = vmul.f32 %v4977, %v5147
    %v5437 = vmul.f32 %v4977, %v5151
    %v5438 = vmul.f32 %v4977, %v5154
    %v5439 = vmul.f32 %v4977, %v5158
    %v5440 = vmul.f32 %v4977, %v5162
    %v5441 = vmul.f32 %v4977, %v5166
    %v5442 = vmul.f32 %v4977, %v5170
    %v5443 = vmul.f32 %v4977, %v5174
    %v5444 = vmul.f32 %v4977, %v5178
    %v5445 = vmul.f32 %v4977, %v5182
    %v5446 = vmul.f32 %v4977, %v5186
    %v5447 = vmul.f32 %v4977, %v5190
    %v5448 = vmul.f32 %v4977, %v5194
    %v5449 = vmul.f32 %v4977, %v5198
    %v5450 = vmul.f32 %v4977, %v5202
    %v5451 = vmul.f32 %v4977, %v5206
    %v5452 = vmul.f32 %v4977, %v5210
    %v5453 = vmul.f32 %v4977, %v5214
    %v5454 = vmul.f32 %v4977, %v5217
    %v5455 = vmul.f32 %v4977, %v5221
    %v5456 = vmul.f32 %v4977, %v5225
    %v5457 = vmul.f32 %v4977, %v5229
    %v5458 = vmul.f32 %v4977, %v5233
    %v5459 = vmul.f32 %v4977, %v5237
    %v5460 = vmul.f32 %v4977, %v5241
    %v5461 = vmul.f32 %v4977, %v5245
    %v5462 = vmul.f32 %v4977, %v5249
    %v5463 = vmul.f32 %v4977, %v5253
    %v5464 = vmul.f32 %v4977, %v5257
    %v5465 = vmul.f32 %v4977, %v5261
    %v5466 = vmul.f32 %v4977, %v5265
    %v5467 = vmul.f32 %v4977, %v5269
    %v5468 = vmul.f32 %v4977, %v5273
    %v5469 = vmul.f32 %v4977, %v5277
    %v5470 = vmul.f32 %v4981, %v5028
    %v5471 = vmul.f32 %v4981, %v5032
    %v5472 = vmul.f32 %v4981, %v5036
    %v5473 = vmul.f32 %v4981, %v5040
    %v5474 = vmul.f32 %v4981, %v5044
    %v5475 = vmul.f32 %v4981, %v5048
    %v5476 = vmul.f32 %v4981, %v5052
    %v5477 = vmul.f32 %v4981, %v5056
    %v5478 = vmul.f32 %v4981, %v5060
    %v5479 = vmul.f32 %v4981, %v5064
    %v5480 = vmul.f32 %v4981, %v5068
    %v5481 = vmul.f32 %v4981, %v5072
    %v5482 = vmul.f32 %v4981, %v5076
    %v5483 = vmul.f32 %v4981, %v5080
    %v5484 = vmul.f32 %v4981, %v5084
    %v5485 = vmul.f32 %v4981, %v5088
    %v5486 = vmul.f32 %v4981, %v5091
    %v5487 = vmul.f32 %v4981, %v5095
    %v5488 = vmul.f32 %v4981, %v5099
    %v5489 = vmul.f32 %v4981, %v5103
    %v5490 = vmul.f32 %v4981, %v5107
    %v5491 = vmul.f32 %v4981, %v5111
    %v5492 = vmul.f32 %v4981, %v5115
    %v5493 = vmul.f32 %v4981, %v5119
    %v5494 = vmul.f32 %v4981, %v5123
    %v5495 = vmul.f32 %v4981, %v5127
    %v5496 = vmul.f32 %v4981, %v5131
    %v5497 = vmul.f32 %v4981, %v5135
    %v5498 = vmul.f32 %v4981, %v5139
    %v5499 = vmul.f32 %v4981, %v5143
    %v5500 = vmul.f32 %v4981, %v5147
    %v5501 = vmul.f32 %v4981, %v5151
    %v5502 = vmul.f32 %v4981, %v5154
    %v5503 = vmul.f32 %v4981, %v5158
    %v5504 = vmul.f32 %v4981, %v5162
    %v5505 = vmul.f32 %v4981, %v5166
    %v5506 = vmul.f32 %v4981, %v5170
    %v5507 = vmul.f32 %v4981, %v5174
    %v5508 = vmul.f32 %v4981, %v5178
    %v5509 = vmul.f32 %v4981, %v5182
    %v5510 = vmul.f32 %v4981, %v5186
    %v5511 = vmul.f32 %v4981, %v5190
    %v5512 = vmul.f32 %v4981, %v5194
    %v5513 = vmul.f32 %v4981, %v5198
    %v5514 = vmul.f32 %v4981, %v5202
    %v5515 = vmul.f32 %v4981, %v5206
    %v5516 = vmul.f32 %v4981, %v5210
    %v5517 = vmul.f32 %v4981, %v5214
    %v5518 = vmul.f32 %v4981, %v5217
    %v5519 = vmul.f32 %v4981, %v5221
    %v5520 = vmul.f32 %v4981, %v5225
    %v5521 = vmul.f32 %v4981, %v5229
    %v5522 = vmul.f32 %v4981, %v5233
    %v5523 = vmul.f32 %v4981, %v5237
    %v5524 = vmul.f32 %v4981, %v5241
    %v5525 = vmul.f32 %v4981, %v5245
    %v5526 = vmul.f32 %v4981, %v5249
    %v5527 = vmul.f32 %v4981, %v5253
    %v5528 = vmul.f32 %v4981, %v5257
    %v5529 = vmul.f32 %v4981, %v5261
    %v5530 = vmul.f32 %v4981, %v5265
    %v5531 = vmul.f32 %v4981, %v5269
    %v5532 = vmul.f32 %v4981, %v5273
    %v5533 = vmul.f32 %v4981, %v5277
    %v5534 = vmul.f32 %v4985, %v5028
    %v5535 = vmul.f32 %v4985, %v5032
    %v5536 = vmul.f32 %v4985, %v5036
    %v5537 = vmul.f32 %v4985, %v5040
    %v5538 = vmul.f32 %v4985, %v5044
    %v5539 = vmul.f32 %v4985, %v5048
    %v5540 = vmul.f32 %v4985, %v5052
    %v5541 = vmul.f32 %v4985, %v5056
    %v5542 = vmul.f32 %v4985, %v5060
    %v5543 = vmul.f32 %v4985, %v5064
    %v5544 = vmul.f32 %v4985, %v5068
    %v5545 = vmul.f32 %v4985, %v5072
    %v5546 = vmul.f32 %v4985, %v5076
    %v5547 = vmul.f32 %v4985, %v5080
    %v5548 = vmul.f32 %v4985, %v5084
    %v5549 = vmul.f32 %v4985, %v5088
    %v5550 = vmul.f32 %v4985, %v5091
    %v5551 = vmul.f32 %v4985, %v5095
    %v5552 = vmul.f32 %v4985, %v5099
    %v5553 = vmul.f32 %v4985, %v5103
    %v5554 = vmul.f32 %v4985, %v5107
    %v5555 = vmul.f32 %v4985, %v5111
    %v5556 = vmul.f32 %v4985, %v5115
    %v5557 = vmul.f32 %v4985, %v5119
    %v5558 = vmul.f32 %v4985, %v5123
    %v5559 = vmul.f32 %v4985, %v5127
    %v5560 = vmul.f32 %v4985, %v5131
    %v5561 = vmul.f32 %v4985, %v5135
    %v5562 = vmul.f32 %v4985, %v5139
    %v5563 = vmul.f32 %v4985, %v5143
    %v5564 = vmul.f32 %v4985, %v5147
    %v5565 = vmul.f32 %v4985, %v5151
    %v5566 = vmul.f32 %v4985, %v5154
    %v5567 = vmul.f32 %v4985, %v5158
    %v5568 = vmul.f32 %v4985, %v5162
    %v5569 = vmul.f32 %v4985, %v5166
    %v5570 = vmul.f32 %v4985, %v5170
    %v5571 = vmul.f32 %v4985, %v5174
    %v5572 = vmul.f32 %v4985, %v5178
    %v5573 = vmul.f32 %v4985, %v5182
    %v5574 = vmul.f32 %v4985, %v5186
    %v5575 = vmul.f32 %v4985, %v5190
    %v5576 = vmul.f32 %v4985, %v5194
    %v5577 = vmul.f32 %v4985, %v5198
    %v5578 = vmul.f32 %v4985, %v5202
    %v5579 = vmul.f32 %v4985, %v5206
    %v5580 = vmul.f32 %v4985, %v5210
    %v5581 = vmul.f32 %v4985, %v5214
    %v5582 = vmul.f32 %v4985, %v5217
    %v5583 = vmul.f32 %v4985, %v5221
    %v5584 = vmul.f32 %v4985, %v5225
    %v5585 = vmul.f32 %v4985, %v5229
    %v5586 = vmul.f32 %v4985, %v5233
    %v5587 = vmul.f32 %v4985, %v5237
    %v5588 = vmul.f32 %v4985, %v5241
    %v5589 = vmul.f32 %v4985, %v5245
    %v5590 = vmul.f32 %v4985, %v5249
    %v5591 = vmul.f32 %v4985, %v5253
    %v5592 = vmul.f32 %v4985, %v5257
    %v5593 = vmul.f32 %v4985, %v5261
    %v5594 = vmul.f32 %v4985, %v5265
    %v5595 = vmul.f32 %v4985, %v5269
    %v5596 = vmul.f32 %v4985, %v5273
    %v5597 = vmul.f32 %v4985, %v5277
    %v5598 = vadd.f32 %v4714, %v5342
    %v5599 = vadd.f32 %v4715, %v5343
    %v5600 = vadd.f32 %v4716, %v5344
    %v5601 = vadd.f32 %v4717, %v5345
    %v5602 = vadd.f32 %v4718, %v5346
    %v5603 = vadd.f32 %v4719, %v5347
    %v5604 = vadd.f32 %v4720, %v5348
    %v5605 = vadd.f32 %v4721, %v5349
    %v5606 = vadd.f32 %v4722, %v5350
    %v5607 = vadd.f32 %v4723, %v5351
    %v5608 = vadd.f32 %v4724, %v5352
    %v5609 = vadd.f32 %v4725, %v5353
    %v5610 = vadd.f32 %v4726, %v5354
    %v5611 = vadd.f32 %v4727, %v5355
    %v5612 = vadd.f32 %v4728, %v5356
    %v5613 = vadd.f32 %v4729, %v5357
    %v5614 = vadd.f32 %v4730, %v5358
    %v5615 = vadd.f32 %v4731, %v5359
    %v5616 = vadd.f32 %v4732, %v5360
    %v5617 = vadd.f32 %v4733, %v5361
    %v5618 = vadd.f32 %v4734, %v5362
    %v5619 = vadd.f32 %v4735, %v5363
    %v5620 = vadd.f32 %v4736, %v5364
    %v5621 = vadd.f32 %v4737, %v5365
    %v5622 = vadd.f32 %v4738, %v5366
    %v5623 = vadd.f32 %v4739, %v5367
    %v5624 = vadd.f32 %v4740, %v5368
    %v5625 = vadd.f32 %v4741, %v5369
    %v5626 = vadd.f32 %v4742, %v5370
    %v5627 = vadd.f32 %v4743, %v5371
    %v5628 = vadd.f32 %v4744, %v5372
    %v5629 = vadd.f32 %v4745, %v5373
    %v5630 = vadd.f32 %v4746, %v5374
    %v5631 = vadd.f32 %v4747, %v5375
    %v5632 = vadd.f32 %v4748, %v5376
    %v5633 = vadd.f32 %v4749, %v5377
    %v5634 = vadd.f32 %v4750, %v5378
    %v5635 = vadd.f32 %v4751, %v5379
    %v5636 = vadd.f32 %v4752, %v5380
    %v5637 = vadd.f32 %v4753, %v5381
    %v5638 = vadd.f32 %v4754, %v5382
    %v5639 = vadd.f32 %v4755, %v5383
    %v5640 = vadd.f32 %v4756, %v5384
    %v5641 = vadd.f32 %v4757, %v5385
    %v5642 = vadd.f32 %v4758, %v5386
    %v5643 = vadd.f32 %v4759, %v5387
    %v5644 = vadd.f32 %v4760, %v5388
    %v5645 = vadd.f32 %v4761, %v5389
    %v5646 = vadd.f32 %v4762, %v5390
    %v5647 = vadd.f32 %v4763, %v5391
    %v5648 = vadd.f32 %v4764, %v5392
    %v5649 = vadd.f32 %v4765, %v5393
    %v5650 = vadd.f32 %v4766, %v5394
    %v5651 = vadd.f32 %v4767, %v5395
    %v5652 = vadd.f32 %v4768, %v5396
    %v5653 = vadd.f32 %v4769, %v5397
    %v5654 = vadd.f32 %v4770, %v5398
    %v5655 = vadd.f32 %v4771, %v5399
    %v5656 = vadd.f32 %v4772, %v5400
    %v5657 = vadd.f32 %v4773, %v5401
    %v5658 = vadd.f32 %v4774, %v5402
    %v5659 = vadd.f32 %v4775, %v5403
    %v5660 = vadd.f32 %v4776, %v5404
    %v5661 = vadd.f32 %v4777, %v5405
    %v5662 = vadd.f32 %v4778, %v5406
    %v5663 = vadd.f32 %v4779, %v5407
    %v5664 = vadd.f32 %v4780, %v5408
    %v5665 = vadd.f32 %v4781, %v5409
    %v5666 = vadd.f32 %v4782, %v5410
    %v5667 = vadd.f32 %v4783, %v5411
    %v5668 = vadd.f32 %v4784, %v5412
    %v5669 = vadd.f32 %v4785, %v5413
    %v5670 = vadd.f32 %v4786, %v5414
    %v5671 = vadd.f32 %v4787, %v5415
    %v5672 = vadd.f32 %v4788, %v5416
    %v5673 = vadd.f32 %v4789, %v5417
    %v5674 = vadd.f32 %v4790, %v5418
    %v5675 = vadd.f32 %v4791, %v5419
    %v5676 = vadd.f32 %v4792, %v5420
    %v5677 = vadd.f32 %v4793, %v5421
    %v5678 = vadd.f32 %v4794, %v5422
    %v5679 = vadd.f32 %v4795, %v5423
    %v5680 = vadd.f32 %v4796, %v5424
    %v5681 = vadd.f32 %v4797, %v5425
    %v5682 = vadd.f32 %v4798, %v5426
    %v5683 = vadd.f32 %v4799, %v5427
    %v5684 = vadd.f32 %v4800, %v5428
    %v5685 = vadd.f32 %v4801, %v5429
    %v5686 = vadd.f32 %v4802, %v5430
    %v5687 = vadd.f32 %v4803, %v5431
    %v5688 = vadd.f32 %v4804, %v5432
    %v5689 = vadd.f32 %v4805, %v5433
    %v5690 = vadd.f32 %v4806, %v5434
    %v5691 = vadd.f32 %v4807, %v5435
    %v5692 = vadd.f32 %v4808, %v5436
    %v5693 = vadd.f32 %v4809, %v5437
    %v5694 = vadd.f32 %v4810, %v5438
    %v5695 = vadd.f32 %v4811, %v5439
    %v5696 = vadd.f32 %v4812, %v5440
    %v5697 = vadd.f32 %v4813, %v5441
    %v5698 = vadd.f32 %v4814, %v5442
    %v5699 = vadd.f32 %v4815, %v5443
    %v5700 = vadd.f32 %v4816, %v5444
    %v5701 = vadd.f32 %v4817, %v5445
    %v5702 = vadd.f32 %v4818, %v5446
    %v5703 = vadd.f32 %v4819, %v5447
    %v5704 = vadd.f32 %v4820, %v5448
    %v5705 = vadd.f32 %v4821, %v5449
    %v5706 = vadd.f32 %v4822, %v5450
    %v5707 = vadd.f32 %v4823, %v5451
    %v5708 = vadd.f32 %v4824, %v5452
    %v5709 = vadd.f32 %v4825, %v5453
    %v5710 = vadd.f32 %v4826, %v5454
    %v5711 = vadd.f32 %v4827, %v5455
    %v5712 = vadd.f32 %v4828, %v5456
    %v5713 = vadd.f32 %v4829, %v5457
    %v5714 = vadd.f32 %v4830, %v5458
    %v5715 = vadd.f32 %v4831, %v5459
    %v5716 = vadd.f32 %v4832, %v5460
    %v5717 = vadd.f32 %v4833, %v5461
    %v5718 = vadd.f32 %v4834, %v5462
    %v5719 = vadd.f32 %v4835, %v5463
    %v5720 = vadd.f32 %v4836, %v5464
    %v5721 = vadd.f32 %v4837, %v5465
    %v5722 = vadd.f32 %v4838, %v5466
    %v5723 = vadd.f32 %v4839, %v5467
    %v5724 = vadd.f32 %v4840, %v5468
    %v5725 = vadd.f32 %v4841, %v5469
    %v5726 = vadd.f32 %v4842, %v5470
    %v5727 = vadd.f32 %v4843, %v5471
    %v5728 = vadd.f32 %v4844, %v5472
    %v5729 = vadd.f32 %v4845, %v5473
    %v5730 = vadd.f32 %v4846, %v5474
    %v5731 = vadd.f32 %v4847, %v5475
    %v5732 = vadd.f32 %v4848, %v5476
    %v5733 = vadd.f32 %v4849, %v5477
    %v5734 = vadd.f32 %v4850, %v5478
    %v5735 = vadd.f32 %v4851, %v5479
    %v5736 = vadd.f32 %v4852, %v5480
    %v5737 = vadd.f32 %v4853, %v5481
    %v5738 = vadd.f32 %v4854, %v5482
    %v5739 = vadd.f32 %v4855, %v5483
    %v5740 = vadd.f32 %v4856, %v5484
    %v5741 = vadd.f32 %v4857, %v5485
    %v5742 = vadd.f32 %v4858, %v5486
    %v5743 = vadd.f32 %v4859, %v5487
    %v5744 = vadd.f32 %v4860, %v5488
    %v5745 = vadd.f32 %v4861, %v5489
    %v5746 = vadd.f32 %v4862, %v5490
    %v5747 = vadd.f32 %v4863, %v5491
    %v5748 = vadd.f32 %v4864, %v5492
    %v5749 = vadd.f32 %v4865, %v5493
    %v5750 = vadd.f32 %v4866, %v5494
    %v5751 = vadd.f32 %v4867, %v5495
    %v5752 = vadd.f32 %v4868, %v5496
    %v5753 = vadd.f32 %v4869, %v5497
    %v5754 = vadd.f32 %v4870, %v5498
    %v5755 = vadd.f32 %v4871, %v5499
    %v5756 = vadd.f32 %v4872, %v5500
    %v5757 = vadd.f32 %v4873, %v5501
    %v5758 = vadd.f32 %v4874, %v5502
    %v5759 = vadd.f32 %v4875, %v5503
    %v5760 = vadd.f32 %v4876, %v5504
    %v5761 = vadd.f32 %v4877, %v5505
    %v5762 = vadd.f32 %v4878, %v5506
    %v5763 = vadd.f32 %v4879, %v5507
    %v5764 = vadd.f32 %v4880, %v5508
    %v5765 = vadd.f32 %v4881, %v5509
    %v5766 = vadd.f32 %v4882, %v5510
    %v5767 = vadd.f32 %v4883, %v5511
    %v5768 = vadd.f32 %v4884, %v5512
    %v5769 = vadd.f32 %v4885, %v5513
    %v5770 = vadd.f32 %v4886, %v5514
    %v5771 = vadd.f32 %v4887, %v5515
    %v5772 = vadd.f32 %v4888, %v5516
    %v5773 = vadd.f32 %v4889, %v5517
    %v5774 = vadd.f32 %v4890, %v5518
    %v5775 = vadd.f32 %v4891, %v5519
    %v5776 = vadd.f32 %v4892, %v5520
    %v5777 = vadd.f32 %v4893, %v5521
    %v5778 = vadd.f32 %v4894, %v5522
    %v5779 = vadd.f32 %v4895, %v5523
    %v5780 = vadd.f32 %v4896, %v5524
    %v5781 = vadd.f32 %v4897, %v5525
    %v5782 = vadd.f32 %v4898, %v5526
    %v5783 = vadd.f32 %v4899, %v5527
    %v5784 = vadd.f32 %v4900, %v5528
    %v5785 = vadd.f32 %v4901, %v5529
    %v5786 = vadd.f32 %v4902, %v5530
    %v5787 = vadd.f32 %v4903, %v5531
    %v5788 = vadd.f32 %v4904, %v5532
    %v5789 = vadd.f32 %v4905, %v5533
    %v5790 = vadd.f32 %v4906, %v5534
    %v5791 = vadd.f32 %v4907, %v5535
    %v5792 = vadd.f32 %v4908, %v5536
    %v5793 = vadd.f32 %v4909, %v5537
    %v5794 = vadd.f32 %v4910, %v5538
    %v5795 = vadd.f32 %v4911, %v5539
    %v5796 = vadd.f32 %v4912, %v5540
    %v5797 = vadd.f32 %v4913, %v5541
    %v5798 = vadd.f32 %v4914, %v5542
    %v5799 = vadd.f32 %v4915, %v5543
    %v5800 = vadd.f32 %v4916, %v5544
    %v5801 = vadd.f32 %v4917, %v5545
    %v5802 = vadd.f32 %v4918, %v5546
    %v5803 = vadd.f32 %v4919, %v5547
    %v5804 = vadd.f32 %v4920, %v5548
    %v5805 = vadd.f32 %v4921, %v5549
    %v5806 = vadd.f32 %v4922, %v5550
    %v5807 = vadd.f32 %v4923, %v5551
    %v5808 = vadd.f32 %v4924, %v5552
    %v5809 = vadd.f32 %v4925, %v5553
    %v5810 = vadd.f32 %v4926, %v5554
    %v5811 = vadd.f32 %v4927, %v5555
    %v5812 = vadd.f32 %v4928, %v5556
    %v5813 = vadd.f32 %v4929, %v5557
    %v5814 = vadd.f32 %v4930, %v5558
    %v5815 = vadd.f32 %v4931, %v5559
    %v5816 = vadd.f32 %v4932, %v5560
    %v5817 = vadd.f32 %v4933, %v5561
    %v5818 = vadd.f32 %v4934, %v5562
    %v5819 = vadd.f32 %v4935, %v5563
    %v5820 = vadd.f32 %v4936, %v5564
    %v5821 = vadd.f32 %v4937, %v5565
    %v5822 = vadd.f32 %v4938, %v5566
    %v5823 = vadd.f32 %v4939, %v5567
    %v5824 = vadd.f32 %v4940, %v5568
    %v5825 = vadd.f32 %v4941, %v5569
    %v5826 = vadd.f32 %v4942, %v5570
    %v5827 = vadd.f32 %v4943, %v5571
    %v5828 = vadd.f32 %v4944, %v5572
    %v5829 = vadd.f32 %v4945, %v5573
    %v5830 = vadd.f32 %v4946, %v5574
    %v5831 = vadd.f32 %v4947, %v5575
    %v5832 = vadd.f32 %v4948, %v5576
    %v5833 = vadd.f32 %v4949, %v5577
    %v5834 = vadd.f32 %v4950, %v5578
    %v5835 = vadd.f32 %v4951, %v5579
    %v5836 = vadd.f32 %v4952, %v5580
    %v5837 = vadd.f32 %v4953, %v5581
    %v5838 = vadd.f32 %v4954, %v5582
    %v5839 = vadd.f32 %v4955, %v5583
    %v5840 = vadd.f32 %v4956, %v5584
    %v5841 = vadd.f32 %v4957, %v5585
    %v5842 = vadd.f32 %v4958, %v5586
    %v5843 = vadd.f32 %v4959, %v5587
    %v5844 = vadd.f32 %v4960, %v5588
    %v5845 = vadd.f32 %v4961, %v5589
    %v5846 = vadd.f32 %v4962, %v5590
    %v5847 = vadd.f32 %v4963, %v5591
    %v5848 = vadd.f32 %v4964, %v5592
    %v5849 = vadd.f32 %v4965, %v5593
    %v5850 = vadd.f32 %v4966, %v5594
    %v5851 = vadd.f32 %v4967, %v5595
    %v5852 = vadd.f32 %v4968, %v5596
    %v5853 = vadd.f32 %v4969, %v5597
    %v5854 = vld [vmem:[%s12] sm:$0xf]
    %v5856 = vlaneseq
    %v5857 = vshrl.u32 %v5856, 7
    %v5858 = vsub.s32 0, %v5857
    %v5859 = vrot.slane %v5854, %v5858
    %v5860 = vlaneseq
    %v5861 = vshrl.u32 %v5860, 7
    %v5862 = vsub.s32 1, %v5861
    %v5863 = vrot.slane %v5854, %v5862
    %v5864 = vlaneseq
    %v5865 = vshrl.u32 %v5864, 7
    %v5866 = vsub.s32 2, %v5865
    %v5867 = vrot.slane %v5854, %v5866
    %v5868 = vlaneseq
    %v5869 = vshrl.u32 %v5868, 7
    %v5870 = vsub.s32 3, %v5869
    %v5871 = vrot.slane %v5854, %v5870
    %5873 = vbcast.lane.b32.xlu0 %v5859, 256
    %v5874 = vpop.permute.xlu0 %5873
    %s5876 = sor.u32 256, 8
    %5877 = vbcast.lane.b32.xlu0 %v5859, %s5876
    %v5878 = vpop.permute.xlu0 %5877
    %s5880 = sor.u32 256, 16
    %5881 = vbcast.lane.b32.xlu0 %v5859, %s5880
    %v5882 = vpop.permute.xlu0 %5881
    %s5884 = sor.u32 256, 24
    %5885 = vbcast.lane.b32.xlu0 %v5859, %s5884
    %v5886 = vpop.permute.xlu0 %5885
    %s5888 = sor.u32 256, 32
    %5889 = vbcast.lane.b32.xlu0 %v5859, %s5888
    %v5890 = vpop.permute.xlu0 %5889
    %s5892 = sor.u32 256, 40
    %5893 = vbcast.lane.b32.xlu0 %v5859, %s5892
    %v5894 = vpop.permute.xlu0 %5893
    %s5896 = sor.u32 256, 48
    %5897 = vbcast.lane.b32.xlu0 %v5859, %s5896
    %v5898 = vpop.permute.xlu0 %5897
    %s5900 = sor.u32 256, 56
    %5901 = vbcast.lane.b32.xlu0 %v5859, %s5900
    %v5902 = vpop.permute.xlu0 %5901
    %s5904 = sor.u32 256, 64
    %5905 = vbcast.lane.b32.xlu0 %v5859, %s5904
    %v5906 = vpop.permute.xlu0 %5905
    %s5908 = sor.u32 256, 72
    %5909 = vbcast.lane.b32.xlu0 %v5859, %s5908
    %v5910 = vpop.permute.xlu0 %5909
    %s5912 = sor.u32 256, 80
    %5913 = vbcast.lane.b32.xlu0 %v5859, %s5912
    %v5914 = vpop.permute.xlu0 %5913
    %s5916 = sor.u32 256, 88
    %5917 = vbcast.lane.b32.xlu0 %v5859, %s5916
    %v5918 = vpop.permute.xlu0 %5917
    %s5920 = sor.u32 256, 96
    %5921 = vbcast.lane.b32.xlu0 %v5859, %s5920
    %v5922 = vpop.permute.xlu0 %5921
    %s5924 = sor.u32 256, 104
    %5925 = vbcast.lane.b32.xlu0 %v5859, %s5924
    %v5926 = vpop.permute.xlu0 %5925
    %s5928 = sor.u32 256, 112
    %5929 = vbcast.lane.b32.xlu0 %v5859, %s5928
    %v5930 = vpop.permute.xlu0 %5929
    %s5932 = sor.u32 256, 120
    %5933 = vbcast.lane.b32.xlu0 %v5859, %s5932
    %v5934 = vpop.permute.xlu0 %5933
    %5936 = vbcast.lane.b32.xlu0 %v5863, 256
    %v5937 = vpop.permute.xlu0 %5936
    %s5939 = sor.u32 256, 8
    %5940 = vbcast.lane.b32.xlu0 %v5863, %s5939
    %v5941 = vpop.permute.xlu0 %5940
    %s5943 = sor.u32 256, 16
    %5944 = vbcast.lane.b32.xlu0 %v5863, %s5943
    %v5945 = vpop.permute.xlu0 %5944
    %s5947 = sor.u32 256, 24
    %5948 = vbcast.lane.b32.xlu0 %v5863, %s5947
    %v5949 = vpop.permute.xlu0 %5948
    %s5951 = sor.u32 256, 32
    %5952 = vbcast.lane.b32.xlu0 %v5863, %s5951
    %v5953 = vpop.permute.xlu0 %5952
    %s5955 = sor.u32 256, 40
    %5956 = vbcast.lane.b32.xlu0 %v5863, %s5955
    %v5957 = vpop.permute.xlu0 %5956
    %s5959 = sor.u32 256, 48
    %5960 = vbcast.lane.b32.xlu0 %v5863, %s5959
    %v5961 = vpop.permute.xlu0 %5960
    %s5963 = sor.u32 256, 56
    %5964 = vbcast.lane.b32.xlu0 %v5863, %s5963
    %v5965 = vpop.permute.xlu0 %5964
    %s5967 = sor.u32 256, 64
    %5968 = vbcast.lane.b32.xlu0 %v5863, %s5967
    %v5969 = vpop.permute.xlu0 %5968
    %s5971 = sor.u32 256, 72
    %5972 = vbcast.lane.b32.xlu0 %v5863, %s5971
    %v5973 = vpop.permute.xlu0 %5972
    %s5975 = sor.u32 256, 80
    %5976 = vbcast.lane.b32.xlu0 %v5863, %s5975
    %v5977 = vpop.permute.xlu0 %5976
    %s5979 = sor.u32 256, 88
    %5980 = vbcast.lane.b32.xlu0 %v5863, %s5979
    %v5981 = vpop.permute.xlu0 %5980
    %s5983 = sor.u32 256, 96
    %5984 = vbcast.lane.b32.xlu0 %v5863, %s5983
    %v5985 = vpop.permute.xlu0 %5984
    %s5987 = sor.u32 256, 104
    %5988 = vbcast.lane.b32.xlu0 %v5863, %s5987
    %v5989 = vpop.permute.xlu0 %5988
    %s5991 = sor.u32 256, 112
    %5992 = vbcast.lane.b32.xlu0 %v5863, %s5991
    %v5993 = vpop.permute.xlu0 %5992
    %s5995 = sor.u32 256, 120
    %5996 = vbcast.lane.b32.xlu0 %v5863, %s5995
    %v5997 = vpop.permute.xlu0 %5996
    %5999 = vbcast.lane.b32.xlu0 %v5867, 256
    %v6000 = vpop.permute.xlu0 %5999
    %s6002 = sor.u32 256, 8
    %6003 = vbcast.lane.b32.xlu0 %v5867, %s6002
    %v6004 = vpop.permute.xlu0 %6003
    %s6006 = sor.u32 256, 16
    %6007 = vbcast.lane.b32.xlu0 %v5867, %s6006
    %v6008 = vpop.permute.xlu0 %6007
    %s6010 = sor.u32 256, 24
    %6011 = vbcast.lane.b32.xlu0 %v5867, %s6010
    %v6012 = vpop.permute.xlu0 %6011
    %s6014 = sor.u32 256, 32
    %6015 = vbcast.lane.b32.xlu0 %v5867, %s6014
    %v6016 = vpop.permute.xlu0 %6015
    %s6018 = sor.u32 256, 40
    %6019 = vbcast.lane.b32.xlu0 %v5867, %s6018
    %v6020 = vpop.permute.xlu0 %6019
    %s6022 = sor.u32 256, 48
    %6023 = vbcast.lane.b32.xlu0 %v5867, %s6022
    %v6024 = vpop.permute.xlu0 %6023
    %s6026 = sor.u32 256, 56
    %6027 = vbcast.lane.b32.xlu0 %v5867, %s6026
    %v6028 = vpop.permute.xlu0 %6027
    %s6030 = sor.u32 256, 64
    %6031 = vbcast.lane.b32.xlu0 %v5867, %s6030
    %v6032 = vpop.permute.xlu0 %6031
    %s6034 = sor.u32 256, 72
    %6035 = vbcast.lane.b32.xlu0 %v5867, %s6034
    %v6036 = vpop.permute.xlu0 %6035
    %s6038 = sor.u32 256, 80
    %6039 = vbcast.lane.b32.xlu0 %v5867, %s6038
    %v6040 = vpop.permute.xlu0 %6039
    %s6042 = sor.u32 256, 88
    %6043 = vbcast.lane.b32.xlu0 %v5867, %s6042
    %v6044 = vpop.permute.xlu0 %6043
    %s6046 = sor.u32 256, 96
    %6047 = vbcast.lane.b32.xlu0 %v5867, %s6046
    %v6048 = vpop.permute.xlu0 %6047
    %s6050 = sor.u32 256, 104
    %6051 = vbcast.lane.b32.xlu0 %v5867, %s6050
    %v6052 = vpop.permute.xlu0 %6051
    %s6054 = sor.u32 256, 112
    %6055 = vbcast.lane.b32.xlu0 %v5867, %s6054
    %v6056 = vpop.permute.xlu0 %6055
    %s6058 = sor.u32 256, 120
    %6059 = vbcast.lane.b32.xlu0 %v5867, %s6058
    %v6060 = vpop.permute.xlu0 %6059
    %6062 = vbcast.lane.b32.xlu0 %v5871, 256
    %v6063 = vpop.permute.xlu0 %6062
    %s6065 = sor.u32 256, 8
    %6066 = vbcast.lane.b32.xlu0 %v5871, %s6065
    %v6067 = vpop.permute.xlu0 %6066
    %s6069 = sor.u32 256, 16
    %6070 = vbcast.lane.b32.xlu0 %v5871, %s6069
    %v6071 = vpop.permute.xlu0 %6070
    %s6073 = sor.u32 256, 24
    %6074 = vbcast.lane.b32.xlu0 %v5871, %s6073
    %v6075 = vpop.permute.xlu0 %6074
    %s6077 = sor.u32 256, 32
    %6078 = vbcast.lane.b32.xlu0 %v5871, %s6077
    %v6079 = vpop.permute.xlu0 %6078
    %s6081 = sor.u32 256, 40
    %6082 = vbcast.lane.b32.xlu0 %v5871, %s6081
    %v6083 = vpop.permute.xlu0 %6082
    %s6085 = sor.u32 256, 48
    %6086 = vbcast.lane.b32.xlu0 %v5871, %s6085
    %v6087 = vpop.permute.xlu0 %6086
    %s6089 = sor.u32 256, 56
    %6090 = vbcast.lane.b32.xlu0 %v5871, %s6089
    %v6091 = vpop.permute.xlu0 %6090
    %s6093 = sor.u32 256, 64
    %6094 = vbcast.lane.b32.xlu0 %v5871, %s6093
    %v6095 = vpop.permute.xlu0 %6094
    %s6097 = sor.u32 256, 72
    %6098 = vbcast.lane.b32.xlu0 %v5871, %s6097
    %v6099 = vpop.permute.xlu0 %6098
    %s6101 = sor.u32 256, 80
    %6102 = vbcast.lane.b32.xlu0 %v5871, %s6101
    %v6103 = vpop.permute.xlu0 %6102
    %s6105 = sor.u32 256, 88
    %6106 = vbcast.lane.b32.xlu0 %v5871, %s6105
    %v6107 = vpop.permute.xlu0 %6106
    %s6109 = sor.u32 256, 96
    %6110 = vbcast.lane.b32.xlu0 %v5871, %s6109
    %v6111 = vpop.permute.xlu0 %6110
    %s6113 = sor.u32 256, 104
    %6114 = vbcast.lane.b32.xlu0 %v5871, %s6113
    %v6115 = vpop.permute.xlu0 %6114
    %s6117 = sor.u32 256, 112
    %6118 = vbcast.lane.b32.xlu0 %v5871, %s6117
    %v6119 = vpop.permute.xlu0 %6118
    %s6121 = sor.u32 256, 120
    %6122 = vbcast.lane.b32.xlu0 %v5871, %s6121
    %v6123 = vpop.permute.xlu0 %6122
    %v6188 = vadd.f32 %v5598, %v5874
    %v6189 = vadd.f32 %v5599, %v5878
    %v6190 = vadd.f32 %v5600, %v5882
    %v6191 = vadd.f32 %v5601, %v5886
    %v6192 = vadd.f32 %v5602, %v5890
    %v6193 = vadd.f32 %v5603, %v5894
    %v6194 = vadd.f32 %v5604, %v5898
    %v6195 = vadd.f32 %v5605, %v5902
    %v6196 = vadd.f32 %v5606, %v5906
    %v6197 = vadd.f32 %v5607, %v5910
    %v6198 = vadd.f32 %v5608, %v5914
    %v6199 = vadd.f32 %v5609, %v5918
    %v6200 = vadd.f32 %v5610, %v5922
    %v6201 = vadd.f32 %v5611, %v5926
    %v6202 = vadd.f32 %v5612, %v5930
    %v6203 = vadd.f32 %v5613, %v5934
    %v6204 = vadd.f32 %v5614, %v5937
    %v6205 = vadd.f32 %v5615, %v5941
    %v6206 = vadd.f32 %v5616, %v5945
    %v6207 = vadd.f32 %v5617, %v5949
    %v6208 = vadd.f32 %v5618, %v5953
    %v6209 = vadd.f32 %v5619, %v5957
    %v6210 = vadd.f32 %v5620, %v5961
    %v6211 = vadd.f32 %v5621, %v5965
    %v6212 = vadd.f32 %v5622, %v5969
    %v6213 = vadd.f32 %v5623, %v5973
    %v6214 = vadd.f32 %v5624, %v5977
    %v6215 = vadd.f32 %v5625, %v5981
    %v6216 = vadd.f32 %v5626, %v5985
    %v6217 = vadd.f32 %v5627, %v5989
    %v6218 = vadd.f32 %v5628, %v5993
    %v6219 = vadd.f32 %v5629, %v5997
    %v6220 = vadd.f32 %v5630, %v6000
    %v6221 = vadd.f32 %v5631, %v6004
    %v6222 = vadd.f32 %v5632, %v6008
    %v6223 = vadd.f32 %v5633, %v6012
    %v6224 = vadd.f32 %v5634, %v6016
    %v6225 = vadd.f32 %v5635, %v6020
    %v6226 = vadd.f32 %v5636, %v6024
    %v6227 = vadd.f32 %v5637, %v6028
    %v6228 = vadd.f32 %v5638, %v6032
    %v6229 = vadd.f32 %v5639, %v6036
    %v6230 = vadd.f32 %v5640, %v6040
    %v6231 = vadd.f32 %v5641, %v6044
    %v6232 = vadd.f32 %v5642, %v6048
    %v6233 = vadd.f32 %v5643, %v6052
    %v6234 = vadd.f32 %v5644, %v6056
    %v6235 = vadd.f32 %v5645, %v6060
    %v6236 = vadd.f32 %v5646, %v6063
    %v6237 = vadd.f32 %v5647, %v6067
    %v6238 = vadd.f32 %v5648, %v6071
    %v6239 = vadd.f32 %v5649, %v6075
    %v6240 = vadd.f32 %v5650, %v6079
    %v6241 = vadd.f32 %v5651, %v6083
    %v6242 = vadd.f32 %v5652, %v6087
    %v6243 = vadd.f32 %v5653, %v6091
    %v6244 = vadd.f32 %v5654, %v6095
    %v6245 = vadd.f32 %v5655, %v6099
    %v6246 = vadd.f32 %v5656, %v6103
    %v6247 = vadd.f32 %v5657, %v6107
    %v6248 = vadd.f32 %v5658, %v6111
    %v6249 = vadd.f32 %v5659, %v6115
    %v6250 = vadd.f32 %v5660, %v6119
    %v6251 = vadd.f32 %v5661, %v6123
    %v6252 = vadd.f32 %v5662, %v5874
    %v6253 = vadd.f32 %v5663, %v5878
    %v6254 = vadd.f32 %v5664, %v5882
    %v6255 = vadd.f32 %v5665, %v5886
    %v6256 = vadd.f32 %v5666, %v5890
    %v6257 = vadd.f32 %v5667, %v5894
    %v6258 = vadd.f32 %v5668, %v5898
    %v6259 = vadd.f32 %v5669, %v5902
    %v6260 = vadd.f32 %v5670, %v5906
    %v6261 = vadd.f32 %v5671, %v5910
    %v6262 = vadd.f32 %v5672, %v5914
    %v6263 = vadd.f32 %v5673, %v5918
    %v6264 = vadd.f32 %v5674, %v5922
    %v6265 = vadd.f32 %v5675, %v5926
    %v6266 = vadd.f32 %v5676, %v5930
    %v6267 = vadd.f32 %v5677, %v5934
    %v6268 = vadd.f32 %v5678, %v5937
    %v6269 = vadd.f32 %v5679, %v5941
    %v6270 = vadd.f32 %v5680, %v5945
    %v6271 = vadd.f32 %v5681, %v5949
    %v6272 = vadd.f32 %v5682, %v5953
    %v6273 = vadd.f32 %v5683, %v5957
    %v6274 = vadd.f32 %v5684, %v5961
    %v6275 = vadd.f32 %v5685, %v5965
    %v6276 = vadd.f32 %v5686, %v5969
    %v6277 = vadd.f32 %v5687, %v5973
    %v6278 = vadd.f32 %v5688, %v5977
    %v6279 = vadd.f32 %v5689, %v5981
    %v6280 = vadd.f32 %v5690, %v5985
    %v6281 = vadd.f32 %v5691, %v5989
    %v6282 = vadd.f32 %v5692, %v5993
    %v6283 = vadd.f32 %v5693, %v5997
    %v6284 = vadd.f32 %v5694, %v6000
    %v6285 = vadd.f32 %v5695, %v6004
    %v6286 = vadd.f32 %v5696, %v6008
    %v6287 = vadd.f32 %v5697, %v6012
    %v6288 = vadd.f32 %v5698, %v6016
    %v6289 = vadd.f32 %v5699, %v6020
    %v6290 = vadd.f32 %v5700, %v6024
    %v6291 = vadd.f32 %v5701, %v6028
    %v6292 = vadd.f32 %v5702, %v6032
    %v6293 = vadd.f32 %v5703, %v6036
    %v6294 = vadd.f32 %v5704, %v6040
    %v6295 = vadd.f32 %v5705, %v6044
    %v6296 = vadd.f32 %v5706, %v6048
    %v6297 = vadd.f32 %v5707, %v6052
    %v6298 = vadd.f32 %v5708, %v6056
    %v6299 = vadd.f32 %v5709, %v6060
    %v6300 = vadd.f32 %v5710, %v6063
    %v6301 = vadd.f32 %v5711, %v6067
    %v6302 = vadd.f32 %v5712, %v6071
    %v6303 = vadd.f32 %v5713, %v6075
    %v6304 = vadd.f32 %v5714, %v6079
    %v6305 = vadd.f32 %v5715, %v6083
    %v6306 = vadd.f32 %v5716, %v6087
    %v6307 = vadd.f32 %v5717, %v6091
    %v6308 = vadd.f32 %v5718, %v6095
    %v6309 = vadd.f32 %v5719, %v6099
    %v6310 = vadd.f32 %v5720, %v6103
    %v6311 = vadd.f32 %v5721, %v6107
    %v6312 = vadd.f32 %v5722, %v6111
    %v6313 = vadd.f32 %v5723, %v6115
    %v6314 = vadd.f32 %v5724, %v6119
    %v6315 = vadd.f32 %v5725, %v6123
    %v6316 = vadd.f32 %v5726, %v5874
    %v6317 = vadd.f32 %v5727, %v5878
    %v6318 = vadd.f32 %v5728, %v5882
    %v6319 = vadd.f32 %v5729, %v5886
    %v6320 = vadd.f32 %v5730, %v5890
    %v6321 = vadd.f32 %v5731, %v5894
    %v6322 = vadd.f32 %v5732, %v5898
    %v6323 = vadd.f32 %v5733, %v5902
    %v6324 = vadd.f32 %v5734, %v5906
    %v6325 = vadd.f32 %v5735, %v5910
    %v6326 = vadd.f32 %v5736, %v5914
    %v6327 = vadd.f32 %v5737, %v5918
    %v6328 = vadd.f32 %v5738, %v5922
    %v6329 = vadd.f32 %v5739, %v5926
    %v6330 = vadd.f32 %v5740, %v5930
    %v6331 = vadd.f32 %v5741, %v5934
    %v6332 = vadd.f32 %v5742, %v5937
    %v6333 = vadd.f32 %v5743, %v5941
    %v6334 = vadd.f32 %v5744, %v5945
    %v6335 = vadd.f32 %v5745, %v5949
    %v6336 = vadd.f32 %v5746, %v5953
    %v6337 = vadd.f32 %v5747, %v5957
    %v6338 = vadd.f32 %v5748, %v5961
    %v6339 = vadd.f32 %v5749, %v5965
    %v6340 = vadd.f32 %v5750, %v5969
    %v6341 = vadd.f32 %v5751, %v5973
    %v6342 = vadd.f32 %v5752, %v5977
    %v6343 = vadd.f32 %v5753, %v5981
    %v6344 = vadd.f32 %v5754, %v5985
    %v6345 = vadd.f32 %v5755, %v5989
    %v6346 = vadd.f32 %v5756, %v5993
    %v6347 = vadd.f32 %v5757, %v5997
    %v6348 = vadd.f32 %v5758, %v6000
    %v6349 = vadd.f32 %v5759, %v6004
    %v6350 = vadd.f32 %v5760, %v6008
    %v6351 = vadd.f32 %v5761, %v6012
    %v6352 = vadd.f32 %v5762, %v6016
    %v6353 = vadd.f32 %v5763, %v6020
    %v6354 = vadd.f32 %v5764, %v6024
    %v6355 = vadd.f32 %v5765, %v6028
    %v6356 = vadd.f32 %v5766, %v6032
    %v6357 = vadd.f32 %v5767, %v6036
    %v6358 = vadd.f32 %v5768, %v6040
    %v6359 = vadd.f32 %v5769, %v6044
    %v6360 = vadd.f32 %v5770, %v6048
    %v6361 = vadd.f32 %v5771, %v6052
    %v6362 = vadd.f32 %v5772, %v6056
    %v6363 = vadd.f32 %v5773, %v6060
    %v6364 = vadd.f32 %v5774, %v6063
    %v6365 = vadd.f32 %v5775, %v6067
    %v6366 = vadd.f32 %v5776, %v6071
    %v6367 = vadd.f32 %v5777, %v6075
    %v6368 = vadd.f32 %v5778, %v6079
    %v6369 = vadd.f32 %v5779, %v6083
    %v6370 = vadd.f32 %v5780, %v6087
    %v6371 = vadd.f32 %v5781, %v6091
    %v6372 = vadd.f32 %v5782, %v6095
    %v6373 = vadd.f32 %v5783, %v6099
    %v6374 = vadd.f32 %v5784, %v6103
    %v6375 = vadd.f32 %v5785, %v6107
    %v6376 = vadd.f32 %v5786, %v6111
    %v6377 = vadd.f32 %v5787, %v6115
    %v6378 = vadd.f32 %v5788, %v6119
    %v6379 = vadd.f32 %v5789, %v6123
    %v6380 = vadd.f32 %v5790, %v5874
    %v6381 = vadd.f32 %v5791, %v5878
    %v6382 = vadd.f32 %v5792, %v5882
    %v6383 = vadd.f32 %v5793, %v5886
    %v6384 = vadd.f32 %v5794, %v5890
    %v6385 = vadd.f32 %v5795, %v5894
    %v6386 = vadd.f32 %v5796, %v5898
    %v6387 = vadd.f32 %v5797, %v5902
    %v6388 = vadd.f32 %v5798, %v5906
    %v6389 = vadd.f32 %v5799, %v5910
    %v6390 = vadd.f32 %v5800, %v5914
    %v6391 = vadd.f32 %v5801, %v5918
    %v6392 = vadd.f32 %v5802, %v5922
    %v6393 = vadd.f32 %v5803, %v5926
    %v6394 = vadd.f32 %v5804, %v5930
    %v6395 = vadd.f32 %v5805, %v5934
    %v6396 = vadd.f32 %v5806, %v5937
    %v6397 = vadd.f32 %v5807, %v5941
    %v6398 = vadd.f32 %v5808, %v5945
    %v6399 = vadd.f32 %v5809, %v5949
    %v6400 = vadd.f32 %v5810, %v5953
    %v6401 = vadd.f32 %v5811, %v5957
    %v6402 = vadd.f32 %v5812, %v5961
    %v6403 = vadd.f32 %v5813, %v5965
    %v6404 = vadd.f32 %v5814, %v5969
    %v6405 = vadd.f32 %v5815, %v5973
    %v6406 = vadd.f32 %v5816, %v5977
    %v6407 = vadd.f32 %v5817, %v5981
    %v6408 = vadd.f32 %v5818, %v5985
    %v6409 = vadd.f32 %v5819, %v5989
    %v6410 = vadd.f32 %v5820, %v5993
    %v6411 = vadd.f32 %v5821, %v5997
    %v6412 = vadd.f32 %v5822, %v6000
    %v6413 = vadd.f32 %v5823, %v6004
    %v6414 = vadd.f32 %v5824, %v6008
    %v6415 = vadd.f32 %v5825, %v6012
    %v6416 = vadd.f32 %v5826, %v6016
    %v6417 = vadd.f32 %v5827, %v6020
    %v6418 = vadd.f32 %v5828, %v6024
    %v6419 = vadd.f32 %v5829, %v6028
    %v6420 = vadd.f32 %v5830, %v6032
    %v6421 = vadd.f32 %v5831, %v6036
    %v6422 = vadd.f32 %v5832, %v6040
    %v6423 = vadd.f32 %v5833, %v6044
    %v6424 = vadd.f32 %v5834, %v6048
    %v6425 = vadd.f32 %v5835, %v6052
    %v6426 = vadd.f32 %v5836, %v6056
    %v6427 = vadd.f32 %v5837, %v6060
    %v6428 = vadd.f32 %v5838, %v6063
    %v6429 = vadd.f32 %v5839, %v6067
    %v6430 = vadd.f32 %v5840, %v6071
    %v6431 = vadd.f32 %v5841, %v6075
    %v6432 = vadd.f32 %v5842, %v6079
    %v6433 = vadd.f32 %v5843, %v6083
    %v6434 = vadd.f32 %v5844, %v6087
    %v6435 = vadd.f32 %v5845, %v6091
    %v6436 = vadd.f32 %v5846, %v6095
    %v6437 = vadd.f32 %v5847, %v6099
    %v6438 = vadd.f32 %v5848, %v6103
    %v6439 = vadd.f32 %v5849, %v6107
    %v6440 = vadd.f32 %v5850, %v6111
    %v6441 = vadd.f32 %v5851, %v6115
    %v6442 = vadd.f32 %v5852, %v6119
    %v6443 = vadd.f32 %v5853, %v6123
    %v6444 = vld [vmem:[%s2] sm:$0xf]
    %v6445 = vpack.c.bf16 %v6444, %v6444
    %v6446 = vld [vmem:[#allocation7] sm:$0xf]
    %v6447 = vld [vmem:[#allocation7 + $0x4] sm:$0xf]
    %v6448 = vld [vmem:[#allocation7 + $0x8] sm:$0xf]
    %v6449 = vld [vmem:[#allocation7 + $0xc] sm:$0xf]
    %v6450 = vld [vmem:[#allocation7 + $0x10] sm:$0xf]
    %v6451 = vld [vmem:[#allocation7 + $0x14] sm:$0xf]
    %v6452 = vld [vmem:[#allocation8] sm:$0x1]
    %v6454 = vlaneseq
    %v6455 = vshrl.u32 %v6454, 7
    %v6456 = vsub.s32 0, %v6455
    %v6457 = vrot.slane %v6452, %v6456
    %v6465 = vunpack.c.l.b16 %v6446
    %v6466 = vunpack.c.l.b16 %v6447
    %v6467 = vunpack.c.l.b16 %v6448
    %v6468 = vunpack.c.l.b16 %v6449
    %v6469 = vunpack.c.l.b16 %v6450
    %v6470 = vunpack.c.l.b16 %v6451
    %v6471 = vpack.c.b16 %v6466, %v6465
    %v6472 = vpack.c.b16 %v6468, %v6467
    %v6473 = vpack.c.b16 %v6470, %v6469
    %vm6477 = vcmask 392192
    %v6479 = vsel %vm6477, %v6445, 0
    %6481 = vmatprep.subr.bf16.mxu0 0
    %6482 = vmatpush1.bf16.msra.mxu0 %v6471
    %6483 = vmatprep.subr.bf16.mxu0 0
    %6484 = vmatpush1.bf16.msra.mxu0 %v6472
    %6485 = vmatprep.subr.bf16.mxu0 0
    %6486 = vmatpush1.bf16.msra.mxu0 %v6473
    %6487 = vmatprep.subr.bf16.mxu0 0
    %6488 = vmatpush1.bf16.msra.mxu0 0
    %6489 = vmatprep.subr.bf16.mxu0 0
    %6490 = vmatpush1.bf16.msra.mxu0 0
    %6491 = vmatprep.subr.bf16.mxu0 0
    %6492 = vmatpush1.bf16.msra.mxu0 0
    %6493 = vmatprep.subr.bf16.mxu0 0
    %6494 = vmatpush1.bf16.msra.mxu0 0
    %6495 = vmatprep.subr.bf16.mxu0 0
    %6496 = vmatpush1.bf16.msra.mxu0 0
    %6497 = vmatprep.subr.bf16.mxu0 0
    %6498 = vmatpush1.bf16.msra.mxu0 0
    %6499 = vmatprep.subr.bf16.mxu0 0
    %6500 = vmatpush1.bf16.msra.mxu0 0
    %6501 = vmatprep.subr.bf16.mxu0 0
    %6502 = vmatpush1.bf16.msra.mxu0 0
    %6503 = vmatprep.subr.bf16.mxu0 0
    %6504 = vmatpush1.bf16.msra.mxu0 0
    %6505 = vmatprep.subr.bf16.mxu0 0
    %6506 = vmatpush1.bf16.msra.mxu0 0
    %6507 = vmatprep.subr.bf16.mxu0 0
    %6508 = vmatpush1.bf16.msra.mxu0 0
    %6509 = vmatprep.subr.bf16.mxu0 0
    %6510 = vmatpush1.bf16.msra.mxu0 0
    %6511 = vmatprep.subr.bf16.mxu0 0
    %6512 = vmatpush1.bf16.msra.mxu0 0
    %6513 = vmatprep.mubr.bf16.mxu0 0
    %6514 = vmatmul.mubr.bf16.gmra.mrb[0].mxu0 %v6479
    %v6515 = vpop.f32.mrb[0].mxu0
    %v6516 = vadd.f32 %v6457, %v6515
    %v6517 = vpop.f32.mrb[0].mxu0
    %v6518 = vpop.f32.mrb[0].mxu0
    %v6519 = vpop.f32.mrb[0].mxu0
    %6520 = vdwg.mxu0
    %v6521 = vmax.f32 %v6516, 0.0
    %v6522 = vpack.c.bf16 %v6521, %v6521
    %v6523 = vld [vmem:[%s15] sm:$0xff]
    %v6524 = vld [vmem:[%s15 + $0x8] sm:$0xff]
    %v6525 = vld [vmem:[%s15 + $0x10] sm:$0xff]
    %v6526 = vld [vmem:[%s15 + $0x18] sm:$0xff]
    %v6527 = vld [vmem:[%s15 + $0x20] sm:$0xff]
    %v6528 = vld [vmem:[%s15 + $0x28] sm:$0xff]
    %v6529 = vld [vmem:[%s15 + $0x30] sm:$0xff]
    %v6530 = vld [vmem:[%s15 + $0x38] sm:$0xff]
    %v6531 = vld [vmem:[%s15 + $0x40] sm:$0xff]
    %v6532 = vld [vmem:[%s15 + $0x48] sm:$0xff]
    %v6533 = vld [vmem:[%s15 + $0x50] sm:$0xff]
    %v6534 = vld [vmem:[%s15 + $0x58] sm:$0xff]
    %v6535 = vld [vmem:[%s15 + $0x60] sm:$0xff]
    %v6536 = vld [vmem:[%s15 + $0x68] sm:$0xff]
    %v6537 = vld [vmem:[%s15 + $0x70] sm:$0xff]
    %v6538 = vld [vmem:[%s15 + $0x78] sm:$0xff]
    %v6539 = vld [vmem:[%s16] sm:$0x3]
    %v6541 = vlaneseq
    %v6542 = vshrl.u32 %v6541, 7
    %v6543 = vsub.s32 0, %v6542
    %v6544 = vrot.slane %v6539, %v6543
    %v6545 = vlaneseq
    %v6546 = vshrl.u32 %v6545, 7
    %v6547 = vsub.s32 1, %v6546
    %v6548 = vrot.slane %v6539, %v6547
    %v6567 = vunpack.c.l.b16 %v6523
    %v6568 = vunpack.c.h.b16 %v6523
    %v6569 = vunpack.c.l.b16 %v6524
    %v6570 = vunpack.c.h.b16 %v6524
    %v6571 = vunpack.c.l.b16 %v6525
    %v6572 = vunpack.c.h.b16 %v6525
    %v6573 = vunpack.c.l.b16 %v6526
    %v6574 = vunpack.c.h.b16 %v6526
    %v6575 = vunpack.c.l.b16 %v6527
    %v6576 = vunpack.c.h.b16 %v6527
    %v6577 = vunpack.c.l.b16 %v6528
    %v6578 = vunpack.c.h.b16 %v6528
    %v6579 = vunpack.c.l.b16 %v6529
    %v6580 = vunpack.c.h.b16 %v6529
    %v6581 = vunpack.c.l.b16 %v6530
    %v6582 = vunpack.c.h.b16 %v6530
    %v6583 = vunpack.c.l.b16 %v6531
    %v6584 = vunpack.c.h.b16 %v6531
    %v6585 = vunpack.c.l.b16 %v6532
    %v6586 = vunpack.c.h.b16 %v6532
    %v6587 = vunpack.c.l.b16 %v6533
    %v6588 = vunpack.c.h.b16 %v6533
    %v6589 = vunpack.c.l.b16 %v6534
    %v6590 = vunpack.c.h.b16 %v6534
    %v6591 = vunpack.c.l.b16 %v6535
    %v6592 = vunpack.c.h.b16 %v6535
    %v6593 = vunpack.c.l.b16 %v6536
    %v6594 = vunpack.c.h.b16 %v6536
    %v6595 = vunpack.c.l.b16 %v6537
    %v6596 = vunpack.c.h.b16 %v6537
    %v6597 = vunpack.c.l.b16 %v6538
    %v6598 = vunpack.c.h.b16 %v6538
    %v6599 = vpack.c.b16 %v6569, %v6567
    %v6600 = vpack.c.b16 %v6570, %v6568
    %v6601 = vpack.c.b16 %v6573, %v6571
    %v6602 = vpack.c.b16 %v6574, %v6572
    %v6603 = vpack.c.b16 %v6577, %v6575
    %v6604 = vpack.c.b16 %v6578, %v6576
    %v6605 = vpack.c.b16 %v6581, %v6579
    %v6606 = vpack.c.b16 %v6582, %v6580
    %v6607 = vpack.c.b16 %v6585, %v6583
    %v6608 = vpack.c.b16 %v6586, %v6584
    %v6609 = vpack.c.b16 %v6589, %v6587
    %v6610 = vpack.c.b16 %v6590, %v6588
    %v6611 = vpack.c.b16 %v6593, %v6591
    %v6612 = vpack.c.b16 %v6594, %v6592
    %v6613 = vpack.c.b16 %v6597, %v6595
    %v6614 = vpack.c.b16 %v6598, %v6596
    %6631 = vmatprep.subr.bf16.mxu0 %v6600
    %6632 = vmatpush1.bf16.msra.mxu0 %v6599
    %6633 = vmatprep.subr.bf16.mxu0 %v6602
    %6634 = vmatpush1.bf16.msra.mxu0 %v6601
    %6635 = vmatprep.subr.bf16.mxu0 %v6604
    %6636 = vmatpush1.bf16.msra.mxu0 %v6603
    %6637 = vmatprep.subr.bf16.mxu0 %v6606
    %6638 = vmatpush1.bf16.msra.mxu0 %v6605
    %6639 = vmatprep.subr.bf16.mxu0 %v6608
    %6640 = vmatpush1.bf16.msra.mxu0 %v6607
    %6641 = vmatprep.subr.bf16.mxu0 %v6610
    %6642 = vmatpush1.bf16.msra.mxu0 %v6609
    %6643 = vmatprep.subr.bf16.mxu0 %v6612
    %6644 = vmatpush1.bf16.msra.mxu0 %v6611
    %6645 = vmatprep.subr.bf16.mxu0 %v6614
    %6646 = vmatpush1.bf16.msra.mxu0 %v6613
    %6647 = vmatprep.subr.bf16.mxu0 0
    %6648 = vmatpush1.bf16.msra.mxu0 0
    %6649 = vmatprep.subr.bf16.mxu0 0
    %6650 = vmatpush1.bf16.msra.mxu0 0
    %6651 = vmatprep.subr.bf16.mxu0 0
    %6652 = vmatpush1.bf16.msra.mxu0 0
    %6653 = vmatprep.subr.bf16.mxu0 0
    %6654 = vmatpush1.bf16.msra.mxu0 0
    %6655 = vmatprep.subr.bf16.mxu0 0
    %6656 = vmatpush1.bf16.msra.mxu0 0
    %6657 = vmatprep.subr.bf16.mxu0 0
    %6658 = vmatpush1.bf16.msra.mxu0 0
    %6659 = vmatprep.subr.bf16.mxu0 0
    %6660 = vmatpush1.bf16.msra.mxu0 0
    %6661 = vmatprep.subr.bf16.mxu0 0
    %6662 = vmatpush1.bf16.msra.mxu0 0
    %6663 = vmatprep.mubr.bf16.mxu0 0
    %6664 = vmatmul.mubr.bf16.gmra.mrb[0].mxu0 %v6522
    %v6665 = vpop.f32.mrb[0].mxu0
    %v6666 = vadd.f32 %v6544, %v6665
    %v6667 = vpop.f32.mrb[0].mxu0
    %v6668 = vadd.f32 %v6548, %v6667
    %v6669 = vpop.f32.mrb[0].mxu0
    %v6670 = vpop.f32.mrb[0].mxu0
    %6671 = vdwg.mxu0
    %v6672 = vld [vmem:[#allocation10] sm:$0xf]
    %v6674 = vlaneseq
    %v6675 = vshrl.u32 %v6674, 7
    %v6676 = vsub.s32 0, %v6675
    %v6677 = vrot.slane %v6672, %v6676
    %v6678 = vlaneseq
    %v6679 = vshrl.u32 %v6678, 7
    %v6680 = vsub.s32 1, %v6679
    %v6681 = vrot.slane %v6672, %v6680
    %v6682 = vlaneseq
    %v6683 = vshrl.u32 %v6682, 7
    %v6684 = vsub.s32 2, %v6683
    %v6685 = vrot.slane %v6672, %v6684
    %v6686 = vlaneseq
    %v6687 = vshrl.u32 %v6686, 7
    %v6688 = vsub.s32 3, %v6687
    %v6689 = vrot.slane %v6672, %v6688
    %6691 = vbcast.lane.b32.xlu0 %v6677, 256
    %v6692 = vpop.permute.xlu0 %6691
    %s6694 = sor.u32 256, 8
    %6695 = vbcast.lane.b32.xlu0 %v6677, %s6694
    %v6696 = vpop.permute.xlu0 %6695
    %s6698 = sor.u32 256, 16
    %6699 = vbcast.lane.b32.xlu0 %v6677, %s6698
    %v6700 = vpop.permute.xlu0 %6699
    %s6702 = sor.u32 256, 24
    %6703 = vbcast.lane.b32.xlu0 %v6677, %s6702
    %v6704 = vpop.permute.xlu0 %6703
    %s6706 = sor.u32 256, 32
    %6707 = vbcast.lane.b32.xlu0 %v6677, %s6706
    %v6708 = vpop.permute.xlu0 %6707
    %s6710 = sor.u32 256, 40
    %6711 = vbcast.lane.b32.xlu0 %v6677, %s6710
    %v6712 = vpop.permute.xlu0 %6711
    %s6714 = sor.u32 256, 48
    %6715 = vbcast.lane.b32.xlu0 %v6677, %s6714
    %v6716 = vpop.permute.xlu0 %6715
    %s6718 = sor.u32 256, 56
    %6719 = vbcast.lane.b32.xlu0 %v6677, %s6718
    %v6720 = vpop.permute.xlu0 %6719
    %s6722 = sor.u32 256, 64
    %6723 = vbcast.lane.b32.xlu0 %v6677, %s6722
    %v6724 = vpop.permute.xlu0 %6723
    %s6726 = sor.u32 256, 72
    %6727 = vbcast.lane.b32.xlu0 %v6677, %s6726
    %v6728 = vpop.permute.xlu0 %6727
    %s6730 = sor.u32 256, 80
    %6731 = vbcast.lane.b32.xlu0 %v6677, %s6730
    %v6732 = vpop.permute.xlu0 %6731
    %s6734 = sor.u32 256, 88
    %6735 = vbcast.lane.b32.xlu0 %v6677, %s6734
    %v6736 = vpop.permute.xlu0 %6735
    %s6738 = sor.u32 256, 96
    %6739 = vbcast.lane.b32.xlu0 %v6677, %s6738
    %v6740 = vpop.permute.xlu0 %6739
    %s6742 = sor.u32 256, 104
    %6743 = vbcast.lane.b32.xlu0 %v6677, %s6742
    %v6744 = vpop.permute.xlu0 %6743
    %s6746 = sor.u32 256, 112
    %6747 = vbcast.lane.b32.xlu0 %v6677, %s6746
    %v6748 = vpop.permute.xlu0 %6747
    %s6750 = sor.u32 256, 120
    %6751 = vbcast.lane.b32.xlu0 %v6677, %s6750
    %v6752 = vpop.permute.xlu0 %6751
    %6754 = vbcast.lane.b32.xlu0 %v6681, 256
    %v6755 = vpop.permute.xlu0 %6754
    %s6757 = sor.u32 256, 8
    %6758 = vbcast.lane.b32.xlu0 %v6681, %s6757
    %v6759 = vpop.permute.xlu0 %6758
    %s6761 = sor.u32 256, 16
    %6762 = vbcast.lane.b32.xlu0 %v6681, %s6761
    %v6763 = vpop.permute.xlu0 %6762
    %s6765 = sor.u32 256, 24
    %6766 = vbcast.lane.b32.xlu0 %v6681, %s6765
    %v6767 = vpop.permute.xlu0 %6766
    %s6769 = sor.u32 256, 32
    %6770 = vbcast.lane.b32.xlu0 %v6681, %s6769
    %v6771 = vpop.permute.xlu0 %6770
    %s6773 = sor.u32 256, 40
    %6774 = vbcast.lane.b32.xlu0 %v6681, %s6773
    %v6775 = vpop.permute.xlu0 %6774
    %s6777 = sor.u32 256, 48
    %6778 = vbcast.lane.b32.xlu0 %v6681, %s6777
    %v6779 = vpop.permute.xlu0 %6778
    %s6781 = sor.u32 256, 56
    %6782 = vbcast.lane.b32.xlu0 %v6681, %s6781
    %v6783 = vpop.permute.xlu0 %6782
    %s6785 = sor.u32 256, 64
    %6786 = vbcast.lane.b32.xlu0 %v6681, %s6785
    %v6787 = vpop.permute.xlu0 %6786
    %s6789 = sor.u32 256, 72
    %6790 = vbcast.lane.b32.xlu0 %v6681, %s6789
    %v6791 = vpop.permute.xlu0 %6790
    %s6793 = sor.u32 256, 80
    %6794 = vbcast.lane.b32.xlu0 %v6681, %s6793
    %v6795 = vpop.permute.xlu0 %6794
    %s6797 = sor.u32 256, 88
    %6798 = vbcast.lane.b32.xlu0 %v6681, %s6797
    %v6799 = vpop.permute.xlu0 %6798
    %s6801 = sor.u32 256, 96
    %6802 = vbcast.lane.b32.xlu0 %v6681, %s6801
    %v6803 = vpop.permute.xlu0 %6802
    %s6805 = sor.u32 256, 104
    %6806 = vbcast.lane.b32.xlu0 %v6681, %s6805
    %v6807 = vpop.permute.xlu0 %6806
    %s6809 = sor.u32 256, 112
    %6810 = vbcast.lane.b32.xlu0 %v6681, %s6809
    %v6811 = vpop.permute.xlu0 %6810
    %s6813 = sor.u32 256, 120
    %6814 = vbcast.lane.b32.xlu0 %v6681, %s6813
    %v6815 = vpop.permute.xlu0 %6814
    %6817 = vbcast.lane.b32.xlu0 %v6685, 256
    %v6818 = vpop.permute.xlu0 %6817
    %s6820 = sor.u32 256, 8
    %6821 = vbcast.lane.b32.xlu0 %v6685, %s6820
    %v6822 = vpop.permute.xlu0 %6821
    %s6824 = sor.u32 256, 16
    %6825 = vbcast.lane.b32.xlu0 %v6685, %s6824
    %v6826 = vpop.permute.xlu0 %6825
    %s6828 = sor.u32 256, 24
    %6829 = vbcast.lane.b32.xlu0 %v6685, %s6828
    %v6830 = vpop.permute.xlu0 %6829
    %s6832 = sor.u32 256, 32
    %6833 = vbcast.lane.b32.xlu0 %v6685, %s6832
    %v6834 = vpop.permute.xlu0 %6833
    %s6836 = sor.u32 256, 40
    %6837 = vbcast.lane.b32.xlu0 %v6685, %s6836
    %v6838 = vpop.permute.xlu0 %6837
    %s6840 = sor.u32 256, 48
    %6841 = vbcast.lane.b32.xlu0 %v6685, %s6840
    %v6842 = vpop.permute.xlu0 %6841
    %s6844 = sor.u32 256, 56
    %6845 = vbcast.lane.b32.xlu0 %v6685, %s6844
    %v6846 = vpop.permute.xlu0 %6845
    %s6848 = sor.u32 256, 64
    %6849 = vbcast.lane.b32.xlu0 %v6685, %s6848
    %v6850 = vpop.permute.xlu0 %6849
    %s6852 = sor.u32 256, 72
    %6853 = vbcast.lane.b32.xlu0 %v6685, %s6852
    %v6854 = vpop.permute.xlu0 %6853
    %s6856 = sor.u32 256, 80
    %6857 = vbcast.lane.b32.xlu0 %v6685, %s6856
    %v6858 = vpop.permute.xlu0 %6857
    %s6860 = sor.u32 256, 88
    %6861 = vbcast.lane.b32.xlu0 %v6685, %s6860
    %v6862 = vpop.permute.xlu0 %6861
    %s6864 = sor.u32 256, 96
    %6865 = vbcast.lane.b32.xlu0 %v6685, %s6864
    %v6866 = vpop.permute.xlu0 %6865
    %s6868 = sor.u32 256, 104
    %6869 = vbcast.lane.b32.xlu0 %v6685, %s6868
    %v6870 = vpop.permute.xlu0 %6869
    %s6872 = sor.u32 256, 112
    %6873 = vbcast.lane.b32.xlu0 %v6685, %s6872
    %v6874 = vpop.permute.xlu0 %6873
    %s6876 = sor.u32 256, 120
    %6877 = vbcast.lane.b32.xlu0 %v6685, %s6876
    %v6878 = vpop.permute.xlu0 %6877
    %6880 = vbcast.lane.b32.xlu0 %v6689, 256
    %v6881 = vpop.permute.xlu0 %6880
    %s6883 = sor.u32 256, 8
    %6884 = vbcast.lane.b32.xlu0 %v6689, %s6883
    %v6885 = vpop.permute.xlu0 %6884
    %s6887 = sor.u32 256, 16
    %6888 = vbcast.lane.b32.xlu0 %v6689, %s6887
    %v6889 = vpop.permute.xlu0 %6888
    %s6891 = sor.u32 256, 24
    %6892 = vbcast.lane.b32.xlu0 %v6689, %s6891
    %v6893 = vpop.permute.xlu0 %6892
    %s6895 = sor.u32 256, 32
    %6896 = vbcast.lane.b32.xlu0 %v6689, %s6895
    %v6897 = vpop.permute.xlu0 %6896
    %s6899 = sor.u32 256, 40
    %6900 = vbcast.lane.b32.xlu0 %v6689, %s6899
    %v6901 = vpop.permute.xlu0 %6900
    %s6903 = sor.u32 256, 48
    %6904 = vbcast.lane.b32.xlu0 %v6689, %s6903
    %v6905 = vpop.permute.xlu0 %6904
    %s6907 = sor.u32 256, 56
    %6908 = vbcast.lane.b32.xlu0 %v6689, %s6907
    %v6909 = vpop.permute.xlu0 %6908
    %s6911 = sor.u32 256, 64
    %6912 = vbcast.lane.b32.xlu0 %v6689, %s6911
    %v6913 = vpop.permute.xlu0 %6912
    %s6915 = sor.u32 256, 72
    %6916 = vbcast.lane.b32.xlu0 %v6689, %s6915
    %v6917 = vpop.permute.xlu0 %6916
    %s6919 = sor.u32 256, 80
    %6920 = vbcast.lane.b32.xlu0 %v6689, %s6919
    %v6921 = vpop.permute.xlu0 %6920
    %s6923 = sor.u32 256, 88
    %6924 = vbcast.lane.b32.xlu0 %v6689, %s6923
    %v6925 = vpop.permute.xlu0 %6924
    %s6927 = sor.u32 256, 96
    %6928 = vbcast.lane.b32.xlu0 %v6689, %s6927
    %v6929 = vpop.permute.xlu0 %6928
    %s6931 = sor.u32 256, 104
    %6932 = vbcast.lane.b32.xlu0 %v6689, %s6931
    %v6933 = vpop.permute.xlu0 %6932
    %s6935 = sor.u32 256, 112
    %6936 = vbcast.lane.b32.xlu0 %v6689, %s6935
    %v6937 = vpop.permute.xlu0 %6936
    %s6939 = sor.u32 256, 120
    %6940 = vbcast.lane.b32.xlu0 %v6689, %s6939
    %v6941 = vpop.permute.xlu0 %6940
    %v7006 = vmul.f32 %v6188, %v6692
    %v7007 = vmul.f32 %v6189, %v6696
    %v7008 = vmul.f32 %v6190, %v6700
    %v7009 = vmul.f32 %v6191, %v6704
    %v7010 = vmul.f32 %v6192, %v6708
    %v7011 = vmul.f32 %v6193, %v6712
    %v7012 = vmul.f32 %v6194, %v6716
    %v7013 = vmul.f32 %v6195, %v6720
    %v7014 = vmul.f32 %v6196, %v6724
    %v7015 = vmul.f32 %v6197, %v6728
    %v7016 = vmul.f32 %v6198, %v6732
    %v7017 = vmul.f32 %v6199, %v6736
    %v7018 = vmul.f32 %v6200, %v6740
    %v7019 = vmul.f32 %v6201, %v6744
    %v7020 = vmul.f32 %v6202, %v6748
    %v7021 = vmul.f32 %v6203, %v6752
    %v7022 = vmul.f32 %v6204, %v6755
    %v7023 = vmul.f32 %v6205, %v6759
    %v7024 = vmul.f32 %v6206, %v6763
    %v7025 = vmul.f32 %v6207, %v6767
    %v7026 = vmul.f32 %v6208, %v6771
    %v7027 = vmul.f32 %v6209, %v6775
    %v7028 = vmul.f32 %v6210, %v6779
    %v7029 = vmul.f32 %v6211, %v6783
    %v7030 = vmul.f32 %v6212, %v6787
    %v7031 = vmul.f32 %v6213, %v6791
    %v7032 = vmul.f32 %v6214, %v6795
    %v7033 = vmul.f32 %v6215, %v6799
    %v7034 = vmul.f32 %v6216, %v6803
    %v7035 = vmul.f32 %v6217, %v6807
    %v7036 = vmul.f32 %v6218, %v6811
    %v7037 = vmul.f32 %v6219, %v6815
    %v7038 = vmul.f32 %v6220, %v6818
    %v7039 = vmul.f32 %v6221, %v6822
    %v7040 = vmul.f32 %v6222, %v6826
    %v7041 = vmul.f32 %v6223, %v6830
    %v7042 = vmul.f32 %v6224, %v6834
    %v7043 = vmul.f32 %v6225, %v6838
    %v7044 = vmul.f32 %v6226, %v6842
    %v7045 = vmul.f32 %v6227, %v6846
    %v7046 = vmul.f32 %v6228, %v6850
    %v7047 = vmul.f32 %v6229, %v6854
    %v7048 = vmul.f32 %v6230, %v6858
    %v7049 = vmul.f32 %v6231, %v6862
    %v7050 = vmul.f32 %v6232, %v6866
    %v7051 = vmul.f32 %v6233, %v6870
    %v7052 = vmul.f32 %v6234, %v6874
    %v7053 = vmul.f32 %v6235, %v6878
    %v7054 = vmul.f32 %v6236, %v6881
    %v7055 = vmul.f32 %v6237, %v6885
    %v7056 = vmul.f32 %v6238, %v6889
    %v7057 = vmul.f32 %v6239, %v6893
    %v7058 = vmul.f32 %v6240, %v6897
    %v7059 = vmul.f32 %v6241, %v6901
    %v7060 = vmul.f32 %v6242, %v6905
    %v7061 = vmul.f32 %v6243, %v6909
    %v7062 = vmul.f32 %v6244, %v6913
    %v7063 = vmul.f32 %v6245, %v6917
    %v7064 = vmul.f32 %v6246, %v6921
    %v7065 = vmul.f32 %v6247, %v6925
    %v7066 = vmul.f32 %v6248, %v6929
    %v7067 = vmul.f32 %v6249, %v6933
    %v7068 = vmul.f32 %v6250, %v6937
    %v7069 = vmul.f32 %v6251, %v6941
    %v7070 = vmul.f32 %v6252, %v6692
    %v7071 = vmul.f32 %v6253, %v6696
    %v7072 = vmul.f32 %v6254, %v6700
    %v7073 = vmul.f32 %v6255, %v6704
    %v7074 = vmul.f32 %v6256, %v6708
    %v7075 = vmul.f32 %v6257, %v6712
    %v7076 = vmul.f32 %v6258, %v6716
    %v7077 = vmul.f32 %v6259, %v6720
    %v7078 = vmul.f32 %v6260, %v6724
    %v7079 = vmul.f32 %v6261, %v6728
    %v7080 = vmul.f32 %v6262, %v6732
    %v7081 = vmul.f32 %v6263, %v6736
    %v7082 = vmul.f32 %v6264, %v6740
    %v7083 = vmul.f32 %v6265, %v6744
    %v7084 = vmul.f32 %v6266, %v6748
    %v7085 = vmul.f32 %v6267, %v6752
    %v7086 = vmul.f32 %v6268, %v6755
    %v7087 = vmul.f32 %v6269, %v6759
    %v7088 = vmul.f32 %v6270, %v6763
    %v7089 = vmul.f32 %v6271, %v6767
    %v7090 = vmul.f32 %v6272, %v6771
    %v7091 = vmul.f32 %v6273, %v6775
    %v7092 = vmul.f32 %v6274, %v6779
    %v7093 = vmul.f32 %v6275, %v6783
    %v7094 = vmul.f32 %v6276, %v6787
    %v7095 = vmul.f32 %v6277, %v6791
    %v7096 = vmul.f32 %v6278, %v6795
    %v7097 = vmul.f32 %v6279, %v6799
    %v7098 = vmul.f32 %v6280, %v6803
    %v7099 = vmul.f32 %v6281, %v6807
    %v7100 = vmul.f32 %v6282, %v6811
    %v7101 = vmul.f32 %v6283, %v6815
    %v7102 = vmul.f32 %v6284, %v6818
    %v7103 = vmul.f32 %v6285, %v6822
    %v7104 = vmul.f32 %v6286, %v6826
    %v7105 = vmul.f32 %v6287, %v6830
    %v7106 = vmul.f32 %v6288, %v6834
    %v7107 = vmul.f32 %v6289, %v6838
    %v7108 = vmul.f32 %v6290, %v6842
    %v7109 = vmul.f32 %v6291, %v6846
    %v7110 = vmul.f32 %v6292, %v6850
    %v7111 = vmul.f32 %v6293, %v6854
    %v7112 = vmul.f32 %v6294, %v6858
    %v7113 = vmul.f32 %v6295, %v6862
    %v7114 = vmul.f32 %v6296, %v6866
    %v7115 = vmul.f32 %v6297, %v6870
    %v7116 = vmul.f32 %v6298, %v6874
    %v7117 = vmul.f32 %v6299, %v6878
    %v7118 = vmul.f32 %v6300, %v6881
    %v7119 = vmul.f32 %v6301, %v6885
    %v7120 = vmul.f32 %v6302, %v6889
    %v7121 = vmul.f32 %v6303, %v6893
    %v7122 = vmul.f32 %v6304, %v6897
    %v7123 = vmul.f32 %v6305, %v6901
    %v7124 = vmul.f32 %v6306, %v6905
    %v7125 = vmul.f32 %v6307, %v6909
    %v7126 = vmul.f32 %v6308, %v6913
    %v7127 = vmul.f32 %v6309, %v6917
    %v7128 = vmul.f32 %v6310, %v6921
    %v7129 = vmul.f32 %v6311, %v6925
    %v7130 = vmul.f32 %v6312, %v6929
    %v7131 = vmul.f32 %v6313, %v6933
    %v7132 = vmul.f32 %v6314, %v6937
    %v7133 = vmul.f32 %v6315, %v6941
    %v7134 = vmul.f32 %v6316, %v6692
    %v7135 = vmul.f32 %v6317, %v6696
    %v7136 = vmul.f32 %v6318, %v6700
    %v7137 = vmul.f32 %v6319, %v6704
    %v7138 = vmul.f32 %v6320, %v6708
    %v7139 = vmul.f32 %v6321, %v6712
    %v7140 = vmul.f32 %v6322, %v6716
    %v7141 = vmul.f32 %v6323, %v6720
    %v7142 = vmul.f32 %v6324, %v6724
    %v7143 = vmul.f32 %v6325, %v6728
    %v7144 = vmul.f32 %v6326, %v6732
    %v7145 = vmul.f32 %v6327, %v6736
    %v7146 = vmul.f32 %v6328, %v6740
    %v7147 = vmul.f32 %v6329, %v6744
    %v7148 = vmul.f32 %v6330, %v6748
    %v7149 = vmul.f32 %v6331, %v6752
    %v7150 = vmul.f32 %v6332, %v6755
    %v7151 = vmul.f32 %v6333, %v6759
    %v7152 = vmul.f32 %v6334, %v6763
    %v7153 = vmul.f32 %v6335, %v6767
    %v7154 = vmul.f32 %v6336, %v6771
    %v7155 = vmul.f32 %v6337, %v6775
    %v7156 = vmul.f32 %v6338, %v6779
    %v7157 = vmul.f32 %v6339, %v6783
    %v7158 = vmul.f32 %v6340, %v6787
    %v7159 = vmul.f32 %v6341, %v6791
    %v7160 = vmul.f32 %v6342, %v6795
    %v7161 = vmul.f32 %v6343, %v6799
    %v7162 = vmul.f32 %v6344, %v6803
    %v7163 = vmul.f32 %v6345, %v6807
    %v7164 = vmul.f32 %v6346, %v6811
    %v7165 = vmul.f32 %v6347, %v6815
    %v7166 = vmul.f32 %v6348, %v6818
    %v7167 = vmul.f32 %v6349, %v6822
    %v7168 = vmul.f32 %v6350, %v6826
    %v7169 = vmul.f32 %v6351, %v6830
    %v7170 = vmul.f32 %v6352, %v6834
    %v7171 = vmul.f32 %v6353, %v6838
    %v7172 = vmul.f32 %v6354, %v6842
    %v7173 = vmul.f32 %v6355, %v6846
    %v7174 = vmul.f32 %v6356, %v6850
    %v7175 = vmul.f32 %v6357, %v6854
    %v7176 = vmul.f32 %v6358, %v6858
    %v7177 = vmul.f32 %v6359, %v6862
    %v7178 = vmul.f32 %v6360, %v6866
    %v7179 = vmul.f32 %v6361, %v6870
    %v7180 = vmul.f32 %v6362, %v6874
    %v7181 = vmul.f32 %v6363, %v6878
    %v7182 = vmul.f32 %v6364, %v6881
    %v7183 = vmul.f32 %v6365, %v6885
    %v7184 = vmul.f32 %v6366, %v6889
    %v7185 = vmul.f32 %v6367, %v6893
    %v7186 = vmul.f32 %v6368, %v6897
    %v7187 = vmul.f32 %v6369, %v6901
    %v7188 = vmul.f32 %v6370, %v6905
    %v7189 = vmul.f32 %v6371, %v6909
    %v7190 = vmul.f32 %v6372, %v6913
    %v7191 = vmul.f32 %v6373, %v6917
    %v7192 = vmul.f32 %v6374, %v6921
    %v7193 = vmul.f32 %v6375, %v6925
    %v7194 = vmul.f32 %v6376, %v6929
    %v7195 = vmul.f32 %v6377, %v6933
    %v7196 = vmul.f32 %v6378, %v6937
    %v7197 = vmul.f32 %v6379, %v6941
    %v7198 = vmul.f32 %v6380, %v6692
    %v7199 = vmul.f32 %v6381, %v6696
    %v7200 = vmul.f32 %v6382, %v6700
    %v7201 = vmul.f32 %v6383, %v6704
    %v7202 = vmul.f32 %v6384, %v6708
    %v7203 = vmul.f32 %v6385, %v6712
    %v7204 = vmul.f32 %v6386, %v6716
    %v7205 = vmul.f32 %v6387, %v6720
    %v7206 = vmul.f32 %v6388, %v6724
    %v7207 = vmul.f32 %v6389, %v6728
    %v7208 = vmul.f32 %v6390, %v6732
    %v7209 = vmul.f32 %v6391, %v6736
    %v7210 = vmul.f32 %v6392, %v6740
    %v7211 = vmul.f32 %v6393, %v6744
    %v7212 = vmul.f32 %v6394, %v6748
    %v7213 = vmul.f32 %v6395, %v6752
    %v7214 = vmul.f32 %v6396, %v6755
    %v7215 = vmul.f32 %v6397, %v6759
    %v7216 = vmul.f32 %v6398, %v6763
    %v7217 = vmul.f32 %v6399, %v6767
    %v7218 = vmul.f32 %v6400, %v6771
    %v7219 = vmul.f32 %v6401, %v6775
    %v7220 = vmul.f32 %v6402, %v6779
    %v7221 = vmul.f32 %v6403, %v6783
    %v7222 = vmul.f32 %v6404, %v6787
    %v7223 = vmul.f32 %v6405, %v6791
    %v7224 = vmul.f32 %v6406, %v6795
    %v7225 = vmul.f32 %v6407, %v6799
    %v7226 = vmul.f32 %v6408, %v6803
    %v7227 = vmul.f32 %v6409, %v6807
    %v7228 = vmul.f32 %v6410, %v6811
    %v7229 = vmul.f32 %v6411, %v6815
    %v7230 = vmul.f32 %v6412, %v6818
    %v7231 = vmul.f32 %v6413, %v6822
    %v7232 = vmul.f32 %v6414, %v6826
    %v7233 = vmul.f32 %v6415, %v6830
    %v7234 = vmul.f32 %v6416, %v6834
    %v7235 = vmul.f32 %v6417, %v6838
    %v7236 = vmul.f32 %v6418, %v6842
    %v7237 = vmul.f32 %v6419, %v6846
    %v7238 = vmul.f32 %v6420, %v6850
    %v7239 = vmul.f32 %v6421, %v6854
    %v7240 = vmul.f32 %v6422, %v6858
    %v7241 = vmul.f32 %v6423, %v6862
    %v7242 = vmul.f32 %v6424, %v6866
    %v7243 = vmul.f32 %v6425, %v6870
    %v7244 = vmul.f32 %v6426, %v6874
    %v7245 = vmul.f32 %v6427, %v6878
    %v7246 = vmul.f32 %v6428, %v6881
    %v7247 = vmul.f32 %v6429, %v6885
    %v7248 = vmul.f32 %v6430, %v6889
    %v7249 = vmul.f32 %v6431, %v6893
    %v7250 = vmul.f32 %v6432, %v6897
    %v7251 = vmul.f32 %v6433, %v6901
    %v7252 = vmul.f32 %v6434, %v6905
    %v7253 = vmul.f32 %v6435, %v6909
    %v7254 = vmul.f32 %v6436, %v6913
    %v7255 = vmul.f32 %v6437, %v6917
    %v7256 = vmul.f32 %v6438, %v6921
    %v7257 = vmul.f32 %v6439, %v6925
    %v7258 = vmul.f32 %v6440, %v6929
    %v7259 = vmul.f32 %v6441, %v6933
    %v7260 = vmul.f32 %v6442, %v6937
    %v7261 = vmul.f32 %v6443, %v6941
    %7518 = vset.pattern.permute.xlu0 0
    %7519 = vperm.xlu0 %7518, %v7006
    %v7520 = vpop.permute.xlu0 %7519
    %7521 = vset.pattern.permute.xlu0 0
    %7522 = vperm.xlu0 %7521, %v7007
    %v7523 = vpop.permute.xlu0 %7522
    %7524 = vset.pattern.permute.xlu0 0
    %7525 = vperm.xlu0 %7524, %v7008
    %v7526 = vpop.permute.xlu0 %7525
    %7527 = vset.pattern.permute.xlu0 0
    %7528 = vperm.xlu0 %7527, %v7009
    %v7529 = vpop.permute.xlu0 %7528
    %7530 = vset.pattern.permute.xlu0 0
    %7531 = vperm.xlu0 %7530, %v7010
    %v7532 = vpop.permute.xlu0 %7531
    %7533 = vset.pattern.permute.xlu0 0
    %7534 = vperm.xlu0 %7533, %v7011
    %v7535 = vpop.permute.xlu0 %7534
    %7536 = vset.pattern.permute.xlu0 0
    %7537 = vperm.xlu0 %7536, %v7012
    %v7538 = vpop.permute.xlu0 %7537
    %7539 = vset.pattern.permute.xlu0 0
    %7540 = vperm.xlu0 %7539, %v7013
    %v7541 = vpop.permute.xlu0 %7540
    %7542 = vset.pattern.permute.xlu0 0
    %7543 = vperm.xlu0 %7542, %v7014
    %v7544 = vpop.permute.xlu0 %7543
    %7545 = vset.pattern.permute.xlu0 0
    %7546 = vperm.xlu0 %7545, %v7015
    %v7547 = vpop.permute.xlu0 %7546
    %7548 = vset.pattern.permute.xlu0 0
    %7549 = vperm.xlu0 %7548, %v7016
    %v7550 = vpop.permute.xlu0 %7549
    %7551 = vset.pattern.permute.xlu0 0
    %7552 = vperm.xlu0 %7551, %v7017
    %v7553 = vpop.permute.xlu0 %7552
    %7554 = vset.pattern.permute.xlu0 0
    %7555 = vperm.xlu0 %7554, %v7018
    %v7556 = vpop.permute.xlu0 %7555
    %7557 = vset.pattern.permute.xlu0 0
    %7558 = vperm.xlu0 %7557, %v7019
    %v7559 = vpop.permute.xlu0 %7558
    %7560 = vset.pattern.permute.xlu0 0
    %7561 = vperm.xlu0 %7560, %v7020
    %v7562 = vpop.permute.xlu0 %7561
    %7563 = vset.pattern.permute.xlu0 0
    %7564 = vperm.xlu0 %7563, %v7021
    %v7565 = vpop.permute.xlu0 %7564
    %7566 = vset.pattern.permute.xlu0 0
    %7567 = vperm.xlu0 %7566, %v7022
    %v7568 = vpop.permute.xlu0 %7567
    %7569 = vset.pattern.permute.xlu0 0
    %7570 = vperm.xlu0 %7569, %v7023
    %v7571 = vpop.permute.xlu0 %7570
    %7572 = vset.pattern.permute.xlu0 0
    %7573 = vperm.xlu0 %7572, %v7024
    %v7574 = vpop.permute.xlu0 %7573
    %7575 = vset.pattern.permute.xlu0 0
    %7576 = vperm.xlu0 %7575, %v7025
    %v7577 = vpop.permute.xlu0 %7576
    %7578 = vset.pattern.permute.xlu0 0
    %7579 = vperm.xlu0 %7578, %v7026
    %v7580 = vpop.permute.xlu0 %7579
    %7581 = vset.pattern.permute.xlu0 0
    %7582 = vperm.xlu0 %7581, %v7027
    %v7583 = vpop.permute.xlu0 %7582
    %7584 = vset.pattern.permute.xlu0 0
    %7585 = vperm.xlu0 %7584, %v7028
    %v7586 = vpop.permute.xlu0 %7585
    %7587 = vset.pattern.permute.xlu0 0
    %7588 = vperm.xlu0 %7587, %v7029
    %v7589 = vpop.permute.xlu0 %7588
    %7590 = vset.pattern.permute.xlu0 0
    %7591 = vperm.xlu0 %7590, %v7030
    %v7592 = vpop.permute.xlu0 %7591
    %7593 = vset.pattern.permute.xlu0 0
    %7594 = vperm.xlu0 %7593, %v7031
    %v7595 = vpop.permute.xlu0 %7594
    %7596 = vset.pattern.permute.xlu0 0
    %7597 = vperm.xlu0 %7596, %v7032
    %v7598 = vpop.permute.xlu0 %7597
    %7599 = vset.pattern.permute.xlu0 0
    %7600 = vperm.xlu0 %7599, %v7033
    %v7601 = vpop.permute.xlu0 %7600
    %7602 = vset.pattern.permute.xlu0 0
    %7603 = vperm.xlu0 %7602, %v7034
    %v7604 = vpop.permute.xlu0 %7603
    %7605 = vset.pattern.permute.xlu0 0
    %7606 = vperm.xlu0 %7605, %v7035
    %v7607 = vpop.permute.xlu0 %7606
    %7608 = vset.pattern.permute.xlu0 0
    %7609 = vperm.xlu0 %7608, %v7036
    %v7610 = vpop.permute.xlu0 %7609
    %7611 = vset.pattern.permute.xlu0 0
    %7612 = vperm.xlu0 %7611, %v7037
    %v7613 = vpop.permute.xlu0 %7612
    %7614 = vset.pattern.permute.xlu0 0
    %7615 = vperm.xlu0 %7614, %v7038
    %v7616 = vpop.permute.xlu0 %7615
    %7617 = vset.pattern.permute.xlu0 0
    %7618 = vperm.xlu0 %7617, %v7039
    %v7619 = vpop.permute.xlu0 %7618
    %7620 = vset.pattern.permute.xlu0 0
    %7621 = vperm.xlu0 %7620, %v7040
    %v7622 = vpop.permute.xlu0 %7621
    %7623 = vset.pattern.permute.xlu0 0
    %7624 = vperm.xlu0 %7623, %v7041
    %v7625 = vpop.permute.xlu0 %7624
    %7626 = vset.pattern.permute.xlu0 0
    %7627 = vperm.xlu0 %7626, %v7042
    %v7628 = vpop.permute.xlu0 %7627
    %7629 = vset.pattern.permute.xlu0 0
    %7630 = vperm.xlu0 %7629, %v7043
    %v7631 = vpop.permute.xlu0 %7630
    %7632 = vset.pattern.permute.xlu0 0
    %7633 = vperm.xlu0 %7632, %v7044
    %v7634 = vpop.permute.xlu0 %7633
    %7635 = vset.pattern.permute.xlu0 0
    %7636 = vperm.xlu0 %7635, %v7045
    %v7637 = vpop.permute.xlu0 %7636
    %7638 = vset.pattern.permute.xlu0 0
    %7639 = vperm.xlu0 %7638, %v7046
    %v7640 = vpop.permute.xlu0 %7639
    %7641 = vset.pattern.permute.xlu0 0
    %7642 = vperm.xlu0 %7641, %v7047
    %v7643 = vpop.permute.xlu0 %7642
    %7644 = vset.pattern.permute.xlu0 0
    %7645 = vperm.xlu0 %7644, %v7048
    %v7646 = vpop.permute.xlu0 %7645
    %7647 = vset.pattern.permute.xlu0 0
    %7648 = vperm.xlu0 %7647, %v7049
    %v7649 = vpop.permute.xlu0 %7648
    %7650 = vset.pattern.permute.xlu0 0
    %7651 = vperm.xlu0 %7650, %v7050
    %v7652 = vpop.permute.xlu0 %7651
    %7653 = vset.pattern.permute.xlu0 0
    %7654 = vperm.xlu0 %7653, %v7051
    %v7655 = vpop.permute.xlu0 %7654
    %7656 = vset.pattern.permute.xlu0 0
    %7657 = vperm.xlu0 %7656, %v7052
    %v7658 = vpop.permute.xlu0 %7657
    %7659 = vset.pattern.permute.xlu0 0
    %7660 = vperm.xlu0 %7659, %v7053
    %v7661 = vpop.permute.xlu0 %7660
    %7662 = vset.pattern.permute.xlu0 0
    %7663 = vperm.xlu0 %7662, %v7054
    %v7664 = vpop.permute.xlu0 %7663
    %7665 = vset.pattern.permute.xlu0 0
    %7666 = vperm.xlu0 %7665, %v7055
    %v7667 = vpop.permute.xlu0 %7666
    %7668 = vset.pattern.permute.xlu0 0
    %7669 = vperm.xlu0 %7668, %v7056
    %v7670 = vpop.permute.xlu0 %7669
    %7671 = vset.pattern.permute.xlu0 0
    %7672 = vperm.xlu0 %7671, %v7057
    %v7673 = vpop.permute.xlu0 %7672
    %7674 = vset.pattern.permute.xlu0 0
    %7675 = vperm.xlu0 %7674, %v7058
    %v7676 = vpop.permute.xlu0 %7675
    %7677 = vset.pattern.permute.xlu0 0
    %7678 = vperm.xlu0 %7677, %v7059
    %v7679 = vpop.permute.xlu0 %7678
    %7680 = vset.pattern.permute.xlu0 0
    %7681 = vperm.xlu0 %7680, %v7060
    %v7682 = vpop.permute.xlu0 %7681
    %7683 = vset.pattern.permute.xlu0 0
    %7684 = vperm.xlu0 %7683, %v7061
    %v7685 = vpop.permute.xlu0 %7684
    %7686 = vset.pattern.permute.xlu0 0
    %7687 = vperm.xlu0 %7686, %v7062
    %v7688 = vpop.permute.xlu0 %7687
    %7689 = vset.pattern.permute.xlu0 0
    %7690 = vperm.xlu0 %7689, %v7063
    %v7691 = vpop.permute.xlu0 %7690
    %7692 = vset.pattern.permute.xlu0 0
    %7693 = vperm.xlu0 %7692, %v7064
    %v7694 = vpop.permute.xlu0 %7693
    %7695 = vset.pattern.permute.xlu0 0
    %7696 = vperm.xlu0 %7695, %v7065
    %v7697 = vpop.permute.xlu0 %7696
    %7698 = vset.pattern.permute.xlu0 0
    %7699 = vperm.xlu0 %7698, %v7066
    %v7700 = vpop.permute.xlu0 %7699
    %7701 = vset.pattern.permute.xlu0 0
    %7702 = vperm.xlu0 %7701, %v7067
    %v7703 = vpop.permute.xlu0 %7702
    %7704 = vset.pattern.permute.xlu0 0
    %7705 = vperm.xlu0 %7704, %v7068
    %v7706 = vpop.permute.xlu0 %7705
    %7707 = vset.pattern.permute.xlu0 0
    %7708 = vperm.xlu0 %7707, %v7069
    %v7709 = vpop.permute.xlu0 %7708
    %7710 = vset.pattern.permute.xlu0 0
    %7711 = vperm.xlu0 %7710, %v7070
    %v7712 = vpop.permute.xlu0 %7711
    %7713 = vset.pattern.permute.xlu0 0
    %7714 = vperm.xlu0 %7713, %v7071
    %v7715 = vpop.permute.xlu0 %7714
    %7716 = vset.pattern.permute.xlu0 0
    %7717 = vperm.xlu0 %7716, %v7072
    %v7718 = vpop.permute.xlu0 %7717
    %7719 = vset.pattern.permute.xlu0 0
    %7720 = vperm.xlu0 %7719, %v7073
    %v7721 = vpop.permute.xlu0 %7720
    %7722 = vset.pattern.permute.xlu0 0
    %7723 = vperm.xlu0 %7722, %v7074
    %v7724 = vpop.permute.xlu0 %7723
    %7725 = vset.pattern.permute.xlu0 0
    %7726 = vperm.xlu0 %7725, %v7075
    %v7727 = vpop.permute.xlu0 %7726
    %7728 = vset.pattern.permute.xlu0 0
    %7729 = vperm.xlu0 %7728, %v7076
    %v7730 = vpop.permute.xlu0 %7729
    %7731 = vset.pattern.permute.xlu0 0
    %7732 = vperm.xlu0 %7731, %v7077
    %v7733 = vpop.permute.xlu0 %7732
    %7734 = vset.pattern.permute.xlu0 0
    %7735 = vperm.xlu0 %7734, %v7078
    %v7736 = vpop.permute.xlu0 %7735
    %7737 = vset.pattern.permute.xlu0 0
    %7738 = vperm.xlu0 %7737, %v7079
    %v7739 = vpop.permute.xlu0 %7738
    %7740 = vset.pattern.permute.xlu0 0
    %7741 = vperm.xlu0 %7740, %v7080
    %v7742 = vpop.permute.xlu0 %7741
    %7743 = vset.pattern.permute.xlu0 0
    %7744 = vperm.xlu0 %7743, %v7081
    %v7745 = vpop.permute.xlu0 %7744
    %7746 = vset.pattern.permute.xlu0 0
    %7747 = vperm.xlu0 %7746, %v7082
    %v7748 = vpop.permute.xlu0 %7747
    %7749 = vset.pattern.permute.xlu0 0
    %7750 = vperm.xlu0 %7749, %v7083
    %v7751 = vpop.permute.xlu0 %7750
    %7752 = vset.pattern.permute.xlu0 0
    %7753 = vperm.xlu0 %7752, %v7084
    %v7754 = vpop.permute.xlu0 %7753
    %7755 = vset.pattern.permute.xlu0 0
    %7756 = vperm.xlu0 %7755, %v7085
    %v7757 = vpop.permute.xlu0 %7756
    %7758 = vset.pattern.permute.xlu0 0
    %7759 = vperm.xlu0 %7758, %v7086
    %v7760 = vpop.permute.xlu0 %7759
    %7761 = vset.pattern.permute.xlu0 0
    %7762 = vperm.xlu0 %7761, %v7087
    %v7763 = vpop.permute.xlu0 %7762
    %7764 = vset.pattern.permute.xlu0 0
    %7765 = vperm.xlu0 %7764, %v7088
    %v7766 = vpop.permute.xlu0 %7765
    %7767 = vset.pattern.permute.xlu0 0
    %7768 = vperm.xlu0 %7767, %v7089
    %v7769 = vpop.permute.xlu0 %7768
    %7770 = vset.pattern.permute.xlu0 0
    %7771 = vperm.xlu0 %7770, %v7090
    %v7772 = vpop.permute.xlu0 %7771
    %7773 = vset.pattern.permute.xlu0 0
    %7774 = vperm.xlu0 %7773, %v7091
    %v7775 = vpop.permute.xlu0 %7774
    %7776 = vset.pattern.permute.xlu0 0
    %7777 = vperm.xlu0 %7776, %v7092
    %v7778 = vpop.permute.xlu0 %7777
    %7779 = vset.pattern.permute.xlu0 0
    %7780 = vperm.xlu0 %7779, %v7093
    %v7781 = vpop.permute.xlu0 %7780
    %7782 = vset.pattern.permute.xlu0 0
    %7783 = vperm.xlu0 %7782, %v7094
    %v7784 = vpop.permute.xlu0 %7783
    %7785 = vset.pattern.permute.xlu0 0
    %7786 = vperm.xlu0 %7785, %v7095
    %v7787 = vpop.permute.xlu0 %7786
    %7788 = vset.pattern.permute.xlu0 0
    %7789 = vperm.xlu0 %7788, %v7096
    %v7790 = vpop.permute.xlu0 %7789
    %7791 = vset.pattern.permute.xlu0 0
    %7792 = vperm.xlu0 %7791, %v7097
    %v7793 = vpop.permute.xlu0 %7792
    %7794 = vset.pattern.permute.xlu0 0
    %7795 = vperm.xlu0 %7794, %v7098
    %v7796 = vpop.permute.xlu0 %7795
    %7797 = vset.pattern.permute.xlu0 0
    %7798 = vperm.xlu0 %7797, %v7099
    %v7799 = vpop.permute.xlu0 %7798
    %7800 = vset.pattern.permute.xlu0 0
    %7801 = vperm.xlu0 %7800, %v7100
    %v7802 = vpop.permute.xlu0 %7801
    %7803 = vset.pattern.permute.xlu0 0
    %7804 = vperm.xlu0 %7803, %v7101
    %v7805 = vpop.permute.xlu0 %7804
    %7806 = vset.pattern.permute.xlu0 0
    %7807 = vperm.xlu0 %7806, %v7102
    %v7808 = vpop.permute.xlu0 %7807
    %7809 = vset.pattern.permute.xlu0 0
    %7810 = vperm.xlu0 %7809, %v7103
    %v7811 = vpop.permute.xlu0 %7810
    %7812 = vset.pattern.permute.xlu0 0
    %7813 = vperm.xlu0 %7812, %v7104
    %v7814 = vpop.permute.xlu0 %7813
    %7815 = vset.pattern.permute.xlu0 0
    %7816 = vperm.xlu0 %7815, %v7105
    %v7817 = vpop.permute.xlu0 %7816
    %7818 = vset.pattern.permute.xlu0 0
    %7819 = vperm.xlu0 %7818, %v7106
    %v7820 = vpop.permute.xlu0 %7819
    %7821 = vset.pattern.permute.xlu0 0
    %7822 = vperm.xlu0 %7821, %v7107
    %v7823 = vpop.permute.xlu0 %7822
    %7824 = vset.pattern.permute.xlu0 0
    %7825 = vperm.xlu0 %7824, %v7108
    %v7826 = vpop.permute.xlu0 %7825
    %7827 = vset.pattern.permute.xlu0 0
    %7828 = vperm.xlu0 %7827, %v7109
    %v7829 = vpop.permute.xlu0 %7828
    %7830 = vset.pattern.permute.xlu0 0
    %7831 = vperm.xlu0 %7830, %v7110
    %v7832 = vpop.permute.xlu0 %7831
    %7833 = vset.pattern.permute.xlu0 0
    %7834 = vperm.xlu0 %7833, %v7111
    %v7835 = vpop.permute.xlu0 %7834
    %7836 = vset.pattern.permute.xlu0 0
    %7837 = vperm.xlu0 %7836, %v7112
    %v7838 = vpop.permute.xlu0 %7837
    %7839 = vset.pattern.permute.xlu0 0
    %7840 = vperm.xlu0 %7839, %v7113
    %v7841 = vpop.permute.xlu0 %7840
    %7842 = vset.pattern.permute.xlu0 0
    %7843 = vperm.xlu0 %7842, %v7114
    %v7844 = vpop.permute.xlu0 %7843
    %7845 = vset.pattern.permute.xlu0 0
    %7846 = vperm.xlu0 %7845, %v7115
    %v7847 = vpop.permute.xlu0 %7846
    %7848 = vset.pattern.permute.xlu0 0
    %7849 = vperm.xlu0 %7848, %v7116
    %v7850 = vpop.permute.xlu0 %7849
    %7851 = vset.pattern.permute.xlu0 0
    %7852 = vperm.xlu0 %7851, %v7117
    %v7853 = vpop.permute.xlu0 %7852
    %7854 = vset.pattern.permute.xlu0 0
    %7855 = vperm.xlu0 %7854, %v7118
    %v7856 = vpop.permute.xlu0 %7855
    %7857 = vset.pattern.permute.xlu0 0
    %7858 = vperm.xlu0 %7857, %v7119
    %v7859 = vpop.permute.xlu0 %7858
    %7860 = vset.pattern.permute.xlu0 0
    %7861 = vperm.xlu0 %7860, %v7120
    %v7862 = vpop.permute.xlu0 %7861
    %7863 = vset.pattern.permute.xlu0 0
    %7864 = vperm.xlu0 %7863, %v7121
    %v7865 = vpop.permute.xlu0 %7864
    %7866 = vset.pattern.permute.xlu0 0
    %7867 = vperm.xlu0 %7866, %v7122
    %v7868 = vpop.permute.xlu0 %7867
    %7869 = vset.pattern.permute.xlu0 0
    %7870 = vperm.xlu0 %7869, %v7123
    %v7871 = vpop.permute.xlu0 %7870
    %7872 = vset.pattern.permute.xlu0 0
    %7873 = vperm.xlu0 %7872, %v7124
    %v7874 = vpop.permute.xlu0 %7873
    %7875 = vset.pattern.permute.xlu0 0
    %7876 = vperm.xlu0 %7875, %v7125
    %v7877 = vpop.permute.xlu0 %7876
    %7878 = vset.pattern.permute.xlu0 0
    %7879 = vperm.xlu0 %7878, %v7126
    %v7880 = vpop.permute.xlu0 %7879
    %7881 = vset.pattern.permute.xlu0 0
    %7882 = vperm.xlu0 %7881, %v7127
    %v7883 = vpop.permute.xlu0 %7882
    %7884 = vset.pattern.permute.xlu0 0
    %7885 = vperm.xlu0 %7884, %v7128
    %v7886 = vpop.permute.xlu0 %7885
    %7887 = vset.pattern.permute.xlu0 0
    %7888 = vperm.xlu0 %7887, %v7129
    %v7889 = vpop.permute.xlu0 %7888
    %7890 = vset.pattern.permute.xlu0 0
    %7891 = vperm.xlu0 %7890, %v7130
    %v7892 = vpop.permute.xlu0 %7891
    %7893 = vset.pattern.permute.xlu0 0
    %7894 = vperm.xlu0 %7893, %v7131
    %v7895 = vpop.permute.xlu0 %7894
    %7896 = vset.pattern.permute.xlu0 0
    %7897 = vperm.xlu0 %7896, %v7132
    %v7898 = vpop.permute.xlu0 %7897
    %7899 = vset.pattern.permute.xlu0 0
    %7900 = vperm.xlu0 %7899, %v7133
    %v7901 = vpop.permute.xlu0 %7900
    %7902 = vset.pattern.permute.xlu0 0
    %7903 = vperm.xlu0 %7902, %v7134
    %v7904 = vpop.permute.xlu0 %7903
    %7905 = vset.pattern.permute.xlu0 0
    %7906 = vperm.xlu0 %7905, %v7135
    %v7907 = vpop.permute.xlu0 %7906
    %7908 = vset.pattern.permute.xlu0 0
    %7909 = vperm.xlu0 %7908, %v7136
    %v7910 = vpop.permute.xlu0 %7909
    %7911 = vset.pattern.permute.xlu0 0
    %7912 = vperm.xlu0 %7911, %v7137
    %v7913 = vpop.permute.xlu0 %7912
    %7914 = vset.pattern.permute.xlu0 0
    %7915 = vperm.xlu0 %7914, %v7138
    %v7916 = vpop.permute.xlu0 %7915
    %7917 = vset.pattern.permute.xlu0 0
    %7918 = vperm.xlu0 %7917, %v7139
    %v7919 = vpop.permute.xlu0 %7918
    %7920 = vset.pattern.permute.xlu0 0
    %7921 = vperm.xlu0 %7920, %v7140
    %v7922 = vpop.permute.xlu0 %7921
    %7923 = vset.pattern.permute.xlu0 0
    %7924 = vperm.xlu0 %7923, %v7141
    %v7925 = vpop.permute.xlu0 %7924
    %7926 = vset.pattern.permute.xlu0 0
    %7927 = vperm.xlu0 %7926, %v7142
    %v7928 = vpop.permute.xlu0 %7927
    %7929 = vset.pattern.permute.xlu0 0
    %7930 = vperm.xlu0 %7929, %v7143
    %v7931 = vpop.permute.xlu0 %7930
    %7932 = vset.pattern.permute.xlu0 0
    %7933 = vperm.xlu0 %7932, %v7144
    %v7934 = vpop.permute.xlu0 %7933
    %7935 = vset.pattern.permute.xlu0 0
    %7936 = vperm.xlu0 %7935, %v7145
    %v7937 = vpop.permute.xlu0 %7936
    %7938 = vset.pattern.permute.xlu0 0
    %7939 = vperm.xlu0 %7938, %v7146
    %v7940 = vpop.permute.xlu0 %7939
    %7941 = vset.pattern.permute.xlu0 0
    %7942 = vperm.xlu0 %7941, %v7147
    %v7943 = vpop.permute.xlu0 %7942
    %7944 = vset.pattern.permute.xlu0 0
    %7945 = vperm.xlu0 %7944, %v7148
    %v7946 = vpop.permute.xlu0 %7945
    %7947 = vset.pattern.permute.xlu0 0
    %7948 = vperm.xlu0 %7947, %v7149
    %v7949 = vpop.permute.xlu0 %7948
    %7950 = vset.pattern.permute.xlu0 0
    %7951 = vperm.xlu0 %7950, %v7150
    %v7952 = vpop.permute.xlu0 %7951
    %7953 = vset.pattern.permute.xlu0 0
    %7954 = vperm.xlu0 %7953, %v7151
    %v7955 = vpop.permute.xlu0 %7954
    %7956 = vset.pattern.permute.xlu0 0
    %7957 = vperm.xlu0 %7956, %v7152
    %v7958 = vpop.permute.xlu0 %7957
    %7959 = vset.pattern.permute.xlu0 0
    %7960 = vperm.xlu0 %7959, %v7153
    %v7961 = vpop.permute.xlu0 %7960
    %7962 = vset.pattern.permute.xlu0 0
    %7963 = vperm.xlu0 %7962, %v7154
    %v7964 = vpop.permute.xlu0 %7963
    %7965 = vset.pattern.permute.xlu0 0
    %7966 = vperm.xlu0 %7965, %v7155
    %v7967 = vpop.permute.xlu0 %7966
    %7968 = vset.pattern.permute.xlu0 0
    %7969 = vperm.xlu0 %7968, %v7156
    %v7970 = vpop.permute.xlu0 %7969
    %7971 = vset.pattern.permute.xlu0 0
    %7972 = vperm.xlu0 %7971, %v7157
    %v7973 = vpop.permute.xlu0 %7972
    %7974 = vset.pattern.permute.xlu0 0
    %7975 = vperm.xlu0 %7974, %v7158
    %v7976 = vpop.permute.xlu0 %7975
    %7977 = vset.pattern.permute.xlu0 0
    %7978 = vperm.xlu0 %7977, %v7159
    %v7979 = vpop.permute.xlu0 %7978
    %7980 = vset.pattern.permute.xlu0 0
    %7981 = vperm.xlu0 %7980, %v7160
    %v7982 = vpop.permute.xlu0 %7981
    %7983 = vset.pattern.permute.xlu0 0
    %7984 = vperm.xlu0 %7983, %v7161
    %v7985 = vpop.permute.xlu0 %7984
    %7986 = vset.pattern.permute.xlu0 0
    %7987 = vperm.xlu0 %7986, %v7162
    %v7988 = vpop.permute.xlu0 %7987
    %7989 = vset.pattern.permute.xlu0 0
    %7990 = vperm.xlu0 %7989, %v7163
    %v7991 = vpop.permute.xlu0 %7990
    %7992 = vset.pattern.permute.xlu0 0
    %7993 = vperm.xlu0 %7992, %v7164
    %v7994 = vpop.permute.xlu0 %7993
    %7995 = vset.pattern.permute.xlu0 0
    %7996 = vperm.xlu0 %7995, %v7165
    %v7997 = vpop.permute.xlu0 %7996
    %7998 = vset.pattern.permute.xlu0 0
    %7999 = vperm.xlu0 %7998, %v7166
    %v8000 = vpop.permute.xlu0 %7999
    %8001 = vset.pattern.permute.xlu0 0
    %8002 = vperm.xlu0 %8001, %v7167
    %v8003 = vpop.permute.xlu0 %8002
    %8004 = vset.pattern.permute.xlu0 0
    %8005 = vperm.xlu0 %8004, %v7168
    %v8006 = vpop.permute.xlu0 %8005
    %8007 = vset.pattern.permute.xlu0 0
    %8008 = vperm.xlu0 %8007, %v7169
    %v8009 = vpop.permute.xlu0 %8008
    %8010 = vset.pattern.permute.xlu0 0
    %8011 = vperm.xlu0 %8010, %v7170
    %v8012 = vpop.permute.xlu0 %8011
    %8013 = vset.pattern.permute.xlu0 0
    %8014 = vperm.xlu0 %8013, %v7171
    %v8015 = vpop.permute.xlu0 %8014
    %8016 = vset.pattern.permute.xlu0 0
    %8017 = vperm.xlu0 %8016, %v7172
    %v8018 = vpop.permute.xlu0 %8017
    %8019 = vset.pattern.permute.xlu0 0
    %8020 = vperm.xlu0 %8019, %v7173
    %v8021 = vpop.permute.xlu0 %8020
    %8022 = vset.pattern.permute.xlu0 0
    %8023 = vperm.xlu0 %8022, %v7174
    %v8024 = vpop.permute.xlu0 %8023
    %8025 = vset.pattern.permute.xlu0 0
    %8026 = vperm.xlu0 %8025, %v7175
    %v8027 = vpop.permute.xlu0 %8026
    %8028 = vset.pattern.permute.xlu0 0
    %8029 = vperm.xlu0 %8028, %v7176
    %v8030 = vpop.permute.xlu0 %8029
    %8031 = vset.pattern.permute.xlu0 0
    %8032 = vperm.xlu0 %8031, %v7177
    %v8033 = vpop.permute.xlu0 %8032
    %8034 = vset.pattern.permute.xlu0 0
    %8035 = vperm.xlu0 %8034, %v7178
    %v8036 = vpop.permute.xlu0 %8035
    %8037 = vset.pattern.permute.xlu0 0
    %8038 = vperm.xlu0 %8037, %v7179
    %v8039 = vpop.permute.xlu0 %8038
    %8040 = vset.pattern.permute.xlu0 0
    %8041 = vperm.xlu0 %8040, %v7180
    %v8042 = vpop.permute.xlu0 %8041
    %8043 = vset.pattern.permute.xlu0 0
    %8044 = vperm.xlu0 %8043, %v7181
    %v8045 = vpop.permute.xlu0 %8044
    %8046 = vset.pattern.permute.xlu0 0
    %8047 = vperm.xlu0 %8046, %v7182
    %v8048 = vpop.permute.xlu0 %8047
    %8049 = vset.pattern.permute.xlu0 0
    %8050 = vperm.xlu0 %8049, %v7183
    %v8051 = vpop.permute.xlu0 %8050
    %8052 = vset.pattern.permute.xlu0 0
    %8053 = vperm.xlu0 %8052, %v7184
    %v8054 = vpop.permute.xlu0 %8053
    %8055 = vset.pattern.permute.xlu0 0
    %8056 = vperm.xlu0 %8055, %v7185
    %v8057 = vpop.permute.xlu0 %8056
    %8058 = vset.pattern.permute.xlu0 0
    %8059 = vperm.xlu0 %8058, %v7186
    %v8060 = vpop.permute.xlu0 %8059
    %8061 = vset.pattern.permute.xlu0 0
    %8062 = vperm.xlu0 %8061, %v7187
    %v8063 = vpop.permute.xlu0 %8062
    %8064 = vset.pattern.permute.xlu0 0
    %8065 = vperm.xlu0 %8064, %v7188
    %v8066 = vpop.permute.xlu0 %8065
    %8067 = vset.pattern.permute.xlu0 0
    %8068 = vperm.xlu0 %8067, %v7189
    %v8069 = vpop.permute.xlu0 %8068
    %8070 = vset.pattern.permute.xlu0 0
    %8071 = vperm.xlu0 %8070, %v7190
    %v8072 = vpop.permute.xlu0 %8071
    %8073 = vset.pattern.permute.xlu0 0
    %8074 = vperm.xlu0 %8073, %v7191
    %v8075 = vpop.permute.xlu0 %8074
    %8076 = vset.pattern.permute.xlu0 0
    %8077 = vperm.xlu0 %8076, %v7192
    %v8078 = vpop.permute.xlu0 %8077
    %8079 = vset.pattern.permute.xlu0 0
    %8080 = vperm.xlu0 %8079, %v7193
    %v8081 = vpop.permute.xlu0 %8080
    %8082 = vset.pattern.permute.xlu0 0
    %8083 = vperm.xlu0 %8082, %v7194
    %v8084 = vpop.permute.xlu0 %8083
    %8085 = vset.pattern.permute.xlu0 0
    %8086 = vperm.xlu0 %8085, %v7195
    %v8087 = vpop.permute.xlu0 %8086
    %8088 = vset.pattern.permute.xlu0 0
    %8089 = vperm.xlu0 %8088, %v7196
    %v8090 = vpop.permute.xlu0 %8089
    %8091 = vset.pattern.permute.xlu0 0
    %8092 = vperm.xlu0 %8091, %v7197
    %v8093 = vpop.permute.xlu0 %8092
    %8094 = vset.pattern.permute.xlu0 0
    %8095 = vperm.xlu0 %8094, %v7198
    %v8096 = vpop.permute.xlu0 %8095
    %8097 = vset.pattern.permute.xlu0 0
    %8098 = vperm.xlu0 %8097, %v7199
    %v8099 = vpop.permute.xlu0 %8098
    %8100 = vset.pattern.permute.xlu0 0
    %8101 = vperm.xlu0 %8100, %v7200
    %v8102 = vpop.permute.xlu0 %8101
    %8103 = vset.pattern.permute.xlu0 0
    %8104 = vperm.xlu0 %8103, %v7201
    %v8105 = vpop.permute.xlu0 %8104
    %8106 = vset.pattern.permute.xlu0 0
    %8107 = vperm.xlu0 %8106, %v7202
    %v8108 = vpop.permute.xlu0 %8107
    %8109 = vset.pattern.permute.xlu0 0
    %8110 = vperm.xlu0 %8109, %v7203
    %v8111 = vpop.permute.xlu0 %8110
    %8112 = vset.pattern.permute.xlu0 0
    %8113 = vperm.xlu0 %8112, %v7204
    %v8114 = vpop.permute.xlu0 %8113
    %8115 = vset.pattern.permute.xlu0 0
    %8116 = vperm.xlu0 %8115, %v7205
    %v8117 = vpop.permute.xlu0 %8116
    %8118 = vset.pattern.permute.xlu0 0
    %8119 = vperm.xlu0 %8118, %v7206
    %v8120 = vpop.permute.xlu0 %8119
    %8121 = vset.pattern.permute.xlu0 0
    %8122 = vperm.xlu0 %8121, %v7207
    %v8123 = vpop.permute.xlu0 %8122
    %8124 = vset.pattern.permute.xlu0 0
    %8125 = vperm.xlu0 %8124, %v7208
    %v8126 = vpop.permute.xlu0 %8125
    %8127 = vset.pattern.permute.xlu0 0
    %8128 = vperm.xlu0 %8127, %v7209
    %v8129 = vpop.permute.xlu0 %8128
    %8130 = vset.pattern.permute.xlu0 0
    %8131 = vperm.xlu0 %8130, %v7210
    %v8132 = vpop.permute.xlu0 %8131
    %8133 = vset.pattern.permute.xlu0 0
    %8134 = vperm.xlu0 %8133, %v7211
    %v8135 = vpop.permute.xlu0 %8134
    %8136 = vset.pattern.permute.xlu0 0
    %8137 = vperm.xlu0 %8136, %v7212
    %v8138 = vpop.permute.xlu0 %8137
    %8139 = vset.pattern.permute.xlu0 0
    %8140 = vperm.xlu0 %8139, %v7213
    %v8141 = vpop.permute.xlu0 %8140
    %8142 = vset.pattern.permute.xlu0 0
    %8143 = vperm.xlu0 %8142, %v7214
    %v8144 = vpop.permute.xlu0 %8143
    %8145 = vset.pattern.permute.xlu0 0
    %8146 = vperm.xlu0 %8145, %v7215
    %v8147 = vpop.permute.xlu0 %8146
    %8148 = vset.pattern.permute.xlu0 0
    %8149 = vperm.xlu0 %8148, %v7216
    %v8150 = vpop.permute.xlu0 %8149
    %8151 = vset.pattern.permute.xlu0 0
    %8152 = vperm.xlu0 %8151, %v7217
    %v8153 = vpop.permute.xlu0 %8152
    %8154 = vset.pattern.permute.xlu0 0
    %8155 = vperm.xlu0 %8154, %v7218
    %v8156 = vpop.permute.xlu0 %8155
    %8157 = vset.pattern.permute.xlu0 0
    %8158 = vperm.xlu0 %8157, %v7219
    %v8159 = vpop.permute.xlu0 %8158
    %8160 = vset.pattern.permute.xlu0 0
    %8161 = vperm.xlu0 %8160, %v7220
    %v8162 = vpop.permute.xlu0 %8161
    %8163 = vset.pattern.permute.xlu0 0
    %8164 = vperm.xlu0 %8163, %v7221
    %v8165 = vpop.permute.xlu0 %8164
    %8166 = vset.pattern.permute.xlu0 0
    %8167 = vperm.xlu0 %8166, %v7222
    %v8168 = vpop.permute.xlu0 %8167
    %8169 = vset.pattern.permute.xlu0 0
    %8170 = vperm.xlu0 %8169, %v7223
    %v8171 = vpop.permute.xlu0 %8170
    %8172 = vset.pattern.permute.xlu0 0
    %8173 = vperm.xlu0 %8172, %v7224
    %v8174 = vpop.permute.xlu0 %8173
    %8175 = vset.pattern.permute.xlu0 0
    %8176 = vperm.xlu0 %8175, %v7225
    %v8177 = vpop.permute.xlu0 %8176
    %8178 = vset.pattern.permute.xlu0 0
    %8179 = vperm.xlu0 %8178, %v7226
    %v8180 = vpop.permute.xlu0 %8179
    %8181 = vset.pattern.permute.xlu0 0
    %8182 = vperm.xlu0 %8181, %v7227
    %v8183 = vpop.permute.xlu0 %8182
    %8184 = vset.pattern.permute.xlu0 0
    %8185 = vperm.xlu0 %8184, %v7228
    %v8186 = vpop.permute.xlu0 %8185
    %8187 = vset.pattern.permute.xlu0 0
    %8188 = vperm.xlu0 %8187, %v7229
    %v8189 = vpop.permute.xlu0 %8188
    %8190 = vset.pattern.permute.xlu0 0
    %8191 = vperm.xlu0 %8190, %v7230
    %v8192 = vpop.permute.xlu0 %8191
    %8193 = vset.pattern.permute.xlu0 0
    %8194 = vperm.xlu0 %8193, %v7231
    %v8195 = vpop.permute.xlu0 %8194
    %8196 = vset.pattern.permute.xlu0 0
    %8197 = vperm.xlu0 %8196, %v7232
    %v8198 = vpop.permute.xlu0 %8197
    %8199 = vset.pattern.permute.xlu0 0
    %8200 = vperm.xlu0 %8199, %v7233
    %v8201 = vpop.permute.xlu0 %8200
    %8202 = vset.pattern.permute.xlu0 0
    %8203 = vperm.xlu0 %8202, %v7234
    %v8204 = vpop.permute.xlu0 %8203
    %8205 = vset.pattern.permute.xlu0 0
    %8206 = vperm.xlu0 %8205, %v7235
    %v8207 = vpop.permute.xlu0 %8206
    %8208 = vset.pattern.permute.xlu0 0
    %8209 = vperm.xlu0 %8208, %v7236
    %v8210 = vpop.permute.xlu0 %8209
    %8211 = vset.pattern.permute.xlu0 0
    %8212 = vperm.xlu0 %8211, %v7237
    %v8213 = vpop.permute.xlu0 %8212
    %8214 = vset.pattern.permute.xlu0 0
    %8215 = vperm.xlu0 %8214, %v7238
    %v8216 = vpop.permute.xlu0 %8215
    %8217 = vset.pattern.permute.xlu0 0
    %8218 = vperm.xlu0 %8217, %v7239
    %v8219 = vpop.permute.xlu0 %8218
    %8220 = vset.pattern.permute.xlu0 0
    %8221 = vperm.xlu0 %8220, %v7240
    %v8222 = vpop.permute.xlu0 %8221
    %8223 = vset.pattern.permute.xlu0 0
    %8224 = vperm.xlu0 %8223, %v7241
    %v8225 = vpop.permute.xlu0 %8224
    %8226 = vset.pattern.permute.xlu0 0
    %8227 = vperm.xlu0 %8226, %v7242
    %v8228 = vpop.permute.xlu0 %8227
    %8229 = vset.pattern.permute.xlu0 0
    %8230 = vperm.xlu0 %8229, %v7243
    %v8231 = vpop.permute.xlu0 %8230
    %8232 = vset.pattern.permute.xlu0 0
    %8233 = vperm.xlu0 %8232, %v7244
    %v8234 = vpop.permute.xlu0 %8233
    %8235 = vset.pattern.permute.xlu0 0
    %8236 = vperm.xlu0 %8235, %v7245
    %v8237 = vpop.permute.xlu0 %8236
    %8238 = vset.pattern.permute.xlu0 0
    %8239 = vperm.xlu0 %8238, %v7246
    %v8240 = vpop.permute.xlu0 %8239
    %8241 = vset.pattern.permute.xlu0 0
    %8242 = vperm.xlu0 %8241, %v7247
    %v8243 = vpop.permute.xlu0 %8242
    %8244 = vset.pattern.permute.xlu0 0
    %8245 = vperm.xlu0 %8244, %v7248
    %v8246 = vpop.permute.xlu0 %8245
    %8247 = vset.pattern.permute.xlu0 0
    %8248 = vperm.xlu0 %8247, %v7249
    %v8249 = vpop.permute.xlu0 %8248
    %8250 = vset.pattern.permute.xlu0 0
    %8251 = vperm.xlu0 %8250, %v7250
    %v8252 = vpop.permute.xlu0 %8251
    %8253 = vset.pattern.permute.xlu0 0
    %8254 = vperm.xlu0 %8253, %v7251
    %v8255 = vpop.permute.xlu0 %8254
    %8256 = vset.pattern.permute.xlu0 0
    %8257 = vperm.xlu0 %8256, %v7252
    %v8258 = vpop.permute.xlu0 %8257
    %8259 = vset.pattern.permute.xlu0 0
    %8260 = vperm.xlu0 %8259, %v7253
    %v8261 = vpop.permute.xlu0 %8260
    %8262 = vset.pattern.permute.xlu0 0
    %8263 = vperm.xlu0 %8262, %v7254
    %v8264 = vpop.permute.xlu0 %8263
    %8265 = vset.pattern.permute.xlu0 0
    %8266 = vperm.xlu0 %8265, %v7255
    %v8267 = vpop.permute.xlu0 %8266
    %8268 = vset.pattern.permute.xlu0 0
    %8269 = vperm.xlu0 %8268, %v7256
    %v8270 = vpop.permute.xlu0 %8269
    %8271 = vset.pattern.permute.xlu0 0
    %8272 = vperm.xlu0 %8271, %v7257
    %v8273 = vpop.permute.xlu0 %8272
    %8274 = vset.pattern.permute.xlu0 0
    %8275 = vperm.xlu0 %8274, %v7258
    %v8276 = vpop.permute.xlu0 %8275
    %8277 = vset.pattern.permute.xlu0 0
    %8278 = vperm.xlu0 %8277, %v7259
    %v8279 = vpop.permute.xlu0 %8278
    %8280 = vset.pattern.permute.xlu0 0
    %8281 = vperm.xlu0 %8280, %v7260
    %v8282 = vpop.permute.xlu0 %8281
    %8283 = vset.pattern.permute.xlu0 0
    %8284 = vperm.xlu0 %8283, %v7261
    %v8285 = vpop.permute.xlu0 %8284
    %v8286 = vlaneseq
    %v8287 = vand.u32 %v8286, 127
    %v8288 = vlaneseq
    %v8289 = vshrl.u32 %v8288, 7
    %v8290 = vsub.s32 %v8287, %v8289
    %v8291 = vrot.slane %v7520, %v8290
    %v8292 = vadd.s32 %v8287, 4294967288
    %v8293 = vlaneseq
    %v8294 = vshrl.u32 %v8293, 7
    %v8295 = vsub.s32 %v8292, %v8294
    %v8296 = vrot.slane %v7523, %v8295
    %vm8297 = vcmask 130112
    %v8298 = vsel %vm8297, %v8296, %v8291
    %v8299 = vadd.s32 %v8287, 4294967280
    %v8300 = vlaneseq
    %v8301 = vshrl.u32 %v8300, 7
    %v8302 = vsub.s32 %v8299, %v8301
    %v8303 = vrot.slane %v7526, %v8302
    %vm8304 = vcmask 195712
    %v8305 = vsel %vm8304, %v8303, %v8298
    %v8306 = vadd.s32 %v8287, 4294967272
    %v8307 = vlaneseq
    %v8308 = vshrl.u32 %v8307, 7
    %v8309 = vsub.s32 %v8306, %v8308
    %v8310 = vrot.slane %v7529, %v8309
    %vm8311 = vcmask 261312
    %v8312 = vsel %vm8311, %v8310, %v8305
    %v8313 = vadd.s32 %v8287, 4294967264
    %v8314 = vlaneseq
    %v8315 = vshrl.u32 %v8314, 7
    %v8316 = vsub.s32 %v8313, %v8315
    %v8317 = vrot.slane %v7532, %v8316
    %vm8318 = vcmask 326912
    %v8319 = vsel %vm8318, %v8317, %v8312
    %v8320 = vadd.s32 %v8287, 4294967256
    %v8321 = vlaneseq
    %v8322 = vshrl.u32 %v8321, 7
    %v8323 = vsub.s32 %v8320, %v8322
    %v8324 = vrot.slane %v7535, %v8323
    %vm8325 = vcmask 392512
    %v8326 = vsel %vm8325, %v8324, %v8319
    %v8327 = vadd.s32 %v8287, 4294967248
    %v8328 = vlaneseq
    %v8329 = vshrl.u32 %v8328, 7
    %v8330 = vsub.s32 %v8327, %v8329
    %v8331 = vrot.slane %v7538, %v8330
    %vm8332 = vcmask 458112
    %v8333 = vsel %vm8332, %v8331, %v8326
    %v8334 = vadd.s32 %v8287, 4294967240
    %v8335 = vlaneseq
    %v8336 = vshrl.u32 %v8335, 7
    %v8337 = vsub.s32 %v8334, %v8336
    %v8338 = vrot.slane %v7541, %v8337
    %vm8339 = vcmask 523712
    %v8340 = vsel %vm8339, %v8338, %v8333
    %v8341 = vadd.s32 %v8287, 4294967232
    %v8342 = vlaneseq
    %v8343 = vshrl.u32 %v8342, 7
    %v8344 = vsub.s32 %v8341, %v8343
    %v8345 = vrot.slane %v7544, %v8344
    %vm8346 = vcmask 589312
    %v8347 = vsel %vm8346, %v8345, %v8340
    %v8348 = vadd.s32 %v8287, 4294967224
    %v8349 = vlaneseq
    %v8350 = vshrl.u32 %v8349, 7
    %v8351 = vsub.s32 %v8348, %v8350
    %v8352 = vrot.slane %v7547, %v8351
    %vm8353 = vcmask 654912
    %v8354 = vsel %vm8353, %v8352, %v8347
    %v8355 = vadd.s32 %v8287, 4294967216
    %v8356 = vlaneseq
    %v8357 = vshrl.u32 %v8356, 7
    %v8358 = vsub.s32 %v8355, %v8357
    %v8359 = vrot.slane %v7550, %v8358
    %vm8360 = vcmask 720512
    %v8361 = vsel %vm8360, %v8359, %v8354
    %v8362 = vadd.s32 %v8287, 4294967208
    %v8363 = vlaneseq
    %v8364 = vshrl.u32 %v8363, 7
    %v8365 = vsub.s32 %v8362, %v8364
    %v8366 = vrot.slane %v7553, %v8365
    %vm8367 = vcmask 786112
    %v8368 = vsel %vm8367, %v8366, %v8361
    %v8369 = vadd.s32 %v8287, 4294967200
    %v8370 = vlaneseq
    %v8371 = vshrl.u32 %v8370, 7
    %v8372 = vsub.s32 %v8369, %v8371
    %v8373 = vrot.slane %v7556, %v8372
    %vm8374 = vcmask 851712
    %v8375 = vsel %vm8374, %v8373, %v8368
    %v8376 = vadd.s32 %v8287, 4294967192
    %v8377 = vlaneseq
    %v8378 = vshrl.u32 %v8377, 7
    %v8379 = vsub.s32 %v8376, %v8378
    %v8380 = vrot.slane %v7559, %v8379
    %vm8381 = vcmask 917312
    %v8382 = vsel %vm8381, %v8380, %v8375
    %v8383 = vadd.s32 %v8287, 4294967184
    %v8384 = vlaneseq
    %v8385 = vshrl.u32 %v8384, 7
    %v8386 = vsub.s32 %v8383, %v8385
    %v8387 = vrot.slane %v7562, %v8386
    %vm8388 = vcmask 982912
    %v8389 = vsel %vm8388, %v8387, %v8382
    %v8390 = vadd.s32 %v8287, 4294967176
    %v8391 = vlaneseq
    %v8392 = vshrl.u32 %v8391, 7
    %v8393 = vsub.s32 %v8390, %v8392
    %v8394 = vrot.slane %v7565, %v8393
    %vm8395 = vcmask 1048512
    %v8396 = vsel %vm8395, %v8394, %v8389
    %v8397 = vlaneseq
    %v8398 = vshrl.u32 %v8397, 7
    %v8399 = vsub.s32 %v8287, %v8398
    %v8400 = vrot.slane %v7568, %v8399
    %v8401 = vlaneseq
    %v8402 = vshrl.u32 %v8401, 7
    %v8403 = vsub.s32 %v8292, %v8402
    %v8404 = vrot.slane %v7571, %v8403
    %v8405 = vsel %vm8297, %v8404, %v8400
    %v8406 = vlaneseq
    %v8407 = vshrl.u32 %v8406, 7
    %v8408 = vsub.s32 %v8299, %v8407
    %v8409 = vrot.slane %v7574, %v8408
    %v8410 = vsel %vm8304, %v8409, %v8405
    %v8411 = vlaneseq
    %v8412 = vshrl.u32 %v8411, 7
    %v8413 = vsub.s32 %v8306, %v8412
    %v8414 = vrot.slane %v7577, %v8413
    %v8415 = vsel %vm8311, %v8414, %v8410
    %v8416 = vlaneseq
    %v8417 = vshrl.u32 %v8416, 7
    %v8418 = vsub.s32 %v8313, %v8417
    %v8419 = vrot.slane %v7580, %v8418
    %v8420 = vsel %vm8318, %v8419, %v8415
    %v8421 = vlaneseq
    %v8422 = vshrl.u32 %v8421, 7
    %v8423 = vsub.s32 %v8320, %v8422
    %v8424 = vrot.slane %v7583, %v8423
    %v8425 = vsel %vm8325, %v8424, %v8420
    %v8426 = vlaneseq
    %v8427 = vshrl.u32 %v8426, 7
    %v8428 = vsub.s32 %v8327, %v8427
    %v8429 = vrot.slane %v7586, %v8428
    %v8430 = vsel %vm8332, %v8429, %v8425
    %v8431 = vlaneseq
    %v8432 = vshrl.u32 %v8431, 7
    %v8433 = vsub.s32 %v8334, %v8432
    %v8434 = vrot.slane %v7589, %v8433
    %v8435 = vsel %vm8339, %v8434, %v8430
    %v8436 = vlaneseq
    %v8437 = vshrl.u32 %v8436, 7
    %v8438 = vsub.s32 %v8341, %v8437
    %v8439 = vrot.slane %v7592, %v8438
    %v8440 = vsel %vm8346, %v8439, %v8435
    %v8441 = vlaneseq
    %v8442 = vshrl.u32 %v8441, 7
    %v8443 = vsub.s32 %v8348, %v8442
    %v8444 = vrot.slane %v7595, %v8443
    %v8445 = vsel %vm8353, %v8444, %v8440
    %v8446 = vlaneseq
    %v8447 = vshrl.u32 %v8446, 7
    %v8448 = vsub.s32 %v8355, %v8447
    %v8449 = vrot.slane %v7598, %v8448
    %v8450 = vsel %vm8360, %v8449, %v8445
    %v8451 = vlaneseq
    %v8452 = vshrl.u32 %v8451, 7
    %v8453 = vsub.s32 %v8362, %v8452
    %v8454 = vrot.slane %v7601, %v8453
    %v8455 = vsel %vm8367, %v8454, %v8450
    %v8456 = vlaneseq
    %v8457 = vshrl.u32 %v8456, 7
    %v8458 = vsub.s32 %v8369, %v8457
    %v8459 = vrot.slane %v7604, %v8458
    %v8460 = vsel %vm8374, %v8459, %v8455
    %v8461 = vlaneseq
    %v8462 = vshrl.u32 %v8461, 7
    %v8463 = vsub.s32 %v8376, %v8462
    %v8464 = vrot.slane %v7607, %v8463
    %v8465 = vsel %vm8381, %v8464, %v8460
    %v8466 = vlaneseq
    %v8467 = vshrl.u32 %v8466, 7
    %v8468 = vsub.s32 %v8383, %v8467
    %v8469 = vrot.slane %v7610, %v8468
    %v8470 = vsel %vm8388, %v8469, %v8465
    %v8471 = vlaneseq
    %v8472 = vshrl.u32 %v8471, 7
    %v8473 = vsub.s32 %v8390, %v8472
    %v8474 = vrot.slane %v7613, %v8473
    %v8475 = vsel %vm8395, %v8474, %v8470
    %v8476 = vlaneseq
    %v8477 = vshrl.u32 %v8476, 7
    %v8478 = vsub.s32 %v8287, %v8477
    %v8479 = vrot.slane %v7616, %v8478
    %v8480 = vlaneseq
    %v8481 = vshrl.u32 %v8480, 7
    %v8482 = vsub.s32 %v8292, %v8481
    %v8483 = vrot.slane %v7619, %v8482
    %v8484 = vsel %vm8297, %v8483, %v8479
    %v8485 = vlaneseq
    %v8486 = vshrl.u32 %v8485, 7
    %v8487 = vsub.s32 %v8299, %v8486
    %v8488 = vrot.slane %v7622, %v8487
    %v8489 = vsel %vm8304, %v8488, %v8484
    %v8490 = vlaneseq
    %v8491 = vshrl.u32 %v8490, 7
    %v8492 = vsub.s32 %v8306, %v8491
    %v8493 = vrot.slane %v7625, %v8492
    %v8494 = vsel %vm8311, %v8493, %v8489
    %v8495 = vlaneseq
    %v8496 = vshrl.u32 %v8495, 7
    %v8497 = vsub.s32 %v8313, %v8496
    %v8498 = vrot.slane %v7628, %v8497
    %v8499 = vsel %vm8318, %v8498, %v8494
    %v8500 = vlaneseq
    %v8501 = vshrl.u32 %v8500, 7
    %v8502 = vsub.s32 %v8320, %v8501
    %v8503 = vrot.slane %v7631, %v8502
    %v8504 = vsel %vm8325, %v8503, %v8499
    %v8505 = vlaneseq
    %v8506 = vshrl.u32 %v8505, 7
    %v8507 = vsub.s32 %v8327, %v8506
    %v8508 = vrot.slane %v7634, %v8507
    %v8509 = vsel %vm8332, %v8508, %v8504
    %v8510 = vlaneseq
    %v8511 = vshrl.u32 %v8510, 7
    %v8512 = vsub.s32 %v8334, %v8511
    %v8513 = vrot.slane %v7637, %v8512
    %v8514 = vsel %vm8339, %v8513, %v8509
    %v8515 = vlaneseq
    %v8516 = vshrl.u32 %v8515, 7
    %v8517 = vsub.s32 %v8341, %v8516
    %v8518 = vrot.slane %v7640, %v8517
    %v8519 = vsel %vm8346, %v8518, %v8514
    %v8520 = vlaneseq
    %v8521 = vshrl.u32 %v8520, 7
    %v8522 = vsub.s32 %v8348, %v8521
    %v8523 = vrot.slane %v7643, %v8522
    %v8524 = vsel %vm8353, %v8523, %v8519
    %v8525 = vlaneseq
    %v8526 = vshrl.u32 %v8525, 7
    %v8527 = vsub.s32 %v8355, %v8526
    %v8528 = vrot.slane %v7646, %v8527
    %v8529 = vsel %vm8360, %v8528, %v8524
    %v8530 = vlaneseq
    %v8531 = vshrl.u32 %v8530, 7
    %v8532 = vsub.s32 %v8362, %v8531
    %v8533 = vrot.slane %v7649, %v8532
    %v8534 = vsel %vm8367, %v8533, %v8529
    %v8535 = vlaneseq
    %v8536 = vshrl.u32 %v8535, 7
    %v8537 = vsub.s32 %v8369, %v8536
    %v8538 = vrot.slane %v7652, %v8537
    %v8539 = vsel %vm8374, %v8538, %v8534
    %v8540 = vlaneseq
    %v8541 = vshrl.u32 %v8540, 7
    %v8542 = vsub.s32 %v8376, %v8541
    %v8543 = vrot.slane %v7655, %v8542
    %v8544 = vsel %vm8381, %v8543, %v8539
    %v8545 = vlaneseq
    %v8546 = vshrl.u32 %v8545, 7
    %v8547 = vsub.s32 %v8383, %v8546
    %v8548 = vrot.slane %v7658, %v8547
    %v8549 = vsel %vm8388, %v8548, %v8544
    %v8550 = vlaneseq
    %v8551 = vshrl.u32 %v8550, 7
    %v8552 = vsub.s32 %v8390, %v8551
    %v8553 = vrot.slane %v7661, %v8552
    %v8554 = vsel %vm8395, %v8553, %v8549
    %v8555 = vlaneseq
    %v8556 = vshrl.u32 %v8555, 7
    %v8557 = vsub.s32 %v8287, %v8556
    %v8558 = vrot.slane %v7664, %v8557
    %v8559 = vlaneseq
    %v8560 = vshrl.u32 %v8559, 7
    %v8561 = vsub.s32 %v8292, %v8560
    %v8562 = vrot.slane %v7667, %v8561
    %v8563 = vsel %vm8297, %v8562, %v8558
    %v8564 = vlaneseq
    %v8565 = vshrl.u32 %v8564, 7
    %v8566 = vsub.s32 %v8299, %v8565
    %v8567 = vrot.slane %v7670, %v8566
    %v8568 = vsel %vm8304, %v8567, %v8563
    %v8569 = vlaneseq
    %v8570 = vshrl.u32 %v8569, 7
    %v8571 = vsub.s32 %v8306, %v8570
    %v8572 = vrot.slane %v7673, %v8571
    %v8573 = vsel %vm8311, %v8572, %v8568
    %v8574 = vlaneseq
    %v8575 = vshrl.u32 %v8574, 7
    %v8576 = vsub.s32 %v8313, %v8575
    %v8577 = vrot.slane %v7676, %v8576
    %v8578 = vsel %vm8318, %v8577, %v8573
    %v8579 = vlaneseq
    %v8580 = vshrl.u32 %v8579, 7
    %v8581 = vsub.s32 %v8320, %v8580
    %v8582 = vrot.slane %v7679, %v8581
    %v8583 = vsel %vm8325, %v8582, %v8578
    %v8584 = vlaneseq
    %v8585 = vshrl.u32 %v8584, 7
    %v8586 = vsub.s32 %v8327, %v8585
    %v8587 = vrot.slane %v7682, %v8586
    %v8588 = vsel %vm8332, %v8587, %v8583
    %v8589 = vlaneseq
    %v8590 = vshrl.u32 %v8589, 7
    %v8591 = vsub.s32 %v8334, %v8590
    %v8592 = vrot.slane %v7685, %v8591
    %v8593 = vsel %vm8339, %v8592, %v8588
    %v8594 = vlaneseq
    %v8595 = vshrl.u32 %v8594, 7
    %v8596 = vsub.s32 %v8341, %v8595
    %v8597 = vrot.slane %v7688, %v8596
    %v8598 = vsel %vm8346, %v8597, %v8593
    %v8599 = vlaneseq
    %v8600 = vshrl.u32 %v8599, 7
    %v8601 = vsub.s32 %v8348, %v8600
    %v8602 = vrot.slane %v7691, %v8601
    %v8603 = vsel %vm8353, %v8602, %v8598
    %v8604 = vlaneseq
    %v8605 = vshrl.u32 %v8604, 7
    %v8606 = vsub.s32 %v8355, %v8605
    %v8607 = vrot.slane %v7694, %v8606
    %v8608 = vsel %vm8360, %v8607, %v8603
    %v8609 = vlaneseq
    %v8610 = vshrl.u32 %v8609, 7
    %v8611 = vsub.s32 %v8362, %v8610
    %v8612 = vrot.slane %v7697, %v8611
    %v8613 = vsel %vm8367, %v8612, %v8608
    %v8614 = vlaneseq
    %v8615 = vshrl.u32 %v8614, 7
    %v8616 = vsub.s32 %v8369, %v8615
    %v8617 = vrot.slane %v7700, %v8616
    %v8618 = vsel %vm8374, %v8617, %v8613
    %v8619 = vlaneseq
    %v8620 = vshrl.u32 %v8619, 7
    %v8621 = vsub.s32 %v8376, %v8620
    %v8622 = vrot.slane %v7703, %v8621
    %v8623 = vsel %vm8381, %v8622, %v8618
    %v8624 = vlaneseq
    %v8625 = vshrl.u32 %v8624, 7
    %v8626 = vsub.s32 %v8383, %v8625
    %v8627 = vrot.slane %v7706, %v8626
    %v8628 = vsel %vm8388, %v8627, %v8623
    %v8629 = vlaneseq
    %v8630 = vshrl.u32 %v8629, 7
    %v8631 = vsub.s32 %v8390, %v8630
    %v8632 = vrot.slane %v7709, %v8631
    %v8633 = vsel %vm8395, %v8632, %v8628
    %v8634 = vlaneseq
    %v8635 = vshrl.u32 %v8634, 7
    %v8636 = vsub.s32 %v8287, %v8635
    %v8637 = vrot.slane %v7712, %v8636
    %v8638 = vlaneseq
    %v8639 = vshrl.u32 %v8638, 7
    %v8640 = vsub.s32 %v8292, %v8639
    %v8641 = vrot.slane %v7715, %v8640
    %v8642 = vsel %vm8297, %v8641, %v8637
    %v8643 = vlaneseq
    %v8644 = vshrl.u32 %v8643, 7
    %v8645 = vsub.s32 %v8299, %v8644
    %v8646 = vrot.slane %v7718, %v8645
    %v8647 = vsel %vm8304, %v8646, %v8642
    %v8648 = vlaneseq
    %v8649 = vshrl.u32 %v8648, 7
    %v8650 = vsub.s32 %v8306, %v8649
    %v8651 = vrot.slane %v7721, %v8650
    %v8652 = vsel %vm8311, %v8651, %v8647
    %v8653 = vlaneseq
    %v8654 = vshrl.u32 %v8653, 7
    %v8655 = vsub.s32 %v8313, %v8654
    %v8656 = vrot.slane %v7724, %v8655
    %v8657 = vsel %vm8318, %v8656, %v8652
    %v8658 = vlaneseq
    %v8659 = vshrl.u32 %v8658, 7
    %v8660 = vsub.s32 %v8320, %v8659
    %v8661 = vrot.slane %v7727, %v8660
    %v8662 = vsel %vm8325, %v8661, %v8657
    %v8663 = vlaneseq
    %v8664 = vshrl.u32 %v8663, 7
    %v8665 = vsub.s32 %v8327, %v8664
    %v8666 = vrot.slane %v7730, %v8665
    %v8667 = vsel %vm8332, %v8666, %v8662
    %v8668 = vlaneseq
    %v8669 = vshrl.u32 %v8668, 7
    %v8670 = vsub.s32 %v8334, %v8669
    %v8671 = vrot.slane %v7733, %v8670
    %v8672 = vsel %vm8339, %v8671, %v8667
    %v8673 = vlaneseq
    %v8674 = vshrl.u32 %v8673, 7
    %v8675 = vsub.s32 %v8341, %v8674
    %v8676 = vrot.slane %v7736, %v8675
    %v8677 = vsel %vm8346, %v8676, %v8672
    %v8678 = vlaneseq
    %v8679 = vshrl.u32 %v8678, 7
    %v8680 = vsub.s32 %v8348, %v8679
    %v8681 = vrot.slane %v7739, %v8680
    %v8682 = vsel %vm8353, %v8681, %v8677
    %v8683 = vlaneseq
    %v8684 = vshrl.u32 %v8683, 7
    %v8685 = vsub.s32 %v8355, %v8684
    %v8686 = vrot.slane %v7742, %v8685
    %v8687 = vsel %vm8360, %v8686, %v8682
    %v8688 = vlaneseq
    %v8689 = vshrl.u32 %v8688, 7
    %v8690 = vsub.s32 %v8362, %v8689
    %v8691 = vrot.slane %v7745, %v8690
    %v8692 = vsel %vm8367, %v8691, %v8687
    %v8693 = vlaneseq
    %v8694 = vshrl.u32 %v8693, 7
    %v8695 = vsub.s32 %v8369, %v8694
    %v8696 = vrot.slane %v7748, %v8695
    %v8697 = vsel %vm8374, %v8696, %v8692
    %v8698 = vlaneseq
    %v8699 = vshrl.u32 %v8698, 7
    %v8700 = vsub.s32 %v8376, %v8699
    %v8701 = vrot.slane %v7751, %v8700
    %v8702 = vsel %vm8381, %v8701, %v8697
    %v8703 = vlaneseq
    %v8704 = vshrl.u32 %v8703, 7
    %v8705 = vsub.s32 %v8383, %v8704
    %v8706 = vrot.slane %v7754, %v8705
    %v8707 = vsel %vm8388, %v8706, %v8702
    %v8708 = vlaneseq
    %v8709 = vshrl.u32 %v8708, 7
    %v8710 = vsub.s32 %v8390, %v8709
    %v8711 = vrot.slane %v7757, %v8710
    %v8712 = vsel %vm8395, %v8711, %v8707
    %v8713 = vlaneseq
    %v8714 = vshrl.u32 %v8713, 7
    %v8715 = vsub.s32 %v8287, %v8714
    %v8716 = vrot.slane %v7760, %v8715
    %v8717 = vlaneseq
    %v8718 = vshrl.u32 %v8717, 7
    %v8719 = vsub.s32 %v8292, %v8718
    %v8720 = vrot.slane %v7763, %v8719
    %v8721 = vsel %vm8297, %v8720, %v8716
    %v8722 = vlaneseq
    %v8723 = vshrl.u32 %v8722, 7
    %v8724 = vsub.s32 %v8299, %v8723
    %v8725 = vrot.slane %v7766, %v8724
    %v8726 = vsel %vm8304, %v8725, %v8721
    %v8727 = vlaneseq
    %v8728 = vshrl.u32 %v8727, 7
    %v8729 = vsub.s32 %v8306, %v8728
    %v8730 = vrot.slane %v7769, %v8729
    %v8731 = vsel %vm8311, %v8730, %v8726
    %v8732 = vlaneseq
    %v8733 = vshrl.u32 %v8732, 7
    %v8734 = vsub.s32 %v8313, %v8733
    %v8735 = vrot.slane %v7772, %v8734
    %v8736 = vsel %vm8318, %v8735, %v8731
    %v8737 = vlaneseq
    %v8738 = vshrl.u32 %v8737, 7
    %v8739 = vsub.s32 %v8320, %v8738
    %v8740 = vrot.slane %v7775, %v8739
    %v8741 = vsel %vm8325, %v8740, %v8736
    %v8742 = vlaneseq
    %v8743 = vshrl.u32 %v8742, 7
    %v8744 = vsub.s32 %v8327, %v8743
    %v8745 = vrot.slane %v7778, %v8744
    %v8746 = vsel %vm8332, %v8745, %v8741
    %v8747 = vlaneseq
    %v8748 = vshrl.u32 %v8747, 7
    %v8749 = vsub.s32 %v8334, %v8748
    %v8750 = vrot.slane %v7781, %v8749
    %v8751 = vsel %vm8339, %v8750, %v8746
    %v8752 = vlaneseq
    %v8753 = vshrl.u32 %v8752, 7
    %v8754 = vsub.s32 %v8341, %v8753
    %v8755 = vrot.slane %v7784, %v8754
    %v8756 = vsel %vm8346, %v8755, %v8751
    %v8757 = vlaneseq
    %v8758 = vshrl.u32 %v8757, 7
    %v8759 = vsub.s32 %v8348, %v8758
    %v8760 = vrot.slane %v7787, %v8759
    %v8761 = vsel %vm8353, %v8760, %v8756
    %v8762 = vlaneseq
    %v8763 = vshrl.u32 %v8762, 7
    %v8764 = vsub.s32 %v8355, %v8763
    %v8765 = vrot.slane %v7790, %v8764
    %v8766 = vsel %vm8360, %v8765, %v8761
    %v8767 = vlaneseq
    %v8768 = vshrl.u32 %v8767, 7
    %v8769 = vsub.s32 %v8362, %v8768
    %v8770 = vrot.slane %v7793, %v8769
    %v8771 = vsel %vm8367, %v8770, %v8766
    %v8772 = vlaneseq
    %v8773 = vshrl.u32 %v8772, 7
    %v8774 = vsub.s32 %v8369, %v8773
    %v8775 = vrot.slane %v7796, %v8774
    %v8776 = vsel %vm8374, %v8775, %v8771
    %v8777 = vlaneseq
    %v8778 = vshrl.u32 %v8777, 7
    %v8779 = vsub.s32 %v8376, %v8778
    %v8780 = vrot.slane %v7799, %v8779
    %v8781 = vsel %vm8381, %v8780, %v8776
    %v8782 = vlaneseq
    %v8783 = vshrl.u32 %v8782, 7
    %v8784 = vsub.s32 %v8383, %v8783
    %v8785 = vrot.slane %v7802, %v8784
    %v8786 = vsel %vm8388, %v8785, %v8781
    %v8787 = vlaneseq
    %v8788 = vshrl.u32 %v8787, 7
    %v8789 = vsub.s32 %v8390, %v8788
    %v8790 = vrot.slane %v7805, %v8789
    %v8791 = vsel %vm8395, %v8790, %v8786
    %v8792 = vlaneseq
    %v8793 = vshrl.u32 %v8792, 7
    %v8794 = vsub.s32 %v8287, %v8793
    %v8795 = vrot.slane %v7808, %v8794
    %v8796 = vlaneseq
    %v8797 = vshrl.u32 %v8796, 7
    %v8798 = vsub.s32 %v8292, %v8797
    %v8799 = vrot.slane %v7811, %v8798
    %v8800 = vsel %vm8297, %v8799, %v8795
    %v8801 = vlaneseq
    %v8802 = vshrl.u32 %v8801, 7
    %v8803 = vsub.s32 %v8299, %v8802
    %v8804 = vrot.slane %v7814, %v8803
    %v8805 = vsel %vm8304, %v8804, %v8800
    %v8806 = vlaneseq
    %v8807 = vshrl.u32 %v8806, 7
    %v8808 = vsub.s32 %v8306, %v8807
    %v8809 = vrot.slane %v7817, %v8808
    %v8810 = vsel %vm8311, %v8809, %v8805
    %v8811 = vlaneseq
    %v8812 = vshrl.u32 %v8811, 7
    %v8813 = vsub.s32 %v8313, %v8812
    %v8814 = vrot.slane %v7820, %v8813
    %v8815 = vsel %vm8318, %v8814, %v8810
    %v8816 = vlaneseq
    %v8817 = vshrl.u32 %v8816, 7
    %v8818 = vsub.s32 %v8320, %v8817
    %v8819 = vrot.slane %v7823, %v8818
    %v8820 = vsel %vm8325, %v8819, %v8815
    %v8821 = vlaneseq
    %v8822 = vshrl.u32 %v8821, 7
    %v8823 = vsub.s32 %v8327, %v8822
    %v8824 = vrot.slane %v7826, %v8823
    %v8825 = vsel %vm8332, %v8824, %v8820
    %v8826 = vlaneseq
    %v8827 = vshrl.u32 %v8826, 7
    %v8828 = vsub.s32 %v8334, %v8827
    %v8829 = vrot.slane %v7829, %v8828
    %v8830 = vsel %vm8339, %v8829, %v8825
    %v8831 = vlaneseq
    %v8832 = vshrl.u32 %v8831, 7
    %v8833 = vsub.s32 %v8341, %v8832
    %v8834 = vrot.slane %v7832, %v8833
    %v8835 = vsel %vm8346, %v8834, %v8830
    %v8836 = vlaneseq
    %v8837 = vshrl.u32 %v8836, 7
    %v8838 = vsub.s32 %v8348, %v8837
    %v8839 = vrot.slane %v7835, %v8838
    %v8840 = vsel %vm8353, %v8839, %v8835
    %v8841 = vlaneseq
    %v8842 = vshrl.u32 %v8841, 7
    %v8843 = vsub.s32 %v8355, %v8842
    %v8844 = vrot.slane %v7838, %v8843
    %v8845 = vsel %vm8360, %v8844, %v8840
    %v8846 = vlaneseq
    %v8847 = vshrl.u32 %v8846, 7
    %v8848 = vsub.s32 %v8362, %v8847
    %v8849 = vrot.slane %v7841, %v8848
    %v8850 = vsel %vm8367, %v8849, %v8845
    %v8851 = vlaneseq
    %v8852 = vshrl.u32 %v8851, 7
    %v8853 = vsub.s32 %v8369, %v8852
    %v8854 = vrot.slane %v7844, %v8853
    %v8855 = vsel %vm8374, %v8854, %v8850
    %v8856 = vlaneseq
    %v8857 = vshrl.u32 %v8856, 7
    %v8858 = vsub.s32 %v8376, %v8857
    %v8859 = vrot.slane %v7847, %v8858
    %v8860 = vsel %vm8381, %v8859, %v8855
    %v8861 = vlaneseq
    %v8862 = vshrl.u32 %v8861, 7
    %v8863 = vsub.s32 %v8383, %v8862
    %v8864 = vrot.slane %v7850, %v8863
    %v8865 = vsel %vm8388, %v8864, %v8860
    %v8866 = vlaneseq
    %v8867 = vshrl.u32 %v8866, 7
    %v8868 = vsub.s32 %v8390, %v8867
    %v8869 = vrot.slane %v7853, %v8868
    %v8870 = vsel %vm8395, %v8869, %v8865
    %v8871 = vlaneseq
    %v8872 = vshrl.u32 %v8871, 7
    %v8873 = vsub.s32 %v8287, %v8872
    %v8874 = vrot.slane %v7856, %v8873
    %v8875 = vlaneseq
    %v8876 = vshrl.u32 %v8875, 7
    %v8877 = vsub.s32 %v8292, %v8876
    %v8878 = vrot.slane %v7859, %v8877
    %v8879 = vsel %vm8297, %v8878, %v8874
    %v8880 = vlaneseq
    %v8881 = vshrl.u32 %v8880, 7
    %v8882 = vsub.s32 %v8299, %v8881
    %v8883 = vrot.slane %v7862, %v8882
    %v8884 = vsel %vm8304, %v8883, %v8879
    %v8885 = vlaneseq
    %v8886 = vshrl.u32 %v8885, 7
    %v8887 = vsub.s32 %v8306, %v8886
    %v8888 = vrot.slane %v7865, %v8887
    %v8889 = vsel %vm8311, %v8888, %v8884
    %v8890 = vlaneseq
    %v8891 = vshrl.u32 %v8890, 7
    %v8892 = vsub.s32 %v8313, %v8891
    %v8893 = vrot.slane %v7868, %v8892
    %v8894 = vsel %vm8318, %v8893, %v8889
    %v8895 = vlaneseq
    %v8896 = vshrl.u32 %v8895, 7
    %v8897 = vsub.s32 %v8320, %v8896
    %v8898 = vrot.slane %v7871, %v8897
    %v8899 = vsel %vm8325, %v8898, %v8894
    %v8900 = vlaneseq
    %v8901 = vshrl.u32 %v8900, 7
    %v8902 = vsub.s32 %v8327, %v8901
    %v8903 = vrot.slane %v7874, %v8902
    %v8904 = vsel %vm8332, %v8903, %v8899
    %v8905 = vlaneseq
    %v8906 = vshrl.u32 %v8905, 7
    %v8907 = vsub.s32 %v8334, %v8906
    %v8908 = vrot.slane %v7877, %v8907
    %v8909 = vsel %vm8339, %v8908, %v8904
    %v8910 = vlaneseq
    %v8911 = vshrl.u32 %v8910, 7
    %v8912 = vsub.s32 %v8341, %v8911
    %v8913 = vrot.slane %v7880, %v8912
    %v8914 = vsel %vm8346, %v8913, %v8909
    %v8915 = vlaneseq
    %v8916 = vshrl.u32 %v8915, 7
    %v8917 = vsub.s32 %v8348, %v8916
    %v8918 = vrot.slane %v7883, %v8917
    %v8919 = vsel %vm8353, %v8918, %v8914
    %v8920 = vlaneseq
    %v8921 = vshrl.u32 %v8920, 7
    %v8922 = vsub.s32 %v8355, %v8921
    %v8923 = vrot.slane %v7886, %v8922
    %v8924 = vsel %vm8360, %v8923, %v8919
    %v8925 = vlaneseq
    %v8926 = vshrl.u32 %v8925, 7
    %v8927 = vsub.s32 %v8362, %v8926
    %v8928 = vrot.slane %v7889, %v8927
    %v8929 = vsel %vm8367, %v8928, %v8924
    %v8930 = vlaneseq
    %v8931 = vshrl.u32 %v8930, 7
    %v8932 = vsub.s32 %v8369, %v8931
    %v8933 = vrot.slane %v7892, %v8932
    %v8934 = vsel %vm8374, %v8933, %v8929
    %v8935 = vlaneseq
    %v8936 = vshrl.u32 %v8935, 7
    %v8937 = vsub.s32 %v8376, %v8936
    %v8938 = vrot.slane %v7895, %v8937
    %v8939 = vsel %vm8381, %v8938, %v8934
    %v8940 = vlaneseq
    %v8941 = vshrl.u32 %v8940, 7
    %v8942 = vsub.s32 %v8383, %v8941
    %v8943 = vrot.slane %v7898, %v8942
    %v8944 = vsel %vm8388, %v8943, %v8939
    %v8945 = vlaneseq
    %v8946 = vshrl.u32 %v8945, 7
    %v8947 = vsub.s32 %v8390, %v8946
    %v8948 = vrot.slane %v7901, %v8947
    %v8949 = vsel %vm8395, %v8948, %v8944
    %v8950 = vlaneseq
    %v8951 = vshrl.u32 %v8950, 7
    %v8952 = vsub.s32 %v8287, %v8951
    %v8953 = vrot.slane %v7904, %v8952
    %v8954 = vlaneseq
    %v8955 = vshrl.u32 %v8954, 7
    %v8956 = vsub.s32 %v8292, %v8955
    %v8957 = vrot.slane %v7907, %v8956
    %v8958 = vsel %vm8297, %v8957, %v8953
    %v8959 = vlaneseq
    %v8960 = vshrl.u32 %v8959, 7
    %v8961 = vsub.s32 %v8299, %v8960
    %v8962 = vrot.slane %v7910, %v8961
    %v8963 = vsel %vm8304, %v8962, %v8958
    %v8964 = vlaneseq
    %v8965 = vshrl.u32 %v8964, 7
    %v8966 = vsub.s32 %v8306, %v8965
    %v8967 = vrot.slane %v7913, %v8966
    %v8968 = vsel %vm8311, %v8967, %v8963
    %v8969 = vlaneseq
    %v8970 = vshrl.u32 %v8969, 7
    %v8971 = vsub.s32 %v8313, %v8970
    %v8972 = vrot.slane %v7916, %v8971
    %v8973 = vsel %vm8318, %v8972, %v8968
    %v8974 = vlaneseq
    %v8975 = vshrl.u32 %v8974, 7
    %v8976 = vsub.s32 %v8320, %v8975
    %v8977 = vrot.slane %v7919, %v8976
    %v8978 = vsel %vm8325, %v8977, %v8973
    %v8979 = vlaneseq
    %v8980 = vshrl.u32 %v8979, 7
    %v8981 = vsub.s32 %v8327, %v8980
    %v8982 = vrot.slane %v7922, %v8981
    %v8983 = vsel %vm8332, %v8982, %v8978
    %v8984 = vlaneseq
    %v8985 = vshrl.u32 %v8984, 7
    %v8986 = vsub.s32 %v8334, %v8985
    %v8987 = vrot.slane %v7925, %v8986
    %v8988 = vsel %vm8339, %v8987, %v8983
    %v8989 = vlaneseq
    %v8990 = vshrl.u32 %v8989, 7
    %v8991 = vsub.s32 %v8341, %v8990
    %v8992 = vrot.slane %v7928, %v8991
    %v8993 = vsel %vm8346, %v8992, %v8988
    %v8994 = vlaneseq
    %v8995 = vshrl.u32 %v8994, 7
    %v8996 = vsub.s32 %v8348, %v8995
    %v8997 = vrot.slane %v7931, %v8996
    %v8998 = vsel %vm8353, %v8997, %v8993
    %v8999 = vlaneseq
    %v9000 = vshrl.u32 %v8999, 7
    %v9001 = vsub.s32 %v8355, %v9000
    %v9002 = vrot.slane %v7934, %v9001
    %v9003 = vsel %vm8360, %v9002, %v8998
    %v9004 = vlaneseq
    %v9005 = vshrl.u32 %v9004, 7
    %v9006 = vsub.s32 %v8362, %v9005
    %v9007 = vrot.slane %v7937, %v9006
    %v9008 = vsel %vm8367, %v9007, %v9003
    %v9009 = vlaneseq
    %v9010 = vshrl.u32 %v9009, 7
    %v9011 = vsub.s32 %v8369, %v9010
    %v9012 = vrot.slane %v7940, %v9011
    %v9013 = vsel %vm8374, %v9012, %v9008
    %v9014 = vlaneseq
    %v9015 = vshrl.u32 %v9014, 7
    %v9016 = vsub.s32 %v8376, %v9015
    %v9017 = vrot.slane %v7943, %v9016
    %v9018 = vsel %vm8381, %v9017, %v9013
    %v9019 = vlaneseq
    %v9020 = vshrl.u32 %v9019, 7
    %v9021 = vsub.s32 %v8383, %v9020
    %v9022 = vrot.slane %v7946, %v9021
    %v9023 = vsel %vm8388, %v9022, %v9018
    %v9024 = vlaneseq
    %v9025 = vshrl.u32 %v9024, 7
    %v9026 = vsub.s32 %v8390, %v9025
    %v9027 = vrot.slane %v7949, %v9026
    %v9028 = vsel %vm8395, %v9027, %v9023
    %v9029 = vlaneseq
    %v9030 = vshrl.u32 %v9029, 7
    %v9031 = vsub.s32 %v8287, %v9030
    %v9032 = vrot.slane %v7952, %v9031
    %v9033 = vlaneseq
    %v9034 = vshrl.u32 %v9033, 7
    %v9035 = vsub.s32 %v8292, %v9034
    %v9036 = vrot.slane %v7955, %v9035
    %v9037 = vsel %vm8297, %v9036, %v9032
    %v9038 = vlaneseq
    %v9039 = vshrl.u32 %v9038, 7
    %v9040 = vsub.s32 %v8299, %v9039
    %v9041 = vrot.slane %v7958, %v9040
    %v9042 = vsel %vm8304, %v9041, %v9037
    %v9043 = vlaneseq
    %v9044 = vshrl.u32 %v9043, 7
    %v9045 = vsub.s32 %v8306, %v9044
    %v9046 = vrot.slane %v7961, %v9045
    %v9047 = vsel %vm8311, %v9046, %v9042
    %v9048 = vlaneseq
    %v9049 = vshrl.u32 %v9048, 7
    %v9050 = vsub.s32 %v8313, %v9049
    %v9051 = vrot.slane %v7964, %v9050
    %v9052 = vsel %vm8318, %v9051, %v9047
    %v9053 = vlaneseq
    %v9054 = vshrl.u32 %v9053, 7
    %v9055 = vsub.s32 %v8320, %v9054
    %v9056 = vrot.slane %v7967, %v9055
    %v9057 = vsel %vm8325, %v9056, %v9052
    %v9058 = vlaneseq
    %v9059 = vshrl.u32 %v9058, 7
    %v9060 = vsub.s32 %v8327, %v9059
    %v9061 = vrot.slane %v7970, %v9060
    %v9062 = vsel %vm8332, %v9061, %v9057
    %v9063 = vlaneseq
    %v9064 = vshrl.u32 %v9063, 7
    %v9065 = vsub.s32 %v8334, %v9064
    %v9066 = vrot.slane %v7973, %v9065
    %v9067 = vsel %vm8339, %v9066, %v9062
    %v9068 = vlaneseq
    %v9069 = vshrl.u32 %v9068, 7
    %v9070 = vsub.s32 %v8341, %v9069
    %v9071 = vrot.slane %v7976, %v9070
    %v9072 = vsel %vm8346, %v9071, %v9067
    %v9073 = vlaneseq
    %v9074 = vshrl.u32 %v9073, 7
    %v9075 = vsub.s32 %v8348, %v9074
    %v9076 = vrot.slane %v7979, %v9075
    %v9077 = vsel %vm8353, %v9076, %v9072
    %v9078 = vlaneseq
    %v9079 = vshrl.u32 %v9078, 7
    %v9080 = vsub.s32 %v8355, %v9079
    %v9081 = vrot.slane %v7982, %v9080
    %v9082 = vsel %vm8360, %v9081, %v9077
    %v9083 = vlaneseq
    %v9084 = vshrl.u32 %v9083, 7
    %v9085 = vsub.s32 %v8362, %v9084
    %v9086 = vrot.slane %v7985, %v9085
    %v9087 = vsel %vm8367, %v9086, %v9082
    %v9088 = vlaneseq
    %v9089 = vshrl.u32 %v9088, 7
    %v9090 = vsub.s32 %v8369, %v9089
    %v9091 = vrot.slane %v7988, %v9090
    %v9092 = vsel %vm8374, %v9091, %v9087
    %v9093 = vlaneseq
    %v9094 = vshrl.u32 %v9093, 7
    %v9095 = vsub.s32 %v8376, %v9094
    %v9096 = vrot.slane %v7991, %v9095
    %v9097 = vsel %vm8381, %v9096, %v9092
    %v9098 = vlaneseq
    %v9099 = vshrl.u32 %v9098, 7
    %v9100 = vsub.s32 %v8383, %v9099
    %v9101 = vrot.slane %v7994, %v9100
    %v9102 = vsel %vm8388, %v9101, %v9097
    %v9103 = vlaneseq
    %v9104 = vshrl.u32 %v9103, 7
    %v9105 = vsub.s32 %v8390, %v9104
    %v9106 = vrot.slane %v7997, %v9105
    %v9107 = vsel %vm8395, %v9106, %v9102
    %v9108 = vlaneseq
    %v9109 = vshrl.u32 %v9108, 7
    %v9110 = vsub.s32 %v8287, %v9109
    %v9111 = vrot.slane %v8000, %v9110
    %v9112 = vlaneseq
    %v9113 = vshrl.u32 %v9112, 7
    %v9114 = vsub.s32 %v8292, %v9113
    %v9115 = vrot.slane %v8003, %v9114
    %v9116 = vsel %vm8297, %v9115, %v9111
    %v9117 = vlaneseq
    %v9118 = vshrl.u32 %v9117, 7
    %v9119 = vsub.s32 %v8299, %v9118
    %v9120 = vrot.slane %v8006, %v9119
    %v9121 = vsel %vm8304, %v9120, %v9116
    %v9122 = vlaneseq
    %v9123 = vshrl.u32 %v9122, 7
    %v9124 = vsub.s32 %v8306, %v9123
    %v9125 = vrot.slane %v8009, %v9124
    %v9126 = vsel %vm8311, %v9125, %v9121
    %v9127 = vlaneseq
    %v9128 = vshrl.u32 %v9127, 7
    %v9129 = vsub.s32 %v8313, %v9128
    %v9130 = vrot.slane %v8012, %v9129
    %v9131 = vsel %vm8318, %v9130, %v9126
    %v9132 = vlaneseq
    %v9133 = vshrl.u32 %v9132, 7
    %v9134 = vsub.s32 %v8320, %v9133
    %v9135 = vrot.slane %v8015, %v9134
    %v9136 = vsel %vm8325, %v9135, %v9131
    %v9137 = vlaneseq
    %v9138 = vshrl.u32 %v9137, 7
    %v9139 = vsub.s32 %v8327, %v9138
    %v9140 = vrot.slane %v8018, %v9139
    %v9141 = vsel %vm8332, %v9140, %v9136
    %v9142 = vlaneseq
    %v9143 = vshrl.u32 %v9142, 7
    %v9144 = vsub.s32 %v8334, %v9143
    %v9145 = vrot.slane %v8021, %v9144
    %v9146 = vsel %vm8339, %v9145, %v9141
    %v9147 = vlaneseq
    %v9148 = vshrl.u32 %v9147, 7
    %v9149 = vsub.s32 %v8341, %v9148
    %v9150 = vrot.slane %v8024, %v9149
    %v9151 = vsel %vm8346, %v9150, %v9146
    %v9152 = vlaneseq
    %v9153 = vshrl.u32 %v9152, 7
    %v9154 = vsub.s32 %v8348, %v9153
    %v9155 = vrot.slane %v8027, %v9154
    %v9156 = vsel %vm8353, %v9155, %v9151
    %v9157 = vlaneseq
    %v9158 = vshrl.u32 %v9157, 7
    %v9159 = vsub.s32 %v8355, %v9158
    %v9160 = vrot.slane %v8030, %v9159
    %v9161 = vsel %vm8360, %v9160, %v9156
    %v9162 = vlaneseq
    %v9163 = vshrl.u32 %v9162, 7
    %v9164 = vsub.s32 %v8362, %v9163
    %v9165 = vrot.slane %v8033, %v9164
    %v9166 = vsel %vm8367, %v9165, %v9161
    %v9167 = vlaneseq
    %v9168 = vshrl.u32 %v9167, 7
    %v9169 = vsub.s32 %v8369, %v9168
    %v9170 = vrot.slane %v8036, %v9169
    %v9171 = vsel %vm8374, %v9170, %v9166
    %v9172 = vlaneseq
    %v9173 = vshrl.u32 %v9172, 7
    %v9174 = vsub.s32 %v8376, %v9173
    %v9175 = vrot.slane %v8039, %v9174
    %v9176 = vsel %vm8381, %v9175, %v9171
    %v9177 = vlaneseq
    %v9178 = vshrl.u32 %v9177, 7
    %v9179 = vsub.s32 %v8383, %v9178
    %v9180 = vrot.slane %v8042, %v9179
    %v9181 = vsel %vm8388, %v9180, %v9176
    %v9182 = vlaneseq
    %v9183 = vshrl.u32 %v9182, 7
    %v9184 = vsub.s32 %v8390, %v9183
    %v9185 = vrot.slane %v8045, %v9184
    %v9186 = vsel %vm8395, %v9185, %v9181
    %v9187 = vlaneseq
    %v9188 = vshrl.u32 %v9187, 7
    %v9189 = vsub.s32 %v8287, %v9188
    %v9190 = vrot.slane %v8048, %v9189
    %v9191 = vlaneseq
    %v9192 = vshrl.u32 %v9191, 7
    %v9193 = vsub.s32 %v8292, %v9192
    %v9194 = vrot.slane %v8051, %v9193
    %v9195 = vsel %vm8297, %v9194, %v9190
    %v9196 = vlaneseq
    %v9197 = vshrl.u32 %v9196, 7
    %v9198 = vsub.s32 %v8299, %v9197
    %v9199 = vrot.slane %v8054, %v9198
    %v9200 = vsel %vm8304, %v9199, %v9195
    %v9201 = vlaneseq
    %v9202 = vshrl.u32 %v9201, 7
    %v9203 = vsub.s32 %v8306, %v9202
    %v9204 = vrot.slane %v8057, %v9203
    %v9205 = vsel %vm8311, %v9204, %v9200
    %v9206 = vlaneseq
    %v9207 = vshrl.u32 %v9206, 7
    %v9208 = vsub.s32 %v8313, %v9207
    %v9209 = vrot.slane %v8060, %v9208
    %v9210 = vsel %vm8318, %v9209, %v9205
    %v9211 = vlaneseq
    %v9212 = vshrl.u32 %v9211, 7
    %v9213 = vsub.s32 %v8320, %v9212
    %v9214 = vrot.slane %v8063, %v9213
    %v9215 = vsel %vm8325, %v9214, %v9210
    %v9216 = vlaneseq
    %v9217 = vshrl.u32 %v9216, 7
    %v9218 = vsub.s32 %v8327, %v9217
    %v9219 = vrot.slane %v8066, %v9218
    %v9220 = vsel %vm8332, %v9219, %v9215
    %v9221 = vlaneseq
    %v9222 = vshrl.u32 %v9221, 7
    %v9223 = vsub.s32 %v8334, %v9222
    %v9224 = vrot.slane %v8069, %v9223
    %v9225 = vsel %vm8339, %v9224, %v9220
    %v9226 = vlaneseq
    %v9227 = vshrl.u32 %v9226, 7
    %v9228 = vsub.s32 %v8341, %v9227
    %v9229 = vrot.slane %v8072, %v9228
    %v9230 = vsel %vm8346, %v9229, %v9225
    %v9231 = vlaneseq
    %v9232 = vshrl.u32 %v9231, 7
    %v9233 = vsub.s32 %v8348, %v9232
    %v9234 = vrot.slane %v8075, %v9233
    %v9235 = vsel %vm8353, %v9234, %v9230
    %v9236 = vlaneseq
    %v9237 = vshrl.u32 %v9236, 7
    %v9238 = vsub.s32 %v8355, %v9237
    %v9239 = vrot.slane %v8078, %v9238
    %v9240 = vsel %vm8360, %v9239, %v9235
    %v9241 = vlaneseq
    %v9242 = vshrl.u32 %v9241, 7
    %v9243 = vsub.s32 %v8362, %v9242
    %v9244 = vrot.slane %v8081, %v9243
    %v9245 = vsel %vm8367, %v9244, %v9240
    %v9246 = vlaneseq
    %v9247 = vshrl.u32 %v9246, 7
    %v9248 = vsub.s32 %v8369, %v9247
    %v9249 = vrot.slane %v8084, %v9248
    %v9250 = vsel %vm8374, %v9249, %v9245
    %v9251 = vlaneseq
    %v9252 = vshrl.u32 %v9251, 7
    %v9253 = vsub.s32 %v8376, %v9252
    %v9254 = vrot.slane %v8087, %v9253
    %v9255 = vsel %vm8381, %v9254, %v9250
    %v9256 = vlaneseq
    %v9257 = vshrl.u32 %v9256, 7
    %v9258 = vsub.s32 %v8383, %v9257
    %v9259 = vrot.slane %v8090, %v9258
    %v9260 = vsel %vm8388, %v9259, %v9255
    %v9261 = vlaneseq
    %v9262 = vshrl.u32 %v9261, 7
    %v9263 = vsub.s32 %v8390, %v9262
    %v9264 = vrot.slane %v8093, %v9263
    %v9265 = vsel %vm8395, %v9264, %v9260
    %v9266 = vlaneseq
    %v9267 = vshrl.u32 %v9266, 7
    %v9268 = vsub.s32 %v8287, %v9267
    %v9269 = vrot.slane %v8096, %v9268
    %v9270 = vlaneseq
    %v9271 = vshrl.u32 %v9270, 7
    %v9272 = vsub.s32 %v8292, %v9271
    %v9273 = vrot.slane %v8099, %v9272
    %v9274 = vsel %vm8297, %v9273, %v9269
    %v9275 = vlaneseq
    %v9276 = vshrl.u32 %v9275, 7
    %v9277 = vsub.s32 %v8299, %v9276
    %v9278 = vrot.slane %v8102, %v9277
    %v9279 = vsel %vm8304, %v9278, %v9274
    %v9280 = vlaneseq
    %v9281 = vshrl.u32 %v9280, 7
    %v9282 = vsub.s32 %v8306, %v9281
    %v9283 = vrot.slane %v8105, %v9282
    %v9284 = vsel %vm8311, %v9283, %v9279
    %v9285 = vlaneseq
    %v9286 = vshrl.u32 %v9285, 7
    %v9287 = vsub.s32 %v8313, %v9286
    %v9288 = vrot.slane %v8108, %v9287
    %v9289 = vsel %vm8318, %v9288, %v9284
    %v9290 = vlaneseq
    %v9291 = vshrl.u32 %v9290, 7
    %v9292 = vsub.s32 %v8320, %v9291
    %v9293 = vrot.slane %v8111, %v9292
    %v9294 = vsel %vm8325, %v9293, %v9289
    %v9295 = vlaneseq
    %v9296 = vshrl.u32 %v9295, 7
    %v9297 = vsub.s32 %v8327, %v9296
    %v9298 = vrot.slane %v8114, %v9297
    %v9299 = vsel %vm8332, %v9298, %v9294
    %v9300 = vlaneseq
    %v9301 = vshrl.u32 %v9300, 7
    %v9302 = vsub.s32 %v8334, %v9301
    %v9303 = vrot.slane %v8117, %v9302
    %v9304 = vsel %vm8339, %v9303, %v9299
    %v9305 = vlaneseq
    %v9306 = vshrl.u32 %v9305, 7
    %v9307 = vsub.s32 %v8341, %v9306
    %v9308 = vrot.slane %v8120, %v9307
    %v9309 = vsel %vm8346, %v9308, %v9304
    %v9310 = vlaneseq
    %v9311 = vshrl.u32 %v9310, 7
    %v9312 = vsub.s32 %v8348, %v9311
    %v9313 = vrot.slane %v8123, %v9312
    %v9314 = vsel %vm8353, %v9313, %v9309
    %v9315 = vlaneseq
    %v9316 = vshrl.u32 %v9315, 7
    %v9317 = vsub.s32 %v8355, %v9316
    %v9318 = vrot.slane %v8126, %v9317
    %v9319 = vsel %vm8360, %v9318, %v9314
    %v9320 = vlaneseq
    %v9321 = vshrl.u32 %v9320, 7
    %v9322 = vsub.s32 %v8362, %v9321
    %v9323 = vrot.slane %v8129, %v9322
    %v9324 = vsel %vm8367, %v9323, %v9319
    %v9325 = vlaneseq
    %v9326 = vshrl.u32 %v9325, 7
    %v9327 = vsub.s32 %v8369, %v9326
    %v9328 = vrot.slane %v8132, %v9327
    %v9329 = vsel %vm8374, %v9328, %v9324
    %v9330 = vlaneseq
    %v9331 = vshrl.u32 %v9330, 7
    %v9332 = vsub.s32 %v8376, %v9331
    %v9333 = vrot.slane %v8135, %v9332
    %v9334 = vsel %vm8381, %v9333, %v9329
    %v9335 = vlaneseq
    %v9336 = vshrl.u32 %v9335, 7
    %v9337 = vsub.s32 %v8383, %v9336
    %v9338 = vrot.slane %v8138, %v9337
    %v9339 = vsel %vm8388, %v9338, %v9334
    %v9340 = vlaneseq
    %v9341 = vshrl.u32 %v9340, 7
    %v9342 = vsub.s32 %v8390, %v9341
    %v9343 = vrot.slane %v8141, %v9342
    %v9344 = vsel %vm8395, %v9343, %v9339
    %v9345 = vlaneseq
    %v9346 = vshrl.u32 %v9345, 7
    %v9347 = vsub.s32 %v8287, %v9346
    %v9348 = vrot.slane %v8144, %v9347
    %v9349 = vlaneseq
    %v9350 = vshrl.u32 %v9349, 7
    %v9351 = vsub.s32 %v8292, %v9350
    %v9352 = vrot.slane %v8147, %v9351
    %v9353 = vsel %vm8297, %v9352, %v9348
    %v9354 = vlaneseq
    %v9355 = vshrl.u32 %v9354, 7
    %v9356 = vsub.s32 %v8299, %v9355
    %v9357 = vrot.slane %v8150, %v9356
    %v9358 = vsel %vm8304, %v9357, %v9353
    %v9359 = vlaneseq
    %v9360 = vshrl.u32 %v9359, 7
    %v9361 = vsub.s32 %v8306, %v9360
    %v9362 = vrot.slane %v8153, %v9361
    %v9363 = vsel %vm8311, %v9362, %v9358
    %v9364 = vlaneseq
    %v9365 = vshrl.u32 %v9364, 7
    %v9366 = vsub.s32 %v8313, %v9365
    %v9367 = vrot.slane %v8156, %v9366
    %v9368 = vsel %vm8318, %v9367, %v9363
    %v9369 = vlaneseq
    %v9370 = vshrl.u32 %v9369, 7
    %v9371 = vsub.s32 %v8320, %v9370
    %v9372 = vrot.slane %v8159, %v9371
    %v9373 = vsel %vm8325, %v9372, %v9368
    %v9374 = vlaneseq
    %v9375 = vshrl.u32 %v9374, 7
    %v9376 = vsub.s32 %v8327, %v9375
    %v9377 = vrot.slane %v8162, %v9376
    %v9378 = vsel %vm8332, %v9377, %v9373
    %v9379 = vlaneseq
    %v9380 = vshrl.u32 %v9379, 7
    %v9381 = vsub.s32 %v8334, %v9380
    %v9382 = vrot.slane %v8165, %v9381
    %v9383 = vsel %vm8339, %v9382, %v9378
    %v9384 = vlaneseq
    %v9385 = vshrl.u32 %v9384, 7
    %v9386 = vsub.s32 %v8341, %v9385
    %v9387 = vrot.slane %v8168, %v9386
    %v9388 = vsel %vm8346, %v9387, %v9383
    %v9389 = vlaneseq
    %v9390 = vshrl.u32 %v9389, 7
    %v9391 = vsub.s32 %v8348, %v9390
    %v9392 = vrot.slane %v8171, %v9391
    %v9393 = vsel %vm8353, %v9392, %v9388
    %v9394 = vlaneseq
    %v9395 = vshrl.u32 %v9394, 7
    %v9396 = vsub.s32 %v8355, %v9395
    %v9397 = vrot.slane %v8174, %v9396
    %v9398 = vsel %vm8360, %v9397, %v9393
    %v9399 = vlaneseq
    %v9400 = vshrl.u32 %v9399, 7
    %v9401 = vsub.s32 %v8362, %v9400
    %v9402 = vrot.slane %v8177, %v9401
    %v9403 = vsel %vm8367, %v9402, %v9398
    %v9404 = vlaneseq
    %v9405 = vshrl.u32 %v9404, 7
    %v9406 = vsub.s32 %v8369, %v9405
    %v9407 = vrot.slane %v8180, %v9406
    %v9408 = vsel %vm8374, %v9407, %v9403
    %v9409 = vlaneseq
    %v9410 = vshrl.u32 %v9409, 7
    %v9411 = vsub.s32 %v8376, %v9410
    %v9412 = vrot.slane %v8183, %v9411
    %v9413 = vsel %vm8381, %v9412, %v9408
    %v9414 = vlaneseq
    %v9415 = vshrl.u32 %v9414, 7
    %v9416 = vsub.s32 %v8383, %v9415
    %v9417 = vrot.slane %v8186, %v9416
    %v9418 = vsel %vm8388, %v9417, %v9413
    %v9419 = vlaneseq
    %v9420 = vshrl.u32 %v9419, 7
    %v9421 = vsub.s32 %v8390, %v9420
    %v9422 = vrot.slane %v8189, %v9421
    %v9423 = vsel %vm8395, %v9422, %v9418
    %v9424 = vlaneseq
    %v9425 = vshrl.u32 %v9424, 7
    %v9426 = vsub.s32 %v8287, %v9425
    %v9427 = vrot.slane %v8192, %v9426
    %v9428 = vlaneseq
    %v9429 = vshrl.u32 %v9428, 7
    %v9430 = vsub.s32 %v8292, %v9429
    %v9431 = vrot.slane %v8195, %v9430
    %v9432 = vsel %vm8297, %v9431, %v9427
    %v9433 = vlaneseq
    %v9434 = vshrl.u32 %v9433, 7
    %v9435 = vsub.s32 %v8299, %v9434
    %v9436 = vrot.slane %v8198, %v9435
    %v9437 = vsel %vm8304, %v9436, %v9432
    %v9438 = vlaneseq
    %v9439 = vshrl.u32 %v9438, 7
    %v9440 = vsub.s32 %v8306, %v9439
    %v9441 = vrot.slane %v8201, %v9440
    %v9442 = vsel %vm8311, %v9441, %v9437
    %v9443 = vlaneseq
    %v9444 = vshrl.u32 %v9443, 7
    %v9445 = vsub.s32 %v8313, %v9444
    %v9446 = vrot.slane %v8204, %v9445
    %v9447 = vsel %vm8318, %v9446, %v9442
    %v9448 = vlaneseq
    %v9449 = vshrl.u32 %v9448, 7
    %v9450 = vsub.s32 %v8320, %v9449
    %v9451 = vrot.slane %v8207, %v9450
    %v9452 = vsel %vm8325, %v9451, %v9447
    %v9453 = vlaneseq
    %v9454 = vshrl.u32 %v9453, 7
    %v9455 = vsub.s32 %v8327, %v9454
    %v9456 = vrot.slane %v8210, %v9455
    %v9457 = vsel %vm8332, %v9456, %v9452
    %v9458 = vlaneseq
    %v9459 = vshrl.u32 %v9458, 7
    %v9460 = vsub.s32 %v8334, %v9459
    %v9461 = vrot.slane %v8213, %v9460
    %v9462 = vsel %vm8339, %v9461, %v9457
    %v9463 = vlaneseq
    %v9464 = vshrl.u32 %v9463, 7
    %v9465 = vsub.s32 %v8341, %v9464
    %v9466 = vrot.slane %v8216, %v9465
    %v9467 = vsel %vm8346, %v9466, %v9462
    %v9468 = vlaneseq
    %v9469 = vshrl.u32 %v9468, 7
    %v9470 = vsub.s32 %v8348, %v9469
    %v9471 = vrot.slane %v8219, %v9470
    %v9472 = vsel %vm8353, %v9471, %v9467
    %v9473 = vlaneseq
    %v9474 = vshrl.u32 %v9473, 7
    %v9475 = vsub.s32 %v8355, %v9474
    %v9476 = vrot.slane %v8222, %v9475
    %v9477 = vsel %vm8360, %v9476, %v9472
    %v9478 = vlaneseq
    %v9479 = vshrl.u32 %v9478, 7
    %v9480 = vsub.s32 %v8362, %v9479
    %v9481 = vrot.slane %v8225, %v9480
    %v9482 = vsel %vm8367, %v9481, %v9477
    %v9483 = vlaneseq
    %v9484 = vshrl.u32 %v9483, 7
    %v9485 = vsub.s32 %v8369, %v9484
    %v9486 = vrot.slane %v8228, %v9485
    %v9487 = vsel %vm8374, %v9486, %v9482
    %v9488 = vlaneseq
    %v9489 = vshrl.u32 %v9488, 7
    %v9490 = vsub.s32 %v8376, %v9489
    %v9491 = vrot.slane %v8231, %v9490
    %v9492 = vsel %vm8381, %v9491, %v9487
    %v9493 = vlaneseq
    %v9494 = vshrl.u32 %v9493, 7
    %v9495 = vsub.s32 %v8383, %v9494
    %v9496 = vrot.slane %v8234, %v9495
    %v9497 = vsel %vm8388, %v9496, %v9492
    %v9498 = vlaneseq
    %v9499 = vshrl.u32 %v9498, 7
    %v9500 = vsub.s32 %v8390, %v9499
    %v9501 = vrot.slane %v8237, %v9500
    %v9502 = vsel %vm8395, %v9501, %v9497
    %v9503 = vlaneseq
    %v9504 = vshrl.u32 %v9503, 7
    %v9505 = vsub.s32 %v8287, %v9504
    %v9506 = vrot.slane %v8240, %v9505
    %v9507 = vlaneseq
    %v9508 = vshrl.u32 %v9507, 7
    %v9509 = vsub.s32 %v8292, %v9508
    %v9510 = vrot.slane %v8243, %v9509
    %v9511 = vsel %vm8297, %v9510, %v9506
    %v9512 = vlaneseq
    %v9513 = vshrl.u32 %v9512, 7
    %v9514 = vsub.s32 %v8299, %v9513
    %v9515 = vrot.slane %v8246, %v9514
    %v9516 = vsel %vm8304, %v9515, %v9511
    %v9517 = vlaneseq
    %v9518 = vshrl.u32 %v9517, 7
    %v9519 = vsub.s32 %v8306, %v9518
    %v9520 = vrot.slane %v8249, %v9519
    %v9521 = vsel %vm8311, %v9520, %v9516
    %v9522 = vlaneseq
    %v9523 = vshrl.u32 %v9522, 7
    %v9524 = vsub.s32 %v8313, %v9523
    %v9525 = vrot.slane %v8252, %v9524
    %v9526 = vsel %vm8318, %v9525, %v9521
    %v9527 = vlaneseq
    %v9528 = vshrl.u32 %v9527, 7
    %v9529 = vsub.s32 %v8320, %v9528
    %v9530 = vrot.slane %v8255, %v9529
    %v9531 = vsel %vm8325, %v9530, %v9526
    %v9532 = vlaneseq
    %v9533 = vshrl.u32 %v9532, 7
    %v9534 = vsub.s32 %v8327, %v9533
    %v9535 = vrot.slane %v8258, %v9534
    %v9536 = vsel %vm8332, %v9535, %v9531
    %v9537 = vlaneseq
    %v9538 = vshrl.u32 %v9537, 7
    %v9539 = vsub.s32 %v8334, %v9538
    %v9540 = vrot.slane %v8261, %v9539
    %v9541 = vsel %vm8339, %v9540, %v9536
    %v9542 = vlaneseq
    %v9543 = vshrl.u32 %v9542, 7
    %v9544 = vsub.s32 %v8341, %v9543
    %v9545 = vrot.slane %v8264, %v9544
    %v9546 = vsel %vm8346, %v9545, %v9541
    %v9547 = vlaneseq
    %v9548 = vshrl.u32 %v9547, 7
    %v9549 = vsub.s32 %v8348, %v9548
    %v9550 = vrot.slane %v8267, %v9549
    %v9551 = vsel %vm8353, %v9550, %v9546
    %v9552 = vlaneseq
    %v9553 = vshrl.u32 %v9552, 7
    %v9554 = vsub.s32 %v8355, %v9553
    %v9555 = vrot.slane %v8270, %v9554
    %v9556 = vsel %vm8360, %v9555, %v9551
    %v9557 = vlaneseq
    %v9558 = vshrl.u32 %v9557, 7
    %v9559 = vsub.s32 %v8362, %v9558
    %v9560 = vrot.slane %v8273, %v9559
    %v9561 = vsel %vm8367, %v9560, %v9556
    %v9562 = vlaneseq
    %v9563 = vshrl.u32 %v9562, 7
    %v9564 = vsub.s32 %v8369, %v9563
    %v9565 = vrot.slane %v8276, %v9564
    %v9566 = vsel %vm8374, %v9565, %v9561
    %v9567 = vlaneseq
    %v9568 = vshrl.u32 %v9567, 7
    %v9569 = vsub.s32 %v8376, %v9568
    %v9570 = vrot.slane %v8279, %v9569
    %v9571 = vsel %vm8381, %v9570, %v9566
    %v9572 = vlaneseq
    %v9573 = vshrl.u32 %v9572, 7
    %v9574 = vsub.s32 %v8383, %v9573
    %v9575 = vrot.slane %v8282, %v9574
    %v9576 = vsel %vm8388, %v9575, %v9571
    %v9577 = vlaneseq
    %v9578 = vshrl.u32 %v9577, 7
    %v9579 = vsub.s32 %v8390, %v9578
    %v9580 = vrot.slane %v8285, %v9579
    %v9581 = vsel %vm8395, %v9580, %v9576
    %vm9582 = vcmask 1041409
    %v9583 = vsel %vm9582, %v8712, %v8396
    %vm9584 = vcmask 1042434
    %v9585 = vsel %vm9584, %v9028, %v9583
    %vm9586 = vcmask 1043459
    %v9587 = vsel %vm9586, %v9344, %v9585
    %v9588 = vsel %vm9582, %v8791, %v8475
    %v9589 = vsel %vm9584, %v9107, %v9588
    %v9590 = vsel %vm9586, %v9423, %v9589
    %v9591 = vsel %vm9582, %v8870, %v8554
    %v9592 = vsel %vm9584, %v9186, %v9591
    %v9593 = vsel %vm9586, %v9502, %v9592
    %v9594 = vsel %vm9582, %v8949, %v8633
    %v9595 = vsel %vm9584, %v9265, %v9594
    %v9596 = vsel %vm9586, %v9581, %v9595
    %vm9601 = vcmask 1043456
    %v9602 = vsel %vm9601, %v9587, 0.0
    %v9603 = vsel %vm9601, %v9590, 0.0
    %v9604 = vadd.f32 %v9602, %v9603
    %v9605 = vsel %vm9601, %v9593, 0.0
    %v9606 = vadd.f32 %v9604, %v9605
    %v9607 = vsel %vm9601, %v9596, 0.0
    %v9608 = vadd.f32 %v9606, %v9607
    %9609 = vadd.xlane.f32.xlu0 %v9608
    %v9610 = vpop.xlane.xlu0 %9609
    %v9611 = vld [vmem:[#allocation11] sm:$0x3]
    %v9613 = vlaneseq
    %v9614 = vshrl.u32 %v9613, 7
    %v9615 = vsub.s32 0, %v9614
    %v9616 = vrot.slane %v9611, %v9615
    %v9617 = vlaneseq
    %v9618 = vshrl.u32 %v9617, 7
    %v9619 = vsub.s32 1, %v9618
    %v9620 = vrot.slane %v9611, %v9619
    %v9623 = vmul.f32 %v6666, %v9616
    %v9624 = vmul.f32 %v6668, %v9620
    %v9625 = vsel %vm9601, %v9623, 0.0
    %v9626 = vsel %vm9601, %v9624, 0.0
    %v9627 = vadd.f32 %v9625, %v9626
    %9628 = vadd.xlane.f32.xlu0 %v9627
    %v9629 = vpop.xlane.xlu0 %9628
    %v9630 = vadd.f32 %v9610, %v9629
    %v9631 = vld [vmem:[#allocation2] sm:$0x1]
    %v9633 = vlaneseq
    %v9634 = vshrl.u32 %v9633, 7
    %v9635 = vsub.s32 0, %v9634
    %v9636 = vrot.slane %v9631, %v9635
    %v9638 = vadd.f32 %v9630, %v9636
    %v9639 = vand.u32 2147483647, %v9638
    %v9640 = vsub.f32 0.0, %v9639
    %v9641 = vmul.f32 %v9640, 1.442695
    %v9642 = vpow.pop %v9641
    %vm9643 = vcmp.ge.f32.partialorder %v9638, 0.0
    %v9644 = vadd.f32 %v9642, 1.0
    %v9645 = vrcp.pop %v9644
    %v9646 = vmul.f32 1.0, %v9645
    %v9647 = vmul.f32 %v9642, %v9645
    %v9648 = vsel %vm9643, %v9646, %v9647
    %9650 = vset.pattern.permute.xlu0 0
    %9651 = vperm.xlu0 %9650, %v9648
    %v9652 = vpop.permute.xlu0 %9651
    %9718 = vset.pattern.permute.xlu0 0
    %9719 = vperm.xlu0 %9718, %v3390
    %v9720 = vpop.permute.xlu0 %9719
    %9721 = vset.pattern.permute.xlu0 0
    %9722 = vperm.xlu0 %9721, %v3391
    %v9723 = vpop.permute.xlu0 %9722
    %9724 = vset.pattern.permute.xlu0 0
    %9725 = vperm.xlu0 %9724, %v3392
    %v9726 = vpop.permute.xlu0 %9725
    %9727 = vset.pattern.permute.xlu0 0
    %9728 = vperm.xlu0 %9727, %v3393
    %v9729 = vpop.permute.xlu0 %9728
    %9730 = vset.pattern.permute.xlu0 0
    %9731 = vperm.xlu0 %9730, %v3394
    %v9732 = vpop.permute.xlu0 %9731
    %9733 = vset.pattern.permute.xlu0 0
    %9734 = vperm.xlu0 %9733, %v3395
    %v9735 = vpop.permute.xlu0 %9734
    %9736 = vset.pattern.permute.xlu0 0
    %9737 = vperm.xlu0 %9736, %v3396
    %v9738 = vpop.permute.xlu0 %9737
    %9739 = vset.pattern.permute.xlu0 0
    %9740 = vperm.xlu0 %9739, %v3397
    %v9741 = vpop.permute.xlu0 %9740
    %9742 = vset.pattern.permute.xlu0 0
    %9743 = vperm.xlu0 %9742, %v3398
    %v9744 = vpop.permute.xlu0 %9743
    %9745 = vset.pattern.permute.xlu0 0
    %9746 = vperm.xlu0 %9745, %v3399
    %v9747 = vpop.permute.xlu0 %9746
    %9748 = vset.pattern.permute.xlu0 0
    %9749 = vperm.xlu0 %9748, %v3400
    %v9750 = vpop.permute.xlu0 %9749
    %9751 = vset.pattern.permute.xlu0 0
    %9752 = vperm.xlu0 %9751, %v3401
    %v9753 = vpop.permute.xlu0 %9752
    %9754 = vset.pattern.permute.xlu0 0
    %9755 = vperm.xlu0 %9754, %v3402
    %v9756 = vpop.permute.xlu0 %9755
    %9757 = vset.pattern.permute.xlu0 0
    %9758 = vperm.xlu0 %9757, %v3403
    %v9759 = vpop.permute.xlu0 %9758
    %9760 = vset.pattern.permute.xlu0 0
    %9761 = vperm.xlu0 %9760, %v3404
    %v9762 = vpop.permute.xlu0 %9761
    %9763 = vset.pattern.permute.xlu0 0
    %9764 = vperm.xlu0 %9763, %v3405
    %v9765 = vpop.permute.xlu0 %9764
    %9766 = vset.pattern.permute.xlu0 0
    %9767 = vperm.xlu0 %9766, %v3406
    %v9768 = vpop.permute.xlu0 %9767
    %9769 = vset.pattern.permute.xlu0 0
    %9770 = vperm.xlu0 %9769, %v3407
    %v9771 = vpop.permute.xlu0 %9770
    %9772 = vset.pattern.permute.xlu0 0
    %9773 = vperm.xlu0 %9772, %v3408
    %v9774 = vpop.permute.xlu0 %9773
    %9775 = vset.pattern.permute.xlu0 0
    %9776 = vperm.xlu0 %9775, %v3409
    %v9777 = vpop.permute.xlu0 %9776
    %9778 = vset.pattern.permute.xlu0 0
    %9779 = vperm.xlu0 %9778, %v3410
    %v9780 = vpop.permute.xlu0 %9779
    %9781 = vset.pattern.permute.xlu0 0
    %9782 = vperm.xlu0 %9781, %v3411
    %v9783 = vpop.permute.xlu0 %9782
    %9784 = vset.pattern.permute.xlu0 0
    %9785 = vperm.xlu0 %9784, %v3412
    %v9786 = vpop.permute.xlu0 %9785
    %9787 = vset.pattern.permute.xlu0 0
    %9788 = vperm.xlu0 %9787, %v3413
    %v9789 = vpop.permute.xlu0 %9788
    %9790 = vset.pattern.permute.xlu0 0
    %9791 = vperm.xlu0 %9790, %v3414
    %v9792 = vpop.permute.xlu0 %9791
    %9793 = vset.pattern.permute.xlu0 0
    %9794 = vperm.xlu0 %9793, %v3415
    %v9795 = vpop.permute.xlu0 %9794
    %9796 = vset.pattern.permute.xlu0 0
    %9797 = vperm.xlu0 %9796, %v3416
    %v9798 = vpop.permute.xlu0 %9797
    %9799 = vset.pattern.permute.xlu0 0
    %9800 = vperm.xlu0 %9799, %v3417
    %v9801 = vpop.permute.xlu0 %9800
    %9802 = vset.pattern.permute.xlu0 0
    %9803 = vperm.xlu0 %9802, %v3418
    %v9804 = vpop.permute.xlu0 %9803
    %9805 = vset.pattern.permute.xlu0 0
    %9806 = vperm.xlu0 %9805, %v3419
    %v9807 = vpop.permute.xlu0 %9806
    %9808 = vset.pattern.permute.xlu0 0
    %9809 = vperm.xlu0 %9808, %v3420
    %v9810 = vpop.permute.xlu0 %9809
    %9811 = vset.pattern.permute.xlu0 0
    %9812 = vperm.xlu0 %9811, %v3421
    %v9813 = vpop.permute.xlu0 %9812
    %9814 = vset.pattern.permute.xlu0 0
    %9815 = vperm.xlu0 %9814, %v3422
    %v9816 = vpop.permute.xlu0 %9815
    %9817 = vset.pattern.permute.xlu0 0
    %9818 = vperm.xlu0 %9817, %v3423
    %v9819 = vpop.permute.xlu0 %9818
    %9820 = vset.pattern.permute.xlu0 0
    %9821 = vperm.xlu0 %9820, %v3424
    %v9822 = vpop.permute.xlu0 %9821
    %9823 = vset.pattern.permute.xlu0 0
    %9824 = vperm.xlu0 %9823, %v3425
    %v9825 = vpop.permute.xlu0 %9824
    %9826 = vset.pattern.permute.xlu0 0
    %9827 = vperm.xlu0 %9826, %v3426
    %v9828 = vpop.permute.xlu0 %9827
    %9829 = vset.pattern.permute.xlu0 0
    %9830 = vperm.xlu0 %9829, %v3427
    %v9831 = vpop.permute.xlu0 %9830
    %9832 = vset.pattern.permute.xlu0 0
    %9833 = vperm.xlu0 %9832, %v3428
    %v9834 = vpop.permute.xlu0 %9833
    %9835 = vset.pattern.permute.xlu0 0
    %9836 = vperm.xlu0 %9835, %v3429
    %v9837 = vpop.permute.xlu0 %9836
    %9838 = vset.pattern.permute.xlu0 0
    %9839 = vperm.xlu0 %9838, %v3430
    %v9840 = vpop.permute.xlu0 %9839
    %9841 = vset.pattern.permute.xlu0 0
    %9842 = vperm.xlu0 %9841, %v3431
    %v9843 = vpop.permute.xlu0 %9842
    %9844 = vset.pattern.permute.xlu0 0
    %9845 = vperm.xlu0 %9844, %v3432
    %v9846 = vpop.permute.xlu0 %9845
    %9847 = vset.pattern.permute.xlu0 0
    %9848 = vperm.xlu0 %9847, %v3433
    %v9849 = vpop.permute.xlu0 %9848
    %9850 = vset.pattern.permute.xlu0 0
    %9851 = vperm.xlu0 %9850, %v3434
    %v9852 = vpop.permute.xlu0 %9851
    %9853 = vset.pattern.permute.xlu0 0
    %9854 = vperm.xlu0 %9853, %v3435
    %v9855 = vpop.permute.xlu0 %9854
    %9856 = vset.pattern.permute.xlu0 0
    %9857 = vperm.xlu0 %9856, %v3436
    %v9858 = vpop.permute.xlu0 %9857
    %9859 = vset.pattern.permute.xlu0 0
    %9860 = vperm.xlu0 %9859, %v3437
    %v9861 = vpop.permute.xlu0 %9860
    %9862 = vset.pattern.permute.xlu0 0
    %9863 = vperm.xlu0 %9862, %v3438
    %v9864 = vpop.permute.xlu0 %9863
    %9865 = vset.pattern.permute.xlu0 0
    %9866 = vperm.xlu0 %9865, %v3439
    %v9867 = vpop.permute.xlu0 %9866
    %9868 = vset.pattern.permute.xlu0 0
    %9869 = vperm.xlu0 %9868, %v3440
    %v9870 = vpop.permute.xlu0 %9869
    %9871 = vset.pattern.permute.xlu0 0
    %9872 = vperm.xlu0 %9871, %v3441
    %v9873 = vpop.permute.xlu0 %9872
    %9874 = vset.pattern.permute.xlu0 0
    %9875 = vperm.xlu0 %9874, %v3442
    %v9876 = vpop.permute.xlu0 %9875
    %9877 = vset.pattern.permute.xlu0 0
    %9878 = vperm.xlu0 %9877, %v3443
    %v9879 = vpop.permute.xlu0 %9878
    %9880 = vset.pattern.permute.xlu0 0
    %9881 = vperm.xlu0 %9880, %v3444
    %v9882 = vpop.permute.xlu0 %9881
    %9883 = vset.pattern.permute.xlu0 0
    %9884 = vperm.xlu0 %9883, %v3445
    %v9885 = vpop.permute.xlu0 %9884
    %9886 = vset.pattern.permute.xlu0 0
    %9887 = vperm.xlu0 %9886, %v3446
    %v9888 = vpop.permute.xlu0 %9887
    %9889 = vset.pattern.permute.xlu0 0
    %9890 = vperm.xlu0 %9889, %v3447
    %v9891 = vpop.permute.xlu0 %9890
    %9892 = vset.pattern.permute.xlu0 0
    %9893 = vperm.xlu0 %9892, %v3448
    %v9894 = vpop.permute.xlu0 %9893
    %9895 = vset.pattern.permute.xlu0 0
    %9896 = vperm.xlu0 %9895, %v3449
    %v9897 = vpop.permute.xlu0 %9896
    %9898 = vset.pattern.permute.xlu0 0
    %9899 = vperm.xlu0 %9898, %v3450
    %v9900 = vpop.permute.xlu0 %9899
    %9901 = vset.pattern.permute.xlu0 0
    %9902 = vperm.xlu0 %9901, %v3451
    %v9903 = vpop.permute.xlu0 %9902
    %9904 = vset.pattern.permute.xlu0 0
    %9905 = vperm.xlu0 %9904, %v3452
    %v9906 = vpop.permute.xlu0 %9905
    %9907 = vset.pattern.permute.xlu0 0
    %9908 = vperm.xlu0 %9907, %v3453
    %v9909 = vpop.permute.xlu0 %9908
    %v9910 = vlaneseq
    %v9911 = vshrl.u32 %v9910, 7
    %v9912 = vsub.s32 %v8287, %v9911
    %v9913 = vrot.slane %v9720, %v9912
    %v9914 = vlaneseq
    %v9915 = vshrl.u32 %v9914, 7
    %v9916 = vsub.s32 %v8292, %v9915
    %v9917 = vrot.slane %v9723, %v9916
    %v9918 = vsel %vm8297, %v9917, %v9913
    %v9919 = vlaneseq
    %v9920 = vshrl.u32 %v9919, 7
    %v9921 = vsub.s32 %v8299, %v9920
    %v9922 = vrot.slane %v9726, %v9921
    %v9923 = vsel %vm8304, %v9922, %v9918
    %v9924 = vlaneseq
    %v9925 = vshrl.u32 %v9924, 7
    %v9926 = vsub.s32 %v8306, %v9925
    %v9927 = vrot.slane %v9729, %v9926
    %v9928 = vsel %vm8311, %v9927, %v9923
    %v9929 = vlaneseq
    %v9930 = vshrl.u32 %v9929, 7
    %v9931 = vsub.s32 %v8313, %v9930
    %v9932 = vrot.slane %v9732, %v9931
    %v9933 = vsel %vm8318, %v9932, %v9928
    %v9934 = vlaneseq
    %v9935 = vshrl.u32 %v9934, 7
    %v9936 = vsub.s32 %v8320, %v9935
    %v9937 = vrot.slane %v9735, %v9936
    %v9938 = vsel %vm8325, %v9937, %v9933
    %v9939 = vlaneseq
    %v9940 = vshrl.u32 %v9939, 7
    %v9941 = vsub.s32 %v8327, %v9940
    %v9942 = vrot.slane %v9738, %v9941
    %v9943 = vsel %vm8332, %v9942, %v9938
    %v9944 = vlaneseq
    %v9945 = vshrl.u32 %v9944, 7
    %v9946 = vsub.s32 %v8334, %v9945
    %v9947 = vrot.slane %v9741, %v9946
    %v9948 = vsel %vm8339, %v9947, %v9943
    %v9949 = vlaneseq
    %v9950 = vshrl.u32 %v9949, 7
    %v9951 = vsub.s32 %v8341, %v9950
    %v9952 = vrot.slane %v9744, %v9951
    %v9953 = vsel %vm8346, %v9952, %v9948
    %v9954 = vlaneseq
    %v9955 = vshrl.u32 %v9954, 7
    %v9956 = vsub.s32 %v8348, %v9955
    %v9957 = vrot.slane %v9747, %v9956
    %v9958 = vsel %vm8353, %v9957, %v9953
    %v9959 = vlaneseq
    %v9960 = vshrl.u32 %v9959, 7
    %v9961 = vsub.s32 %v8355, %v9960
    %v9962 = vrot.slane %v9750, %v9961
    %v9963 = vsel %vm8360, %v9962, %v9958
    %v9964 = vlaneseq
    %v9965 = vshrl.u32 %v9964, 7
    %v9966 = vsub.s32 %v8362, %v9965
    %v9967 = vrot.slane %v9753, %v9966
    %v9968 = vsel %vm8367, %v9967, %v9963
    %v9969 = vlaneseq
    %v9970 = vshrl.u32 %v9969, 7
    %v9971 = vsub.s32 %v8369, %v9970
    %v9972 = vrot.slane %v9756, %v9971
    %v9973 = vsel %vm8374, %v9972, %v9968
    %v9974 = vlaneseq
    %v9975 = vshrl.u32 %v9974, 7
    %v9976 = vsub.s32 %v8376, %v9975
    %v9977 = vrot.slane %v9759, %v9976
    %v9978 = vsel %vm8381, %v9977, %v9973
    %v9979 = vlaneseq
    %v9980 = vshrl.u32 %v9979, 7
    %v9981 = vsub.s32 %v8383, %v9980
    %v9982 = vrot.slane %v9762, %v9981
    %v9983 = vsel %vm8388, %v9982, %v9978
    %v9984 = vlaneseq
    %v9985 = vshrl.u32 %v9984, 7
    %v9986 = vsub.s32 %v8390, %v9985
    %v9987 = vrot.slane %v9765, %v9986
    %v9988 = vsel %vm8395, %v9987, %v9983
    %v9989 = vlaneseq
    %v9990 = vshrl.u32 %v9989, 7
    %v9991 = vsub.s32 %v8287, %v9990
    %v9992 = vrot.slane %v9768, %v9991
    %v9993 = vlaneseq
    %v9994 = vshrl.u32 %v9993, 7
    %v9995 = vsub.s32 %v8292, %v9994
    %v9996 = vrot.slane %v9771, %v9995
    %v9997 = vsel %vm8297, %v9996, %v9992
    %v9998 = vlaneseq
    %v9999 = vshrl.u32 %v9998, 7
    %v10000 = vsub.s32 %v8299, %v9999
    %v10001 = vrot.slane %v9774, %v10000
    %v10002 = vsel %vm8304, %v10001, %v9997
    %v10003 = vlaneseq
    %v10004 = vshrl.u32 %v10003, 7
    %v10005 = vsub.s32 %v8306, %v10004
    %v10006 = vrot.slane %v9777, %v10005
    %v10007 = vsel %vm8311, %v10006, %v10002
    %v10008 = vlaneseq
    %v10009 = vshrl.u32 %v10008, 7
    %v10010 = vsub.s32 %v8313, %v10009
    %v10011 = vrot.slane %v9780, %v10010
    %v10012 = vsel %vm8318, %v10011, %v10007
    %v10013 = vlaneseq
    %v10014 = vshrl.u32 %v10013, 7
    %v10015 = vsub.s32 %v8320, %v10014
    %v10016 = vrot.slane %v9783, %v10015
    %v10017 = vsel %vm8325, %v10016, %v10012
    %v10018 = vlaneseq
    %v10019 = vshrl.u32 %v10018, 7
    %v10020 = vsub.s32 %v8327, %v10019
    %v10021 = vrot.slane %v9786, %v10020
    %v10022 = vsel %vm8332, %v10021, %v10017
    %v10023 = vlaneseq
    %v10024 = vshrl.u32 %v10023, 7
    %v10025 = vsub.s32 %v8334, %v10024
    %v10026 = vrot.slane %v9789, %v10025
    %v10027 = vsel %vm8339, %v10026, %v10022
    %v10028 = vlaneseq
    %v10029 = vshrl.u32 %v10028, 7
    %v10030 = vsub.s32 %v8341, %v10029
    %v10031 = vrot.slane %v9792, %v10030
    %v10032 = vsel %vm8346, %v10031, %v10027
    %v10033 = vlaneseq
    %v10034 = vshrl.u32 %v10033, 7
    %v10035 = vsub.s32 %v8348, %v10034
    %v10036 = vrot.slane %v9795, %v10035
    %v10037 = vsel %vm8353, %v10036, %v10032
    %v10038 = vlaneseq
    %v10039 = vshrl.u32 %v10038, 7
    %v10040 = vsub.s32 %v8355, %v10039
    %v10041 = vrot.slane %v9798, %v10040
    %v10042 = vsel %vm8360, %v10041, %v10037
    %v10043 = vlaneseq
    %v10044 = vshrl.u32 %v10043, 7
    %v10045 = vsub.s32 %v8362, %v10044
    %v10046 = vrot.slane %v9801, %v10045
    %v10047 = vsel %vm8367, %v10046, %v10042
    %v10048 = vlaneseq
    %v10049 = vshrl.u32 %v10048, 7
    %v10050 = vsub.s32 %v8369, %v10049
    %v10051 = vrot.slane %v9804, %v10050
    %v10052 = vsel %vm8374, %v10051, %v10047
    %v10053 = vlaneseq
    %v10054 = vshrl.u32 %v10053, 7
    %v10055 = vsub.s32 %v8376, %v10054
    %v10056 = vrot.slane %v9807, %v10055
    %v10057 = vsel %vm8381, %v10056, %v10052
    %v10058 = vlaneseq
    %v10059 = vshrl.u32 %v10058, 7
    %v10060 = vsub.s32 %v8383, %v10059
    %v10061 = vrot.slane %v9810, %v10060
    %v10062 = vsel %vm8388, %v10061, %v10057
    %v10063 = vlaneseq
    %v10064 = vshrl.u32 %v10063, 7
    %v10065 = vsub.s32 %v8390, %v10064
    %v10066 = vrot.slane %v9813, %v10065
    %v10067 = vsel %vm8395, %v10066, %v10062
    %v10068 = vlaneseq
    %v10069 = vshrl.u32 %v10068, 7
    %v10070 = vsub.s32 %v8287, %v10069
    %v10071 = vrot.slane %v9816, %v10070
    %v10072 = vlaneseq
    %v10073 = vshrl.u32 %v10072, 7
    %v10074 = vsub.s32 %v8292, %v10073
    %v10075 = vrot.slane %v9819, %v10074
    %v10076 = vsel %vm8297, %v10075, %v10071
    %v10077 = vlaneseq
    %v10078 = vshrl.u32 %v10077, 7
    %v10079 = vsub.s32 %v8299, %v10078
    %v10080 = vrot.slane %v9822, %v10079
    %v10081 = vsel %vm8304, %v10080, %v10076
    %v10082 = vlaneseq
    %v10083 = vshrl.u32 %v10082, 7
    %v10084 = vsub.s32 %v8306, %v10083
    %v10085 = vrot.slane %v9825, %v10084
    %v10086 = vsel %vm8311, %v10085, %v10081
    %v10087 = vlaneseq
    %v10088 = vshrl.u32 %v10087, 7
    %v10089 = vsub.s32 %v8313, %v10088
    %v10090 = vrot.slane %v9828, %v10089
    %v10091 = vsel %vm8318, %v10090, %v10086
    %v10092 = vlaneseq
    %v10093 = vshrl.u32 %v10092, 7
    %v10094 = vsub.s32 %v8320, %v10093
    %v10095 = vrot.slane %v9831, %v10094
    %v10096 = vsel %vm8325, %v10095, %v10091
    %v10097 = vlaneseq
    %v10098 = vshrl.u32 %v10097, 7
    %v10099 = vsub.s32 %v8327, %v10098
    %v10100 = vrot.slane %v9834, %v10099
    %v10101 = vsel %vm8332, %v10100, %v10096
    %v10102 = vlaneseq
    %v10103 = vshrl.u32 %v10102, 7
    %v10104 = vsub.s32 %v8334, %v10103
    %v10105 = vrot.slane %v9837, %v10104
    %v10106 = vsel %vm8339, %v10105, %v10101
    %v10107 = vlaneseq
    %v10108 = vshrl.u32 %v10107, 7
    %v10109 = vsub.s32 %v8341, %v10108
    %v10110 = vrot.slane %v9840, %v10109
    %v10111 = vsel %vm8346, %v10110, %v10106
    %v10112 = vlaneseq
    %v10113 = vshrl.u32 %v10112, 7
    %v10114 = vsub.s32 %v8348, %v10113
    %v10115 = vrot.slane %v9843, %v10114
    %v10116 = vsel %vm8353, %v10115, %v10111
    %v10117 = vlaneseq
    %v10118 = vshrl.u32 %v10117, 7
    %v10119 = vsub.s32 %v8355, %v10118
    %v10120 = vrot.slane %v9846, %v10119
    %v10121 = vsel %vm8360, %v10120, %v10116
    %v10122 = vlaneseq
    %v10123 = vshrl.u32 %v10122, 7
    %v10124 = vsub.s32 %v8362, %v10123
    %v10125 = vrot.slane %v9849, %v10124
    %v10126 = vsel %vm8367, %v10125, %v10121
    %v10127 = vlaneseq
    %v10128 = vshrl.u32 %v10127, 7
    %v10129 = vsub.s32 %v8369, %v10128
    %v10130 = vrot.slane %v9852, %v10129
    %v10131 = vsel %vm8374, %v10130, %v10126
    %v10132 = vlaneseq
    %v10133 = vshrl.u32 %v10132, 7
    %v10134 = vsub.s32 %v8376, %v10133
    %v10135 = vrot.slane %v9855, %v10134
    %v10136 = vsel %vm8381, %v10135, %v10131
    %v10137 = vlaneseq
    %v10138 = vshrl.u32 %v10137, 7
    %v10139 = vsub.s32 %v8383, %v10138
    %v10140 = vrot.slane %v9858, %v10139
    %v10141 = vsel %vm8388, %v10140, %v10136
    %v10142 = vlaneseq
    %v10143 = vshrl.u32 %v10142, 7
    %v10144 = vsub.s32 %v8390, %v10143
    %v10145 = vrot.slane %v9861, %v10144
    %v10146 = vsel %vm8395, %v10145, %v10141
    %v10147 = vlaneseq
    %v10148 = vshrl.u32 %v10147, 7
    %v10149 = vsub.s32 %v8287, %v10148
    %v10150 = vrot.slane %v9864, %v10149
    %v10151 = vlaneseq
    %v10152 = vshrl.u32 %v10151, 7
    %v10153 = vsub.s32 %v8292, %v10152
    %v10154 = vrot.slane %v9867, %v10153
    %v10155 = vsel %vm8297, %v10154, %v10150
    %v10156 = vlaneseq
    %v10157 = vshrl.u32 %v10156, 7
    %v10158 = vsub.s32 %v8299, %v10157
    %v10159 = vrot.slane %v9870, %v10158
    %v10160 = vsel %vm8304, %v10159, %v10155
    %v10161 = vlaneseq
    %v10162 = vshrl.u32 %v10161, 7
    %v10163 = vsub.s32 %v8306, %v10162
    %v10164 = vrot.slane %v9873, %v10163
    %v10165 = vsel %vm8311, %v10164, %v10160
    %v10166 = vlaneseq
    %v10167 = vshrl.u32 %v10166, 7
    %v10168 = vsub.s32 %v8313, %v10167
    %v10169 = vrot.slane %v9876, %v10168
    %v10170 = vsel %vm8318, %v10169, %v10165
    %v10171 = vlaneseq
    %v10172 = vshrl.u32 %v10171, 7
    %v10173 = vsub.s32 %v8320, %v10172
    %v10174 = vrot.slane %v9879, %v10173
    %v10175 = vsel %vm8325, %v10174, %v10170
    %v10176 = vlaneseq
    %v10177 = vshrl.u32 %v10176, 7
    %v10178 = vsub.s32 %v8327, %v10177
    %v10179 = vrot.slane %v9882, %v10178
    %v10180 = vsel %vm8332, %v10179, %v10175
    %v10181 = vlaneseq
    %v10182 = vshrl.u32 %v10181, 7
    %v10183 = vsub.s32 %v8334, %v10182
    %v10184 = vrot.slane %v9885, %v10183
    %v10185 = vsel %vm8339, %v10184, %v10180
    %v10186 = vlaneseq
    %v10187 = vshrl.u32 %v10186, 7
    %v10188 = vsub.s32 %v8341, %v10187
    %v10189 = vrot.slane %v9888, %v10188
    %v10190 = vsel %vm8346, %v10189, %v10185
    %v10191 = vlaneseq
    %v10192 = vshrl.u32 %v10191, 7
    %v10193 = vsub.s32 %v8348, %v10192
    %v10194 = vrot.slane %v9891, %v10193
    %v10195 = vsel %vm8353, %v10194, %v10190
    %v10196 = vlaneseq
    %v10197 = vshrl.u32 %v10196, 7
    %v10198 = vsub.s32 %v8355, %v10197
    %v10199 = vrot.slane %v9894, %v10198
    %v10200 = vsel %vm8360, %v10199, %v10195
    %v10201 = vlaneseq
    %v10202 = vshrl.u32 %v10201, 7
    %v10203 = vsub.s32 %v8362, %v10202
    %v10204 = vrot.slane %v9897, %v10203
    %v10205 = vsel %vm8367, %v10204, %v10200
    %v10206 = vlaneseq
    %v10207 = vshrl.u32 %v10206, 7
    %v10208 = vsub.s32 %v8369, %v10207
    %v10209 = vrot.slane %v9900, %v10208
    %v10210 = vsel %vm8374, %v10209, %v10205
    %v10211 = vlaneseq
    %v10212 = vshrl.u32 %v10211, 7
    %v10213 = vsub.s32 %v8376, %v10212
    %v10214 = vrot.slane %v9903, %v10213
    %v10215 = vsel %vm8381, %v10214, %v10210
    %v10216 = vlaneseq
    %v10217 = vshrl.u32 %v10216, 7
    %v10218 = vsub.s32 %v8383, %v10217
    %v10219 = vrot.slane %v9906, %v10218
    %v10220 = vsel %vm8388, %v10219, %v10215
    %v10221 = vlaneseq
    %v10222 = vshrl.u32 %v10221, 7
    %v10223 = vsub.s32 %v8390, %v10222
    %v10224 = vrot.slane %v9909, %v10223
    %v10225 = vsel %vm8395, %v10224, %v10220
    %v10226 = vsel %vm9582, %v10067, %v9988
    %v10227 = vsel %vm9584, %v10146, %v10226
    %v10228 = vsel %vm9586, %v10225, %v10227
    %v10230 = vmul.f32 %v9652, %v10228
    %v10231 = vsub.f32 1.0, %v9648
    %v10232 = vld [vmem:[#allocation5] sm:$0x1]
    %10234 = vset.pattern.permute.xlu0 0
    %10235 = vperm.xlu0 %10234, %v10231
    %v10236 = vpop.permute.xlu0 %10235
    %v10239 = vlaneseq
    %v10240 = vshrl.u32 %v10239, 7
    %v10241 = vsub.s32 0, %v10240
    %v10242 = vrot.slane %v10232, %v10241
    %v10244 = vmul.f32 %v10236, %v10242
    %v10245 = vadd.f32 %v10230, %v10244
    %v10246 = vpack.c.bf16 %v1788, %v1787
    %v10247 = vpack.c.bf16 %v1790, %v1789
    %v10248 = vpack.c.bf16 %v1792, %v1791
    %v10249 = vpack.c.bf16 %v1794, %v1793
    %v10250 = vpack.c.bf16 %v1796, %v1795
    %v10251 = vpack.c.bf16 %v1798, %v1797
    %v10252 = vpack.c.bf16 %v1800, %v1799
    %v10253 = vpack.c.bf16 %v1802, %v1801
    %v10254 = vpack.c.bf16 %v1804, %v1803
    %v10255 = vpack.c.bf16 %v1806, %v1805
    %v10256 = vpack.c.bf16 %v1808, %v1807
    %v10257 = vpack.c.bf16 %v1810, %v1809
    %v10258 = vpack.c.bf16 %v1812, %v1811
    %v10259 = vpack.c.bf16 %v1814, %v1813
    %v10260 = vpack.c.bf16 %v1816, %v1815
    %v10261 = vpack.c.bf16 %v1818, %v1817
    %v10262 = vpack.c.bf16 %v1820, %v1819
    %v10263 = vpack.c.bf16 %v1822, %v1821
    %v10264 = vpack.c.bf16 %v1824, %v1823
    %v10265 = vpack.c.bf16 %v1826, %v1825
    %v10266 = vpack.c.bf16 %v1828, %v1827
    %v10267 = vpack.c.bf16 %v1830, %v1829
    %v10268 = vpack.c.bf16 %v1832, %v1831
    %v10269 = vpack.c.bf16 %v1834, %v1833
    %v10270 = vpack.c.bf16 %v1836, %v1835
    %v10271 = vpack.c.bf16 %v1838, %v1837
    %v10272 = vpack.c.bf16 %v1840, %v1839
    %v10273 = vpack.c.bf16 %v1842, %v1841
    %v10274 = vpack.c.bf16 %v1844, %v1843
    %v10275 = vpack.c.bf16 %v1846, %v1845
    %v10276 = vpack.c.bf16 %v1848, %v1847
    %v10277 = vpack.c.bf16 %v1850, %v1849
    %v10278 = vld [vmem:[%s20] sm:$0xff]
    %v10279 = vld [vmem:[%s20 + $0x8] sm:$0xff]
    %v10280 = vld [vmem:[%s20 + $0x10] sm:$0xff]
    %v10281 = vld [vmem:[%s20 + $0x18] sm:$0xff]
    %v10282 = vld [vmem:[%s20 + $0x20] sm:$0xff]
    %v10283 = vld [vmem:[%s20 + $0x28] sm:$0xff]
    %v10284 = vld [vmem:[%s20 + $0x30] sm:$0xff]
    %v10285 = vld [vmem:[%s20 + $0x38] sm:$0xff]
    %v10286 = vld [vmem:[%s20 + $0x40] sm:$0xff]
    %v10287 = vld [vmem:[%s20 + $0x48] sm:$0xff]
    %v10288 = vld [vmem:[%s20 + $0x50] sm:$0xff]
    %v10289 = vld [vmem:[%s20 + $0x58] sm:$0xff]
    %v10290 = vld [vmem:[%s20 + $0x60] sm:$0xff]
    %v10291 = vld [vmem:[%s20 + $0x68] sm:$0xff]
    %v10292 = vld [vmem:[%s20 + $0x70] sm:$0xff]
    %v10293 = vld [vmem:[%s20 + $0x78] sm:$0xff]
    %v10294 = vpack.c.bf16 %v10245, %v10245
    %v10295 = vld [vmem:[%s21] sm:$0xff]
    %v10296 = vld [vmem:[%s21 + $0x8] sm:$0xff]
    %v10297 = vld [vmem:[%s21 + $0x10] sm:$0xff]
    %v10298 = vld [vmem:[%s21 + $0x18] sm:$0xff]
    %v10299 = vld [vmem:[%s21 + $0x20] sm:$0xff]
    %v10300 = vld [vmem:[%s21 + $0x28] sm:$0xff]
    %v10301 = vld [vmem:[%s21 + $0x30] sm:$0xff]
    %v10302 = vld [vmem:[%s21 + $0x38] sm:$0xff]
    %v10303 = vld [vmem:[%s21 + $0x40] sm:$0xff]
    %v10304 = vld [vmem:[%s21 + $0x48] sm:$0xff]
    %v10305 = vld [vmem:[%s21 + $0x50] sm:$0xff]
    %v10306 = vld [vmem:[%s21 + $0x58] sm:$0xff]
    %v10307 = vld [vmem:[%s21 + $0x60] sm:$0xff]
    %v10308 = vld [vmem:[%s21 + $0x68] sm:$0xff]
    %v10309 = vld [vmem:[%s21 + $0x70] sm:$0xff]
    %v10310 = vld [vmem:[%s21 + $0x78] sm:$0xff]
    %v10327 = vunpack.c.l.b16 %v10295
    %v10328 = vunpack.c.h.b16 %v10295
    %v10329 = vunpack.c.l.b16 %v10296
    %v10330 = vunpack.c.h.b16 %v10296
    %v10331 = vunpack.c.l.b16 %v10297
    %v10332 = vunpack.c.h.b16 %v10297
    %v10333 = vunpack.c.l.b16 %v10298
    %v10334 = vunpack.c.h.b16 %v10298
    %v10335 = vunpack.c.l.b16 %v10299
    %v10336 = vunpack.c.h.b16 %v10299
    %v10337 = vunpack.c.l.b16 %v10300
    %v10338 = vunpack.c.h.b16 %v10300
    %v10339 = vunpack.c.l.b16 %v10301
    %v10340 = vunpack.c.h.b16 %v10301
    %v10341 = vunpack.c.l.b16 %v10302
    %v10342 = vunpack.c.h.b16 %v10302
    %v10343 = vunpack.c.l.b16 %v10303
    %v10344 = vunpack.c.h.b16 %v10303
    %v10345 = vunpack.c.l.b16 %v10304
    %v10346 = vunpack.c.h.b16 %v10304
    %v10347 = vunpack.c.l.b16 %v10305
    %v10348 = vunpack.c.h.b16 %v10305
    %v10349 = vunpack.c.l.b16 %v10306
    %v10350 = vunpack.c.h.b16 %v10306
    %v10351 = vunpack.c.l.b16 %v10307
    %v10352 = vunpack.c.h.b16 %v10307
    %v10353 = vunpack.c.l.b16 %v10308
    %v10354 = vunpack.c.h.b16 %v10308
    %v10355 = vunpack.c.l.b16 %v10309
    %v10356 = vunpack.c.h.b16 %v10309
    %v10357 = vunpack.c.l.b16 %v10310
    %v10358 = vunpack.c.h.b16 %v10310
    %v10359 = vpack.c.b16 %v10329, %v10327
    %v10360 = vpack.c.b16 %v10330, %v10328
    %v10361 = vpack.c.b16 %v10333, %v10331
    %v10362 = vpack.c.b16 %v10334, %v10332
    %v10363 = vpack.c.b16 %v10337, %v10335
    %v10364 = vpack.c.b16 %v10338, %v10336
    %v10365 = vpack.c.b16 %v10341, %v10339
    %v10366 = vpack.c.b16 %v10342, %v10340
    %v10367 = vpack.c.b16 %v10345, %v10343
    %v10368 = vpack.c.b16 %v10346, %v10344
    %v10369 = vpack.c.b16 %v10349, %v10347
    %v10370 = vpack.c.b16 %v10350, %v10348
    %v10371 = vpack.c.b16 %v10353, %v10351
    %v10372 = vpack.c.b16 %v10354, %v10352
    %v10373 = vpack.c.b16 %v10357, %v10355
    %v10374 = vpack.c.b16 %v10358, %v10356
    %10391 = vmatprep.subr.bf16.mxu0 %v10360
    %10392 = vmatpush1.bf16.msra.mxu0 %v10359
    %10393 = vmatprep.subr.bf16.mxu0 %v10362
    %10394 = vmatpush1.bf16.msra.mxu0 %v10361
    %10395 = vmatprep.subr.bf16.mxu0 %v10364
    %10396 = vmatpush1.bf16.msra.mxu0 %v10363
    %10397 = vmatprep.subr.bf16.mxu0 %v10366
    %10398 = vmatpush1.bf16.msra.mxu0 %v10365
    %10399 = vmatprep.subr.bf16.mxu0 %v10368
    %10400 = vmatpush1.bf16.msra.mxu0 %v10367
    %10401 = vmatprep.subr.bf16.mxu0 %v10370
    %10402 = vmatpush1.bf16.msra.mxu0 %v10369
    %10403 = vmatprep.subr.bf16.mxu0 %v10372
    %10404 = vmatpush1.bf16.msra.mxu0 %v10371
    %10405 = vmatprep.subr.bf16.mxu0 %v10374
    %10406 = vmatpush1.bf16.msra.mxu0 %v10373
    %10407 = vmatprep.subr.bf16.mxu0 0
    %10408 = vmatpush1.bf16.msra.mxu0 0
    %10409 = vmatprep.subr.bf16.mxu0 0
    %10410 = vmatpush1.bf16.msra.mxu0 0
    %10411 = vmatprep.subr.bf16.mxu0 0
    %10412 = vmatpush1.bf16.msra.mxu0 0
    %10413 = vmatprep.subr.bf16.mxu0 0
    %10414 = vmatpush1.bf16.msra.mxu0 0
    %10415 = vmatprep.subr.bf16.mxu0 0
    %10416 = vmatpush1.bf16.msra.mxu0 0
    %10417 = vmatprep.subr.bf16.mxu0 0
    %10418 = vmatpush1.bf16.msra.mxu0 0
    %10419 = vmatprep.subr.bf16.mxu0 0
    %10420 = vmatpush1.bf16.msra.mxu0 0
    %10421 = vmatprep.subr.bf16.mxu0 0
    %10422 = vmatpush1.bf16.msra.mxu0 0
    %10423 = vmatprep.mubr.bf16.mxu0 0
    %10424 = vmatmul.mubr.bf16.gmra.mrb[0].mxu0 %v10294
    %v10425 = vpop.f32.mrb[0].mxu0
    %v10426 = vadd.f32 0.0, %v10425
    %v10427 = vpop.f32.mrb[0].mxu0
    %v10428 = vadd.f32 0.0, %v10427
    %v10429 = vpop.f32.mrb[0].mxu0
    %v10430 = vpop.f32.mrb[0].mxu0
    %10431 = vdwg.mxu0
    %v10464 = vunpack.c.l.b16 %v10246
    %v10465 = vunpack.c.h.b16 %v10246
    %v10466 = vunpack.c.l.b16 %v10247
    %v10467 = vunpack.c.h.b16 %v10247
    %v10468 = vunpack.c.l.b16 %v10248
    %v10469 = vunpack.c.h.b16 %v10248
    %v10470 = vunpack.c.l.b16 %v10249
    %v10471 = vunpack.c.h.b16 %v10249
    %v10472 = vunpack.c.l.b16 %v10250
    %v10473 = vunpack.c.h.b16 %v10250
    %v10474 = vunpack.c.l.b16 %v10251
    %v10475 = vunpack.c.h.b16 %v10251
    %v10476 = vunpack.c.l.b16 %v10252
    %v10477 = vunpack.c.h.b16 %v10252
    %v10478 = vunpack.c.l.b16 %v10253
    %v10479 = vunpack.c.h.b16 %v10253
    %v10480 = vunpack.c.l.b16 %v10254
    %v10481 = vunpack.c.h.b16 %v10254
    %v10482 = vunpack.c.l.b16 %v10255
    %v10483 = vunpack.c.h.b16 %v10255
    %v10484 = vunpack.c.l.b16 %v10256
    %v10485 = vunpack.c.h.b16 %v10256
    %v10486 = vunpack.c.l.b16 %v10257
    %v10487 = vunpack.c.h.b16 %v10257
    %v10488 = vunpack.c.l.b16 %v10258
    %v10489 = vunpack.c.h.b16 %v10258
    %v10490 = vunpack.c.l.b16 %v10259
    %v10491 = vunpack.c.h.b16 %v10259
    %v10492 = vunpack.c.l.b16 %v10260
    %v10493 = vunpack.c.h.b16 %v10260
    %v10494 = vunpack.c.l.b16 %v10261
    %v10495 = vunpack.c.h.b16 %v10261
    %v10496 = vunpack.c.l.b16 %v10262
    %v10497 = vunpack.c.h.b16 %v10262
    %v10498 = vunpack.c.l.b16 %v10263
    %v10499 = vunpack.c.h.b16 %v10263
    %v10500 = vunpack.c.l.b16 %v10264
    %v10501 = vunpack.c.h.b16 %v10264
    %v10502 = vunpack.c.l.b16 %v10265
    %v10503 = vunpack.c.h.b16 %v10265
    %v10504 = vunpack.c.l.b16 %v10266
    %v10505 = vunpack.c.h.b16 %v10266
    %v10506 = vunpack.c.l.b16 %v10267
    %v10507 = vunpack.c.h.b16 %v10267
    %v10508 = vunpack.c.l.b16 %v10268
    %v10509 = vunpack.c.h.b16 %v10268
    %v10510 = vunpack.c.l.b16 %v10269
    %v10511 = vunpack.c.h.b16 %v10269
    %v10512 = vunpack.c.l.b16 %v10270
    %v10513 = vunpack.c.h.b16 %v10270
    %v10514 = vunpack.c.l.b16 %v10271
    %v10515 = vunpack.c.h.b16 %v10271
    %v10516 = vunpack.c.l.b16 %v10272
    %v10517 = vunpack.c.h.b16 %v10272
    %v10518 = vunpack.c.l.b16 %v10273
    %v10519 = vunpack.c.h.b16 %v10273
    %v10520 = vunpack.c.l.b16 %v10274
    %v10521 = vunpack.c.h.b16 %v10274
    %v10522 = vunpack.c.l.b16 %v10275
    %v10523 = vunpack.c.h.b16 %v10275
    %v10524 = vunpack.c.l.b16 %v10276
    %v10525 = vunpack.c.h.b16 %v10276
    %v10526 = vunpack.c.l.b16 %v10277
    %v10527 = vunpack.c.h.b16 %v10277
    %10528 = vset.pattern.permute.xlu0 0
    %10529 = vperm.xlu0 %10528, %v10464
    %v10530 = vpop.permute.xlu0 %10529
    %10531 = vset.pattern.permute.xlu0 0
    %10532 = vperm.xlu0 %10531, %v10465
    %v10533 = vpop.permute.xlu0 %10532
    %10534 = vset.pattern.permute.xlu0 0
    %10535 = vperm.xlu0 %10534, %v10466
    %v10536 = vpop.permute.xlu0 %10535
    %10537 = vset.pattern.permute.xlu0 0
    %10538 = vperm.xlu0 %10537, %v10467
    %v10539 = vpop.permute.xlu0 %10538
    %10540 = vset.pattern.permute.xlu0 0
    %10541 = vperm.xlu0 %10540, %v10468
    %v10542 = vpop.permute.xlu0 %10541
    %10543 = vset.pattern.permute.xlu0 0
    %10544 = vperm.xlu0 %10543, %v10469
    %v10545 = vpop.permute.xlu0 %10544
    %10546 = vset.pattern.permute.xlu0 0
    %10547 = vperm.xlu0 %10546, %v10470
    %v10548 = vpop.permute.xlu0 %10547
    %10549 = vset.pattern.permute.xlu0 0
    %10550 = vperm.xlu0 %10549, %v10471
    %v10551 = vpop.permute.xlu0 %10550
    %10552 = vset.pattern.permute.xlu0 0
    %10553 = vperm.xlu0 %10552, %v10472
    %v10554 = vpop.permute.xlu0 %10553
    %10555 = vset.pattern.permute.xlu0 0
    %10556 = vperm.xlu0 %10555, %v10473
    %v10557 = vpop.permute.xlu0 %10556
    %10558 = vset.pattern.permute.xlu0 0
    %10559 = vperm.xlu0 %10558, %v10474
    %v10560 = vpop.permute.xlu0 %10559
    %10561 = vset.pattern.permute.xlu0 0
    %10562 = vperm.xlu0 %10561, %v10475
    %v10563 = vpop.permute.xlu0 %10562
    %10564 = vset.pattern.permute.xlu0 0
    %10565 = vperm.xlu0 %10564, %v10476
    %v10566 = vpop.permute.xlu0 %10565
    %10567 = vset.pattern.permute.xlu0 0
    %10568 = vperm.xlu0 %10567, %v10477
    %v10569 = vpop.permute.xlu0 %10568
    %10570 = vset.pattern.permute.xlu0 0
    %10571 = vperm.xlu0 %10570, %v10478
    %v10572 = vpop.permute.xlu0 %10571
    %10573 = vset.pattern.permute.xlu0 0
    %10574 = vperm.xlu0 %10573, %v10479
    %v10575 = vpop.permute.xlu0 %10574
    %10576 = vset.pattern.permute.xlu0 0
    %10577 = vperm.xlu0 %10576, %v10480
    %v10578 = vpop.permute.xlu0 %10577
    %10579 = vset.pattern.permute.xlu0 0
    %10580 = vperm.xlu0 %10579, %v10481
    %v10581 = vpop.permute.xlu0 %10580
    %10582 = vset.pattern.permute.xlu0 0
    %10583 = vperm.xlu0 %10582, %v10482
    %v10584 = vpop.permute.xlu0 %10583
    %10585 = vset.pattern.permute.xlu0 0
    %10586 = vperm.xlu0 %10585, %v10483
    %v10587 = vpop.permute.xlu0 %10586
    %10588 = vset.pattern.permute.xlu0 0
    %10589 = vperm.xlu0 %10588, %v10484
    %v10590 = vpop.permute.xlu0 %10589
    %10591 = vset.pattern.permute.xlu0 0
    %10592 = vperm.xlu0 %10591, %v10485
    %v10593 = vpop.permute.xlu0 %10592
    %10594 = vset.pattern.permute.xlu0 0
    %10595 = vperm.xlu0 %10594, %v10486
    %v10596 = vpop.permute.xlu0 %10595
    %10597 = vset.pattern.permute.xlu0 0
    %10598 = vperm.xlu0 %10597, %v10487
    %v10599 = vpop.permute.xlu0 %10598
    %10600 = vset.pattern.permute.xlu0 0
    %10601 = vperm.xlu0 %10600, %v10488
    %v10602 = vpop.permute.xlu0 %10601
    %10603 = vset.pattern.permute.xlu0 0
    %10604 = vperm.xlu0 %10603, %v10489
    %v10605 = vpop.permute.xlu0 %10604
    %10606 = vset.pattern.permute.xlu0 0
    %10607 = vperm.xlu0 %10606, %v10490
    %v10608 = vpop.permute.xlu0 %10607
    %10609 = vset.pattern.permute.xlu0 0
    %10610 = vperm.xlu0 %10609, %v10491
    %v10611 = vpop.permute.xlu0 %10610
    %10612 = vset.pattern.permute.xlu0 0
    %10613 = vperm.xlu0 %10612, %v10492
    %v10614 = vpop.permute.xlu0 %10613
    %10615 = vset.pattern.permute.xlu0 0
    %10616 = vperm.xlu0 %10615, %v10493
    %v10617 = vpop.permute.xlu0 %10616
    %10618 = vset.pattern.permute.xlu0 0
    %10619 = vperm.xlu0 %10618, %v10494
    %v10620 = vpop.permute.xlu0 %10619
    %10621 = vset.pattern.permute.xlu0 0
    %10622 = vperm.xlu0 %10621, %v10495
    %v10623 = vpop.permute.xlu0 %10622
    %10624 = vset.pattern.permute.xlu0 0
    %10625 = vperm.xlu0 %10624, %v10496
    %v10626 = vpop.permute.xlu0 %10625
    %10627 = vset.pattern.permute.xlu0 0
    %10628 = vperm.xlu0 %10627, %v10497
    %v10629 = vpop.permute.xlu0 %10628
    %10630 = vset.pattern.permute.xlu0 0
    %10631 = vperm.xlu0 %10630, %v10498
    %v10632 = vpop.permute.xlu0 %10631
    %10633 = vset.pattern.permute.xlu0 0
    %10634 = vperm.xlu0 %10633, %v10499
    %v10635 = vpop.permute.xlu0 %10634
    %10636 = vset.pattern.permute.xlu0 0
    %10637 = vperm.xlu0 %10636, %v10500
    %v10638 = vpop.permute.xlu0 %10637
    %10639 = vset.pattern.permute.xlu0 0
    %10640 = vperm.xlu0 %10639, %v10501
    %v10641 = vpop.permute.xlu0 %10640
    %10642 = vset.pattern.permute.xlu0 0
    %10643 = vperm.xlu0 %10642, %v10502
    %v10644 = vpop.permute.xlu0 %10643
    %10645 = vset.pattern.permute.xlu0 0
    %10646 = vperm.xlu0 %10645, %v10503
    %v10647 = vpop.permute.xlu0 %10646
    %10648 = vset.pattern.permute.xlu0 0
    %10649 = vperm.xlu0 %10648, %v10504
    %v10650 = vpop.permute.xlu0 %10649
    %10651 = vset.pattern.permute.xlu0 0
    %10652 = vperm.xlu0 %10651, %v10505
    %v10653 = vpop.permute.xlu0 %10652
    %10654 = vset.pattern.permute.xlu0 0
    %10655 = vperm.xlu0 %10654, %v10506
    %v10656 = vpop.permute.xlu0 %10655
    %10657 = vset.pattern.permute.xlu0 0
    %10658 = vperm.xlu0 %10657, %v10507
    %v10659 = vpop.permute.xlu0 %10658
    %10660 = vset.pattern.permute.xlu0 0
    %10661 = vperm.xlu0 %10660, %v10508
    %v10662 = vpop.permute.xlu0 %10661
    %10663 = vset.pattern.permute.xlu0 0
    %10664 = vperm.xlu0 %10663, %v10509
    %v10665 = vpop.permute.xlu0 %10664
    %10666 = vset.pattern.permute.xlu0 0
    %10667 = vperm.xlu0 %10666, %v10510
    %v10668 = vpop.permute.xlu0 %10667
    %10669 = vset.pattern.permute.xlu0 0
    %10670 = vperm.xlu0 %10669, %v10511
    %v10671 = vpop.permute.xlu0 %10670
    %10672 = vset.pattern.permute.xlu0 0
    %10673 = vperm.xlu0 %10672, %v10512
    %v10674 = vpop.permute.xlu0 %10673
    %10675 = vset.pattern.permute.xlu0 0
    %10676 = vperm.xlu0 %10675, %v10513
    %v10677 = vpop.permute.xlu0 %10676
    %10678 = vset.pattern.permute.xlu0 0
    %10679 = vperm.xlu0 %10678, %v10514
    %v10680 = vpop.permute.xlu0 %10679
    %10681 = vset.pattern.permute.xlu0 0
    %10682 = vperm.xlu0 %10681, %v10515
    %v10683 = vpop.permute.xlu0 %10682
    %10684 = vset.pattern.permute.xlu0 0
    %10685 = vperm.xlu0 %10684, %v10516
    %v10686 = vpop.permute.xlu0 %10685
    %10687 = vset.pattern.permute.xlu0 0
    %10688 = vperm.xlu0 %10687, %v10517
    %v10689 = vpop.permute.xlu0 %10688
    %10690 = vset.pattern.permute.xlu0 0
    %10691 = vperm.xlu0 %10690, %v10518
    %v10692 = vpop.permute.xlu0 %10691
    %10693 = vset.pattern.permute.xlu0 0
    %10694 = vperm.xlu0 %10693, %v10519
    %v10695 = vpop.permute.xlu0 %10694
    %10696 = vset.pattern.permute.xlu0 0
    %10697 = vperm.xlu0 %10696, %v10520
    %v10698 = vpop.permute.xlu0 %10697
    %10699 = vset.pattern.permute.xlu0 0
    %10700 = vperm.xlu0 %10699, %v10521
    %v10701 = vpop.permute.xlu0 %10700
    %10702 = vset.pattern.permute.xlu0 0
    %10703 = vperm.xlu0 %10702, %v10522
    %v10704 = vpop.permute.xlu0 %10703
    %10705 = vset.pattern.permute.xlu0 0
    %10706 = vperm.xlu0 %10705, %v10523
    %v10707 = vpop.permute.xlu0 %10706
    %10708 = vset.pattern.permute.xlu0 0
    %10709 = vperm.xlu0 %10708, %v10524
    %v10710 = vpop.permute.xlu0 %10709
    %10711 = vset.pattern.permute.xlu0 0
    %10712 = vperm.xlu0 %10711, %v10525
    %v10713 = vpop.permute.xlu0 %10712
    %10714 = vset.pattern.permute.xlu0 0
    %10715 = vperm.xlu0 %10714, %v10526
    %v10716 = vpop.permute.xlu0 %10715
    %10717 = vset.pattern.permute.xlu0 0
    %10718 = vperm.xlu0 %10717, %v10527
    %v10719 = vpop.permute.xlu0 %10718
    %v10720 = vlaneseq
    %v10721 = vshrl.u32 %v10720, 7
    %v10722 = vsub.s32 %v8287, %v10721
    %v10723 = vrot.slane %v10530, %v10722
    %v10724 = vlaneseq
    %v10725 = vshrl.u32 %v10724, 7
    %v10726 = vsub.s32 %v8292, %v10725
    %v10727 = vrot.slane %v10533, %v10726
    %v10728 = vsel %vm8297, %v10727, %v10723
    %v10729 = vlaneseq
    %v10730 = vshrl.u32 %v10729, 7
    %v10731 = vsub.s32 %v8299, %v10730
    %v10732 = vrot.slane %v10536, %v10731
    %v10733 = vsel %vm8304, %v10732, %v10728
    %v10734 = vlaneseq
    %v10735 = vshrl.u32 %v10734, 7
    %v10736 = vsub.s32 %v8306, %v10735
    %v10737 = vrot.slane %v10539, %v10736
    %v10738 = vsel %vm8311, %v10737, %v10733
    %v10739 = vlaneseq
    %v10740 = vshrl.u32 %v10739, 7
    %v10741 = vsub.s32 %v8313, %v10740
    %v10742 = vrot.slane %v10542, %v10741
    %v10743 = vsel %vm8318, %v10742, %v10738
    %v10744 = vlaneseq
    %v10745 = vshrl.u32 %v10744, 7
    %v10746 = vsub.s32 %v8320, %v10745
    %v10747 = vrot.slane %v10545, %v10746
    %v10748 = vsel %vm8325, %v10747, %v10743
    %v10749 = vlaneseq
    %v10750 = vshrl.u32 %v10749, 7
    %v10751 = vsub.s32 %v8327, %v10750
    %v10752 = vrot.slane %v10548, %v10751
    %v10753 = vsel %vm8332, %v10752, %v10748
    %v10754 = vlaneseq
    %v10755 = vshrl.u32 %v10754, 7
    %v10756 = vsub.s32 %v8334, %v10755
    %v10757 = vrot.slane %v10551, %v10756
    %v10758 = vsel %vm8339, %v10757, %v10753
    %v10759 = vlaneseq
    %v10760 = vshrl.u32 %v10759, 7
    %v10761 = vsub.s32 %v8341, %v10760
    %v10762 = vrot.slane %v10554, %v10761
    %v10763 = vsel %vm8346, %v10762, %v10758
    %v10764 = vlaneseq
    %v10765 = vshrl.u32 %v10764, 7
    %v10766 = vsub.s32 %v8348, %v10765
    %v10767 = vrot.slane %v10557, %v10766
    %v10768 = vsel %vm8353, %v10767, %v10763
    %v10769 = vlaneseq
    %v10770 = vshrl.u32 %v10769, 7
    %v10771 = vsub.s32 %v8355, %v10770
    %v10772 = vrot.slane %v10560, %v10771
    %v10773 = vsel %vm8360, %v10772, %v10768
    %v10774 = vlaneseq
    %v10775 = vshrl.u32 %v10774, 7
    %v10776 = vsub.s32 %v8362, %v10775
    %v10777 = vrot.slane %v10563, %v10776
    %v10778 = vsel %vm8367, %v10777, %v10773
    %v10779 = vlaneseq
    %v10780 = vshrl.u32 %v10779, 7
    %v10781 = vsub.s32 %v8369, %v10780
    %v10782 = vrot.slane %v10566, %v10781
    %v10783 = vsel %vm8374, %v10782, %v10778
    %v10784 = vlaneseq
    %v10785 = vshrl.u32 %v10784, 7
    %v10786 = vsub.s32 %v8376, %v10785
    %v10787 = vrot.slane %v10569, %v10786
    %v10788 = vsel %vm8381, %v10787, %v10783
    %v10789 = vlaneseq
    %v10790 = vshrl.u32 %v10789, 7
    %v10791 = vsub.s32 %v8383, %v10790
    %v10792 = vrot.slane %v10572, %v10791
    %v10793 = vsel %vm8388, %v10792, %v10788
    %v10794 = vlaneseq
    %v10795 = vshrl.u32 %v10794, 7
    %v10796 = vsub.s32 %v8390, %v10795
    %v10797 = vrot.slane %v10575, %v10796
    %v10798 = vsel %vm8395, %v10797, %v10793
    %v10799 = vlaneseq
    %v10800 = vshrl.u32 %v10799, 7
    %v10801 = vsub.s32 %v8287, %v10800
    %v10802 = vrot.slane %v10578, %v10801
    %v10803 = vlaneseq
    %v10804 = vshrl.u32 %v10803, 7
    %v10805 = vsub.s32 %v8292, %v10804
    %v10806 = vrot.slane %v10581, %v10805
    %v10807 = vsel %vm8297, %v10806, %v10802
    %v10808 = vlaneseq
    %v10809 = vshrl.u32 %v10808, 7
    %v10810 = vsub.s32 %v8299, %v10809
    %v10811 = vrot.slane %v10584, %v10810
    %v10812 = vsel %vm8304, %v10811, %v10807
    %v10813 = vlaneseq
    %v10814 = vshrl.u32 %v10813, 7
    %v10815 = vsub.s32 %v8306, %v10814
    %v10816 = vrot.slane %v10587, %v10815
    %v10817 = vsel %vm8311, %v10816, %v10812
    %v10818 = vlaneseq
    %v10819 = vshrl.u32 %v10818, 7
    %v10820 = vsub.s32 %v8313, %v10819
    %v10821 = vrot.slane %v10590, %v10820
    %v10822 = vsel %vm8318, %v10821, %v10817
    %v10823 = vlaneseq
    %v10824 = vshrl.u32 %v10823, 7
    %v10825 = vsub.s32 %v8320, %v10824
    %v10826 = vrot.slane %v10593, %v10825
    %v10827 = vsel %vm8325, %v10826, %v10822
    %v10828 = vlaneseq
    %v10829 = vshrl.u32 %v10828, 7
    %v10830 = vsub.s32 %v8327, %v10829
    %v10831 = vrot.slane %v10596, %v10830
    %v10832 = vsel %vm8332, %v10831, %v10827
    %v10833 = vlaneseq
    %v10834 = vshrl.u32 %v10833, 7
    %v10835 = vsub.s32 %v8334, %v10834
    %v10836 = vrot.slane %v10599, %v10835
    %v10837 = vsel %vm8339, %v10836, %v10832
    %v10838 = vlaneseq
    %v10839 = vshrl.u32 %v10838, 7
    %v10840 = vsub.s32 %v8341, %v10839
    %v10841 = vrot.slane %v10602, %v10840
    %v10842 = vsel %vm8346, %v10841, %v10837
    %v10843 = vlaneseq
    %v10844 = vshrl.u32 %v10843, 7
    %v10845 = vsub.s32 %v8348, %v10844
    %v10846 = vrot.slane %v10605, %v10845
    %v10847 = vsel %vm8353, %v10846, %v10842
    %v10848 = vlaneseq
    %v10849 = vshrl.u32 %v10848, 7
    %v10850 = vsub.s32 %v8355, %v10849
    %v10851 = vrot.slane %v10608, %v10850
    %v10852 = vsel %vm8360, %v10851, %v10847
    %v10853 = vlaneseq
    %v10854 = vshrl.u32 %v10853, 7
    %v10855 = vsub.s32 %v8362, %v10854
    %v10856 = vrot.slane %v10611, %v10855
    %v10857 = vsel %vm8367, %v10856, %v10852
    %v10858 = vlaneseq
    %v10859 = vshrl.u32 %v10858, 7
    %v10860 = vsub.s32 %v8369, %v10859
    %v10861 = vrot.slane %v10614, %v10860
    %v10862 = vsel %vm8374, %v10861, %v10857
    %v10863 = vlaneseq
    %v10864 = vshrl.u32 %v10863, 7
    %v10865 = vsub.s32 %v8376, %v10864
    %v10866 = vrot.slane %v10617, %v10865
    %v10867 = vsel %vm8381, %v10866, %v10862
    %v10868 = vlaneseq
    %v10869 = vshrl.u32 %v10868, 7
    %v10870 = vsub.s32 %v8383, %v10869
    %v10871 = vrot.slane %v10620, %v10870
    %v10872 = vsel %vm8388, %v10871, %v10867
    %v10873 = vlaneseq
    %v10874 = vshrl.u32 %v10873, 7
    %v10875 = vsub.s32 %v8390, %v10874
    %v10876 = vrot.slane %v10623, %v10875
    %v10877 = vsel %vm8395, %v10876, %v10872
    %v10878 = vlaneseq
    %v10879 = vshrl.u32 %v10878, 7
    %v10880 = vsub.s32 %v8287, %v10879
    %v10881 = vrot.slane %v10626, %v10880
    %v10882 = vlaneseq
    %v10883 = vshrl.u32 %v10882, 7
    %v10884 = vsub.s32 %v8292, %v10883
    %v10885 = vrot.slane %v10629, %v10884
    %v10886 = vsel %vm8297, %v10885, %v10881
    %v10887 = vlaneseq
    %v10888 = vshrl.u32 %v10887, 7
    %v10889 = vsub.s32 %v8299, %v10888
    %v10890 = vrot.slane %v10632, %v10889
    %v10891 = vsel %vm8304, %v10890, %v10886
    %v10892 = vlaneseq
    %v10893 = vshrl.u32 %v10892, 7
    %v10894 = vsub.s32 %v8306, %v10893
    %v10895 = vrot.slane %v10635, %v10894
    %v10896 = vsel %vm8311, %v10895, %v10891
    %v10897 = vlaneseq
    %v10898 = vshrl.u32 %v10897, 7
    %v10899 = vsub.s32 %v8313, %v10898
    %v10900 = vrot.slane %v10638, %v10899
    %v10901 = vsel %vm8318, %v10900, %v10896
    %v10902 = vlaneseq
    %v10903 = vshrl.u32 %v10902, 7
    %v10904 = vsub.s32 %v8320, %v10903
    %v10905 = vrot.slane %v10641, %v10904
    %v10906 = vsel %vm8325, %v10905, %v10901
    %v10907 = vlaneseq
    %v10908 = vshrl.u32 %v10907, 7
    %v10909 = vsub.s32 %v8327, %v10908
    %v10910 = vrot.slane %v10644, %v10909
    %v10911 = vsel %vm8332, %v10910, %v10906
    %v10912 = vlaneseq
    %v10913 = vshrl.u32 %v10912, 7
    %v10914 = vsub.s32 %v8334, %v10913
    %v10915 = vrot.slane %v10647, %v10914
    %v10916 = vsel %vm8339, %v10915, %v10911
    %v10917 = vlaneseq
    %v10918 = vshrl.u32 %v10917, 7
    %v10919 = vsub.s32 %v8341, %v10918
    %v10920 = vrot.slane %v10650, %v10919
    %v10921 = vsel %vm8346, %v10920, %v10916
    %v10922 = vlaneseq
    %v10923 = vshrl.u32 %v10922, 7
    %v10924 = vsub.s32 %v8348, %v10923
    %v10925 = vrot.slane %v10653, %v10924
    %v10926 = vsel %vm8353, %v10925, %v10921
    %v10927 = vlaneseq
    %v10928 = vshrl.u32 %v10927, 7
    %v10929 = vsub.s32 %v8355, %v10928
    %v10930 = vrot.slane %v10656, %v10929
    %v10931 = vsel %vm8360, %v10930, %v10926
    %v10932 = vlaneseq
    %v10933 = vshrl.u32 %v10932, 7
    %v10934 = vsub.s32 %v8362, %v10933
    %v10935 = vrot.slane %v10659, %v10934
    %v10936 = vsel %vm8367, %v10935, %v10931
    %v10937 = vlaneseq
    %v10938 = vshrl.u32 %v10937, 7
    %v10939 = vsub.s32 %v8369, %v10938
    %v10940 = vrot.slane %v10662, %v10939
    %v10941 = vsel %vm8374, %v10940, %v10936
    %v10942 = vlaneseq
    %v10943 = vshrl.u32 %v10942, 7
    %v10944 = vsub.s32 %v8376, %v10943
    %v10945 = vrot.slane %v10665, %v10944
    %v10946 = vsel %vm8381, %v10945, %v10941
    %v10947 = vlaneseq
    %v10948 = vshrl.u32 %v10947, 7
    %v10949 = vsub.s32 %v8383, %v10948
    %v10950 = vrot.slane %v10668, %v10949
    %v10951 = vsel %vm8388, %v10950, %v10946
    %v10952 = vlaneseq
    %v10953 = vshrl.u32 %v10952, 7
    %v10954 = vsub.s32 %v8390, %v10953
    %v10955 = vrot.slane %v10671, %v10954
    %v10956 = vsel %vm8395, %v10955, %v10951
    %v10957 = vlaneseq
    %v10958 = vshrl.u32 %v10957, 7
    %v10959 = vsub.s32 %v8287, %v10958
    %v10960 = vrot.slane %v10674, %v10959
    %v10961 = vlaneseq
    %v10962 = vshrl.u32 %v10961, 7
    %v10963 = vsub.s32 %v8292, %v10962
    %v10964 = vrot.slane %v10677, %v10963
    %v10965 = vsel %vm8297, %v10964, %v10960
    %v10966 = vlaneseq
    %v10967 = vshrl.u32 %v10966, 7
    %v10968 = vsub.s32 %v8299, %v10967
    %v10969 = vrot.slane %v10680, %v10968
    %v10970 = vsel %vm8304, %v10969, %v10965
    %v10971 = vlaneseq
    %v10972 = vshrl.u32 %v10971, 7
    %v10973 = vsub.s32 %v8306, %v10972
    %v10974 = vrot.slane %v10683, %v10973
    %v10975 = vsel %vm8311, %v10974, %v10970
    %v10976 = vlaneseq
    %v10977 = vshrl.u32 %v10976, 7
    %v10978 = vsub.s32 %v8313, %v10977
    %v10979 = vrot.slane %v10686, %v10978
    %v10980 = vsel %vm8318, %v10979, %v10975
    %v10981 = vlaneseq
    %v10982 = vshrl.u32 %v10981, 7
    %v10983 = vsub.s32 %v8320, %v10982
    %v10984 = vrot.slane %v10689, %v10983
    %v10985 = vsel %vm8325, %v10984, %v10980
    %v10986 = vlaneseq
    %v10987 = vshrl.u32 %v10986, 7
    %v10988 = vsub.s32 %v8327, %v10987
    %v10989 = vrot.slane %v10692, %v10988
    %v10990 = vsel %vm8332, %v10989, %v10985
    %v10991 = vlaneseq
    %v10992 = vshrl.u32 %v10991, 7
    %v10993 = vsub.s32 %v8334, %v10992
    %v10994 = vrot.slane %v10695, %v10993
    %v10995 = vsel %vm8339, %v10994, %v10990
    %v10996 = vlaneseq
    %v10997 = vshrl.u32 %v10996, 7
    %v10998 = vsub.s32 %v8341, %v10997
    %v10999 = vrot.slane %v10698, %v10998
    %v11000 = vsel %vm8346, %v10999, %v10995
    %v11001 = vlaneseq
    %v11002 = vshrl.u32 %v11001, 7
    %v11003 = vsub.s32 %v8348, %v11002
    %v11004 = vrot.slane %v10701, %v11003
    %v11005 = vsel %vm8353, %v11004, %v11000
    %v11006 = vlaneseq
    %v11007 = vshrl.u32 %v11006, 7
    %v11008 = vsub.s32 %v8355, %v11007
    %v11009 = vrot.slane %v10704, %v11008
    %v11010 = vsel %vm8360, %v11009, %v11005
    %v11011 = vlaneseq
    %v11012 = vshrl.u32 %v11011, 7
    %v11013 = vsub.s32 %v8362, %v11012
    %v11014 = vrot.slane %v10707, %v11013
    %v11015 = vsel %vm8367, %v11014, %v11010
    %v11016 = vlaneseq
    %v11017 = vshrl.u32 %v11016, 7
    %v11018 = vsub.s32 %v8369, %v11017
    %v11019 = vrot.slane %v10710, %v11018
    %v11020 = vsel %vm8374, %v11019, %v11015
    %v11021 = vlaneseq
    %v11022 = vshrl.u32 %v11021, 7
    %v11023 = vsub.s32 %v8376, %v11022
    %v11024 = vrot.slane %v10713, %v11023
    %v11025 = vsel %vm8381, %v11024, %v11020
    %v11026 = vlaneseq
    %v11027 = vshrl.u32 %v11026, 7
    %v11028 = vsub.s32 %v8383, %v11027
    %v11029 = vrot.slane %v10716, %v11028
    %v11030 = vsel %vm8388, %v11029, %v11025
    %v11031 = vlaneseq
    %v11032 = vshrl.u32 %v11031, 7
    %v11033 = vsub.s32 %v8390, %v11032
    %v11034 = vrot.slane %v10719, %v11033
    %v11035 = vsel %vm8395, %v11034, %v11030
    %v11036 = vsel %vm9582, %v10877, %v10798
    %v11037 = vsel %vm9584, %v10956, %v11036
    %v11038 = vsel %vm9586, %v11035, %v11037
    %v11039 = vpack.c.b16 %v11038, %v11038
    %v11057 = vunpack.c.l.b16 %v10278
    %v11058 = vunpack.c.h.b16 %v10278
    %v11059 = vunpack.c.l.b16 %v10279
    %v11060 = vunpack.c.h.b16 %v10279
    %v11061 = vunpack.c.l.b16 %v10280
    %v11062 = vunpack.c.h.b16 %v10280
    %v11063 = vunpack.c.l.b16 %v10281
    %v11064 = vunpack.c.h.b16 %v10281
    %v11065 = vunpack.c.l.b16 %v10282
    %v11066 = vunpack.c.h.b16 %v10282
    %v11067 = vunpack.c.l.b16 %v10283
    %v11068 = vunpack.c.h.b16 %v10283
    %v11069 = vunpack.c.l.b16 %v10284
    %v11070 = vunpack.c.h.b16 %v10284
    %v11071 = vunpack.c.l.b16 %v10285
    %v11072 = vunpack.c.h.b16 %v10285
    %v11073 = vunpack.c.l.b16 %v10286
    %v11074 = vunpack.c.h.b16 %v10286
    %v11075 = vunpack.c.l.b16 %v10287
    %v11076 = vunpack.c.h.b16 %v10287
    %v11077 = vunpack.c.l.b16 %v10288
    %v11078 = vunpack.c.h.b16 %v10288
    %v11079 = vunpack.c.l.b16 %v10289
    %v11080 = vunpack.c.h.b16 %v10289
    %v11081 = vunpack.c.l.b16 %v10290
    %v11082 = vunpack.c.h.b16 %v10290
    %v11083 = vunpack.c.l.b16 %v10291
    %v11084 = vunpack.c.h.b16 %v10291
    %v11085 = vunpack.c.l.b16 %v10292
    %v11086 = vunpack.c.h.b16 %v10292
    %v11087 = vunpack.c.l.b16 %v10293
    %v11088 = vunpack.c.h.b16 %v10293
    %v11089 = vpack.c.b16 %v11059, %v11057
    %v11090 = vpack.c.b16 %v11060, %v11058
    %v11091 = vpack.c.b16 %v11063, %v11061
    %v11092 = vpack.c.b16 %v11064, %v11062
    %v11093 = vpack.c.b16 %v11067, %v11065
    %v11094 = vpack.c.b16 %v11068, %v11066
    %v11095 = vpack.c.b16 %v11071, %v11069
    %v11096 = vpack.c.b16 %v11072, %v11070
    %v11097 = vpack.c.b16 %v11075, %v11073
    %v11098 = vpack.c.b16 %v11076, %v11074
    %v11099 = vpack.c.b16 %v11079, %v11077
    %v11100 = vpack.c.b16 %v11080, %v11078
    %v11101 = vpack.c.b16 %v11083, %v11081
    %v11102 = vpack.c.b16 %v11084, %v11082
    %v11103 = vpack.c.b16 %v11087, %v11085
    %v11104 = vpack.c.b16 %v11088, %v11086
    %11121 = vmatprep.subr.bf16.mxu0 %v11090
    %11122 = vmatpush1.bf16.msra.mxu0 %v11089
    %11123 = vmatprep.subr.bf16.mxu0 %v11092
    %11124 = vmatpush1.bf16.msra.mxu0 %v11091
    %11125 = vmatprep.subr.bf16.mxu0 %v11094
    %11126 = vmatpush1.bf16.msra.mxu0 %v11093
    %11127 = vmatprep.subr.bf16.mxu0 %v11096
    %11128 = vmatpush1.bf16.msra.mxu0 %v11095
    %11129 = vmatprep.subr.bf16.mxu0 %v11098
    %11130 = vmatpush1.bf16.msra.mxu0 %v11097
    %11131 = vmatprep.subr.bf16.mxu0 %v11100
    %11132 = vmatpush1.bf16.msra.mxu0 %v11099
    %11133 = vmatprep.subr.bf16.mxu0 %v11102
    %11134 = vmatpush1.bf16.msra.mxu0 %v11101
    %11135 = vmatprep.subr.bf16.mxu0 %v11104
    %11136 = vmatpush1.bf16.msra.mxu0 %v11103
    %11137 = vmatprep.subr.bf16.mxu0 0
    %11138 = vmatpush1.bf16.msra.mxu0 0
    %11139 = vmatprep.subr.bf16.mxu0 0
    %11140 = vmatpush1.bf16.msra.mxu0 0
    %11141 = vmatprep.subr.bf16.mxu0 0
    %11142 = vmatpush1.bf16.msra.mxu0 0
    %11143 = vmatprep.subr.bf16.mxu0 0
    %11144 = vmatpush1.bf16.msra.mxu0 0
    %11145 = vmatprep.subr.bf16.mxu0 0
    %11146 = vmatpush1.bf16.msra.mxu0 0
    %11147 = vmatprep.subr.bf16.mxu0 0
    %11148 = vmatpush1.bf16.msra.mxu0 0
    %11149 = vmatprep.subr.bf16.mxu0 0
    %11150 = vmatpush1.bf16.msra.mxu0 0
    %11151 = vmatprep.subr.bf16.mxu0 0
    %11152 = vmatpush1.bf16.msra.mxu0 0
    %11153 = vmatprep.mubr.bf16.mxu0 0
    %11154 = vmatmul.mubr.bf16.gmra.mrb[0].mxu0 %v11039
    %v11155 = vpop.f32.mrb[0].mxu0
    %v11156 = vadd.f32 %v10426, %v11155
    %v11157 = vpop.f32.mrb[0].mxu0
    %v11158 = vadd.f32 %v10428, %v11157
    %v11159 = vpop.f32.mrb[0].mxu0
    %v11160 = vpop.f32.mrb[0].mxu0
    %11161 = vdwg.mxu0
    %v11162 = vld [vmem:[#allocation13] sm:$0x3]
    %v11164 = vlaneseq
    %v11165 = vshrl.u32 %v11164, 7
    %v11166 = vsub.s32 0, %v11165
    %v11167 = vrot.slane %v11162, %v11166
    %v11168 = vlaneseq
    %v11169 = vshrl.u32 %v11168, 7
    %v11170 = vsub.s32 1, %v11169
    %v11171 = vrot.slane %v11162, %v11170
    %v11174 = vadd.f32 %v11156, %v11167
    %v11175 = vadd.f32 %v11158, %v11171
    %11176 = vst [vmem:[%s23] sm:$0xf] %v9652
    %v11179 = vcombine.low %v11174, %v11175
    %11181 = vst [vmem:[%s24] sm:$0xff] %v11179
    // Predicated region
    $region122: #{foar_forward.1} parent=1 // pred_check
      _
    $region123: #{foar_forward.1} parent=1 // pred_check_branch
      %11183 = sbr.rel (0) target = $region125
    $region124: #{foar_forward.1} parent=1 // pred_region
      _
    $region125: #{foar_forward.1} parent=1 // pred_fallthru
      _
    // Predicated region
    $region126: #{foar_forward.1} parent=1 // pred_check
      _
    $region127: #{foar_forward.1} parent=1 // pred_check_branch
      %11185 = sbr.rel (0) target = $region129
    $region128: #{foar_forward.1} parent=1 // pred_region
      _
    $region129: #{foar_forward.1} parent=1 // pred_fallthru
      _
    // Predicated region
    $region130: #{foar_forward.1} parent=1 // pred_check
      _
    $region131: #{foar_forward.1} parent=1 // pred_check_branch
      %11187 = sbr.rel (0) target = $region133
    $region132: #{foar_forward.1} parent=1 // pred_region
      _
    $region133: #{foar_forward.1} parent=1 // pred_fallthru
      _
    // Predicated region
    $region134: #{foar_forward.1} parent=1 // pred_check
      _
    $region135: #{foar_forward.1} parent=1 // pred_check_branch
      %11189 = sbr.rel (0) target = $region137
    $region136: #{foar_forward.1} parent=1 // pred_region
      _
    $region137: #{foar_forward.1} parent=1 // pred_fallthru
      _
    %11190 = vsyncpa [#allocation4], 1
    %11191 = vsyncpa [#allocation6], 1
    %11192 = vsyncpa [#allocation9], 1
    %11193 = vsyncpa [#allocation12], 1

</llo_original>
